<compile_context>
chip_gen: v7x
topology: tpu7x:2x2x1
jax: 0.10.0
libtpu: 0.0.40
codegen_flags: <defaults>
</compile_context>

<pallas_src>
import functools
import math

import jax
import jax.numpy as jnp
from jax.experimental import pallas as pl
from jax.experimental.pallas import tpu as pltpu


def causal_self_attention_kernel(
    x_ref,            # (1, T, C)  f32
    w_attn_ref,       # (C, 3C)    bf16
    b_attn_ref,       # (1, 3C)    f32
    w_proj_ref,       # (C, C)     bf16
    b_proj_ref,       # (1, C)     f32
    out_ref,          # (1, T, C)  f32
    acc_ref,          # (T, C)     f32 VMEM scratch (per-head proj accumulator)
    *, n_head,
):
    x = x_ref[0]                          # (T, C) f32
    T, C = x.shape
    D = C // n_head
    scale = 1.0 / math.sqrt(D)

    # ---- fused QKV projection (bf16 operands, f32 accumulation on the MXU) ----
    xb = x.astype(jnp.bfloat16)
    qkv = jnp.dot(xb, w_attn_ref[...], preferred_element_type=jnp.float32)
    qkv = qkv + b_attn_ref[...]           # (T, 3C) f32

    # fold the attention scale into q once (same scale for every head):
    # scales a (T, C) tensor instead of n_head (T, T) score matrices.
    q = qkv[:, 0 * C:1 * C] * scale
    k = qkv[:, 1 * C:2 * C]
    v = qkv[:, 2 * C:3 * C]

    # additive causal mask: 0 where j <= i, -1e30 otherwise (computed once).
    row = jax.lax.broadcasted_iota(jnp.int32, (T, T), 0)
    col = jax.lax.broadcasted_iota(jnp.int32, (T, T), 1)
    mask_add = jnp.where(col <= row, 0.0, -1e30).astype(jnp.float32)

    # ---- per-head attention with immediate output-projection accumulation ----
    # (no concatenate: acc += yh @ W_proj[h*D:(h+1)*D, :] keeps live ranges flat)
    acc_ref[...] = jnp.zeros_like(acc_ref)
    for h in range(n_head):               # small static unroll (n_head is small)
        qh = q[:, h * D:(h + 1) * D].astype(jnp.bfloat16)   # (T, D)
        kh = k[:, h * D:(h + 1) * D].astype(jnp.bfloat16)   # (T, D)
        vh = v[:, h * D:(h + 1) * D].astype(jnp.bfloat16)   # (T, D)

        s = jnp.dot(qh, kh.T, preferred_element_type=jnp.float32)  # (T, T) f32
        s = s + mask_add
        s = s - jnp.max(s, axis=-1, keepdims=True)
        p = jnp.exp(s)
        p = p * pl.reciprocal(jnp.sum(p, axis=-1, keepdims=True), approx=True)

        yh = jnp.dot(p.astype(jnp.bfloat16), vh,
                     preferred_element_type=jnp.float32)            # (T, D) f32

        acc_ref[...] += jnp.dot(yh.astype(jnp.bfloat16),
                                w_proj_ref[h * D:(h + 1) * D, :],
                                preferred_element_type=jnp.float32)  # (T, C)

    out_ref[0] = (acc_ref[...] + b_proj_ref[...]).astype(out_ref.dtype)


def causal_self_attention(x, w_attn, b_attn, w_proj, b_proj, n_head):
    """x: (B, T, C) f32; w_* bf16 stored (in, out); b_* f32 shaped (1, K)."""
    B, T, C = x.shape

    x_spec = pl.BlockSpec((1, T, C), lambda b: (b, 0, 0))
    # All parameters are fully resident (constant block index every grid step).
    # NOTE: with a constant index_map double-buffering these is pure VMEM waste;
    # at real GPT-2 sizes on v7x, single-buffer them (pipeline_mode) or tile the
    # output (N) dimension of the weights. Not needed at these shapes.
    param_specs = [
        pl.BlockSpec(p.shape, lambda b: (0, 0))
        for p in (w_attn, b_attn, w_proj, b_proj)
    ]

    kernel = functools.partial(causal_self_attention_kernel, n_head=n_head)
    return pl.pallas_call(
        kernel,
        out_shape=jax.ShapeDtypeStruct((B, T, C), x.dtype),
        grid_spec=pltpu.PrefetchScalarGridSpec(
            num_scalar_prefetch=0,
            grid=(B,),
            in_specs=[x_spec] + param_specs,
            out_specs=x_spec,
            scratch_shapes=[pltpu.VMEM((T, C), jnp.float32)],
        ),
        compiler_params=pltpu.CompilerParams(
            dimension_semantics=("parallel",),
            vmem_limit_bytes=32 * 1024 * 1024,
        ),
    )(x, w_attn, b_attn, w_proj, b_proj)


# ---------------- pure-JAX reference (for correctness check) ----------------
def causal_self_attention_ref(x, w_attn, b_attn, w_proj, b_proj, n_head):
    B, T, C = x.shape
    D = C // n_head
    qkv = x @ w_attn.astype(jnp.float32) + b_attn
    q, k, v = jnp.split(qkv, 3, axis=-1)
    q = q.reshape(B, T, n_head, D).transpose(0, 2, 1, 3)
    k = k.reshape(B, T, n_head, D).transpose(0, 2, 1, 3)
    v = v.reshape(B, T, n_head, D).transpose(0, 2, 1, 3)
    s = jnp.einsum("bhqd,bhkd->bhqk", q, k) / math.sqrt(D)
    mask = jnp.tril(jnp.ones((T, T), dtype=bool))
    s = jnp.where(mask, s, -1e30)
    p = jax.nn.softmax(s, axis=-1)
    y = jnp.einsum("bhqk,bhkd->bhqd", p, v)
    y = y.transpose(0, 2, 1, 3).reshape(B, T, C)
    return y @ w_proj.astype(jnp.float32) + b_proj


if __name__ == "__main__":
    # small config consistent with the module (C % n_head == 0, head dim 64)
    B, T, C, n_head = 2, 256, 256, 4

    key = jax.random.PRNGKey(0)
    ks = jax.random.split(key, 6)

    x = jax.random.normal(ks[0], (B, T, C), dtype=jnp.float32)

    def init_w(k, shape, scale=0.02):
        # weights stored in bf16 in HBM (halves DMA bytes / VMEM residency)
        return (scale * jax.random.normal(k, shape)).astype(jnp.bfloat16)

    w_attn = init_w(ks[1], (C, 3 * C))                                   # c_attn.weight.T
    b_attn = (0.01 * jax.random.normal(ks[2], (1, 3 * C))).astype(jnp.float32)
    w_proj = init_w(ks[3], (C, C))                                       # c_proj.weight.T
    b_proj = (0.01 * jax.random.normal(ks[4], (1, C))).astype(jnp.float32)

    out = causal_self_attention(x, w_attn, b_attn, w_proj, b_proj, n_head)
    out = jax.block_until_ready(out)

    ref = causal_self_attention_ref(x, w_attn, b_attn, w_proj, b_proj, n_head)
    assert out.shape == (B, T, C)
    # bf16 matmul operands + approx reciprocal -> relaxed tolerance vs f32 ref
    assert jnp.allclose(out, ref, rtol=2e-2, atol=2e-2), "mismatch vs reference"

    print("KERNEL_OK")
</pallas_src>

<mosaic_0001>
module attributes {stable_mosaic.version = 11 : i64} {
  func.func @causal_self_attention_kernel(%arg0: i32, %arg1: memref<1x256x256xf32, #tpu.memory_space<vmem>>, %arg2: memref<256x768xbf16, #tpu.memory_space<vmem>>, %arg3: memref<1x768xf32, #tpu.memory_space<vmem>>, %arg4: memref<256x256xbf16, #tpu.memory_space<vmem>>, %arg5: memref<1x256xf32, #tpu.memory_space<vmem>>, %arg6: memref<1x256x256xf32, #tpu.memory_space<vmem>>, %arg7: memref<256x256xf32, #tpu.memory_space<vmem>>) attributes {dimension_semantics = [#tpu.dimension_semantics<parallel>], iteration_bounds = array<i64: 2>, scalar_prefetch = 0 : i64, scratch_operands = 1 : i64, tpu.core_type = #tpu.core_type<tc>, window_params = [{transform_indices = @transform_0, window_bounds = array<i64: 1, 256, 256>}, {pipeline_mode = #tpu.pipeline_mode<synchronous>, transform_indices = @transform_1, window_bounds = array<i64: 256, 768>}, {pipeline_mode = #tpu.pipeline_mode<synchronous>, transform_indices = @transform_2, window_bounds = array<i64: 1, 768>}, {pipeline_mode = #tpu.pipeline_mode<synchronous>, transform_indices = @transform_3, window_bounds = array<i64: 256, 256>}, {pipeline_mode = #tpu.pipeline_mode<synchronous>, transform_indices = @transform_4, window_bounds = array<i64: 1, 256>}, {transform_indices = @transform_5, window_bounds = array<i64: 1, 256, 256>}]} {
    %c0 = arith.constant 0 : index
    %c0_0 = arith.constant 0 : index
    %c0_1 = arith.constant 0 : index
    %0 = vector.load %arg1[%c0, %c0_0, %c0_1] : memref<1x256x256xf32, #tpu.memory_space<vmem>>, vector<1x256x256xf32>
    %1 = vector.shape_cast %0 : vector<1x256x256xf32> to vector<256x256xf32>
    %2 = arith.truncf %1 : vector<256x256xf32> to vector<256x256xbf16>
    %c0_2 = arith.constant 0 : index
    %c0_3 = arith.constant 0 : index
    %3 = vector.load %arg2[%c0_2, %c0_3] : memref<256x768xbf16, #tpu.memory_space<vmem>>, vector<256x768xbf16>
    %cst = arith.constant dense<0.000000e+00> : vector<256x768xf32>
    %4 = tpu.matmul %2, %3, %cst {dimension_numbers = #tpu.dot_dimension_numbers<[1], [0], [0], [1], [0, 0, 1, 1], [], []>} : vector<256x256xbf16>, vector<256x768xbf16>, vector<256x768xf32> -> vector<256x768xf32>
    %c0_4 = arith.constant 0 : index
    %c0_5 = arith.constant 0 : index
    %5 = vector.load %arg3[%c0_4, %c0_5] : memref<1x768xf32, #tpu.memory_space<vmem>>, vector<1x768xf32>
    %6 = vector.broadcast %5 : vector<1x768xf32> to vector<256x768xf32>
    %7 = arith.addf %4, %6 : vector<256x768xf32>
    %8 = vector.extract_strided_slice %7 {offsets = [0, 0], sizes = [256, 256], strides = [1, 1]} : vector<256x768xf32> to vector<256x256xf32>
    %cst_6 = arith.constant 1.250000e-01 : f32
    %9 = vector.broadcast %cst_6 : f32 to vector<256x256xf32>
    %10 = arith.mulf %8, %9 : vector<256x256xf32>
    %11 = vector.extract_strided_slice %7 {offsets = [0, 256], sizes = [256, 256], strides = [1, 1]} : vector<256x768xf32> to vector<256x256xf32>
    %12 = vector.extract_strided_slice %7 {offsets = [0, 512], sizes = [256, 256], strides = [1, 1]} : vector<256x768xf32> to vector<256x256xf32>
    %13 = tpu.iota {dimensions = array<i32: 0>} : vector<256x256xi32>
    %14 = tpu.iota {dimensions = array<i32: 1>} : vector<256x256xi32>
    %15 = arith.cmpi sle, %14, %13 : vector<256x256xi32>
    %cst_7 = arith.constant 0.000000e+00 : f32
    %cst_8 = arith.constant -1.000000e+30 : f32
    %16 = vector.broadcast %cst_7 : f32 to vector<256x256xf32>
    %17 = vector.broadcast %cst_8 : f32 to vector<256x256xf32>
    %18 = arith.select %15, %16, %17 : vector<256x256xi1>, vector<256x256xf32>
    %cst_9 = arith.constant 0.000000e+00 : f32
    %19 = vector.broadcast %cst_9 : f32 to vector<256x256xf32>
    %c0_10 = arith.constant 0 : index
    %c0_11 = arith.constant 0 : index
    %20 = vector.load %arg7[%c0_10, %c0_11] : memref<256x256xf32, #tpu.memory_space<vmem>>, vector<256x256xf32>
    tpu.vector_store %arg7[%c0_10, %c0_11], %19 {strides = array<i32>} : memref<256x256xf32, #tpu.memory_space<vmem>>, vector<256x256xf32>,
    %21 = vector.extract_strided_slice %10 {offsets = [0, 0], sizes = [256, 64], strides = [1, 1]} : vector<256x256xf32> to vector<256x64xf32>
    %22 = arith.truncf %21 : vector<256x64xf32> to vector<256x64xbf16>
    %23 = vector.extract_strided_slice %11 {offsets = [0, 0], sizes = [256, 64], strides = [1, 1]} : vector<256x256xf32> to vector<256x64xf32>
    %24 = arith.truncf %23 : vector<256x64xf32> to vector<256x64xbf16>
    %25 = vector.extract_strided_slice %12 {offsets = [0, 0], sizes = [256, 64], strides = [1, 1]} : vector<256x256xf32> to vector<256x64xf32>
    %26 = arith.truncf %25 : vector<256x64xf32> to vector<256x64xbf16>
    %27 = tpu.transpose %24, [1, 0] : vector<256x64xbf16> -> vector<64x256xbf16>
    %cst_12 = arith.constant dense<0.000000e+00> : vector<256x256xf32>
    %28 = tpu.matmul %22, %27, %cst_12 {dimension_numbers = #tpu.dot_dimension_numbers<[1], [0], [0], [1], [0, 0, 1, 1], [], []>} : vector<256x64xbf16>, vector<64x256xbf16>, vector<256x256xf32> -> vector<256x256xf32>
    %29 = arith.addf %28, %18 : vector<256x256xf32>
    %cst_13 = arith.constant dense<0xFF800000> : vector<256xf32>
    %30 = vector.multi_reduction <maximumf>, %29, %cst_13 [1] : vector<256x256xf32> to vector<256xf32>
    %31 = vector.shape_cast %30 : vector<256xf32> to vector<256x1xf32>
    %32 = vector.broadcast %31 : vector<256x1xf32> to vector<256x256xf32>
    %33 = arith.subf %29, %32 : vector<256x256xf32>
    %34 = math.exp %33 : vector<256x256xf32>
    %cst_14 = arith.constant dense<0.000000e+00> : vector<256xf32>
    %35 = vector.multi_reduction <add>, %34, %cst_14 [1] : vector<256x256xf32> to vector<256xf32>
    %36 = vector.shape_cast %35 : vector<256xf32> to vector<256x1xf32>
    %37 = tpu.reciprocal %36 {approx = true} : vector<256x1xf32> -> vector<256x1xf32>
    %38 = vector.broadcast %37 : vector<256x1xf32> to vector<256x256xf32>
    %39 = arith.mulf %34, %38 : vector<256x256xf32>
    %40 = arith.truncf %39 : vector<256x256xf32> to vector<256x256xbf16>
    %cst_15 = arith.constant dense<0.000000e+00> : vector<256x64xf32>
    %41 = tpu.matmul %40, %26, %cst_15 {dimension_numbers = #tpu.dot_dimension_numbers<[1], [0], [0], [1], [0, 0, 1, 1], [], []>} : vector<256x256xbf16>, vector<256x64xbf16>, vector<256x64xf32> -> vector<256x64xf32>
    %c0_16 = arith.constant 0 : index
    %c0_17 = arith.constant 0 : index
    %42 = vector.load %arg7[%c0_16, %c0_17] : memref<256x256xf32, #tpu.memory_space<vmem>>, vector<256x256xf32>
    %43 = arith.truncf %41 : vector<256x64xf32> to vector<256x64xbf16>
    %c0_18 = arith.constant 0 : index
    %c0_19 = arith.constant 0 : index
    %44 = vector.load %arg4[%c0_18, %c0_19] : memref<256x256xbf16, #tpu.memory_space<vmem>>, vector<64x256xbf16>
    %cst_20 = arith.constant dense<0.000000e+00> : vector<256x256xf32>
    %45 = tpu.matmul %43, %44, %cst_20 {dimension_numbers = #tpu.dot_dimension_numbers<[1], [0], [0], [1], [0, 0, 1, 1], [], []>} : vector<256x64xbf16>, vector<64x256xbf16>, vector<256x256xf32> -> vector<256x256xf32>
    %46 = arith.addf %42, %45 : vector<256x256xf32>
    %c0_21 = arith.constant 0 : index
    %c0_22 = arith.constant 0 : index
    %47 = vector.load %arg7[%c0_21, %c0_22] : memref<256x256xf32, #tpu.memory_space<vmem>>, vector<256x256xf32>
    tpu.vector_store %arg7[%c0_21, %c0_22], %46 {strides = array<i32>} : memref<256x256xf32, #tpu.memory_space<vmem>>, vector<256x256xf32>,
    %48 = vector.extract_strided_slice %10 {offsets = [0, 64], sizes = [256, 64], strides = [1, 1]} : vector<256x256xf32> to vector<256x64xf32>
    %49 = arith.truncf %48 : vector<256x64xf32> to vector<256x64xbf16>
    %50 = vector.extract_strided_slice %11 {offsets = [0, 64], sizes = [256, 64], strides = [1, 1]} : vector<256x256xf32> to vector<256x64xf32>
    %51 = arith.truncf %50 : vector<256x64xf32> to vector<256x64xbf16>
    %52 = vector.extract_strided_slice %12 {offsets = [0, 64], sizes = [256, 64], strides = [1, 1]} : vector<256x256xf32> to vector<256x64xf32>
    %53 = arith.truncf %52 : vector<256x64xf32> to vector<256x64xbf16>
    %54 = tpu.transpose %51, [1, 0] : vector<256x64xbf16> -> vector<64x256xbf16>
    %cst_23 = arith.constant dense<0.000000e+00> : vector<256x256xf32>
    %55 = tpu.matmul %49, %54, %cst_23 {dimension_numbers = #tpu.dot_dimension_numbers<[1], [0], [0], [1], [0, 0, 1, 1], [], []>} : vector<256x64xbf16>, vector<64x256xbf16>, vector<256x256xf32> -> vector<256x256xf32>
    %56 = arith.addf %55, %18 : vector<256x256xf32>
    %cst_24 = arith.constant dense<0xFF800000> : vector<256xf32>
    %57 = vector.multi_reduction <maximumf>, %56, %cst_24 [1] : vector<256x256xf32> to vector<256xf32>
    %58 = vector.shape_cast %57 : vector<256xf32> to vector<256x1xf32>
    %59 = vector.broadcast %58 : vector<256x1xf32> to vector<256x256xf32>
    %60 = arith.subf %56, %59 : vector<256x256xf32>
    %61 = math.exp %60 : vector<256x256xf32>
    %cst_25 = arith.constant dense<0.000000e+00> : vector<256xf32>
    %62 = vector.multi_reduction <add>, %61, %cst_25 [1] : vector<256x256xf32> to vector<256xf32>
    %63 = vector.shape_cast %62 : vector<256xf32> to vector<256x1xf32>
    %64 = tpu.reciprocal %63 {approx = true} : vector<256x1xf32> -> vector<256x1xf32>
    %65 = vector.broadcast %64 : vector<256x1xf32> to vector<256x256xf32>
    %66 = arith.mulf %61, %65 : vector<256x256xf32>
    %67 = arith.truncf %66 : vector<256x256xf32> to vector<256x256xbf16>
    %cst_26 = arith.constant dense<0.000000e+00> : vector<256x64xf32>
    %68 = tpu.matmul %67, %53, %cst_26 {dimension_numbers = #tpu.dot_dimension_numbers<[1], [0], [0], [1], [0, 0, 1, 1], [], []>} : vector<256x256xbf16>, vector<256x64xbf16>, vector<256x64xf32> -> vector<256x64xf32>
    %c0_27 = arith.constant 0 : index
    %c0_28 = arith.constant 0 : index
    %69 = vector.load %arg7[%c0_27, %c0_28] : memref<256x256xf32, #tpu.memory_space<vmem>>, vector<256x256xf32>
    %70 = arith.truncf %68 : vector<256x64xf32> to vector<256x64xbf16>
    %c64 = arith.constant 64 : index
    %c0_29 = arith.constant 0 : index
    %71 = vector.load %arg4[%c64, %c0_29] : memref<256x256xbf16, #tpu.memory_space<vmem>>, vector<64x256xbf16>
    %cst_30 = arith.constant dense<0.000000e+00> : vector<256x256xf32>
    %72 = tpu.matmul %70, %71, %cst_30 {dimension_numbers = #tpu.dot_dimension_numbers<[1], [0], [0], [1], [0, 0, 1, 1], [], []>} : vector<256x64xbf16>, vector<64x256xbf16>, vector<256x256xf32> -> vector<256x256xf32>
    %73 = arith.addf %69, %72 : vector<256x256xf32>
    %c0_31 = arith.constant 0 : index
    %c0_32 = arith.constant 0 : index
    %74 = vector.load %arg7[%c0_31, %c0_32] : memref<256x256xf32, #tpu.memory_space<vmem>>, vector<256x256xf32>
    tpu.vector_store %arg7[%c0_31, %c0_32], %73 {strides = array<i32>} : memref<256x256xf32, #tpu.memory_space<vmem>>, vector<256x256xf32>,
    %75 = vector.extract_strided_slice %10 {offsets = [0, 128], sizes = [256, 64], strides = [1, 1]} : vector<256x256xf32> to vector<256x64xf32>
    %76 = arith.truncf %75 : vector<256x64xf32> to vector<256x64xbf16>
    %77 = vector.extract_strided_slice %11 {offsets = [0, 128], sizes = [256, 64], strides = [1, 1]} : vector<256x256xf32> to vector<256x64xf32>
    %78 = arith.truncf %77 : vector<256x64xf32> to vector<256x64xbf16>
    %79 = vector.extract_strided_slice %12 {offsets = [0, 128], sizes = [256, 64], strides = [1, 1]} : vector<256x256xf32> to vector<256x64xf32>
    %80 = arith.truncf %79 : vector<256x64xf32> to vector<256x64xbf16>
    %81 = tpu.transpose %78, [1, 0] : vector<256x64xbf16> -> vector<64x256xbf16>
    %cst_33 = arith.constant dense<0.000000e+00> : vector<256x256xf32>
    %82 = tpu.matmul %76, %81, %cst_33 {dimension_numbers = #tpu.dot_dimension_numbers<[1], [0], [0], [1], [0, 0, 1, 1], [], []>} : vector<256x64xbf16>, vector<64x256xbf16>, vector<256x256xf32> -> vector<256x256xf32>
    %83 = arith.addf %82, %18 : vector<256x256xf32>
    %cst_34 = arith.constant dense<0xFF800000> : vector<256xf32>
    %84 = vector.multi_reduction <maximumf>, %83, %cst_34 [1] : vector<256x256xf32> to vector<256xf32>
    %85 = vector.shape_cast %84 : vector<256xf32> to vector<256x1xf32>
    %86 = vector.broadcast %85 : vector<256x1xf32> to vector<256x256xf32>
    %87 = arith.subf %83, %86 : vector<256x256xf32>
    %88 = math.exp %87 : vector<256x256xf32>
    %cst_35 = arith.constant dense<0.000000e+00> : vector<256xf32>
    %89 = vector.multi_reduction <add>, %88, %cst_35 [1] : vector<256x256xf32> to vector<256xf32>
    %90 = vector.shape_cast %89 : vector<256xf32> to vector<256x1xf32>
    %91 = tpu.reciprocal %90 {approx = true} : vector<256x1xf32> -> vector<256x1xf32>
    %92 = vector.broadcast %91 : vector<256x1xf32> to vector<256x256xf32>
    %93 = arith.mulf %88, %92 : vector<256x256xf32>
    %94 = arith.truncf %93 : vector<256x256xf32> to vector<256x256xbf16>
    %cst_36 = arith.constant dense<0.000000e+00> : vector<256x64xf32>
    %95 = tpu.matmul %94, %80, %cst_36 {dimension_numbers = #tpu.dot_dimension_numbers<[1], [0], [0], [1], [0, 0, 1, 1], [], []>} : vector<256x256xbf16>, vector<256x64xbf16>, vector<256x64xf32> -> vector<256x64xf32>
    %c0_37 = arith.constant 0 : index
    %c0_38 = arith.constant 0 : index
    %96 = vector.load %arg7[%c0_37, %c0_38] : memref<256x256xf32, #tpu.memory_space<vmem>>, vector<256x256xf32>
    %97 = arith.truncf %95 : vector<256x64xf32> to vector<256x64xbf16>
    %c128 = arith.constant 128 : index
    %c0_39 = arith.constant 0 : index
    %98 = vector.load %arg4[%c128, %c0_39] : memref<256x256xbf16, #tpu.memory_space<vmem>>, vector<64x256xbf16>
    %cst_40 = arith.constant dense<0.000000e+00> : vector<256x256xf32>
    %99 = tpu.matmul %97, %98, %cst_40 {dimension_numbers = #tpu.dot_dimension_numbers<[1], [0], [0], [1], [0, 0, 1, 1], [], []>} : vector<256x64xbf16>, vector<64x256xbf16>, vector<256x256xf32> -> vector<256x256xf32>
    %100 = arith.addf %96, %99 : vector<256x256xf32>
    %c0_41 = arith.constant 0 : index
    %c0_42 = arith.constant 0 : index
    %101 = vector.load %arg7[%c0_41, %c0_42] : memref<256x256xf32, #tpu.memory_space<vmem>>, vector<256x256xf32>
    tpu.vector_store %arg7[%c0_41, %c0_42], %100 {strides = array<i32>} : memref<256x256xf32, #tpu.memory_space<vmem>>, vector<256x256xf32>,
    %102 = vector.extract_strided_slice %10 {offsets = [0, 192], sizes = [256, 64], strides = [1, 1]} : vector<256x256xf32> to vector<256x64xf32>
    %103 = arith.truncf %102 : vector<256x64xf32> to vector<256x64xbf16>
    %104 = vector.extract_strided_slice %11 {offsets = [0, 192], sizes = [256, 64], strides = [1, 1]} : vector<256x256xf32> to vector<256x64xf32>
    %105 = arith.truncf %104 : vector<256x64xf32> to vector<256x64xbf16>
    %106 = vector.extract_strided_slice %12 {offsets = [0, 192], sizes = [256, 64], strides = [1, 1]} : vector<256x256xf32> to vector<256x64xf32>
    %107 = arith.truncf %106 : vector<256x64xf32> to vector<256x64xbf16>
    %108 = tpu.transpose %105, [1, 0] : vector<256x64xbf16> -> vector<64x256xbf16>
    %cst_43 = arith.constant dense<0.000000e+00> : vector<256x256xf32>
    %109 = tpu.matmul %103, %108, %cst_43 {dimension_numbers = #tpu.dot_dimension_numbers<[1], [0], [0], [1], [0, 0, 1, 1], [], []>} : vector<256x64xbf16>, vector<64x256xbf16>, vector<256x256xf32> -> vector<256x256xf32>
    %110 = arith.addf %109, %18 : vector<256x256xf32>
    %cst_44 = arith.constant dense<0xFF800000> : vector<256xf32>
    %111 = vector.multi_reduction <maximumf>, %110, %cst_44 [1] : vector<256x256xf32> to vector<256xf32>
    %112 = vector.shape_cast %111 : vector<256xf32> to vector<256x1xf32>
    %113 = vector.broadcast %112 : vector<256x1xf32> to vector<256x256xf32>
    %114 = arith.subf %110, %113 : vector<256x256xf32>
    %115 = math.exp %114 : vector<256x256xf32>
    %cst_45 = arith.constant dense<0.000000e+00> : vector<256xf32>
    %116 = vector.multi_reduction <add>, %115, %cst_45 [1] : vector<256x256xf32> to vector<256xf32>
    %117 = vector.shape_cast %116 : vector<256xf32> to vector<256x1xf32>
    %118 = tpu.reciprocal %117 {approx = true} : vector<256x1xf32> -> vector<256x1xf32>
    %119 = vector.broadcast %118 : vector<256x1xf32> to vector<256x256xf32>
    %120 = arith.mulf %115, %119 : vector<256x256xf32>
    %121 = arith.truncf %120 : vector<256x256xf32> to vector<256x256xbf16>
    %cst_46 = arith.constant dense<0.000000e+00> : vector<256x64xf32>
    %122 = tpu.matmul %121, %107, %cst_46 {dimension_numbers = #tpu.dot_dimension_numbers<[1], [0], [0], [1], [0, 0, 1, 1], [], []>} : vector<256x256xbf16>, vector<256x64xbf16>, vector<256x64xf32> -> vector<256x64xf32>
    %c0_47 = arith.constant 0 : index
    %c0_48 = arith.constant 0 : index
    %123 = vector.load %arg7[%c0_47, %c0_48] : memref<256x256xf32, #tpu.memory_space<vmem>>, vector<256x256xf32>
    %124 = arith.truncf %122 : vector<256x64xf32> to vector<256x64xbf16>
    %c192 = arith.constant 192 : index
    %c0_49 = arith.constant 0 : index
    %125 = vector.load %arg4[%c192, %c0_49] : memref<256x256xbf16, #tpu.memory_space<vmem>>, vector<64x256xbf16>
    %cst_50 = arith.constant dense<0.000000e+00> : vector<256x256xf32>
    %126 = tpu.matmul %124, %125, %cst_50 {dimension_numbers = #tpu.dot_dimension_numbers<[1], [0], [0], [1], [0, 0, 1, 1], [], []>} : vector<256x64xbf16>, vector<64x256xbf16>, vector<256x256xf32> -> vector<256x256xf32>
    %127 = arith.addf %123, %126 : vector<256x256xf32>
    %c0_51 = arith.constant 0 : index
    %c0_52 = arith.constant 0 : index
    %128 = vector.load %arg7[%c0_51, %c0_52] : memref<256x256xf32, #tpu.memory_space<vmem>>, vector<256x256xf32>
    tpu.vector_store %arg7[%c0_51, %c0_52], %127 {strides = array<i32>} : memref<256x256xf32, #tpu.memory_space<vmem>>, vector<256x256xf32>,
    %c0_53 = arith.constant 0 : index
    %c0_54 = arith.constant 0 : index
    %129 = vector.load %arg7[%c0_53, %c0_54] : memref<256x256xf32, #tpu.memory_space<vmem>>, vector<256x256xf32>
    %c0_55 = arith.constant 0 : index
    %c0_56 = arith.constant 0 : index
    %130 = vector.load %arg5[%c0_55, %c0_56] : memref<1x256xf32, #tpu.memory_space<vmem>>, vector<1x256xf32>
    %131 = vector.broadcast %130 : vector<1x256xf32> to vector<256x256xf32>
    %132 = arith.addf %129, %131 : vector<256x256xf32>
    %c0_57 = arith.constant 0 : index
    %c0_58 = arith.constant 0 : index
    %c0_59 = arith.constant 0 : index
    %133 = vector.load %arg6[%c0_57, %c0_58, %c0_59] : memref<1x256x256xf32, #tpu.memory_space<vmem>>, vector<1x256x256xf32>
    %134 = vector.shape_cast %133 : vector<1x256x256xf32> to vector<256x256xf32>
    %135 = vector.shape_cast %132 : vector<256x256xf32> to vector<1x256x256xf32>
    tpu.vector_store %arg6[%c0_57, %c0_58, %c0_59], %135 {strides = array<i32>} : memref<1x256x256xf32, #tpu.memory_space<vmem>>, vector<1x256x256xf32>,
    return
  }
  func.func @transform_0(%arg0: i32) -> (i32, i32, i32) {
    %c0_i32 = arith.constant 0 : i32
    %c0_i32_0 = arith.constant 0 : i32
    %c0_i32_1 = arith.constant 0 : i32
    return %arg0, %c0_i32, %c0_i32_0 : i32, i32, i32
  }
  func.func @transform_1(%arg0: i32) -> (i32, i32) {
    %c0_i32 = arith.constant 0 : i32
    %c0_i32_0 = arith.constant 0 : i32
    %c0_i32_1 = arith.constant 0 : i32
    return %c0_i32, %c0_i32_0 : i32, i32
  }
  func.func @transform_2(%arg0: i32) -> (i32, i32) {
    %c0_i32 = arith.constant 0 : i32
    %c0_i32_0 = arith.constant 0 : i32
    %c0_i32_1 = arith.constant 0 : i32
    return %c0_i32, %c0_i32_0 : i32, i32
  }
  func.func @transform_3(%arg0: i32) -> (i32, i32) {
    %c0_i32 = arith.constant 0 : i32
    %c0_i32_0 = arith.constant 0 : i32
    %c0_i32_1 = arith.constant 0 : i32
    return %c0_i32, %c0_i32_0 : i32, i32
  }
  func.func @transform_4(%arg0: i32) -> (i32, i32) {
    %c0_i32 = arith.constant 0 : i32
    %c0_i32_0 = arith.constant 0 : i32
    %c0_i32_1 = arith.constant 0 : i32
    return %c0_i32, %c0_i32_0 : i32, i32
  }
  func.func @transform_5(%arg0: i32) -> (i32, i32, i32) {
    %c0_i32 = arith.constant 0 : i32
    %c0_i32_0 = arith.constant 0 : i32
    %c0_i32_1 = arith.constant 0 : i32
    return %arg0, %c0_i32, %c0_i32_0 : i32, i32, i32
  }
}

</mosaic_0001>

<llo_original>
// kernel: tpu_custom_call.1
$region0: #{tpu_custom_call.1}
  #allocation0 [shape = 'u32[]', space=smem, size = 0x4, offset = 0x4, fixed_abs, tag = 'smem constant byte address 0x4 - core index']
  #allocation1 [shape = 'u32[144,128]{1,0:T(1,128)}', space=vmem, size = 0x12000, scoped, tag = 'internal scratch']
  #allocation2 [shape = 'f32[256,256]{1,0:T(8,128)}', space=vmem, size = 0x40000, scoped, tag = 'scratch operand']
  %s0 = inlined_call_operand.hbm [shape: f32[2,256,256], index: 0, kind: input, shape index: {}]
  %s1 = inlined_call_operand.hbm [shape: bf16[256,768], index: 1, kind: input, shape index: {}]
  %s2 = inlined_call_operand.vmem [shape: f32[1,768], index: 2, kind: input, shape index: {}]
  %s3 = inlined_call_operand.hbm [shape: bf16[256,256], index: 3, kind: input, shape index: {}]
  %s4 = inlined_call_operand.vmem [shape: f32[1,256], index: 4, kind: input, shape index: {}]
  %s5 = inlined_call_operand.hbm [shape: f32[2,256,256], index: 5, kind: output, shape index: {}]
  %s6 = sld [smem:[#allocation0]]
  $region65: #{tpu_custom_call.1} parent=0
    _
  %s8 = ssub.s32 1, %s6
  %s9 = scalar_select 0, %s8, %s6
  $region1: #{tpu_custom_call.1} parent=0
    #allocation3 [shape = 'u8[524288]{0}', space=vmem, size = 0x80000, scoped, tag = 'input window, operand 0']
    #allocation4 [shape = 's32[2]{0}', space=sflag, size = 0x8, scoped, tag = 'scoped memory for tpu_custom_call.1']
    #allocation5 [shape = 's32[2]{0}', space=sflag, size = 0x8, scoped, tag = 'scoped memory for tpu_custom_call.1']
    #allocation6 [shape = 'u8[393216]{0}', space=vmem, size = 0x60000, scoped, tag = 'input window, operand 1, single buffered']
    #allocation7 [shape = 's32[1]{0}', space=sflag, size = 0x4, scoped, tag = 'scoped memory for tpu_custom_call.1']
    #allocation8 [shape = 'u8[131072]{0}', space=vmem, size = 0x20000, scoped, tag = 'input window, operand 3, single buffered']
    #allocation9 [shape = 'u8[524288]{0}', space=vmem, size = 0x80000, scoped, tag = 'output window, operand 0']
    %10 = vsyncpa [#allocation4], 0
    %s11 = scalar_lea.sflag [#allocation4], 1
    %12 = vsyncpa %s11, 0
    %13 = vsyncpa [#allocation7], 0
    %14 = vsyncpa [#allocation5], 0
    %s15 = scalar_lea.sflag [#allocation5], 1
    %16 = vsyncpa %s15, 0
    loop: start=0, step=1, limit=4
    $region2: #{tpu_custom_call.1} parent=1 // loop_pre_header
      _
    $region3: #{tpu_custom_call.1} parent=1 // loop_header
      %s18 = sphi 0, %s22
      %p19 = scmp.ge.s32.totalorder %s18, 4
      %s28 = sphi 0, %s30
      %s31 = sphi 0, %s28
      %s32 = sphi 0, %s31
      %s48 = sphi 0, %s32
      %s52 = sphi 0, %s52
      %s54 = sphi 0, %s52
      %s55 = sphi 0, %s54
      %s69 = sphi 0, %s55
      %s73 = sphi 0, %s73
      %s75 = sphi 0, %s73
      %s76 = sphi 0, %s75
      %s90 = sphi 0, %s76
      %s94 = sphi 0, %s94
      %s96 = sphi 0, %s94
      %s97 = sphi 0, %s96
      %s111 = sphi 0, %s97
      %s115 = sphi 0, %s115
      %s117 = sphi 0, %s115
      %s118 = sphi 0, %s117
      %s132 = sphi 0, %s118
      %s138 = sphi 0, %s140
      %s141 = sphi 0, %s138
      %s142 = sphi 0, %s141
      %s158 = sphi 0, %s142
    $region4: #{tpu_custom_call.1} parent=1 // loop_header_branch
      %21 = sbr.rel (%p19) target = $region8
    $region5: #{tpu_custom_call.1} parent=1 // loop_body
      %s23 = ssub.s32 %s18, 1
      %s24 = ssub.s32 %s18, 2
      %s25 = sadd.s32 %s18, 1
      %s26 = ssub.s32 %s18, %s25
      %p27 = scmp.eq.s32.totalorder %s26, 0
      %s29 = sadd.s32 %s28, 1
      %s30 = scalar_select %p27, %s28, %s29
      %p33 = pneg %p27
      %p34 = scmp.eq.s32.totalorder %s18, 1
      %p35 = por %p33, %p34
      %p36 = scmp.ne.s32.totalorder %s28, %s31
      %p37 = scmp.eq.s32.totalorder %s18, 0
      %p38 = por %p36, %p37
      %p39 = scmp.ne.s32.totalorder %s28, %s31
      %p40 = scmp.eq.s32.totalorder %s23, 1
      %p41 = por %p39, %p40
      %p42 = scmp.ne.s32.totalorder %s31, %s32
      %p43 = scmp.eq.s32.totalorder %s23, 0
      %p44 = por %p42, %p43
      %p45 = scmp.ne.s32.totalorder %s31, %s32
      %p46 = scmp.eq.s32.totalorder %s24, 1
      %p47 = por %p45, %p46
      %p49 = scmp.ne.s32.totalorder %s32, %s48
      %p50 = scmp.eq.s32.totalorder %s24, 0
      %p51 = por %p49, %p50
      %s53 = sadd.s32 %s52, 1
      %p56 = scmp.eq.s32.totalorder %s18, 1
      %p57 = scmp.ne.s32.totalorder %s52, %s54
      %p58 = scmp.eq.s32.totalorder %s18, 0
      %p59 = por %p57, %p58
      %p60 = scmp.ne.s32.totalorder %s52, %s54
      %p61 = scmp.eq.s32.totalorder %s23, 1
      %p62 = por %p60, %p61
      %p63 = scmp.ne.s32.totalorder %s54, %s55
      %p64 = scmp.eq.s32.totalorder %s23, 0
      %p65 = por %p63, %p64
      %p66 = scmp.ne.s32.totalorder %s54, %s55
      %p67 = scmp.eq.s32.totalorder %s24, 1
      %p68 = por %p66, %p67
      %p70 = scmp.ne.s32.totalorder %s55, %s69
      %p71 = scmp.eq.s32.totalorder %s24, 0
      %p72 = por %p70, %p71
      %s74 = sadd.s32 %s73, 1
      %p77 = scmp.eq.s32.totalorder %s18, 1
      %p78 = scmp.ne.s32.totalorder %s73, %s75
      %p79 = scmp.eq.s32.totalorder %s18, 0
      %p80 = por %p78, %p79
      %p81 = scmp.ne.s32.totalorder %s73, %s75
      %p82 = scmp.eq.s32.totalorder %s23, 1
      %p83 = por %p81, %p82
      %p84 = scmp.ne.s32.totalorder %s75, %s76
      %p85 = scmp.eq.s32.totalorder %s23, 0
      %p86 = por %p84, %p85
      %p87 = scmp.ne.s32.totalorder %s75, %s76
      %p88 = scmp.eq.s32.totalorder %s24, 1
      %p89 = por %p87, %p88
      %p91 = scmp.ne.s32.totalorder %s76, %s90
      %p92 = scmp.eq.s32.totalorder %s24, 0
      %p93 = por %p91, %p92
      %s95 = sadd.s32 %s94, 1
      %p98 = scmp.eq.s32.totalorder %s18, 1
      %p99 = scmp.ne.s32.totalorder %s94, %s96
      %p100 = scmp.eq.s32.totalorder %s18, 0
      %p101 = por %p99, %p100
      %p102 = scmp.ne.s32.totalorder %s94, %s96
      %p103 = scmp.eq.s32.totalorder %s23, 1
      %p104 = por %p102, %p103
      %p105 = scmp.ne.s32.totalorder %s96, %s97
      %p106 = scmp.eq.s32.totalorder %s23, 0
      %p107 = por %p105, %p106
      %p108 = scmp.ne.s32.totalorder %s96, %s97
      %p109 = scmp.eq.s32.totalorder %s24, 1
      %p110 = por %p108, %p109
      %p112 = scmp.ne.s32.totalorder %s97, %s111
      %p113 = scmp.eq.s32.totalorder %s24, 0
      %p114 = por %p112, %p113
      %s116 = sadd.s32 %s115, 1
      %p119 = scmp.eq.s32.totalorder %s18, 1
      %p120 = scmp.ne.s32.totalorder %s115, %s117
      %p121 = scmp.eq.s32.totalorder %s18, 0
      %p122 = por %p120, %p121
      %p123 = scmp.ne.s32.totalorder %s115, %s117
      %p124 = scmp.eq.s32.totalorder %s23, 1
      %p125 = por %p123, %p124
      %p126 = scmp.ne.s32.totalorder %s117, %s118
      %p127 = scmp.eq.s32.totalorder %s23, 0
      %p128 = por %p126, %p127
      %p129 = scmp.ne.s32.totalorder %s117, %s118
      %p130 = scmp.eq.s32.totalorder %s24, 1
      %p131 = por %p129, %p130
      %p133 = scmp.ne.s32.totalorder %s118, %s132
      %p134 = scmp.eq.s32.totalorder %s24, 0
      %p135 = por %p133, %p134
      %s136 = ssub.s32 %s18, %s25
      %p137 = scmp.eq.s32.totalorder %s136, 0
      %s139 = sadd.s32 %s138, 1
      %s140 = scalar_select %p137, %s138, %s139
      %p143 = pneg %p137
      %p144 = scmp.eq.s32.totalorder %s18, 1
      %p145 = por %p143, %p144
      %p146 = scmp.ne.s32.totalorder %s138, %s141
      %p147 = scmp.eq.s32.totalorder %s18, 0
      %p148 = por %p146, %p147
      %p149 = scmp.ne.s32.totalorder %s138, %s141
      %p150 = scmp.eq.s32.totalorder %s23, 1
      %p151 = por %p149, %p150
      %p152 = scmp.ne.s32.totalorder %s141, %s142
      %p153 = scmp.eq.s32.totalorder %s23, 0
      %p154 = por %p152, %p153
      %p155 = scmp.ne.s32.totalorder %s141, %s142
      %p156 = scmp.eq.s32.totalorder %s24, 1
      %p157 = por %p155, %p156
      %p159 = scmp.ne.s32.totalorder %s142, %s158
      %p160 = scmp.eq.s32.totalorder %s24, 0
      %p161 = por %p159, %p160
      %p162 = scmp.le.s32.totalorder 1, %s18
      %p163 = scmp.lt.s32.totalorder %s18, 3
      %p164 = pnand %p162, %p163
      %p165 = pneg %p164
      // Predicated region
      $region9: #{tpu_custom_call.1} parent=5 // pred_check
        _
      $region10: #{tpu_custom_call.1} parent=5 // pred_check_branch
        %167 = sbr.rel (%p164) target = $region12
      $region11: #{tpu_custom_call.1} parent=5 // pred_region
        %s168 = ssub.s32 %s18, 1
        // Predicated region
        $region13: #{tpu_custom_call.1} parent=11 // pred_check
          %p169 = pneg %p65
        $region14: #{tpu_custom_call.1} parent=11 // pred_check_branch
          %171 = sbr.rel (%p169) target = $region16
        $region15: #{tpu_custom_call.1} parent=11 // pred_region
          %s173 = ssub.s32 12288, 12288
          %174 = vsyncadd [#allocation7], %s173
          %s175 = sshll.u32 [#allocation6], 4
          %s176 = int_to_ptr.vmem [resolvable:$true] %s175
          %181 = dma.hbm_to_vmem [thread:$0]  %s1, 12288, %s176, [#allocation7], 384, 384, 24
        $region16: #{tpu_custom_call.1} parent=11 // pred_fallthru
          _
        // Predicated region
        $region17: #{tpu_custom_call.1} parent=11 // pred_check
          %p182 = pneg %p86
        $region18: #{tpu_custom_call.1} parent=11 // pred_check_branch
          %184 = sbr.rel (%p182) target = $region20
        $region19: #{tpu_custom_call.1} parent=11 // pred_region
          _
        $region20: #{tpu_custom_call.1} parent=11 // pred_fallthru
          _
        // Predicated region
        $region21: #{tpu_custom_call.1} parent=11 // pred_check
          %p185 = pneg %p107
        $region22: #{tpu_custom_call.1} parent=11 // pred_check_branch
          %187 = sbr.rel (%p185) target = $region24
        $region23: #{tpu_custom_call.1} parent=11 // pred_region
          %s189 = ssub.s32 4096, 4096
          %190 = vsyncadd [#allocation7], %s189
          %s191 = sshll.u32 [#allocation8], 4
          %s192 = int_to_ptr.vmem [resolvable:$true] %s191
          %197 = dma.hbm_to_vmem [thread:$0]  %s3, 4096, %s192, [#allocation7], 128, 128, 8
        $region24: #{tpu_custom_call.1} parent=11 // pred_fallthru
          _
        // Predicated region
        $region25: #{tpu_custom_call.1} parent=11 // pred_check
          %p198 = pneg %p128
        $region26: #{tpu_custom_call.1} parent=11 // pred_check_branch
          %200 = sbr.rel (%p198) target = $region28
        $region27: #{tpu_custom_call.1} parent=11 // pred_region
          _
        $region28: #{tpu_custom_call.1} parent=11 // pred_fallthru
          _
      $region12: #{tpu_custom_call.1} parent=5 // pred_fallthru
        _
      %p201 = scmp.lt.s32.totalorder %s18, 2
      // Predicated region
      $region29: #{tpu_custom_call.1} parent=5 // pred_check
        %p202 = pneg %p201
      $region30: #{tpu_custom_call.1} parent=5 // pred_check_branch
        %204 = sbr.rel (%p202) target = $region32
      $region31: #{tpu_custom_call.1} parent=5 // pred_region
        // Predicated region
        $region33: #{tpu_custom_call.1} parent=31 // pred_check
          %p205 = pneg %p38
        $region34: #{tpu_custom_call.1} parent=31 // pred_check_branch
          %207 = sbr.rel (%p205) target = $region36
        $region35: #{tpu_custom_call.1} parent=31 // pred_region
          %s208 = sand.u32 %s28, 1
          %s209 = scalar_lea.sflag [#allocation4], %s208
          %s210 = sand.u32 %s28, 1
          %s211 = smul.addr %s210, 512
          %s212 = scalar_lea.vmem [#allocation3], %s211
          %s214 = ssub.s32 8192, 8192
          %215 = vsyncadd %s209, %s214
          %s216 = smul.addr %s18, 64
          %s217 = smul.addr %s216, 128
          %s218 = scalar_lea.hbm %s0, %s217
          %s219 = sshll.u32 %s212, 4
          %s220 = int_to_ptr.vmem [resolvable:$true] %s219
          %225 = dma.hbm_to_vmem [thread:$0]  %s218, 8192, %s220, %s209, 256, 256, 16
        $region36: #{tpu_custom_call.1} parent=31 // pred_fallthru
          _
      $region32: #{tpu_custom_call.1} parent=5 // pred_fallthru
        _
      %p226 = scmp.le.s32.totalorder 1, %s18
      %p227 = scmp.lt.s32.totalorder %s18, 3
      %p228 = pnand %p226, %p227
      %p229 = pneg %p228
      // Predicated region
      $region37: #{tpu_custom_call.1} parent=5 // pred_check
        _
      $region38: #{tpu_custom_call.1} parent=5 // pred_check_branch
        %231 = sbr.rel (%p228) target = $region40
      $region39: #{tpu_custom_call.1} parent=5 // pred_region
        %s232 = ssub.s32 %s18, 1
        %s233 = sand.u32 %s31, 1
        %s234 = scalar_lea.sflag [#allocation4], %s233
        %s235 = sand.u32 %s31, 1
        %s236 = smul.addr %s235, 512
        %s237 = scalar_lea.vmem [#allocation3], %s236
        // Predicated region
        $region41: #{tpu_custom_call.1} parent=39 // pred_check
          %p238 = pneg %p44
        $region42: #{tpu_custom_call.1} parent=39 // pred_check_branch
          %240 = sbr.rel (%p238) target = $region44
        $region43: #{tpu_custom_call.1} parent=39 // pred_region
          %241 = dma.done %s234, 8192
        $region44: #{tpu_custom_call.1} parent=39 // pred_fallthru
          _
        // Predicated region
        $region45: #{tpu_custom_call.1} parent=39 // pred_check
          %p242 = pneg %p65
        $region46: #{tpu_custom_call.1} parent=39 // pred_check_branch
          %244 = sbr.rel (%p242) target = $region48
        $region47: #{tpu_custom_call.1} parent=39 // pred_region
          %245 = dma.done [#allocation7], 12288
        $region48: #{tpu_custom_call.1} parent=39 // pred_fallthru
          _
        // Predicated region
        $region49: #{tpu_custom_call.1} parent=39 // pred_check
          %p246 = pneg %p107
        $region50: #{tpu_custom_call.1} parent=39 // pred_check_branch
          %248 = sbr.rel (%p246) target = $region52
        $region51: #{tpu_custom_call.1} parent=39 // pred_region
          %249 = dma.done [#allocation7], 4096
        $region52: #{tpu_custom_call.1} parent=39 // pred_fallthru
          _
        %s250 = sand.u32 %s31, 1
        %s251 = scalar_lea.sflag [#allocation4], %s250
        %s252 = sand.u32 %s31, 1
        %s253 = smul.addr %s252, 512
        %s254 = scalar_lea.vmem [#allocation3], %s253
        %p255 = pneg %p44
        %p256 = pneg %p41
        %p257 = pneg %p65
        %p258 = pneg %p62
        %p259 = pneg %p86
        %p260 = pneg %p83
        %p261 = pneg %p107
        %p262 = pneg %p104
        %p263 = pneg %p128
        %p264 = pneg %p125
        %p265 = pneg %p154
        %p266 = pneg %p151
        %s267 = sand.u32 %s141, 1
        %s268 = scalar_lea.sflag [#allocation5], %s267
        %s269 = sand.u32 %s141, 1
        %s270 = smul.addr %s269, 512
        %s271 = scalar_lea.vmem [#allocation9], %s270
        %v273 = vld [vmem:[%s237] sm:$0xff]
        %v274 = vld [vmem:[%s237 + $0x8] sm:$0xff]
        %v275 = vld [vmem:[%s237 + $0x10] sm:$0xff]
        %v276 = vld [vmem:[%s237 + $0x18] sm:$0xff]
        %v277 = vld [vmem:[%s237 + $0x20] sm:$0xff]
        %v278 = vld [vmem:[%s237 + $0x28] sm:$0xff]
        %v279 = vld [vmem:[%s237 + $0x30] sm:$0xff]
        %v280 = vld [vmem:[%s237 + $0x38] sm:$0xff]
        %v281 = vld [vmem:[%s237 + $0x40] sm:$0xff]
        %v282 = vld [vmem:[%s237 + $0x48] sm:$0xff]
        %v283 = vld [vmem:[%s237 + $0x50] sm:$0xff]
        %v284 = vld [vmem:[%s237 + $0x58] sm:$0xff]
        %v285 = vld [vmem:[%s237 + $0x60] sm:$0xff]
        %v286 = vld [vmem:[%s237 + $0x68] sm:$0xff]
        %v287 = vld [vmem:[%s237 + $0x70] sm:$0xff]
        %v288 = vld [vmem:[%s237 + $0x78] sm:$0xff]
        %v289 = vld [vmem:[%s237 + $0x80] sm:$0xff]
        %v290 = vld [vmem:[%s237 + $0x88] sm:$0xff]
        %v291 = vld [vmem:[%s237 + $0x90] sm:$0xff]
        %v292 = vld [vmem:[%s237 + $0x98] sm:$0xff]
        %v293 = vld [vmem:[%s237 + $0xa0] sm:$0xff]
        %v294 = vld [vmem:[%s237 + $0xa8] sm:$0xff]
        %v295 = vld [vmem:[%s237 + $0xb0] sm:$0xff]
        %v296 = vld [vmem:[%s237 + $0xb8] sm:$0xff]
        %v297 = vld [vmem:[%s237 + $0xc0] sm:$0xff]
        %v298 = vld [vmem:[%s237 + $0xc8] sm:$0xff]
        %v299 = vld [vmem:[%s237 + $0xd0] sm:$0xff]
        %v300 = vld [vmem:[%s237 + $0xd8] sm:$0xff]
        %v301 = vld [vmem:[%s237 + $0xe0] sm:$0xff]
        %v302 = vld [vmem:[%s237 + $0xe8] sm:$0xff]
        %v303 = vld [vmem:[%s237 + $0xf0] sm:$0xff]
        %v304 = vld [vmem:[%s237 + $0xf8] sm:$0xff]
        %v305 = vld [vmem:[%s237 + $0x100] sm:$0xff]
        %v306 = vld [vmem:[%s237 + $0x108] sm:$0xff]
        %v307 = vld [vmem:[%s237 + $0x110] sm:$0xff]
        %v308 = vld [vmem:[%s237 + $0x118] sm:$0xff]
        %v309 = vld [vmem:[%s237 + $0x120] sm:$0xff]
        %v310 = vld [vmem:[%s237 + $0x128] sm:$0xff]
        %v311 = vld [vmem:[%s237 + $0x130] sm:$0xff]
        %v312 = vld [vmem:[%s237 + $0x138] sm:$0xff]
        %v313 = vld [vmem:[%s237 + $0x140] sm:$0xff]
        %v314 = vld [vmem:[%s237 + $0x148] sm:$0xff]
        %v315 = vld [vmem:[%s237 + $0x150] sm:$0xff]
        %v316 = vld [vmem:[%s237 + $0x158] sm:$0xff]
        %v317 = vld [vmem:[%s237 + $0x160] sm:$0xff]
        %v318 = vld [vmem:[%s237 + $0x168] sm:$0xff]
        %v319 = vld [vmem:[%s237 + $0x170] sm:$0xff]
        %v320 = vld [vmem:[%s237 + $0x178] sm:$0xff]
        %v321 = vld [vmem:[%s237 + $0x180] sm:$0xff]
        %v322 = vld [vmem:[%s237 + $0x188] sm:$0xff]
        %v323 = vld [vmem:[%s237 + $0x190] sm:$0xff]
        %v324 = vld [vmem:[%s237 + $0x198] sm:$0xff]
        %v325 = vld [vmem:[%s237 + $0x1a0] sm:$0xff]
        %v326 = vld [vmem:[%s237 + $0x1a8] sm:$0xff]
        %v327 = vld [vmem:[%s237 + $0x1b0] sm:$0xff]
        %v328 = vld [vmem:[%s237 + $0x1b8] sm:$0xff]
        %v329 = vld [vmem:[%s237 + $0x1c0] sm:$0xff]
        %v330 = vld [vmem:[%s237 + $0x1c8] sm:$0xff]
        %v331 = vld [vmem:[%s237 + $0x1d0] sm:$0xff]
        %v332 = vld [vmem:[%s237 + $0x1d8] sm:$0xff]
        %v333 = vld [vmem:[%s237 + $0x1e0] sm:$0xff]
        %v334 = vld [vmem:[%s237 + $0x1e8] sm:$0xff]
        %v335 = vld [vmem:[%s237 + $0x1f0] sm:$0xff]
        %v336 = vld [vmem:[%s237 + $0x1f8] sm:$0xff]
        %v337 = vpack.c.bf16 %v275, %v273
        %v338 = vpack.c.bf16 %v276, %v274
        %v339 = vpack.c.bf16 %v279, %v277
        %v340 = vpack.c.bf16 %v280, %v278
        %v341 = vpack.c.bf16 %v283, %v281
        %v342 = vpack.c.bf16 %v284, %v282
        %v343 = vpack.c.bf16 %v287, %v285
        %v344 = vpack.c.bf16 %v288, %v286
        %v345 = vpack.c.bf16 %v291, %v289
        %v346 = vpack.c.bf16 %v292, %v290
        %v347 = vpack.c.bf16 %v295, %v293
        %v348 = vpack.c.bf16 %v296, %v294
        %v349 = vpack.c.bf16 %v299, %v297
        %v350 = vpack.c.bf16 %v300, %v298
        %v351 = vpack.c.bf16 %v303, %v301
        %v352 = vpack.c.bf16 %v304, %v302
        %v353 = vpack.c.bf16 %v307, %v305
        %v354 = vpack.c.bf16 %v308, %v306
        %v355 = vpack.c.bf16 %v311, %v309
        %v356 = vpack.c.bf16 %v312, %v310
        %v357 = vpack.c.bf16 %v315, %v313
        %v358 = vpack.c.bf16 %v316, %v314
        %v359 = vpack.c.bf16 %v319, %v317
        %v360 = vpack.c.bf16 %v320, %v318
        %v361 = vpack.c.bf16 %v323, %v321
        %v362 = vpack.c.bf16 %v324, %v322
        %v363 = vpack.c.bf16 %v327, %v325
        %v364 = vpack.c.bf16 %v328, %v326
        %v365 = vpack.c.bf16 %v331, %v329
        %v366 = vpack.c.bf16 %v332, %v330
        %v367 = vpack.c.bf16 %v335, %v333
        %v368 = vpack.c.bf16 %v336, %v334
        %v369 = vld [vmem:[#allocation6] sm:$0xff]
        %v370 = vld [vmem:[#allocation6 + $0x8] sm:$0xff]
        %v371 = vld [vmem:[#allocation6 + $0x10] sm:$0xff]
        %v372 = vld [vmem:[#allocation6 + $0x18] sm:$0xff]
        %v373 = vld [vmem:[#allocation6 + $0x20] sm:$0xff]
        %v374 = vld [vmem:[#allocation6 + $0x28] sm:$0xff]
        %v375 = vld [vmem:[#allocation6 + $0x30] sm:$0xff]
        %v376 = vld [vmem:[#allocation6 + $0x38] sm:$0xff]
        %v377 = vld [vmem:[#allocation6 + $0x40] sm:$0xff]
        %v378 = vld [vmem:[#allocation6 + $0x48] sm:$0xff]
        %v379 = vld [vmem:[#allocation6 + $0x50] sm:$0xff]
        %v380 = vld [vmem:[#allocation6 + $0x58] sm:$0xff]
        %v381 = vld [vmem:[#allocation6 + $0x60] sm:$0xff]
        %v382 = vld [vmem:[#allocation6 + $0x68] sm:$0xff]
        %v383 = vld [vmem:[#allocation6 + $0x70] sm:$0xff]
        %v384 = vld [vmem:[#allocation6 + $0x78] sm:$0xff]
        %v385 = vld [vmem:[#allocation6 + $0x80] sm:$0xff]
        %v386 = vld [vmem:[#allocation6 + $0x88] sm:$0xff]
        %v387 = vld [vmem:[#allocation6 + $0x90] sm:$0xff]
        %v388 = vld [vmem:[#allocation6 + $0x98] sm:$0xff]
        %v389 = vld [vmem:[#allocation6 + $0xa0] sm:$0xff]
        %v390 = vld [vmem:[#allocation6 + $0xa8] sm:$0xff]
        %v391 = vld [vmem:[#allocation6 + $0xb0] sm:$0xff]
        %v392 = vld [vmem:[#allocation6 + $0xb8] sm:$0xff]
        %v393 = vld [vmem:[#allocation6 + $0xc0] sm:$0xff]
        %v394 = vld [vmem:[#allocation6 + $0xc8] sm:$0xff]
        %v395 = vld [vmem:[#allocation6 + $0xd0] sm:$0xff]
        %v396 = vld [vmem:[#allocation6 + $0xd8] sm:$0xff]
        %v397 = vld [vmem:[#allocation6 + $0xe0] sm:$0xff]
        %v398 = vld [vmem:[#allocation6 + $0xe8] sm:$0xff]
        %v399 = vld [vmem:[#allocation6 + $0xf0] sm:$0xff]
        %v400 = vld [vmem:[#allocation6 + $0xf8] sm:$0xff]
        %v401 = vld [vmem:[#allocation6 + $0x100] sm:$0xff]
        %v402 = vld [vmem:[#allocation6 + $0x108] sm:$0xff]
        %v403 = vld [vmem:[#allocation6 + $0x110] sm:$0xff]
        %v404 = vld [vmem:[#allocation6 + $0x118] sm:$0xff]
        %v405 = vld [vmem:[#allocation6 + $0x120] sm:$0xff]
        %v406 = vld [vmem:[#allocation6 + $0x128] sm:$0xff]
        %v407 = vld [vmem:[#allocation6 + $0x130] sm:$0xff]
        %v408 = vld [vmem:[#allocation6 + $0x138] sm:$0xff]
        %v409 = vld [vmem:[#allocation6 + $0x140] sm:$0xff]
        %v410 = vld [vmem:[#allocation6 + $0x148] sm:$0xff]
        %v411 = vld [vmem:[#allocation6 + $0x150] sm:$0xff]
        %v412 = vld [vmem:[#allocation6 + $0x158] sm:$0xff]
        %v413 = vld [vmem:[#allocation6 + $0x160] sm:$0xff]
        %v414 = vld [vmem:[#allocation6 + $0x168] sm:$0xff]
        %v415 = vld [vmem:[#allocation6 + $0x170] sm:$0xff]
        %v416 = vld [vmem:[#allocation6 + $0x178] sm:$0xff]
        %v417 = vld [vmem:[#allocation6 + $0x180] sm:$0xff]
        %v418 = vld [vmem:[#allocation6 + $0x188] sm:$0xff]
        %v419 = vld [vmem:[#allocation6 + $0x190] sm:$0xff]
        %v420 = vld [vmem:[#allocation6 + $0x198] sm:$0xff]
        %v421 = vld [vmem:[#allocation6 + $0x1a0] sm:$0xff]
        %v422 = vld [vmem:[#allocation6 + $0x1a8] sm:$0xff]
        %v423 = vld [vmem:[#allocation6 + $0x1b0] sm:$0xff]
        %v424 = vld [vmem:[#allocation6 + $0x1b8] sm:$0xff]
        %v425 = vld [vmem:[#allocation6 + $0x1c0] sm:$0xff]
        %v426 = vld [vmem:[#allocation6 + $0x1c8] sm:$0xff]
        %v427 = vld [vmem:[#allocation6 + $0x1d0] sm:$0xff]
        %v428 = vld [vmem:[#allocation6 + $0x1d8] sm:$0xff]
        %v429 = vld [vmem:[#allocation6 + $0x1e0] sm:$0xff]
        %v430 = vld [vmem:[#allocation6 + $0x1e8] sm:$0xff]
        %v431 = vld [vmem:[#allocation6 + $0x1f0] sm:$0xff]
        %v432 = vld [vmem:[#allocation6 + $0x1f8] sm:$0xff]
        %v433 = vld [vmem:[#allocation6 + $0x200] sm:$0xff]
        %v434 = vld [vmem:[#allocation6 + $0x208] sm:$0xff]
        %v435 = vld [vmem:[#allocation6 + $0x210] sm:$0xff]
        %v436 = vld [vmem:[#allocation6 + $0x218] sm:$0xff]
        %v437 = vld [vmem:[#allocation6 + $0x220] sm:$0xff]
        %v438 = vld [vmem:[#allocation6 + $0x228] sm:$0xff]
        %v439 = vld [vmem:[#allocation6 + $0x230] sm:$0xff]
        %v440 = vld [vmem:[#allocation6 + $0x238] sm:$0xff]
        %v441 = vld [vmem:[#allocation6 + $0x240] sm:$0xff]
        %v442 = vld [vmem:[#allocation6 + $0x248] sm:$0xff]
        %v443 = vld [vmem:[#allocation6 + $0x250] sm:$0xff]
        %v444 = vld [vmem:[#allocation6 + $0x258] sm:$0xff]
        %v445 = vld [vmem:[#allocation6 + $0x260] sm:$0xff]
        %v446 = vld [vmem:[#allocation6 + $0x268] sm:$0xff]
        %v447 = vld [vmem:[#allocation6 + $0x270] sm:$0xff]
        %v448 = vld [vmem:[#allocation6 + $0x278] sm:$0xff]
        %v449 = vld [vmem:[#allocation6 + $0x280] sm:$0xff]
        %v450 = vld [vmem:[#allocation6 + $0x288] sm:$0xff]
        %v451 = vld [vmem:[#allocation6 + $0x290] sm:$0xff]
        %v452 = vld [vmem:[#allocation6 + $0x298] sm:$0xff]
        %v453 = vld [vmem:[#allocation6 + $0x2a0] sm:$0xff]
        %v454 = vld [vmem:[#allocation6 + $0x2a8] sm:$0xff]
        %v455 = vld [vmem:[#allocation6 + $0x2b0] sm:$0xff]
        %v456 = vld [vmem:[#allocation6 + $0x2b8] sm:$0xff]
        %v457 = vld [vmem:[#allocation6 + $0x2c0] sm:$0xff]
        %v458 = vld [vmem:[#allocation6 + $0x2c8] sm:$0xff]
        %v459 = vld [vmem:[#allocation6 + $0x2d0] sm:$0xff]
        %v460 = vld [vmem:[#allocation6 + $0x2d8] sm:$0xff]
        %v461 = vld [vmem:[#allocation6 + $0x2e0] sm:$0xff]
        %v462 = vld [vmem:[#allocation6 + $0x2e8] sm:$0xff]
        %v463 = vld [vmem:[#allocation6 + $0x2f0] sm:$0xff]
        %v464 = vld [vmem:[#allocation6 + $0x2f8] sm:$0xff]
        %v465 = vld [vmem:[%s2] sm:$0x3f]
        %v467 = vlaneseq
        %v468 = vshrl.u32 %v467, 7
        %v469 = vsub.s32 0, %v468
        %v470 = vrot.slane %v465, %v469
        %v471 = vlaneseq
        %v472 = vshrl.u32 %v471, 7
        %v473 = vsub.s32 1, %v472
        %v474 = vrot.slane %v465, %v473
        %v475 = vlaneseq
        %v476 = vshrl.u32 %v475, 7
        %v477 = vsub.s32 2, %v476
        %v478 = vrot.slane %v465, %v477
        %v479 = vlaneseq
        %v480 = vshrl.u32 %v479, 7
        %v481 = vsub.s32 3, %v480
        %v482 = vrot.slane %v465, %v481
        %v483 = vlaneseq
        %v484 = vshrl.u32 %v483, 7
        %v485 = vsub.s32 4, %v484
        %v486 = vrot.slane %v465, %v485
        %v487 = vlaneseq
        %v488 = vshrl.u32 %v487, 7
        %v489 = vsub.s32 5, %v488
        %v490 = vrot.slane %v465, %v489
        %v593 = vunpack.c.l.b16 %v369
        %v594 = vunpack.c.h.b16 %v369
        %v595 = vunpack.c.l.b16 %v370
        %v596 = vunpack.c.h.b16 %v370
        %v597 = vunpack.c.l.b16 %v371
        %v598 = vunpack.c.h.b16 %v371
        %v599 = vunpack.c.l.b16 %v372
        %v600 = vunpack.c.h.b16 %v372
        %v601 = vunpack.c.l.b16 %v373
        %v602 = vunpack.c.h.b16 %v373
        %v603 = vunpack.c.l.b16 %v374
        %v604 = vunpack.c.h.b16 %v374
        %v605 = vunpack.c.l.b16 %v375
        %v606 = vunpack.c.h.b16 %v375
        %v607 = vunpack.c.l.b16 %v376
        %v608 = vunpack.c.h.b16 %v376
        %v609 = vunpack.c.l.b16 %v377
        %v610 = vunpack.c.h.b16 %v377
        %v611 = vunpack.c.l.b16 %v378
        %v612 = vunpack.c.h.b16 %v378
        %v613 = vunpack.c.l.b16 %v379
        %v614 = vunpack.c.h.b16 %v379
        %v615 = vunpack.c.l.b16 %v380
        %v616 = vunpack.c.h.b16 %v380
        %v617 = vunpack.c.l.b16 %v381
        %v618 = vunpack.c.h.b16 %v381
        %v619 = vunpack.c.l.b16 %v382
        %v620 = vunpack.c.h.b16 %v382
        %v621 = vunpack.c.l.b16 %v383
        %v622 = vunpack.c.h.b16 %v383
        %v623 = vunpack.c.l.b16 %v384
        %v624 = vunpack.c.h.b16 %v384
        %v625 = vunpack.c.l.b16 %v385
        %v626 = vunpack.c.h.b16 %v385
        %v627 = vunpack.c.l.b16 %v386
        %v628 = vunpack.c.h.b16 %v386
        %v629 = vunpack.c.l.b16 %v387
        %v630 = vunpack.c.h.b16 %v387
        %v631 = vunpack.c.l.b16 %v388
        %v632 = vunpack.c.h.b16 %v388
        %v633 = vunpack.c.l.b16 %v389
        %v634 = vunpack.c.h.b16 %v389
        %v635 = vunpack.c.l.b16 %v390
        %v636 = vunpack.c.h.b16 %v390
        %v637 = vunpack.c.l.b16 %v391
        %v638 = vunpack.c.h.b16 %v391
        %v639 = vunpack.c.l.b16 %v392
        %v640 = vunpack.c.h.b16 %v392
        %v641 = vunpack.c.l.b16 %v393
        %v642 = vunpack.c.h.b16 %v393
        %v643 = vunpack.c.l.b16 %v394
        %v644 = vunpack.c.h.b16 %v394
        %v645 = vunpack.c.l.b16 %v395
        %v646 = vunpack.c.h.b16 %v395
        %v647 = vunpack.c.l.b16 %v396
        %v648 = vunpack.c.h.b16 %v396
        %v649 = vunpack.c.l.b16 %v397
        %v650 = vunpack.c.h.b16 %v397
        %v651 = vunpack.c.l.b16 %v398
        %v652 = vunpack.c.h.b16 %v398
        %v653 = vunpack.c.l.b16 %v399
        %v654 = vunpack.c.h.b16 %v399
        %v655 = vunpack.c.l.b16 %v400
        %v656 = vunpack.c.h.b16 %v400
        %v657 = vunpack.c.l.b16 %v401
        %v658 = vunpack.c.h.b16 %v401
        %v659 = vunpack.c.l.b16 %v402
        %v660 = vunpack.c.h.b16 %v402
        %v661 = vunpack.c.l.b16 %v403
        %v662 = vunpack.c.h.b16 %v403
        %v663 = vunpack.c.l.b16 %v404
        %v664 = vunpack.c.h.b16 %v404
        %v665 = vunpack.c.l.b16 %v405
        %v666 = vunpack.c.h.b16 %v405
        %v667 = vunpack.c.l.b16 %v406
        %v668 = vunpack.c.h.b16 %v406
        %v669 = vunpack.c.l.b16 %v407
        %v670 = vunpack.c.h.b16 %v407
        %v671 = vunpack.c.l.b16 %v408
        %v672 = vunpack.c.h.b16 %v408
        %v673 = vunpack.c.l.b16 %v409
        %v674 = vunpack.c.h.b16 %v409
        %v675 = vunpack.c.l.b16 %v410
        %v676 = vunpack.c.h.b16 %v410
        %v677 = vunpack.c.l.b16 %v411
        %v678 = vunpack.c.h.b16 %v411
        %v679 = vunpack.c.l.b16 %v412
        %v680 = vunpack.c.h.b16 %v412
        %v681 = vunpack.c.l.b16 %v413
        %v682 = vunpack.c.h.b16 %v413
        %v683 = vunpack.c.l.b16 %v414
        %v684 = vunpack.c.h.b16 %v414
        %v685 = vunpack.c.l.b16 %v415
        %v686 = vunpack.c.h.b16 %v415
        %v687 = vunpack.c.l.b16 %v416
        %v688 = vunpack.c.h.b16 %v416
        %v689 = vunpack.c.l.b16 %v417
        %v690 = vunpack.c.h.b16 %v417
        %v691 = vunpack.c.l.b16 %v418
        %v692 = vunpack.c.h.b16 %v418
        %v693 = vunpack.c.l.b16 %v419
        %v694 = vunpack.c.h.b16 %v419
        %v695 = vunpack.c.l.b16 %v420
        %v696 = vunpack.c.h.b16 %v420
        %v697 = vunpack.c.l.b16 %v421
        %v698 = vunpack.c.h.b16 %v421
        %v699 = vunpack.c.l.b16 %v422
        %v700 = vunpack.c.h.b16 %v422
        %v701 = vunpack.c.l.b16 %v423
        %v702 = vunpack.c.h.b16 %v423
        %v703 = vunpack.c.l.b16 %v424
        %v704 = vunpack.c.h.b16 %v424
        %v705 = vunpack.c.l.b16 %v425
        %v706 = vunpack.c.h.b16 %v425
        %v707 = vunpack.c.l.b16 %v426
        %v708 = vunpack.c.h.b16 %v426
        %v709 = vunpack.c.l.b16 %v427
        %v710 = vunpack.c.h.b16 %v427
        %v711 = vunpack.c.l.b16 %v428
        %v712 = vunpack.c.h.b16 %v428
        %v713 = vunpack.c.l.b16 %v429
        %v714 = vunpack.c.h.b16 %v429
        %v715 = vunpack.c.l.b16 %v430
        %v716 = vunpack.c.h.b16 %v430
        %v717 = vunpack.c.l.b16 %v431
        %v718 = vunpack.c.h.b16 %v431
        %v719 = vunpack.c.l.b16 %v432
        %v720 = vunpack.c.h.b16 %v432
        %v721 = vunpack.c.l.b16 %v433
        %v722 = vunpack.c.h.b16 %v433
        %v723 = vunpack.c.l.b16 %v434
        %v724 = vunpack.c.h.b16 %v434
        %v725 = vunpack.c.l.b16 %v435
        %v726 = vunpack.c.h.b16 %v435
        %v727 = vunpack.c.l.b16 %v436
        %v728 = vunpack.c.h.b16 %v436
        %v729 = vunpack.c.l.b16 %v437
        %v730 = vunpack.c.h.b16 %v437
        %v731 = vunpack.c.l.b16 %v438
        %v732 = vunpack.c.h.b16 %v438
        %v733 = vunpack.c.l.b16 %v439
        %v734 = vunpack.c.h.b16 %v439
        %v735 = vunpack.c.l.b16 %v440
        %v736 = vunpack.c.h.b16 %v440
        %v737 = vunpack.c.l.b16 %v441
        %v738 = vunpack.c.h.b16 %v441
        %v739 = vunpack.c.l.b16 %v442
        %v740 = vunpack.c.h.b16 %v442
        %v741 = vunpack.c.l.b16 %v443
        %v742 = vunpack.c.h.b16 %v443
        %v743 = vunpack.c.l.b16 %v444
        %v744 = vunpack.c.h.b16 %v444
        %v745 = vunpack.c.l.b16 %v445
        %v746 = vunpack.c.h.b16 %v445
        %v747 = vunpack.c.l.b16 %v446
        %v748 = vunpack.c.h.b16 %v446
        %v749 = vunpack.c.l.b16 %v447
        %v750 = vunpack.c.h.b16 %v447
        %v751 = vunpack.c.l.b16 %v448
        %v752 = vunpack.c.h.b16 %v448
        %v753 = vunpack.c.l.b16 %v449
        %v754 = vunpack.c.h.b16 %v449
        %v755 = vunpack.c.l.b16 %v450
        %v756 = vunpack.c.h.b16 %v450
        %v757 = vunpack.c.l.b16 %v451
        %v758 = vunpack.c.h.b16 %v451
        %v759 = vunpack.c.l.b16 %v452
        %v760 = vunpack.c.h.b16 %v452
        %v761 = vunpack.c.l.b16 %v453
        %v762 = vunpack.c.h.b16 %v453
        %v763 = vunpack.c.l.b16 %v454
        %v764 = vunpack.c.h.b16 %v454
        %v765 = vunpack.c.l.b16 %v455
        %v766 = vunpack.c.h.b16 %v455
        %v767 = vunpack.c.l.b16 %v456
        %v768 = vunpack.c.h.b16 %v456
        %v769 = vunpack.c.l.b16 %v457
        %v770 = vunpack.c.h.b16 %v457
        %v771 = vunpack.c.l.b16 %v458
        %v772 = vunpack.c.h.b16 %v458
        %v773 = vunpack.c.l.b16 %v459
        %v774 = vunpack.c.h.b16 %v459
        %v775 = vunpack.c.l.b16 %v460
        %v776 = vunpack.c.h.b16 %v460
        %v777 = vunpack.c.l.b16 %v461
        %v778 = vunpack.c.h.b16 %v461
        %v779 = vunpack.c.l.b16 %v462
        %v780 = vunpack.c.h.b16 %v462
        %v781 = vunpack.c.l.b16 %v463
        %v782 = vunpack.c.h.b16 %v463
        %v783 = vunpack.c.l.b16 %v464
        %v784 = vunpack.c.h.b16 %v464
        %v785 = vpack.c.b16 %v599, %v593
        %v786 = vpack.c.b16 %v600, %v594
        %v787 = vpack.c.b16 %v601, %v595
        %v788 = vpack.c.b16 %v602, %v596
        %v789 = vpack.c.b16 %v603, %v597
        %v790 = vpack.c.b16 %v604, %v598
        %v791 = vpack.c.b16 %v611, %v605
        %v792 = vpack.c.b16 %v612, %v606
        %v793 = vpack.c.b16 %v613, %v607
        %v794 = vpack.c.b16 %v614, %v608
        %v795 = vpack.c.b16 %v615, %v609
        %v796 = vpack.c.b16 %v616, %v610
        %v797 = vpack.c.b16 %v623, %v617
        %v798 = vpack.c.b16 %v624, %v618
        %v799 = vpack.c.b16 %v625, %v619
        %v800 = vpack.c.b16 %v626, %v620
        %v801 = vpack.c.b16 %v627, %v621
        %v802 = vpack.c.b16 %v628, %v622
        %v803 = vpack.c.b16 %v635, %v629
        %v804 = vpack.c.b16 %v636, %v630
        %v805 = vpack.c.b16 %v637, %v631
        %v806 = vpack.c.b16 %v638, %v632
        %v807 = vpack.c.b16 %v639, %v633
        %v808 = vpack.c.b16 %v640, %v634
        %v809 = vpack.c.b16 %v647, %v641
        %v810 = vpack.c.b16 %v648, %v642
        %v811 = vpack.c.b16 %v649, %v643
        %v812 = vpack.c.b16 %v650, %v644
        %v813 = vpack.c.b16 %v651, %v645
        %v814 = vpack.c.b16 %v652, %v646
        %v815 = vpack.c.b16 %v659, %v653
        %v816 = vpack.c.b16 %v660, %v654
        %v817 = vpack.c.b16 %v661, %v655
        %v818 = vpack.c.b16 %v662, %v656
        %v819 = vpack.c.b16 %v663, %v657
        %v820 = vpack.c.b16 %v664, %v658
        %v821 = vpack.c.b16 %v671, %v665
        %v822 = vpack.c.b16 %v672, %v666
        %v823 = vpack.c.b16 %v673, %v667
        %v824 = vpack.c.b16 %v674, %v668
        %v825 = vpack.c.b16 %v675, %v669
        %v826 = vpack.c.b16 %v676, %v670
        %v827 = vpack.c.b16 %v683, %v677
        %v828 = vpack.c.b16 %v684, %v678
        %v829 = vpack.c.b16 %v685, %v679
        %v830 = vpack.c.b16 %v686, %v680
        %v831 = vpack.c.b16 %v687, %v681
        %v832 = vpack.c.b16 %v688, %v682
        %v833 = vpack.c.b16 %v695, %v689
        %v834 = vpack.c.b16 %v696, %v690
        %v835 = vpack.c.b16 %v697, %v691
        %v836 = vpack.c.b16 %v698, %v692
        %v837 = vpack.c.b16 %v699, %v693
        %v838 = vpack.c.b16 %v700, %v694
        %v839 = vpack.c.b16 %v707, %v701
        %v840 = vpack.c.b16 %v708, %v702
        %v841 = vpack.c.b16 %v709, %v703
        %v842 = vpack.c.b16 %v710, %v704
        %v843 = vpack.c.b16 %v711, %v705
        %v844 = vpack.c.b16 %v712, %v706
        %v845 = vpack.c.b16 %v719, %v713
        %v846 = vpack.c.b16 %v720, %v714
        %v847 = vpack.c.b16 %v721, %v715
        %v848 = vpack.c.b16 %v722, %v716
        %v849 = vpack.c.b16 %v723, %v717
        %v850 = vpack.c.b16 %v724, %v718
        %v851 = vpack.c.b16 %v731, %v725
        %v852 = vpack.c.b16 %v732, %v726
        %v853 = vpack.c.b16 %v733, %v727
        %v854 = vpack.c.b16 %v734, %v728
        %v855 = vpack.c.b16 %v735, %v729
        %v856 = vpack.c.b16 %v736, %v730
        %v857 = vpack.c.b16 %v743, %v737
        %v858 = vpack.c.b16 %v744, %v738
        %v859 = vpack.c.b16 %v745, %v739
        %v860 = vpack.c.b16 %v746, %v740
        %v861 = vpack.c.b16 %v747, %v741
        %v862 = vpack.c.b16 %v748, %v742
        %v863 = vpack.c.b16 %v755, %v749
        %v864 = vpack.c.b16 %v756, %v750
        %v865 = vpack.c.b16 %v757, %v751
        %v866 = vpack.c.b16 %v758, %v752
        %v867 = vpack.c.b16 %v759, %v753
        %v868 = vpack.c.b16 %v760, %v754
        %v869 = vpack.c.b16 %v767, %v761
        %v870 = vpack.c.b16 %v768, %v762
        %v871 = vpack.c.b16 %v769, %v763
        %v872 = vpack.c.b16 %v770, %v764
        %v873 = vpack.c.b16 %v771, %v765
        %v874 = vpack.c.b16 %v772, %v766
        %v875 = vpack.c.b16 %v779, %v773
        %v876 = vpack.c.b16 %v780, %v774
        %v877 = vpack.c.b16 %v781, %v775
        %v878 = vpack.c.b16 %v782, %v776
        %v879 = vpack.c.b16 %v783, %v777
        %v880 = vpack.c.b16 %v784, %v778
        %977 = vmatprep.subr.bf16.mxu0 %v786
        %978 = vmatpush1.bf16.msra.mxu0 %v785
        %979 = vmatprep.subr.bf16.mxu0 %v792
        %980 = vmatpush1.bf16.msra.mxu0 %v791
        %981 = vmatprep.subr.bf16.mxu0 %v798
        %982 = vmatpush1.bf16.msra.mxu0 %v797
        %983 = vmatprep.subr.bf16.mxu0 %v804
        %984 = vmatpush1.bf16.msra.mxu0 %v803
        %985 = vmatprep.subr.bf16.mxu0 %v810
        %986 = vmatpush1.bf16.msra.mxu0 %v809
        %987 = vmatprep.subr.bf16.mxu0 %v816
        %988 = vmatpush1.bf16.msra.mxu0 %v815
        %989 = vmatprep.subr.bf16.mxu0 %v822
        %990 = vmatpush1.bf16.msra.mxu0 %v821
        %991 = vmatprep.subr.bf16.mxu0 %v828
        %992 = vmatpush1.bf16.msra.mxu0 %v827
        %993 = vmatprep.subr.bf16.mxu0 %v834
        %994 = vmatpush1.bf16.msra.mxu0 %v833
        %995 = vmatprep.subr.bf16.mxu0 %v840
        %996 = vmatpush1.bf16.msra.mxu0 %v839
        %997 = vmatprep.subr.bf16.mxu0 %v846
        %998 = vmatpush1.bf16.msra.mxu0 %v845
        %999 = vmatprep.subr.bf16.mxu0 %v852
        %1000 = vmatpush1.bf16.msra.mxu0 %v851
        %1001 = vmatprep.subr.bf16.mxu0 %v858
        %1002 = vmatpush1.bf16.msra.mxu0 %v857
        %1003 = vmatprep.subr.bf16.mxu0 %v864
        %1004 = vmatpush1.bf16.msra.mxu0 %v863
        %1005 = vmatprep.subr.bf16.mxu0 %v870
        %1006 = vmatpush1.bf16.msra.mxu0 %v869
        %1007 = vmatprep.subr.bf16.mxu0 %v876
        %1008 = vmatpush1.bf16.msra.mxu0 %v875
        %1009 = vmatprep.mubr.bf16.mxu0 %v338
        %1010 = vmatmul.mubr.bf16.gmra.mrb[0].mxu0 %v337
        %v1011 = vpop.f32.mrb[0].mxu0
        %v1012 = vadd.f32 %v470, %v1011
        %v1013 = vpop.f32.mrb[0].mxu0
        %v1014 = vadd.f32 %v474, %v1013
        %v1015 = vpop.f32.mrb[0].mxu0
        %v1016 = vadd.f32 %v470, %v1015
        %v1017 = vpop.f32.mrb[0].mxu0
        %v1018 = vadd.f32 %v474, %v1017
        %1019 = vmatprep.mubr.bf16.mxu0 %v340
        %1020 = vmatmul.mubr.bf16.gmra.mrb[0].mxu0 %v339
        %v1021 = vpop.f32.mrb[0].mxu0
        %v1022 = vadd.f32 %v470, %v1021
        %v1023 = vpop.f32.mrb[0].mxu0
        %v1024 = vadd.f32 %v474, %v1023
        %v1025 = vpop.f32.mrb[0].mxu0
        %v1026 = vadd.f32 %v470, %v1025
        %v1027 = vpop.f32.mrb[0].mxu0
        %v1028 = vadd.f32 %v474, %v1027
        %1029 = vmatprep.mubr.bf16.mxu0 %v342
        %1030 = vmatmul.mubr.bf16.gmra.mrb[0].mxu0 %v341
        %v1031 = vpop.f32.mrb[0].mxu0
        %v1032 = vadd.f32 %v470, %v1031
        %v1033 = vpop.f32.mrb[0].mxu0
        %v1034 = vadd.f32 %v474, %v1033
        %v1035 = vpop.f32.mrb[0].mxu0
        %v1036 = vadd.f32 %v470, %v1035
        %v1037 = vpop.f32.mrb[0].mxu0
        %v1038 = vadd.f32 %v474, %v1037
        %1039 = vmatprep.mubr.bf16.mxu0 %v344
        %1040 = vmatmul.mubr.bf16.gmra.mrb[0].mxu0 %v343
        %v1041 = vpop.f32.mrb[0].mxu0
        %v1042 = vadd.f32 %v470, %v1041
        %v1043 = vpop.f32.mrb[0].mxu0
        %v1044 = vadd.f32 %v474, %v1043
        %v1045 = vpop.f32.mrb[0].mxu0
        %v1046 = vadd.f32 %v470, %v1045
        %v1047 = vpop.f32.mrb[0].mxu0
        %v1048 = vadd.f32 %v474, %v1047
        %1049 = vmatprep.mubr.bf16.mxu0 %v346
        %1050 = vmatmul.mubr.bf16.gmra.mrb[0].mxu0 %v345
        %v1051 = vpop.f32.mrb[0].mxu0
        %v1052 = vadd.f32 %v470, %v1051
        %v1053 = vpop.f32.mrb[0].mxu0
        %v1054 = vadd.f32 %v474, %v1053
        %v1055 = vpop.f32.mrb[0].mxu0
        %v1056 = vadd.f32 %v470, %v1055
        %v1057 = vpop.f32.mrb[0].mxu0
        %v1058 = vadd.f32 %v474, %v1057
        %1059 = vmatprep.mubr.bf16.mxu0 %v348
        %1060 = vmatmul.mubr.bf16.gmra.mrb[0].mxu0 %v347
        %v1061 = vpop.f32.mrb[0].mxu0
        %v1062 = vadd.f32 %v470, %v1061
        %v1063 = vpop.f32.mrb[0].mxu0
        %v1064 = vadd.f32 %v474, %v1063
        %v1065 = vpop.f32.mrb[0].mxu0
        %v1066 = vadd.f32 %v470, %v1065
        %v1067 = vpop.f32.mrb[0].mxu0
        %v1068 = vadd.f32 %v474, %v1067
        %1069 = vmatprep.mubr.bf16.mxu0 %v350
        %1070 = vmatmul.mubr.bf16.gmra.mrb[0].mxu0 %v349
        %v1071 = vpop.f32.mrb[0].mxu0
        %v1072 = vadd.f32 %v470, %v1071
        %v1073 = vpop.f32.mrb[0].mxu0
        %v1074 = vadd.f32 %v474, %v1073
        %v1075 = vpop.f32.mrb[0].mxu0
        %v1076 = vadd.f32 %v470, %v1075
        %v1077 = vpop.f32.mrb[0].mxu0
        %v1078 = vadd.f32 %v474, %v1077
        %1079 = vmatprep.mubr.bf16.mxu0 %v352
        %1080 = vmatmul.mubr.bf16.gmra.mrb[0].mxu0 %v351
        %v1081 = vpop.f32.mrb[0].mxu0
        %v1082 = vadd.f32 %v470, %v1081
        %v1083 = vpop.f32.mrb[0].mxu0
        %v1084 = vadd.f32 %v474, %v1083
        %v1085 = vpop.f32.mrb[0].mxu0
        %v1086 = vadd.f32 %v470, %v1085
        %v1087 = vpop.f32.mrb[0].mxu0
        %v1088 = vadd.f32 %v474, %v1087
        %1089 = vmatprep.mubr.bf16.mxu0 %v354
        %1090 = vmatmul.mubr.bf16.gmra.mrb[0].mxu0 %v353
        %v1091 = vpop.f32.mrb[0].mxu0
        %v1092 = vadd.f32 %v470, %v1091
        %v1093 = vpop.f32.mrb[0].mxu0
        %v1094 = vadd.f32 %v474, %v1093
        %v1095 = vpop.f32.mrb[0].mxu0
        %v1096 = vadd.f32 %v470, %v1095
        %v1097 = vpop.f32.mrb[0].mxu0
        %v1098 = vadd.f32 %v474, %v1097
        %1099 = vmatprep.mubr.bf16.mxu0 %v356
        %1100 = vmatmul.mubr.bf16.gmra.mrb[0].mxu0 %v355
        %v1101 = vpop.f32.mrb[0].mxu0
        %v1102 = vadd.f32 %v470, %v1101
        %v1103 = vpop.f32.mrb[0].mxu0
        %v1104 = vadd.f32 %v474, %v1103
        %v1105 = vpop.f32.mrb[0].mxu0
        %v1106 = vadd.f32 %v470, %v1105
        %v1107 = vpop.f32.mrb[0].mxu0
        %v1108 = vadd.f32 %v474, %v1107
        %1109 = vmatprep.mubr.bf16.mxu0 %v358
        %1110 = vmatmul.mubr.bf16.gmra.mrb[0].mxu0 %v357
        %v1111 = vpop.f32.mrb[0].mxu0
        %v1112 = vadd.f32 %v470, %v1111
        %v1113 = vpop.f32.mrb[0].mxu0
        %v1114 = vadd.f32 %v474, %v1113
        %v1115 = vpop.f32.mrb[0].mxu0
        %v1116 = vadd.f32 %v470, %v1115
        %v1117 = vpop.f32.mrb[0].mxu0
        %v1118 = vadd.f32 %v474, %v1117
        %1119 = vmatprep.mubr.bf16.mxu0 %v360
        %1120 = vmatmul.mubr.bf16.gmra.mrb[0].mxu0 %v359
        %v1121 = vpop.f32.mrb[0].mxu0
        %v1122 = vadd.f32 %v470, %v1121
        %v1123 = vpop.f32.mrb[0].mxu0
        %v1124 = vadd.f32 %v474, %v1123
        %v1125 = vpop.f32.mrb[0].mxu0
        %v1126 = vadd.f32 %v470, %v1125
        %v1127 = vpop.f32.mrb[0].mxu0
        %v1128 = vadd.f32 %v474, %v1127
        %1129 = vmatprep.mubr.bf16.mxu0 %v362
        %1130 = vmatmul.mubr.bf16.gmra.mrb[0].mxu0 %v361
        %v1131 = vpop.f32.mrb[0].mxu0
        %v1132 = vadd.f32 %v470, %v1131
        %v1133 = vpop.f32.mrb[0].mxu0
        %v1134 = vadd.f32 %v474, %v1133
        %v1135 = vpop.f32.mrb[0].mxu0
        %v1136 = vadd.f32 %v470, %v1135
        %v1137 = vpop.f32.mrb[0].mxu0
        %v1138 = vadd.f32 %v474, %v1137
        %1139 = vmatprep.mubr.bf16.mxu0 %v364
        %1140 = vmatmul.mubr.bf16.gmra.mrb[0].mxu0 %v363
        %v1141 = vpop.f32.mrb[0].mxu0
        %v1142 = vadd.f32 %v470, %v1141
        %v1143 = vpop.f32.mrb[0].mxu0
        %v1144 = vadd.f32 %v474, %v1143
        %v1145 = vpop.f32.mrb[0].mxu0
        %v1146 = vadd.f32 %v470, %v1145
        %v1147 = vpop.f32.mrb[0].mxu0
        %v1148 = vadd.f32 %v474, %v1147
        %1149 = vmatprep.mubr.bf16.mxu0 %v366
        %1150 = vmatmul.mubr.bf16.gmra.mrb[0].mxu0 %v365
        %v1151 = vpop.f32.mrb[0].mxu0
        %v1152 = vadd.f32 %v470, %v1151
        %v1153 = vpop.f32.mrb[0].mxu0
        %v1154 = vadd.f32 %v474, %v1153
        %v1155 = vpop.f32.mrb[0].mxu0
        %v1156 = vadd.f32 %v470, %v1155
        %v1157 = vpop.f32.mrb[0].mxu0
        %v1158 = vadd.f32 %v474, %v1157
        %1159 = vmatprep.mubr.bf16.mxu0 %v368
        %1160 = vmatmul.mubr.bf16.gmra.mrb[0].mxu0 %v367
        %v1161 = vpop.f32.mrb[0].mxu0
        %v1162 = vadd.f32 %v470, %v1161
        %v1163 = vpop.f32.mrb[0].mxu0
        %v1164 = vadd.f32 %v474, %v1163
        %v1165 = vpop.f32.mrb[0].mxu0
        %v1166 = vadd.f32 %v470, %v1165
        %v1167 = vpop.f32.mrb[0].mxu0
        %v1168 = vadd.f32 %v474, %v1167
        %1169 = vdwg.mxu0
        %1170 = vmatprep.subr.bf16.mxu0 %v788
        %1171 = vmatpush1.bf16.msra.mxu0 %v787
        %1172 = vmatprep.subr.bf16.mxu0 %v794
        %1173 = vmatpush1.bf16.msra.mxu0 %v793
        %1174 = vmatprep.subr.bf16.mxu0 %v800
        %1175 = vmatpush1.bf16.msra.mxu0 %v799
        %1176 = vmatprep.subr.bf16.mxu0 %v806
        %1177 = vmatpush1.bf16.msra.mxu0 %v805
        %1178 = vmatprep.subr.bf16.mxu0 %v812
        %1179 = vmatpush1.bf16.msra.mxu0 %v811
        %1180 = vmatprep.subr.bf16.mxu0 %v818
        %1181 = vmatpush1.bf16.msra.mxu0 %v817
        %1182 = vmatprep.subr.bf16.mxu0 %v824
        %1183 = vmatpush1.bf16.msra.mxu0 %v823
        %1184 = vmatprep.subr.bf16.mxu0 %v830
        %1185 = vmatpush1.bf16.msra.mxu0 %v829
        %1186 = vmatprep.subr.bf16.mxu0 %v836
        %1187 = vmatpush1.bf16.msra.mxu0 %v835
        %1188 = vmatprep.subr.bf16.mxu0 %v842
        %1189 = vmatpush1.bf16.msra.mxu0 %v841
        %1190 = vmatprep.subr.bf16.mxu0 %v848
        %1191 = vmatpush1.bf16.msra.mxu0 %v847
        %1192 = vmatprep.subr.bf16.mxu0 %v854
        %1193 = vmatpush1.bf16.msra.mxu0 %v853
        %1194 = vmatprep.subr.bf16.mxu0 %v860
        %1195 = vmatpush1.bf16.msra.mxu0 %v859
        %1196 = vmatprep.subr.bf16.mxu0 %v866
        %1197 = vmatpush1.bf16.msra.mxu0 %v865
        %1198 = vmatprep.subr.bf16.mxu0 %v872
        %1199 = vmatpush1.bf16.msra.mxu0 %v871
        %1200 = vmatprep.subr.bf16.mxu0 %v878
        %1201 = vmatpush1.bf16.msra.mxu0 %v877
        %1202 = vmatprep.mubr.bf16.mxu0 %v338
        %1203 = vmatmul.mubr.bf16.gmra.mrb[0].mxu0 %v337
        %v1204 = vpop.f32.mrb[0].mxu0
        %v1205 = vadd.f32 %v478, %v1204
        %v1206 = vpop.f32.mrb[0].mxu0
        %v1207 = vadd.f32 %v482, %v1206
        %v1208 = vpop.f32.mrb[0].mxu0
        %v1209 = vadd.f32 %v478, %v1208
        %v1210 = vpop.f32.mrb[0].mxu0
        %v1211 = vadd.f32 %v482, %v1210
        %1212 = vmatprep.mubr.bf16.mxu0 %v340
        %1213 = vmatmul.mubr.bf16.gmra.mrb[0].mxu0 %v339
        %v1214 = vpop.f32.mrb[0].mxu0
        %v1215 = vadd.f32 %v478, %v1214
        %v1216 = vpop.f32.mrb[0].mxu0
        %v1217 = vadd.f32 %v482, %v1216
        %v1218 = vpop.f32.mrb[0].mxu0
        %v1219 = vadd.f32 %v478, %v1218
        %v1220 = vpop.f32.mrb[0].mxu0
        %v1221 = vadd.f32 %v482, %v1220
        %1222 = vmatprep.mubr.bf16.mxu0 %v342
        %1223 = vmatmul.mubr.bf16.gmra.mrb[0].mxu0 %v341
        %v1224 = vpop.f32.mrb[0].mxu0
        %v1225 = vadd.f32 %v478, %v1224
        %v1226 = vpop.f32.mrb[0].mxu0
        %v1227 = vadd.f32 %v482, %v1226
        %v1228 = vpop.f32.mrb[0].mxu0
        %v1229 = vadd.f32 %v478, %v1228
        %v1230 = vpop.f32.mrb[0].mxu0
        %v1231 = vadd.f32 %v482, %v1230
        %1232 = vmatprep.mubr.bf16.mxu0 %v344
        %1233 = vmatmul.mubr.bf16.gmra.mrb[0].mxu0 %v343
        %v1234 = vpop.f32.mrb[0].mxu0
        %v1235 = vadd.f32 %v478, %v1234
        %v1236 = vpop.f32.mrb[0].mxu0
        %v1237 = vadd.f32 %v482, %v1236
        %v1238 = vpop.f32.mrb[0].mxu0
        %v1239 = vadd.f32 %v478, %v1238
        %v1240 = vpop.f32.mrb[0].mxu0
        %v1241 = vadd.f32 %v482, %v1240
        %1242 = vmatprep.mubr.bf16.mxu0 %v346
        %1243 = vmatmul.mubr.bf16.gmra.mrb[0].mxu0 %v345
        %v1244 = vpop.f32.mrb[0].mxu0
        %v1245 = vadd.f32 %v478, %v1244
        %v1246 = vpop.f32.mrb[0].mxu0
        %v1247 = vadd.f32 %v482, %v1246
        %v1248 = vpop.f32.mrb[0].mxu0
        %v1249 = vadd.f32 %v478, %v1248
        %v1250 = vpop.f32.mrb[0].mxu0
        %v1251 = vadd.f32 %v482, %v1250
        %1252 = vmatprep.mubr.bf16.mxu0 %v348
        %1253 = vmatmul.mubr.bf16.gmra.mrb[0].mxu0 %v347
        %v1254 = vpop.f32.mrb[0].mxu0
        %v1255 = vadd.f32 %v478, %v1254
        %v1256 = vpop.f32.mrb[0].mxu0
        %v1257 = vadd.f32 %v482, %v1256
        %v1258 = vpop.f32.mrb[0].mxu0
        %v1259 = vadd.f32 %v478, %v1258
        %v1260 = vpop.f32.mrb[0].mxu0
        %v1261 = vadd.f32 %v482, %v1260
        %1262 = vmatprep.mubr.bf16.mxu0 %v350
        %1263 = vmatmul.mubr.bf16.gmra.mrb[0].mxu0 %v349
        %v1264 = vpop.f32.mrb[0].mxu0
        %v1265 = vadd.f32 %v478, %v1264
        %v1266 = vpop.f32.mrb[0].mxu0
        %v1267 = vadd.f32 %v482, %v1266
        %v1268 = vpop.f32.mrb[0].mxu0
        %v1269 = vadd.f32 %v478, %v1268
        %v1270 = vpop.f32.mrb[0].mxu0
        %v1271 = vadd.f32 %v482, %v1270
        %1272 = vmatprep.mubr.bf16.mxu0 %v352
        %1273 = vmatmul.mubr.bf16.gmra.mrb[0].mxu0 %v351
        %v1274 = vpop.f32.mrb[0].mxu0
        %v1275 = vadd.f32 %v478, %v1274
        %v1276 = vpop.f32.mrb[0].mxu0
        %v1277 = vadd.f32 %v482, %v1276
        %v1278 = vpop.f32.mrb[0].mxu0
        %v1279 = vadd.f32 %v478, %v1278
        %v1280 = vpop.f32.mrb[0].mxu0
        %v1281 = vadd.f32 %v482, %v1280
        %1282 = vmatprep.mubr.bf16.mxu0 %v354
        %1283 = vmatmul.mubr.bf16.gmra.mrb[0].mxu0 %v353
        %v1284 = vpop.f32.mrb[0].mxu0
        %v1285 = vadd.f32 %v478, %v1284
        %v1286 = vpop.f32.mrb[0].mxu0
        %v1287 = vadd.f32 %v482, %v1286
        %v1288 = vpop.f32.mrb[0].mxu0
        %v1289 = vadd.f32 %v478, %v1288
        %v1290 = vpop.f32.mrb[0].mxu0
        %v1291 = vadd.f32 %v482, %v1290
        %1292 = vmatprep.mubr.bf16.mxu0 %v356
        %1293 = vmatmul.mubr.bf16.gmra.mrb[0].mxu0 %v355
        %v1294 = vpop.f32.mrb[0].mxu0
        %v1295 = vadd.f32 %v478, %v1294
        %v1296 = vpop.f32.mrb[0].mxu0
        %v1297 = vadd.f32 %v482, %v1296
        %v1298 = vpop.f32.mrb[0].mxu0
        %v1299 = vadd.f32 %v478, %v1298
        %v1300 = vpop.f32.mrb[0].mxu0
        %v1301 = vadd.f32 %v482, %v1300
        %1302 = vmatprep.mubr.bf16.mxu0 %v358
        %1303 = vmatmul.mubr.bf16.gmra.mrb[0].mxu0 %v357
        %v1304 = vpop.f32.mrb[0].mxu0
        %v1305 = vadd.f32 %v478, %v1304
        %v1306 = vpop.f32.mrb[0].mxu0
        %v1307 = vadd.f32 %v482, %v1306
        %v1308 = vpop.f32.mrb[0].mxu0
        %v1309 = vadd.f32 %v478, %v1308
        %v1310 = vpop.f32.mrb[0].mxu0
        %v1311 = vadd.f32 %v482, %v1310
        %1312 = vmatprep.mubr.bf16.mxu0 %v360
        %1313 = vmatmul.mubr.bf16.gmra.mrb[0].mxu0 %v359
        %v1314 = vpop.f32.mrb[0].mxu0
        %v1315 = vadd.f32 %v478, %v1314
        %v1316 = vpop.f32.mrb[0].mxu0
        %v1317 = vadd.f32 %v482, %v1316
        %v1318 = vpop.f32.mrb[0].mxu0
        %v1319 = vadd.f32 %v478, %v1318
        %v1320 = vpop.f32.mrb[0].mxu0
        %v1321 = vadd.f32 %v482, %v1320
        %1322 = vmatprep.mubr.bf16.mxu0 %v362
        %1323 = vmatmul.mubr.bf16.gmra.mrb[0].mxu0 %v361
        %v1324 = vpop.f32.mrb[0].mxu0
        %v1325 = vadd.f32 %v478, %v1324
        %v1326 = vpop.f32.mrb[0].mxu0
        %v1327 = vadd.f32 %v482, %v1326
        %v1328 = vpop.f32.mrb[0].mxu0
        %v1329 = vadd.f32 %v478, %v1328
        %v1330 = vpop.f32.mrb[0].mxu0
        %v1331 = vadd.f32 %v482, %v1330
        %1332 = vmatprep.mubr.bf16.mxu0 %v364
        %1333 = vmatmul.mubr.bf16.gmra.mrb[0].mxu0 %v363
        %v1334 = vpop.f32.mrb[0].mxu0
        %v1335 = vadd.f32 %v478, %v1334
        %v1336 = vpop.f32.mrb[0].mxu0
        %v1337 = vadd.f32 %v482, %v1336
        %v1338 = vpop.f32.mrb[0].mxu0
        %v1339 = vadd.f32 %v478, %v1338
        %v1340 = vpop.f32.mrb[0].mxu0
        %v1341 = vadd.f32 %v482, %v1340
        %1342 = vmatprep.mubr.bf16.mxu0 %v366
        %1343 = vmatmul.mubr.bf16.gmra.mrb[0].mxu0 %v365
        %v1344 = vpop.f32.mrb[0].mxu0
        %v1345 = vadd.f32 %v478, %v1344
        %v1346 = vpop.f32.mrb[0].mxu0
        %v1347 = vadd.f32 %v482, %v1346
        %v1348 = vpop.f32.mrb[0].mxu0
        %v1349 = vadd.f32 %v478, %v1348
        %v1350 = vpop.f32.mrb[0].mxu0
        %v1351 = vadd.f32 %v482, %v1350
        %1352 = vmatprep.mubr.bf16.mxu0 %v368
        %1353 = vmatmul.mubr.bf16.gmra.mrb[0].mxu0 %v367
        %v1354 = vpop.f32.mrb[0].mxu0
        %v1355 = vadd.f32 %v478, %v1354
        %v1356 = vpop.f32.mrb[0].mxu0
        %v1357 = vadd.f32 %v482, %v1356
        %v1358 = vpop.f32.mrb[0].mxu0
        %v1359 = vadd.f32 %v478, %v1358
        %v1360 = vpop.f32.mrb[0].mxu0
        %v1361 = vadd.f32 %v482, %v1360
        %1362 = vdwg.mxu0
        %1363 = vmatprep.subr.bf16.mxu0 %v790
        %1364 = vmatpush1.bf16.msra.mxu0 %v789
        %1365 = vmatprep.subr.bf16.mxu0 %v796
        %1366 = vmatpush1.bf16.msra.mxu0 %v795
        %1367 = vmatprep.subr.bf16.mxu0 %v802
        %1368 = vmatpush1.bf16.msra.mxu0 %v801
        %1369 = vmatprep.subr.bf16.mxu0 %v808
        %1370 = vmatpush1.bf16.msra.mxu0 %v807
        %1371 = vmatprep.subr.bf16.mxu0 %v814
        %1372 = vmatpush1.bf16.msra.mxu0 %v813
        %1373 = vmatprep.subr.bf16.mxu0 %v820
        %1374 = vmatpush1.bf16.msra.mxu0 %v819
        %1375 = vmatprep.subr.bf16.mxu0 %v826
        %1376 = vmatpush1.bf16.msra.mxu0 %v825
        %1377 = vmatprep.subr.bf16.mxu0 %v832
        %1378 = vmatpush1.bf16.msra.mxu0 %v831
        %1379 = vmatprep.subr.bf16.mxu0 %v838
        %1380 = vmatpush1.bf16.msra.mxu0 %v837
        %1381 = vmatprep.subr.bf16.mxu0 %v844
        %1382 = vmatpush1.bf16.msra.mxu0 %v843
        %1383 = vmatprep.subr.bf16.mxu0 %v850
        %1384 = vmatpush1.bf16.msra.mxu0 %v849
        %1385 = vmatprep.subr.bf16.mxu0 %v856
        %1386 = vmatpush1.bf16.msra.mxu0 %v855
        %1387 = vmatprep.subr.bf16.mxu0 %v862
        %1388 = vmatpush1.bf16.msra.mxu0 %v861
        %1389 = vmatprep.subr.bf16.mxu0 %v868
        %1390 = vmatpush1.bf16.msra.mxu0 %v867
        %1391 = vmatprep.subr.bf16.mxu0 %v874
        %1392 = vmatpush1.bf16.msra.mxu0 %v873
        %1393 = vmatprep.subr.bf16.mxu0 %v880
        %1394 = vmatpush1.bf16.msra.mxu0 %v879
        %1395 = vmatprep.mubr.bf16.mxu0 %v338
        %1396 = vmatmul.mubr.bf16.gmra.mrb[0].mxu0 %v337
        %v1397 = vpop.f32.mrb[0].mxu0
        %v1398 = vadd.f32 %v486, %v1397
        %v1399 = vpop.f32.mrb[0].mxu0
        %v1400 = vadd.f32 %v490, %v1399
        %v1401 = vpop.f32.mrb[0].mxu0
        %v1402 = vadd.f32 %v486, %v1401
        %v1403 = vpop.f32.mrb[0].mxu0
        %v1404 = vadd.f32 %v490, %v1403
        %1405 = vmatprep.mubr.bf16.mxu0 %v340
        %1406 = vmatmul.mubr.bf16.gmra.mrb[0].mxu0 %v339
        %v1407 = vpop.f32.mrb[0].mxu0
        %v1408 = vadd.f32 %v486, %v1407
        %v1409 = vpop.f32.mrb[0].mxu0
        %v1410 = vadd.f32 %v490, %v1409
        %v1411 = vpop.f32.mrb[0].mxu0
        %v1412 = vadd.f32 %v486, %v1411
        %v1413 = vpop.f32.mrb[0].mxu0
        %v1414 = vadd.f32 %v490, %v1413
        %1415 = vmatprep.mubr.bf16.mxu0 %v342
        %1416 = vmatmul.mubr.bf16.gmra.mrb[0].mxu0 %v341
        %v1417 = vpop.f32.mrb[0].mxu0
        %v1418 = vadd.f32 %v486, %v1417
        %v1419 = vpop.f32.mrb[0].mxu0
        %v1420 = vadd.f32 %v490, %v1419
        %v1421 = vpop.f32.mrb[0].mxu0
        %v1422 = vadd.f32 %v486, %v1421
        %v1423 = vpop.f32.mrb[0].mxu0
        %v1424 = vadd.f32 %v490, %v1423
        %1425 = vmatprep.mubr.bf16.mxu0 %v344
        %1426 = vmatmul.mubr.bf16.gmra.mrb[0].mxu0 %v343
        %v1427 = vpop.f32.mrb[0].mxu0
        %v1428 = vadd.f32 %v486, %v1427
        %v1429 = vpop.f32.mrb[0].mxu0
        %v1430 = vadd.f32 %v490, %v1429
        %v1431 = vpop.f32.mrb[0].mxu0
        %v1432 = vadd.f32 %v486, %v1431
        %v1433 = vpop.f32.mrb[0].mxu0
        %v1434 = vadd.f32 %v490, %v1433
        %1435 = vmatprep.mubr.bf16.mxu0 %v346
        %1436 = vmatmul.mubr.bf16.gmra.mrb[0].mxu0 %v345
        %v1437 = vpop.f32.mrb[0].mxu0
        %v1438 = vadd.f32 %v486, %v1437
        %v1439 = vpop.f32.mrb[0].mxu0
        %v1440 = vadd.f32 %v490, %v1439
        %v1441 = vpop.f32.mrb[0].mxu0
        %v1442 = vadd.f32 %v486, %v1441
        %v1443 = vpop.f32.mrb[0].mxu0
        %v1444 = vadd.f32 %v490, %v1443
        %1445 = vmatprep.mubr.bf16.mxu0 %v348
        %1446 = vmatmul.mubr.bf16.gmra.mrb[0].mxu0 %v347
        %v1447 = vpop.f32.mrb[0].mxu0
        %v1448 = vadd.f32 %v486, %v1447
        %v1449 = vpop.f32.mrb[0].mxu0
        %v1450 = vadd.f32 %v490, %v1449
        %v1451 = vpop.f32.mrb[0].mxu0
        %v1452 = vadd.f32 %v486, %v1451
        %v1453 = vpop.f32.mrb[0].mxu0
        %v1454 = vadd.f32 %v490, %v1453
        %1455 = vmatprep.mubr.bf16.mxu0 %v350
        %1456 = vmatmul.mubr.bf16.gmra.mrb[0].mxu0 %v349
        %v1457 = vpop.f32.mrb[0].mxu0
        %v1458 = vadd.f32 %v486, %v1457
        %v1459 = vpop.f32.mrb[0].mxu0
        %v1460 = vadd.f32 %v490, %v1459
        %v1461 = vpop.f32.mrb[0].mxu0
        %v1462 = vadd.f32 %v486, %v1461
        %v1463 = vpop.f32.mrb[0].mxu0
        %v1464 = vadd.f32 %v490, %v1463
        %1465 = vmatprep.mubr.bf16.mxu0 %v352
        %1466 = vmatmul.mubr.bf16.gmra.mrb[0].mxu0 %v351
        %v1467 = vpop.f32.mrb[0].mxu0
        %v1468 = vadd.f32 %v486, %v1467
        %v1469 = vpop.f32.mrb[0].mxu0
        %v1470 = vadd.f32 %v490, %v1469
        %v1471 = vpop.f32.mrb[0].mxu0
        %v1472 = vadd.f32 %v486, %v1471
        %v1473 = vpop.f32.mrb[0].mxu0
        %v1474 = vadd.f32 %v490, %v1473
        %1475 = vmatprep.mubr.bf16.mxu0 %v354
        %1476 = vmatmul.mubr.bf16.gmra.mrb[0].mxu0 %v353
        %v1477 = vpop.f32.mrb[0].mxu0
        %v1478 = vadd.f32 %v486, %v1477
        %v1479 = vpop.f32.mrb[0].mxu0
        %v1480 = vadd.f32 %v490, %v1479
        %v1481 = vpop.f32.mrb[0].mxu0
        %v1482 = vadd.f32 %v486, %v1481
        %v1483 = vpop.f32.mrb[0].mxu0
        %v1484 = vadd.f32 %v490, %v1483
        %1485 = vmatprep.mubr.bf16.mxu0 %v356
        %1486 = vmatmul.mubr.bf16.gmra.mrb[0].mxu0 %v355
        %v1487 = vpop.f32.mrb[0].mxu0
        %v1488 = vadd.f32 %v486, %v1487
        %v1489 = vpop.f32.mrb[0].mxu0
        %v1490 = vadd.f32 %v490, %v1489
        %v1491 = vpop.f32.mrb[0].mxu0
        %v1492 = vadd.f32 %v486, %v1491
        %v1493 = vpop.f32.mrb[0].mxu0
        %v1494 = vadd.f32 %v490, %v1493
        %1495 = vmatprep.mubr.bf16.mxu0 %v358
        %1496 = vmatmul.mubr.bf16.gmra.mrb[0].mxu0 %v357
        %v1497 = vpop.f32.mrb[0].mxu0
        %v1498 = vadd.f32 %v486, %v1497
        %v1499 = vpop.f32.mrb[0].mxu0
        %v1500 = vadd.f32 %v490, %v1499
        %v1501 = vpop.f32.mrb[0].mxu0
        %v1502 = vadd.f32 %v486, %v1501
        %v1503 = vpop.f32.mrb[0].mxu0
        %v1504 = vadd.f32 %v490, %v1503
        %1505 = vmatprep.mubr.bf16.mxu0 %v360
        %1506 = vmatmul.mubr.bf16.gmra.mrb[0].mxu0 %v359
        %v1507 = vpop.f32.mrb[0].mxu0
        %v1508 = vadd.f32 %v486, %v1507
        %v1509 = vpop.f32.mrb[0].mxu0
        %v1510 = vadd.f32 %v490, %v1509
        %v1511 = vpop.f32.mrb[0].mxu0
        %v1512 = vadd.f32 %v486, %v1511
        %v1513 = vpop.f32.mrb[0].mxu0
        %v1514 = vadd.f32 %v490, %v1513
        %1515 = vmatprep.mubr.bf16.mxu0 %v362
        %1516 = vmatmul.mubr.bf16.gmra.mrb[0].mxu0 %v361
        %v1517 = vpop.f32.mrb[0].mxu0
        %v1518 = vadd.f32 %v486, %v1517
        %v1519 = vpop.f32.mrb[0].mxu0
        %v1520 = vadd.f32 %v490, %v1519
        %v1521 = vpop.f32.mrb[0].mxu0
        %v1522 = vadd.f32 %v486, %v1521
        %v1523 = vpop.f32.mrb[0].mxu0
        %v1524 = vadd.f32 %v490, %v1523
        %1525 = vmatprep.mubr.bf16.mxu0 %v364
        %1526 = vmatmul.mubr.bf16.gmra.mrb[0].mxu0 %v363
        %v1527 = vpop.f32.mrb[0].mxu0
        %v1528 = vadd.f32 %v486, %v1527
        %v1529 = vpop.f32.mrb[0].mxu0
        %v1530 = vadd.f32 %v490, %v1529
        %v1531 = vpop.f32.mrb[0].mxu0
        %v1532 = vadd.f32 %v486, %v1531
        %v1533 = vpop.f32.mrb[0].mxu0
        %v1534 = vadd.f32 %v490, %v1533
        %1535 = vmatprep.mubr.bf16.mxu0 %v366
        %1536 = vmatmul.mubr.bf16.gmra.mrb[0].mxu0 %v365
        %v1537 = vpop.f32.mrb[0].mxu0
        %v1538 = vadd.f32 %v486, %v1537
        %v1539 = vpop.f32.mrb[0].mxu0
        %v1540 = vadd.f32 %v490, %v1539
        %v1541 = vpop.f32.mrb[0].mxu0
        %v1542 = vadd.f32 %v486, %v1541
        %v1543 = vpop.f32.mrb[0].mxu0
        %v1544 = vadd.f32 %v490, %v1543
        %1545 = vmatprep.mubr.bf16.mxu0 %v368
        %1546 = vmatmul.mubr.bf16.gmra.mrb[0].mxu0 %v367
        %v1547 = vpop.f32.mrb[0].mxu0
        %v1548 = vadd.f32 %v486, %v1547
        %v1549 = vpop.f32.mrb[0].mxu0
        %v1550 = vadd.f32 %v490, %v1549
        %v1551 = vpop.f32.mrb[0].mxu0
        %v1552 = vadd.f32 %v486, %v1551
        %v1553 = vpop.f32.mrb[0].mxu0
        %v1554 = vadd.f32 %v490, %v1553
        %1555 = vdwg.mxu0
        %v1556 = vmul.f32 %v1012, 0.125
        %v1557 = vmul.f32 %v1014, 0.125
        %v1558 = vmul.f32 %v1016, 0.125
        %v1559 = vmul.f32 %v1018, 0.125
        %v1560 = vmul.f32 %v1022, 0.125
        %v1561 = vmul.f32 %v1024, 0.125
        %v1562 = vmul.f32 %v1026, 0.125
        %v1563 = vmul.f32 %v1028, 0.125
        %v1564 = vmul.f32 %v1032, 0.125
        %v1565 = vmul.f32 %v1034, 0.125
        %v1566 = vmul.f32 %v1036, 0.125
        %v1567 = vmul.f32 %v1038, 0.125
        %v1568 = vmul.f32 %v1042, 0.125
        %v1569 = vmul.f32 %v1044, 0.125
        %v1570 = vmul.f32 %v1046, 0.125
        %v1571 = vmul.f32 %v1048, 0.125
        %v1572 = vmul.f32 %v1052, 0.125
        %v1573 = vmul.f32 %v1054, 0.125
        %v1574 = vmul.f32 %v1056, 0.125
        %v1575 = vmul.f32 %v1058, 0.125
        %v1576 = vmul.f32 %v1062, 0.125
        %v1577 = vmul.f32 %v1064, 0.125
        %v1578 = vmul.f32 %v1066, 0.125
        %v1579 = vmul.f32 %v1068, 0.125
        %v1580 = vmul.f32 %v1072, 0.125
        %v1581 = vmul.f32 %v1074, 0.125
        %v1582 = vmul.f32 %v1076, 0.125
        %v1583 = vmul.f32 %v1078, 0.125
        %v1584 = vmul.f32 %v1082, 0.125
        %v1585 = vmul.f32 %v1084, 0.125
        %v1586 = vmul.f32 %v1086, 0.125
        %v1587 = vmul.f32 %v1088, 0.125
        %v1588 = vmul.f32 %v1092, 0.125
        %v1589 = vmul.f32 %v1094, 0.125
        %v1590 = vmul.f32 %v1096, 0.125
        %v1591 = vmul.f32 %v1098, 0.125
        %v1592 = vmul.f32 %v1102, 0.125
        %v1593 = vmul.f32 %v1104, 0.125
        %v1594 = vmul.f32 %v1106, 0.125
        %v1595 = vmul.f32 %v1108, 0.125
        %v1596 = vmul.f32 %v1112, 0.125
        %v1597 = vmul.f32 %v1114, 0.125
        %v1598 = vmul.f32 %v1116, 0.125
        %v1599 = vmul.f32 %v1118, 0.125
        %v1600 = vmul.f32 %v1122, 0.125
        %v1601 = vmul.f32 %v1124, 0.125
        %v1602 = vmul.f32 %v1126, 0.125
        %v1603 = vmul.f32 %v1128, 0.125
        %v1604 = vmul.f32 %v1132, 0.125
        %v1605 = vmul.f32 %v1134, 0.125
        %v1606 = vmul.f32 %v1136, 0.125
        %v1607 = vmul.f32 %v1138, 0.125
        %v1608 = vmul.f32 %v1142, 0.125
        %v1609 = vmul.f32 %v1144, 0.125
        %v1610 = vmul.f32 %v1146, 0.125
        %v1611 = vmul.f32 %v1148, 0.125
        %v1612 = vmul.f32 %v1152, 0.125
        %v1613 = vmul.f32 %v1154, 0.125
        %v1614 = vmul.f32 %v1156, 0.125
        %v1615 = vmul.f32 %v1158, 0.125
        %v1616 = vmul.f32 %v1162, 0.125
        %v1617 = vmul.f32 %v1164, 0.125
        %v1618 = vmul.f32 %v1166, 0.125
        %v1619 = vmul.f32 %v1168, 0.125
        %v1620 = vlaneseq
        %v1621 = vshrl.u32 %v1620, 7
        %v1622 = vadd.s32 %v1621, 8
        %v1623 = vadd.s32 %v1621, 16
        %v1624 = vadd.s32 %v1621, 24
        %v1625 = vadd.s32 %v1621, 32
        %v1626 = vadd.s32 %v1621, 40
        %v1627 = vadd.s32 %v1621, 48
        %v1628 = vadd.s32 %v1621, 56
        %v1629 = vadd.s32 %v1621, 64
        %v1630 = vadd.s32 %v1621, 72
        %v1631 = vadd.s32 %v1621, 80
        %v1632 = vadd.s32 %v1621, 88
        %v1633 = vadd.s32 %v1621, 96
        %v1634 = vadd.s32 %v1621, 104
        %v1635 = vadd.s32 %v1621, 112
        %v1636 = vadd.s32 %v1621, 120
        %v1637 = vadd.s32 %v1621, 128
        %v1638 = vadd.s32 %v1621, 136
        %v1639 = vadd.s32 %v1621, 144
        %v1640 = vadd.s32 %v1621, 152
        %v1641 = vadd.s32 %v1621, 160
        %v1642 = vadd.s32 %v1621, 168
        %v1643 = vadd.s32 %v1621, 176
        %v1644 = vadd.s32 %v1621, 184
        %v1645 = vadd.s32 %v1621, 192
        %v1646 = vadd.s32 %v1621, 200
        %v1647 = vadd.s32 %v1621, 208
        %v1648 = vadd.s32 %v1621, 216
        %v1649 = vadd.s32 %v1621, 224
        %v1650 = vadd.s32 %v1621, 232
        %v1651 = vadd.s32 %v1621, 240
        %v1652 = vadd.s32 %v1621, 248
        %v1653 = vlaneseq
        %v1654 = vand.u32 %v1653, 127
        %v1655 = vadd.s32 %v1654, 128
        %vm1656 = vcmp.le.s32.totalorder %v1654, %v1621
        %vm1657 = vcmp.le.s32.totalorder %v1655, %v1621
        %vm1658 = vcmp.le.s32.totalorder %v1654, %v1622
        %vm1659 = vcmp.le.s32.totalorder %v1655, %v1622
        %vm1660 = vcmp.le.s32.totalorder %v1654, %v1623
        %vm1661 = vcmp.le.s32.totalorder %v1655, %v1623
        %vm1662 = vcmp.le.s32.totalorder %v1654, %v1624
        %vm1663 = vcmp.le.s32.totalorder %v1655, %v1624
        %vm1664 = vcmp.le.s32.totalorder %v1654, %v1625
        %vm1665 = vcmp.le.s32.totalorder %v1655, %v1625
        %vm1666 = vcmp.le.s32.totalorder %v1654, %v1626
        %vm1667 = vcmp.le.s32.totalorder %v1655, %v1626
        %vm1668 = vcmp.le.s32.totalorder %v1654, %v1627
        %vm1669 = vcmp.le.s32.totalorder %v1655, %v1627
        %vm1670 = vcmp.le.s32.totalorder %v1654, %v1628
        %vm1671 = vcmp.le.s32.totalorder %v1655, %v1628
        %vm1672 = vcmp.le.s32.totalorder %v1654, %v1629
        %vm1673 = vcmp.le.s32.totalorder %v1655, %v1629
        %vm1674 = vcmp.le.s32.totalorder %v1654, %v1630
        %vm1675 = vcmp.le.s32.totalorder %v1655, %v1630
        %vm1676 = vcmp.le.s32.totalorder %v1654, %v1631
        %vm1677 = vcmp.le.s32.totalorder %v1655, %v1631
        %vm1678 = vcmp.le.s32.totalorder %v1654, %v1632
        %vm1679 = vcmp.le.s32.totalorder %v1655, %v1632
        %vm1680 = vcmp.le.s32.totalorder %v1654, %v1633
        %vm1681 = vcmp.le.s32.totalorder %v1655, %v1633
        %vm1682 = vcmp.le.s32.totalorder %v1654, %v1634
        %vm1683 = vcmp.le.s32.totalorder %v1655, %v1634
        %vm1684 = vcmp.le.s32.totalorder %v1654, %v1635
        %vm1685 = vcmp.le.s32.totalorder %v1655, %v1635
        %vm1686 = vcmp.le.s32.totalorder %v1654, %v1636
        %vm1687 = vcmp.le.s32.totalorder %v1655, %v1636
        %vm1688 = vcmp.le.s32.totalorder %v1654, %v1637
        %vm1689 = vcmp.le.s32.totalorder %v1655, %v1637
        %vm1690 = vcmp.le.s32.totalorder %v1654, %v1638
        %vm1691 = vcmp.le.s32.totalorder %v1655, %v1638
        %vm1692 = vcmp.le.s32.totalorder %v1654, %v1639
        %vm1693 = vcmp.le.s32.totalorder %v1655, %v1639
        %vm1694 = vcmp.le.s32.totalorder %v1654, %v1640
        %vm1695 = vcmp.le.s32.totalorder %v1655, %v1640
        %vm1696 = vcmp.le.s32.totalorder %v1654, %v1641
        %vm1697 = vcmp.le.s32.totalorder %v1655, %v1641
        %vm1698 = vcmp.le.s32.totalorder %v1654, %v1642
        %vm1699 = vcmp.le.s32.totalorder %v1655, %v1642
        %vm1700 = vcmp.le.s32.totalorder %v1654, %v1643
        %vm1701 = vcmp.le.s32.totalorder %v1655, %v1643
        %vm1702 = vcmp.le.s32.totalorder %v1654, %v1644
        %vm1703 = vcmp.le.s32.totalorder %v1655, %v1644
        %vm1704 = vcmp.le.s32.totalorder %v1654, %v1645
        %vm1705 = vcmp.le.s32.totalorder %v1655, %v1645
        %vm1706 = vcmp.le.s32.totalorder %v1654, %v1646
        %vm1707 = vcmp.le.s32.totalorder %v1655, %v1646
        %vm1708 = vcmp.le.s32.totalorder %v1654, %v1647
        %vm1709 = vcmp.le.s32.totalorder %v1655, %v1647
        %vm1710 = vcmp.le.s32.totalorder %v1654, %v1648
        %vm1711 = vcmp.le.s32.totalorder %v1655, %v1648
        %vm1712 = vcmp.le.s32.totalorder %v1654, %v1649
        %vm1713 = vcmp.le.s32.totalorder %v1655, %v1649
        %vm1714 = vcmp.le.s32.totalorder %v1654, %v1650
        %vm1715 = vcmp.le.s32.totalorder %v1655, %v1650
        %vm1716 = vcmp.le.s32.totalorder %v1654, %v1651
        %vm1717 = vcmp.le.s32.totalorder %v1655, %v1651
        %vm1718 = vcmp.le.s32.totalorder %v1654, %v1652
        %vm1719 = vcmp.le.s32.totalorder %v1655, %v1652
        %v1720 = vsel %vm1656, 0.0, -1e+30
        %v1721 = vsel %vm1657, 0.0, -1e+30
        %v1722 = vsel %vm1658, 0.0, -1e+30
        %v1723 = vsel %vm1659, 0.0, -1e+30
        %v1724 = vsel %vm1660, 0.0, -1e+30
        %v1725 = vsel %vm1661, 0.0, -1e+30
        %v1726 = vsel %vm1662, 0.0, -1e+30
        %v1727 = vsel %vm1663, 0.0, -1e+30
        %v1728 = vsel %vm1664, 0.0, -1e+30
        %v1729 = vsel %vm1665, 0.0, -1e+30
        %v1730 = vsel %vm1666, 0.0, -1e+30
        %v1731 = vsel %vm1667, 0.0, -1e+30
        %v1732 = vsel %vm1668, 0.0, -1e+30
        %v1733 = vsel %vm1669, 0.0, -1e+30
        %v1734 = vsel %vm1670, 0.0, -1e+30
        %v1735 = vsel %vm1671, 0.0, -1e+30
        %v1736 = vsel %vm1672, 0.0, -1e+30
        %v1737 = vsel %vm1673, 0.0, -1e+30
        %v1738 = vsel %vm1674, 0.0, -1e+30
        %v1739 = vsel %vm1675, 0.0, -1e+30
        %v1740 = vsel %vm1676, 0.0, -1e+30
        %v1741 = vsel %vm1677, 0.0, -1e+30
        %v1742 = vsel %vm1678, 0.0, -1e+30
        %v1743 = vsel %vm1679, 0.0, -1e+30
        %v1744 = vsel %vm1680, 0.0, -1e+30
        %v1745 = vsel %vm1681, 0.0, -1e+30
        %v1746 = vsel %vm1682, 0.0, -1e+30
        %v1747 = vsel %vm1683, 0.0, -1e+30
        %v1748 = vsel %vm1684, 0.0, -1e+30
        %v1749 = vsel %vm1685, 0.0, -1e+30
        %v1750 = vsel %vm1686, 0.0, -1e+30
        %v1751 = vsel %vm1687, 0.0, -1e+30
        %v1752 = vsel %vm1688, 0.0, -1e+30
        %v1753 = vsel %vm1689, 0.0, -1e+30
        %v1754 = vsel %vm1690, 0.0, -1e+30
        %v1755 = vsel %vm1691, 0.0, -1e+30
        %v1756 = vsel %vm1692, 0.0, -1e+30
        %v1757 = vsel %vm1693, 0.0, -1e+30
        %v1758 = vsel %vm1694, 0.0, -1e+30
        %v1759 = vsel %vm1695, 0.0, -1e+30
        %v1760 = vsel %vm1696, 0.0, -1e+30
        %v1761 = vsel %vm1697, 0.0, -1e+30
        %v1762 = vsel %vm1698, 0.0, -1e+30
        %v1763 = vsel %vm1699, 0.0, -1e+30
        %v1764 = vsel %vm1700, 0.0, -1e+30
        %v1765 = vsel %vm1701, 0.0, -1e+30
        %v1766 = vsel %vm1702, 0.0, -1e+30
        %v1767 = vsel %vm1703, 0.0, -1e+30
        %v1768 = vsel %vm1704, 0.0, -1e+30
        %v1769 = vsel %vm1705, 0.0, -1e+30
        %v1770 = vsel %vm1706, 0.0, -1e+30
        %v1771 = vsel %vm1707, 0.0, -1e+30
        %v1772 = vsel %vm1708, 0.0, -1e+30
        %v1773 = vsel %vm1709, 0.0, -1e+30
        %v1774 = vsel %vm1710, 0.0, -1e+30
        %v1775 = vsel %vm1711, 0.0, -1e+30
        %v1776 = vsel %vm1712, 0.0, -1e+30
        %v1777 = vsel %vm1713, 0.0, -1e+30
        %v1778 = vsel %vm1714, 0.0, -1e+30
        %v1779 = vsel %vm1715, 0.0, -1e+30
        %v1780 = vsel %vm1716, 0.0, -1e+30
        %v1781 = vsel %vm1717, 0.0, -1e+30
        %v1782 = vsel %vm1718, 0.0, -1e+30
        %v1783 = vsel %vm1719, 0.0, -1e+30
        %1784 = vst [vmem:[#allocation2] sm:$0xff] 0.0
        %1785 = vst [vmem:[#allocation2 + $0x8] sm:$0xff] 0.0
        %1786 = vst [vmem:[#allocation2 + $0x10] sm:$0xff] 0.0
        %1787 = vst [vmem:[#allocation2 + $0x18] sm:$0xff] 0.0
        %1788 = vst [vmem:[#allocation2 + $0x20] sm:$0xff] 0.0
        %1789 = vst [vmem:[#allocation2 + $0x28] sm:$0xff] 0.0
        %1790 = vst [vmem:[#allocation2 + $0x30] sm:$0xff] 0.0
        %1791 = vst [vmem:[#allocation2 + $0x38] sm:$0xff] 0.0
        %1792 = vst [vmem:[#allocation2 + $0x40] sm:$0xff] 0.0
        %1793 = vst [vmem:[#allocation2 + $0x48] sm:$0xff] 0.0
        %1794 = vst [vmem:[#allocation2 + $0x50] sm:$0xff] 0.0
        %1795 = vst [vmem:[#allocation2 + $0x58] sm:$0xff] 0.0
        %1796 = vst [vmem:[#allocation2 + $0x60] sm:$0xff] 0.0
        %1797 = vst [vmem:[#allocation2 + $0x68] sm:$0xff] 0.0
        %1798 = vst [vmem:[#allocation2 + $0x70] sm:$0xff] 0.0
        %1799 = vst [vmem:[#allocation2 + $0x78] sm:$0xff] 0.0
        %1800 = vst [vmem:[#allocation2 + $0x80] sm:$0xff] 0.0
        %1801 = vst [vmem:[#allocation2 + $0x88] sm:$0xff] 0.0
        %1802 = vst [vmem:[#allocation2 + $0x90] sm:$0xff] 0.0
        %1803 = vst [vmem:[#allocation2 + $0x98] sm:$0xff] 0.0
        %1804 = vst [vmem:[#allocation2 + $0xa0] sm:$0xff] 0.0
        %1805 = vst [vmem:[#allocation2 + $0xa8] sm:$0xff] 0.0
        %1806 = vst [vmem:[#allocation2 + $0xb0] sm:$0xff] 0.0
        %1807 = vst [vmem:[#allocation2 + $0xb8] sm:$0xff] 0.0
        %1808 = vst [vmem:[#allocation2 + $0xc0] sm:$0xff] 0.0
        %1809 = vst [vmem:[#allocation2 + $0xc8] sm:$0xff] 0.0
        %1810 = vst [vmem:[#allocation2 + $0xd0] sm:$0xff] 0.0
        %1811 = vst [vmem:[#allocation2 + $0xd8] sm:$0xff] 0.0
        %1812 = vst [vmem:[#allocation2 + $0xe0] sm:$0xff] 0.0
        %1813 = vst [vmem:[#allocation2 + $0xe8] sm:$0xff] 0.0
        %1814 = vst [vmem:[#allocation2 + $0xf0] sm:$0xff] 0.0
        %1815 = vst [vmem:[#allocation2 + $0xf8] sm:$0xff] 0.0
        %1816 = vst [vmem:[#allocation2 + $0x100] sm:$0xff] 0.0
        %1817 = vst [vmem:[#allocation2 + $0x108] sm:$0xff] 0.0
        %1818 = vst [vmem:[#allocation2 + $0x110] sm:$0xff] 0.0
        %1819 = vst [vmem:[#allocation2 + $0x118] sm:$0xff] 0.0
        %1820 = vst [vmem:[#allocation2 + $0x120] sm:$0xff] 0.0
        %1821 = vst [vmem:[#allocation2 + $0x128] sm:$0xff] 0.0
        %1822 = vst [vmem:[#allocation2 + $0x130] sm:$0xff] 0.0
        %1823 = vst [vmem:[#allocation2 + $0x138] sm:$0xff] 0.0
        %1824 = vst [vmem:[#allocation2 + $0x140] sm:$0xff] 0.0
        %1825 = vst [vmem:[#allocation2 + $0x148] sm:$0xff] 0.0
        %1826 = vst [vmem:[#allocation2 + $0x150] sm:$0xff] 0.0
        %1827 = vst [vmem:[#allocation2 + $0x158] sm:$0xff] 0.0
        %1828 = vst [vmem:[#allocation2 + $0x160] sm:$0xff] 0.0
        %1829 = vst [vmem:[#allocation2 + $0x168] sm:$0xff] 0.0
        %1830 = vst [vmem:[#allocation2 + $0x170] sm:$0xff] 0.0
        %1831 = vst [vmem:[#allocation2 + $0x178] sm:$0xff] 0.0
        %1832 = vst [vmem:[#allocation2 + $0x180] sm:$0xff] 0.0
        %1833 = vst [vmem:[#allocation2 + $0x188] sm:$0xff] 0.0
        %1834 = vst [vmem:[#allocation2 + $0x190] sm:$0xff] 0.0
        %1835 = vst [vmem:[#allocation2 + $0x198] sm:$0xff] 0.0
        %1836 = vst [vmem:[#allocation2 + $0x1a0] sm:$0xff] 0.0
        %1837 = vst [vmem:[#allocation2 + $0x1a8] sm:$0xff] 0.0
        %1838 = vst [vmem:[#allocation2 + $0x1b0] sm:$0xff] 0.0
        %1839 = vst [vmem:[#allocation2 + $0x1b8] sm:$0xff] 0.0
        %1840 = vst [vmem:[#allocation2 + $0x1c0] sm:$0xff] 0.0
        %1841 = vst [vmem:[#allocation2 + $0x1c8] sm:$0xff] 0.0
        %1842 = vst [vmem:[#allocation2 + $0x1d0] sm:$0xff] 0.0
        %1843 = vst [vmem:[#allocation2 + $0x1d8] sm:$0xff] 0.0
        %1844 = vst [vmem:[#allocation2 + $0x1e0] sm:$0xff] 0.0
        %1845 = vst [vmem:[#allocation2 + $0x1e8] sm:$0xff] 0.0
        %1846 = vst [vmem:[#allocation2 + $0x1f0] sm:$0xff] 0.0
        %1847 = vst [vmem:[#allocation2 + $0x1f8] sm:$0xff] 0.0
        %v1848 = vpack.c.bf16 %v1558, %v1556
        %v1849 = vpack.c.bf16 %v1562, %v1560
        %v1850 = vpack.c.bf16 %v1566, %v1564
        %v1851 = vpack.c.bf16 %v1570, %v1568
        %v1852 = vpack.c.bf16 %v1574, %v1572
        %v1853 = vpack.c.bf16 %v1578, %v1576
        %v1854 = vpack.c.bf16 %v1582, %v1580
        %v1855 = vpack.c.bf16 %v1586, %v1584
        %v1856 = vpack.c.bf16 %v1590, %v1588
        %v1857 = vpack.c.bf16 %v1594, %v1592
        %v1858 = vpack.c.bf16 %v1598, %v1596
        %v1859 = vpack.c.bf16 %v1602, %v1600
        %v1860 = vpack.c.bf16 %v1606, %v1604
        %v1861 = vpack.c.bf16 %v1610, %v1608
        %v1862 = vpack.c.bf16 %v1614, %v1612
        %v1863 = vpack.c.bf16 %v1618, %v1616
        %v1864 = vpack.c.bf16 %v1209, %v1205
        %v1865 = vpack.c.bf16 %v1219, %v1215
        %v1866 = vpack.c.bf16 %v1229, %v1225
        %v1867 = vpack.c.bf16 %v1239, %v1235
        %v1868 = vpack.c.bf16 %v1249, %v1245
        %v1869 = vpack.c.bf16 %v1259, %v1255
        %v1870 = vpack.c.bf16 %v1269, %v1265
        %v1871 = vpack.c.bf16 %v1279, %v1275
        %v1872 = vpack.c.bf16 %v1289, %v1285
        %v1873 = vpack.c.bf16 %v1299, %v1295
        %v1874 = vpack.c.bf16 %v1309, %v1305
        %v1875 = vpack.c.bf16 %v1319, %v1315
        %v1876 = vpack.c.bf16 %v1329, %v1325
        %v1877 = vpack.c.bf16 %v1339, %v1335
        %v1878 = vpack.c.bf16 %v1349, %v1345
        %v1879 = vpack.c.bf16 %v1359, %v1355
        %v1880 = vpack.c.bf16 %v1402, %v1398
        %v1881 = vpack.c.bf16 %v1412, %v1408
        %v1882 = vpack.c.bf16 %v1422, %v1418
        %v1883 = vpack.c.bf16 %v1432, %v1428
        %v1884 = vpack.c.bf16 %v1442, %v1438
        %v1885 = vpack.c.bf16 %v1452, %v1448
        %v1886 = vpack.c.bf16 %v1462, %v1458
        %v1887 = vpack.c.bf16 %v1472, %v1468
        %v1888 = vpack.c.bf16 %v1482, %v1478
        %v1889 = vpack.c.bf16 %v1492, %v1488
        %v1890 = vpack.c.bf16 %v1502, %v1498
        %v1891 = vpack.c.bf16 %v1512, %v1508
        %v1892 = vpack.c.bf16 %v1522, %v1518
        %v1893 = vpack.c.bf16 %v1532, %v1528
        %v1894 = vpack.c.bf16 %v1542, %v1538
        %v1895 = vpack.c.bf16 %v1552, %v1548
        %vm1896 = vcmask 523264
        %v1898 = vsel %vm1896, %v1848, 0
        %v1901 = vsel %vm1896, %v1849, 0
        %v1904 = vsel %vm1896, %v1850, 0
        %v1907 = vsel %vm1896, %v1851, 0
        %v1910 = vsel %vm1896, %v1852, 0
        %v1913 = vsel %vm1896, %v1853, 0
        %v1916 = vsel %vm1896, %v1854, 0
        %v1919 = vsel %vm1896, %v1855, 0
        %v1922 = vsel %vm1896, %v1856, 0
        %v1925 = vsel %vm1896, %v1857, 0
        %v1928 = vsel %vm1896, %v1858, 0
        %v1931 = vsel %vm1896, %v1859, 0
        %v1934 = vsel %vm1896, %v1860, 0
        %v1937 = vsel %vm1896, %v1861, 0
        %v1940 = vsel %vm1896, %v1862, 0
        %v1943 = vsel %vm1896, %v1863, 0
        %v1946 = vsel %vm1896, %v1864, 0
        %v1949 = vsel %vm1896, %v1865, 0
        %v1952 = vsel %vm1896, %v1866, 0
        %v1955 = vsel %vm1896, %v1867, 0
        %v1958 = vsel %vm1896, %v1868, 0
        %v1961 = vsel %vm1896, %v1869, 0
        %v1964 = vsel %vm1896, %v1870, 0
        %v1967 = vsel %vm1896, %v1871, 0
        %v1970 = vsel %vm1896, %v1872, 0
        %v1973 = vsel %vm1896, %v1873, 0
        %v1976 = vsel %vm1896, %v1874, 0
        %v1979 = vsel %vm1896, %v1875, 0
        %v1982 = vsel %vm1896, %v1876, 0
        %v1985 = vsel %vm1896, %v1877, 0
        %v1988 = vsel %vm1896, %v1878, 0
        %v1991 = vsel %vm1896, %v1879, 0
        %1993 = vmatprep.subr.bf16.mxu0 0
        %1994 = vmatpush1.bf16.xpose.msra.mxu0 %v1946
        %1995 = vmatprep.subr.bf16.mxu0 0
        %1996 = vmatpush1.bf16.xpose.msra.mxu0 %v1949
        %1997 = vmatprep.subr.bf16.mxu0 0
        %1998 = vmatpush1.bf16.xpose.msra.mxu0 %v1952
        %1999 = vmatprep.subr.bf16.mxu0 0
        %2000 = vmatpush1.bf16.xpose.msra.mxu0 %v1955
        %2001 = vmatprep.subr.bf16.mxu0 0
        %2002 = vmatpush1.bf16.xpose.msra.mxu0 %v1958
        %2003 = vmatprep.subr.bf16.mxu0 0
        %2004 = vmatpush1.bf16.xpose.msra.mxu0 %v1961
        %2005 = vmatprep.subr.bf16.mxu0 0
        %2006 = vmatpush1.bf16.xpose.msra.mxu0 %v1964
        %2007 = vmatprep.subr.bf16.mxu0 0
        %2008 = vmatpush1.bf16.xpose.msra.mxu0 %v1967
        %2009 = vmatprep.subr.bf16.mxu0 0
        %2010 = vmatpush1.bf16.xpose.msra.mxu0 %v1970
        %2011 = vmatprep.subr.bf16.mxu0 0
        %2012 = vmatpush1.bf16.xpose.msra.mxu0 %v1973
        %2013 = vmatprep.subr.bf16.mxu0 0
        %2014 = vmatpush1.bf16.xpose.msra.mxu0 %v1976
        %2015 = vmatprep.subr.bf16.mxu0 0
        %2016 = vmatpush1.bf16.xpose.msra.mxu0 %v1979
        %2017 = vmatprep.subr.bf16.mxu0 0
        %2018 = vmatpush1.bf16.xpose.msra.mxu0 %v1982
        %2019 = vmatprep.subr.bf16.mxu0 0
        %2020 = vmatpush1.bf16.xpose.msra.mxu0 %v1985
        %2021 = vmatprep.subr.bf16.mxu0 0
        %2022 = vmatpush1.bf16.xpose.msra.mxu0 %v1988
        %2023 = vmatprep.subr.bf16.mxu0 0
        %2024 = vmatpush1.bf16.xpose.msra.mxu0 %v1991
        %2025 = vmatprep.mubr.bf16.mxu0 0
        %2026 = vmatmul.mubr.bf16.gmra.mrb[0].mxu0 %v1898
        %v2027 = vpop.f32.mrb[0].mxu0
        %v2028 = vadd.f32 %v1720, %v2027
        %v2029 = vpop.f32.mrb[0].mxu0
        %v2030 = vadd.f32 %v1721, %v2029
        %v2031 = vpop.f32.mrb[0].mxu0
        %v2032 = vadd.f32 %v1722, %v2031
        %v2033 = vpop.f32.mrb[0].mxu0
        %v2034 = vadd.f32 %v1723, %v2033
        %2035 = vmatprep.mubr.bf16.mxu0 0
        %2036 = vmatmul.mubr.bf16.gmra.mrb[0].mxu0 %v1901
        %v2037 = vpop.f32.mrb[0].mxu0
        %v2038 = vadd.f32 %v1724, %v2037
        %v2039 = vpop.f32.mrb[0].mxu0
        %v2040 = vadd.f32 %v1725, %v2039
        %v2041 = vpop.f32.mrb[0].mxu0
        %v2042 = vadd.f32 %v1726, %v2041
        %v2043 = vpop.f32.mrb[0].mxu0
        %v2044 = vadd.f32 %v1727, %v2043
        %2045 = vmatprep.mubr.bf16.mxu0 0
        %2046 = vmatmul.mubr.bf16.gmra.mrb[0].mxu0 %v1904
        %v2047 = vpop.f32.mrb[0].mxu0
        %v2048 = vadd.f32 %v1728, %v2047
        %v2049 = vpop.f32.mrb[0].mxu0
        %v2050 = vadd.f32 %v1729, %v2049
        %v2051 = vpop.f32.mrb[0].mxu0
        %v2052 = vadd.f32 %v1730, %v2051
        %v2053 = vpop.f32.mrb[0].mxu0
        %v2054 = vadd.f32 %v1731, %v2053
        %2055 = vmatprep.mubr.bf16.mxu0 0
        %2056 = vmatmul.mubr.bf16.gmra.mrb[0].mxu0 %v1907
        %v2057 = vpop.f32.mrb[0].mxu0
        %v2058 = vadd.f32 %v1732, %v2057
        %v2059 = vpop.f32.mrb[0].mxu0
        %v2060 = vadd.f32 %v1733, %v2059
        %v2061 = vpop.f32.mrb[0].mxu0
        %v2062 = vadd.f32 %v1734, %v2061
        %v2063 = vpop.f32.mrb[0].mxu0
        %v2064 = vadd.f32 %v1735, %v2063
        %2065 = vmatprep.mubr.bf16.mxu0 0
        %2066 = vmatmul.mubr.bf16.gmra.mrb[0].mxu0 %v1910
        %v2067 = vpop.f32.mrb[0].mxu0
        %v2068 = vadd.f32 %v1736, %v2067
        %v2069 = vpop.f32.mrb[0].mxu0
        %v2070 = vadd.f32 %v1737, %v2069
        %v2071 = vpop.f32.mrb[0].mxu0
        %v2072 = vadd.f32 %v1738, %v2071
        %v2073 = vpop.f32.mrb[0].mxu0
        %v2074 = vadd.f32 %v1739, %v2073
        %2075 = vmatprep.mubr.bf16.mxu0 0
        %2076 = vmatmul.mubr.bf16.gmra.mrb[0].mxu0 %v1913
        %v2077 = vpop.f32.mrb[0].mxu0
        %v2078 = vadd.f32 %v1740, %v2077
        %v2079 = vpop.f32.mrb[0].mxu0
        %v2080 = vadd.f32 %v1741, %v2079
        %v2081 = vpop.f32.mrb[0].mxu0
        %v2082 = vadd.f32 %v1742, %v2081
        %v2083 = vpop.f32.mrb[0].mxu0
        %v2084 = vadd.f32 %v1743, %v2083
        %2085 = vmatprep.mubr.bf16.mxu0 0
        %2086 = vmatmul.mubr.bf16.gmra.mrb[0].mxu0 %v1916
        %v2087 = vpop.f32.mrb[0].mxu0
        %v2088 = vadd.f32 %v1744, %v2087
        %v2089 = vpop.f32.mrb[0].mxu0
        %v2090 = vadd.f32 %v1745, %v2089
        %v2091 = vpop.f32.mrb[0].mxu0
        %v2092 = vadd.f32 %v1746, %v2091
        %v2093 = vpop.f32.mrb[0].mxu0
        %v2094 = vadd.f32 %v1747, %v2093
        %2095 = vmatprep.mubr.bf16.mxu0 0
        %2096 = vmatmul.mubr.bf16.gmra.mrb[0].mxu0 %v1919
        %v2097 = vpop.f32.mrb[0].mxu0
        %v2098 = vadd.f32 %v1748, %v2097
        %v2099 = vpop.f32.mrb[0].mxu0
        %v2100 = vadd.f32 %v1749, %v2099
        %v2101 = vpop.f32.mrb[0].mxu0
        %v2102 = vadd.f32 %v1750, %v2101
        %v2103 = vpop.f32.mrb[0].mxu0
        %v2104 = vadd.f32 %v1751, %v2103
        %2105 = vmatprep.mubr.bf16.mxu0 0
        %2106 = vmatmul.mubr.bf16.gmra.mrb[0].mxu0 %v1922
        %v2107 = vpop.f32.mrb[0].mxu0
        %v2108 = vadd.f32 %v1752, %v2107
        %v2109 = vpop.f32.mrb[0].mxu0
        %v2110 = vadd.f32 %v1753, %v2109
        %v2111 = vpop.f32.mrb[0].mxu0
        %v2112 = vadd.f32 %v1754, %v2111
        %v2113 = vpop.f32.mrb[0].mxu0
        %v2114 = vadd.f32 %v1755, %v2113
        %2115 = vmatprep.mubr.bf16.mxu0 0
        %2116 = vmatmul.mubr.bf16.gmra.mrb[0].mxu0 %v1925
        %v2117 = vpop.f32.mrb[0].mxu0
        %v2118 = vadd.f32 %v1756, %v2117
        %v2119 = vpop.f32.mrb[0].mxu0
        %v2120 = vadd.f32 %v1757, %v2119
        %v2121 = vpop.f32.mrb[0].mxu0
        %v2122 = vadd.f32 %v1758, %v2121
        %v2123 = vpop.f32.mrb[0].mxu0
        %v2124 = vadd.f32 %v1759, %v2123
        %2125 = vmatprep.mubr.bf16.mxu0 0
        %2126 = vmatmul.mubr.bf16.gmra.mrb[0].mxu0 %v1928
        %v2127 = vpop.f32.mrb[0].mxu0
        %v2128 = vadd.f32 %v1760, %v2127
        %v2129 = vpop.f32.mrb[0].mxu0
        %v2130 = vadd.f32 %v1761, %v2129
        %v2131 = vpop.f32.mrb[0].mxu0
        %v2132 = vadd.f32 %v1762, %v2131
        %v2133 = vpop.f32.mrb[0].mxu0
        %v2134 = vadd.f32 %v1763, %v2133
        %2135 = vmatprep.mubr.bf16.mxu0 0
        %2136 = vmatmul.mubr.bf16.gmra.mrb[0].mxu0 %v1931
        %v2137 = vpop.f32.mrb[0].mxu0
        %v2138 = vadd.f32 %v1764, %v2137
        %v2139 = vpop.f32.mrb[0].mxu0
        %v2140 = vadd.f32 %v1765, %v2139
        %v2141 = vpop.f32.mrb[0].mxu0
        %v2142 = vadd.f32 %v1766, %v2141
        %v2143 = vpop.f32.mrb[0].mxu0
        %v2144 = vadd.f32 %v1767, %v2143
        %2145 = vmatprep.mubr.bf16.mxu0 0
        %2146 = vmatmul.mubr.bf16.gmra.mrb[0].mxu0 %v1934
        %v2147 = vpop.f32.mrb[0].mxu0
        %v2148 = vadd.f32 %v1768, %v2147
        %v2149 = vpop.f32.mrb[0].mxu0
        %v2150 = vadd.f32 %v1769, %v2149
        %v2151 = vpop.f32.mrb[0].mxu0
        %v2152 = vadd.f32 %v1770, %v2151
        %v2153 = vpop.f32.mrb[0].mxu0
        %v2154 = vadd.f32 %v1771, %v2153
        %2155 = vmatprep.mubr.bf16.mxu0 0
        %2156 = vmatmul.mubr.bf16.gmra.mrb[0].mxu0 %v1937
        %v2157 = vpop.f32.mrb[0].mxu0
        %v2158 = vadd.f32 %v1772, %v2157
        %v2159 = vpop.f32.mrb[0].mxu0
        %v2160 = vadd.f32 %v1773, %v2159
        %v2161 = vpop.f32.mrb[0].mxu0
        %v2162 = vadd.f32 %v1774, %v2161
        %v2163 = vpop.f32.mrb[0].mxu0
        %v2164 = vadd.f32 %v1775, %v2163
        %2165 = vmatprep.mubr.bf16.mxu0 0
        %2166 = vmatmul.mubr.bf16.gmra.mrb[0].mxu0 %v1940
        %v2167 = vpop.f32.mrb[0].mxu0
        %v2168 = vadd.f32 %v1776, %v2167
        %v2169 = vpop.f32.mrb[0].mxu0
        %v2170 = vadd.f32 %v1777, %v2169
        %v2171 = vpop.f32.mrb[0].mxu0
        %v2172 = vadd.f32 %v1778, %v2171
        %v2173 = vpop.f32.mrb[0].mxu0
        %v2174 = vadd.f32 %v1779, %v2173
        %2175 = vmatprep.mubr.bf16.mxu0 0
        %2176 = vmatmul.mubr.bf16.gmra.mrb[0].mxu0 %v1943
        %v2177 = vpop.f32.mrb[0].mxu0
        %v2178 = vadd.f32 %v1780, %v2177
        %v2179 = vpop.f32.mrb[0].mxu0
        %v2180 = vadd.f32 %v1781, %v2179
        %v2181 = vpop.f32.mrb[0].mxu0
        %v2182 = vadd.f32 %v1782, %v2181
        %v2183 = vpop.f32.mrb[0].mxu0
        %v2184 = vadd.f32 %v1783, %v2183
        %2185 = vdwg.mxu0
        %v2186 = vmax.f32 %v2028, %v2030
        %2187 = vmax.xlane.f32.xlu0 %v2186
        %v2188 = vpop.xlane.xlu0 %2187
        %v2189 = vmax.f32 %v2032, %v2034
        %2190 = vmax.xlane.f32.xlu0 %v2189
        %v2191 = vpop.xlane.xlu0 %2190
        %v2192 = vmax.f32 %v2038, %v2040
        %2193 = vmax.xlane.f32.xlu0 %v2192
        %v2194 = vpop.xlane.xlu0 %2193
        %v2195 = vmax.f32 %v2042, %v2044
        %2196 = vmax.xlane.f32.xlu0 %v2195
        %v2197 = vpop.xlane.xlu0 %2196
        %v2198 = vmax.f32 %v2048, %v2050
        %2199 = vmax.xlane.f32.xlu0 %v2198
        %v2200 = vpop.xlane.xlu0 %2199
        %v2201 = vmax.f32 %v2052, %v2054
        %2202 = vmax.xlane.f32.xlu0 %v2201
        %v2203 = vpop.xlane.xlu0 %2202
        %v2204 = vmax.f32 %v2058, %v2060
        %2205 = vmax.xlane.f32.xlu0 %v2204
        %v2206 = vpop.xlane.xlu0 %2205
        %v2207 = vmax.f32 %v2062, %v2064
        %2208 = vmax.xlane.f32.xlu0 %v2207
        %v2209 = vpop.xlane.xlu0 %2208
        %v2210 = vmax.f32 %v2068, %v2070
        %2211 = vmax.xlane.f32.xlu0 %v2210
        %v2212 = vpop.xlane.xlu0 %2211
        %v2213 = vmax.f32 %v2072, %v2074
        %2214 = vmax.xlane.f32.xlu0 %v2213
        %v2215 = vpop.xlane.xlu0 %2214
        %v2216 = vmax.f32 %v2078, %v2080
        %2217 = vmax.xlane.f32.xlu0 %v2216
        %v2218 = vpop.xlane.xlu0 %2217
        %v2219 = vmax.f32 %v2082, %v2084
        %2220 = vmax.xlane.f32.xlu0 %v2219
        %v2221 = vpop.xlane.xlu0 %2220
        %v2222 = vmax.f32 %v2088, %v2090
        %2223 = vmax.xlane.f32.xlu0 %v2222
        %v2224 = vpop.xlane.xlu0 %2223
        %v2225 = vmax.f32 %v2092, %v2094
        %2226 = vmax.xlane.f32.xlu0 %v2225
        %v2227 = vpop.xlane.xlu0 %2226
        %v2228 = vmax.f32 %v2098, %v2100
        %2229 = vmax.xlane.f32.xlu0 %v2228
        %v2230 = vpop.xlane.xlu0 %2229
        %v2231 = vmax.f32 %v2102, %v2104
        %2232 = vmax.xlane.f32.xlu0 %v2231
        %v2233 = vpop.xlane.xlu0 %2232
        %v2234 = vmax.f32 %v2108, %v2110
        %2235 = vmax.xlane.f32.xlu0 %v2234
        %v2236 = vpop.xlane.xlu0 %2235
        %v2237 = vmax.f32 %v2112, %v2114
        %2238 = vmax.xlane.f32.xlu0 %v2237
        %v2239 = vpop.xlane.xlu0 %2238
        %v2240 = vmax.f32 %v2118, %v2120
        %2241 = vmax.xlane.f32.xlu0 %v2240
        %v2242 = vpop.xlane.xlu0 %2241
        %v2243 = vmax.f32 %v2122, %v2124
        %2244 = vmax.xlane.f32.xlu0 %v2243
        %v2245 = vpop.xlane.xlu0 %2244
        %v2246 = vmax.f32 %v2128, %v2130
        %2247 = vmax.xlane.f32.xlu0 %v2246
        %v2248 = vpop.xlane.xlu0 %2247
        %v2249 = vmax.f32 %v2132, %v2134
        %2250 = vmax.xlane.f32.xlu0 %v2249
        %v2251 = vpop.xlane.xlu0 %2250
        %v2252 = vmax.f32 %v2138, %v2140
        %2253 = vmax.xlane.f32.xlu0 %v2252
        %v2254 = vpop.xlane.xlu0 %2253
        %v2255 = vmax.f32 %v2142, %v2144
        %2256 = vmax.xlane.f32.xlu0 %v2255
        %v2257 = vpop.xlane.xlu0 %2256
        %v2258 = vmax.f32 %v2148, %v2150
        %2259 = vmax.xlane.f32.xlu0 %v2258
        %v2260 = vpop.xlane.xlu0 %2259
        %v2261 = vmax.f32 %v2152, %v2154
        %2262 = vmax.xlane.f32.xlu0 %v2261
        %v2263 = vpop.xlane.xlu0 %2262
        %v2264 = vmax.f32 %v2158, %v2160
        %2265 = vmax.xlane.f32.xlu0 %v2264
        %v2266 = vpop.xlane.xlu0 %2265
        %v2267 = vmax.f32 %v2162, %v2164
        %2268 = vmax.xlane.f32.xlu0 %v2267
        %v2269 = vpop.xlane.xlu0 %2268
        %v2270 = vmax.f32 %v2168, %v2170
        %2271 = vmax.xlane.f32.xlu0 %v2270
        %v2272 = vpop.xlane.xlu0 %2271
        %v2273 = vmax.f32 %v2172, %v2174
        %2274 = vmax.xlane.f32.xlu0 %v2273
        %v2275 = vpop.xlane.xlu0 %2274
        %v2276 = vmax.f32 %v2178, %v2180
        %2277 = vmax.xlane.f32.xlu0 %v2276
        %v2278 = vpop.xlane.xlu0 %2277
        %v2279 = vmax.f32 %v2182, %v2184
        %2280 = vmax.xlane.f32.xlu0 %v2279
        %v2281 = vpop.xlane.xlu0 %2280
        %v2282 = vsub.f32 %v2028, %v2188
        %v2283 = vsub.f32 %v2030, %v2188
        %v2284 = vsub.f32 %v2032, %v2191
        %v2285 = vsub.f32 %v2034, %v2191
        %v2286 = vsub.f32 %v2038, %v2194
        %v2287 = vsub.f32 %v2040, %v2194
        %v2288 = vsub.f32 %v2042, %v2197
        %v2289 = vsub.f32 %v2044, %v2197
        %v2290 = vsub.f32 %v2048, %v2200
        %v2291 = vsub.f32 %v2050, %v2200
        %v2292 = vsub.f32 %v2052, %v2203
        %v2293 = vsub.f32 %v2054, %v2203
        %v2294 = vsub.f32 %v2058, %v2206
        %v2295 = vsub.f32 %v2060, %v2206
        %v2296 = vsub.f32 %v2062, %v2209
        %v2297 = vsub.f32 %v2064, %v2209
        %v2298 = vsub.f32 %v2068, %v2212
        %v2299 = vsub.f32 %v2070, %v2212
        %v2300 = vsub.f32 %v2072, %v2215
        %v2301 = vsub.f32 %v2074, %v2215
        %v2302 = vsub.f32 %v2078, %v2218
        %v2303 = vsub.f32 %v2080, %v2218
        %v2304 = vsub.f32 %v2082, %v2221
        %v2305 = vsub.f32 %v2084, %v2221
        %v2306 = vsub.f32 %v2088, %v2224
        %v2307 = vsub.f32 %v2090, %v2224
        %v2308 = vsub.f32 %v2092, %v2227
        %v2309 = vsub.f32 %v2094, %v2227
        %v2310 = vsub.f32 %v2098, %v2230
        %v2311 = vsub.f32 %v2100, %v2230
        %v2312 = vsub.f32 %v2102, %v2233
        %v2313 = vsub.f32 %v2104, %v2233
        %v2314 = vsub.f32 %v2108, %v2236
        %v2315 = vsub.f32 %v2110, %v2236
        %v2316 = vsub.f32 %v2112, %v2239
        %v2317 = vsub.f32 %v2114, %v2239
        %v2318 = vsub.f32 %v2118, %v2242
        %v2319 = vsub.f32 %v2120, %v2242
        %v2320 = vsub.f32 %v2122, %v2245
        %v2321 = vsub.f32 %v2124, %v2245
        %v2322 = vsub.f32 %v2128, %v2248
        %v2323 = vsub.f32 %v2130, %v2248
        %v2324 = vsub.f32 %v2132, %v2251
        %v2325 = vsub.f32 %v2134, %v2251
        %v2326 = vsub.f32 %v2138, %v2254
        %v2327 = vsub.f32 %v2140, %v2254
        %v2328 = vsub.f32 %v2142, %v2257
        %v2329 = vsub.f32 %v2144, %v2257
        %v2330 = vsub.f32 %v2148, %v2260
        %v2331 = vsub.f32 %v2150, %v2260
        %v2332 = vsub.f32 %v2152, %v2263
        %v2333 = vsub.f32 %v2154, %v2263
        %v2334 = vsub.f32 %v2158, %v2266
        %v2335 = vsub.f32 %v2160, %v2266
        %v2336 = vsub.f32 %v2162, %v2269
        %v2337 = vsub.f32 %v2164, %v2269
        %v2338 = vsub.f32 %v2168, %v2272
        %v2339 = vsub.f32 %v2170, %v2272
        %v2340 = vsub.f32 %v2172, %v2275
        %v2341 = vsub.f32 %v2174, %v2275
        %v2342 = vsub.f32 %v2178, %v2278
        %v2343 = vsub.f32 %v2180, %v2278
        %v2344 = vsub.f32 %v2182, %v2281
        %v2345 = vsub.f32 %v2184, %v2281
        %v2346 = vmul.f32 %v2282, 1.442695
        %v2347 = vpow.pop %v2346
        %v2348 = vmul.f32 %v2283, 1.442695
        %v2349 = vpow.pop %v2348
        %v2350 = vmul.f32 %v2284, 1.442695
        %v2351 = vpow.pop %v2350
        %v2352 = vmul.f32 %v2285, 1.442695
        %v2353 = vpow.pop %v2352
        %v2354 = vmul.f32 %v2286, 1.442695
        %v2355 = vpow.pop %v2354
        %v2356 = vmul.f32 %v2287, 1.442695
        %v2357 = vpow.pop %v2356
        %v2358 = vmul.f32 %v2288, 1.442695
        %v2359 = vpow.pop %v2358
        %v2360 = vmul.f32 %v2289, 1.442695
        %v2361 = vpow.pop %v2360
        %v2362 = vmul.f32 %v2290, 1.442695
        %v2363 = vpow.pop %v2362
        %v2364 = vmul.f32 %v2291, 1.442695
        %v2365 = vpow.pop %v2364
        %v2366 = vmul.f32 %v2292, 1.442695
        %v2367 = vpow.pop %v2366
        %v2368 = vmul.f32 %v2293, 1.442695
        %v2369 = vpow.pop %v2368
        %v2370 = vmul.f32 %v2294, 1.442695
        %v2371 = vpow.pop %v2370
        %v2372 = vmul.f32 %v2295, 1.442695
        %v2373 = vpow.pop %v2372
        %v2374 = vmul.f32 %v2296, 1.442695
        %v2375 = vpow.pop %v2374
        %v2376 = vmul.f32 %v2297, 1.442695
        %v2377 = vpow.pop %v2376
        %v2378 = vmul.f32 %v2298, 1.442695
        %v2379 = vpow.pop %v2378
        %v2380 = vmul.f32 %v2299, 1.442695
        %v2381 = vpow.pop %v2380
        %v2382 = vmul.f32 %v2300, 1.442695
        %v2383 = vpow.pop %v2382
        %v2384 = vmul.f32 %v2301, 1.442695
        %v2385 = vpow.pop %v2384
        %v2386 = vmul.f32 %v2302, 1.442695
        %v2387 = vpow.pop %v2386
        %v2388 = vmul.f32 %v2303, 1.442695
        %v2389 = vpow.pop %v2388
        %v2390 = vmul.f32 %v2304, 1.442695
        %v2391 = vpow.pop %v2390
        %v2392 = vmul.f32 %v2305, 1.442695
        %v2393 = vpow.pop %v2392
        %v2394 = vmul.f32 %v2306, 1.442695
        %v2395 = vpow.pop %v2394
        %v2396 = vmul.f32 %v2307, 1.442695
        %v2397 = vpow.pop %v2396
        %v2398 = vmul.f32 %v2308, 1.442695
        %v2399 = vpow.pop %v2398
        %v2400 = vmul.f32 %v2309, 1.442695
        %v2401 = vpow.pop %v2400
        %v2402 = vmul.f32 %v2310, 1.442695
        %v2403 = vpow.pop %v2402
        %v2404 = vmul.f32 %v2311, 1.442695
        %v2405 = vpow.pop %v2404
        %v2406 = vmul.f32 %v2312, 1.442695
        %v2407 = vpow.pop %v2406
        %v2408 = vmul.f32 %v2313, 1.442695
        %v2409 = vpow.pop %v2408
        %v2410 = vmul.f32 %v2314, 1.442695
        %v2411 = vpow.pop %v2410
        %v2412 = vmul.f32 %v2315, 1.442695
        %v2413 = vpow.pop %v2412
        %v2414 = vmul.f32 %v2316, 1.442695
        %v2415 = vpow.pop %v2414
        %v2416 = vmul.f32 %v2317, 1.442695
        %v2417 = vpow.pop %v2416
        %v2418 = vmul.f32 %v2318, 1.442695
        %v2419 = vpow.pop %v2418
        %v2420 = vmul.f32 %v2319, 1.442695
        %v2421 = vpow.pop %v2420
        %v2422 = vmul.f32 %v2320, 1.442695
        %v2423 = vpow.pop %v2422
        %v2424 = vmul.f32 %v2321, 1.442695
        %v2425 = vpow.pop %v2424
        %v2426 = vmul.f32 %v2322, 1.442695
        %v2427 = vpow.pop %v2426
        %v2428 = vmul.f32 %v2323, 1.442695
        %v2429 = vpow.pop %v2428
        %v2430 = vmul.f32 %v2324, 1.442695
        %v2431 = vpow.pop %v2430
        %v2432 = vmul.f32 %v2325, 1.442695
        %v2433 = vpow.pop %v2432
        %v2434 = vmul.f32 %v2326, 1.442695
        %v2435 = vpow.pop %v2434
        %v2436 = vmul.f32 %v2327, 1.442695
        %v2437 = vpow.pop %v2436
        %v2438 = vmul.f32 %v2328, 1.442695
        %v2439 = vpow.pop %v2438
        %v2440 = vmul.f32 %v2329, 1.442695
        %v2441 = vpow.pop %v2440
        %v2442 = vmul.f32 %v2330, 1.442695
        %v2443 = vpow.pop %v2442
        %v2444 = vmul.f32 %v2331, 1.442695
        %v2445 = vpow.pop %v2444
        %v2446 = vmul.f32 %v2332, 1.442695
        %v2447 = vpow.pop %v2446
        %v2448 = vmul.f32 %v2333, 1.442695
        %v2449 = vpow.pop %v2448
        %v2450 = vmul.f32 %v2334, 1.442695
        %v2451 = vpow.pop %v2450
        %v2452 = vmul.f32 %v2335, 1.442695
        %v2453 = vpow.pop %v2452
        %v2454 = vmul.f32 %v2336, 1.442695
        %v2455 = vpow.pop %v2454
        %v2456 = vmul.f32 %v2337, 1.442695
        %v2457 = vpow.pop %v2456
        %v2458 = vmul.f32 %v2338, 1.442695
        %v2459 = vpow.pop %v2458
        %v2460 = vmul.f32 %v2339, 1.442695
        %v2461 = vpow.pop %v2460
        %v2462 = vmul.f32 %v2340, 1.442695
        %v2463 = vpow.pop %v2462
        %v2464 = vmul.f32 %v2341, 1.442695
        %v2465 = vpow.pop %v2464
        %v2466 = vmul.f32 %v2342, 1.442695
        %v2467 = vpow.pop %v2466
        %v2468 = vmul.f32 %v2343, 1.442695
        %v2469 = vpow.pop %v2468
        %v2470 = vmul.f32 %v2344, 1.442695
        %v2471 = vpow.pop %v2470
        %v2472 = vmul.f32 %v2345, 1.442695
        %v2473 = vpow.pop %v2472
        %v2474 = vadd.f32 %v2347, %v2349
        %2475 = vadd.xlane.f32.xlu0 %v2474
        %v2476 = vpop.xlane.xlu0 %2475
        %v2477 = vadd.f32 %v2351, %v2353
        %2478 = vadd.xlane.f32.xlu0 %v2477
        %v2479 = vpop.xlane.xlu0 %2478
        %v2480 = vadd.f32 %v2355, %v2357
        %2481 = vadd.xlane.f32.xlu0 %v2480
        %v2482 = vpop.xlane.xlu0 %2481
        %v2483 = vadd.f32 %v2359, %v2361
        %2484 = vadd.xlane.f32.xlu0 %v2483
        %v2485 = vpop.xlane.xlu0 %2484
        %v2486 = vadd.f32 %v2363, %v2365
        %2487 = vadd.xlane.f32.xlu0 %v2486
        %v2488 = vpop.xlane.xlu0 %2487
        %v2489 = vadd.f32 %v2367, %v2369
        %2490 = vadd.xlane.f32.xlu0 %v2489
        %v2491 = vpop.xlane.xlu0 %2490
        %v2492 = vadd.f32 %v2371, %v2373
        %2493 = vadd.xlane.f32.xlu0 %v2492
        %v2494 = vpop.xlane.xlu0 %2493
        %v2495 = vadd.f32 %v2375, %v2377
        %2496 = vadd.xlane.f32.xlu0 %v2495
        %v2497 = vpop.xlane.xlu0 %2496
        %v2498 = vadd.f32 %v2379, %v2381
        %2499 = vadd.xlane.f32.xlu0 %v2498
        %v2500 = vpop.xlane.xlu0 %2499
        %v2501 = vadd.f32 %v2383, %v2385
        %2502 = vadd.xlane.f32.xlu0 %v2501
        %v2503 = vpop.xlane.xlu0 %2502
        %v2504 = vadd.f32 %v2387, %v2389
        %2505 = vadd.xlane.f32.xlu0 %v2504
        %v2506 = vpop.xlane.xlu0 %2505
        %v2507 = vadd.f32 %v2391, %v2393
        %2508 = vadd.xlane.f32.xlu0 %v2507
        %v2509 = vpop.xlane.xlu0 %2508
        %v2510 = vadd.f32 %v2395, %v2397
        %2511 = vadd.xlane.f32.xlu0 %v2510
        %v2512 = vpop.xlane.xlu0 %2511
        %v2513 = vadd.f32 %v2399, %v2401
        %2514 = vadd.xlane.f32.xlu0 %v2513
        %v2515 = vpop.xlane.xlu0 %2514
        %v2516 = vadd.f32 %v2403, %v2405
        %2517 = vadd.xlane.f32.xlu0 %v2516
        %v2518 = vpop.xlane.xlu0 %2517
        %v2519 = vadd.f32 %v2407, %v2409
        %2520 = vadd.xlane.f32.xlu0 %v2519
        %v2521 = vpop.xlane.xlu0 %2520
        %v2522 = vadd.f32 %v2411, %v2413
        %2523 = vadd.xlane.f32.xlu0 %v2522
        %v2524 = vpop.xlane.xlu0 %2523
        %v2525 = vadd.f32 %v2415, %v2417
        %2526 = vadd.xlane.f32.xlu0 %v2525
        %v2527 = vpop.xlane.xlu0 %2526
        %v2528 = vadd.f32 %v2419, %v2421
        %2529 = vadd.xlane.f32.xlu0 %v2528
        %v2530 = vpop.xlane.xlu0 %2529
        %v2531 = vadd.f32 %v2423, %v2425
        %2532 = vadd.xlane.f32.xlu0 %v2531
        %v2533 = vpop.xlane.xlu0 %2532
        %v2534 = vadd.f32 %v2427, %v2429
        %2535 = vadd.xlane.f32.xlu0 %v2534
        %v2536 = vpop.xlane.xlu0 %2535
        %v2537 = vadd.f32 %v2431, %v2433
        %2538 = vadd.xlane.f32.xlu0 %v2537
        %v2539 = vpop.xlane.xlu0 %2538
        %v2540 = vadd.f32 %v2435, %v2437
        %2541 = vadd.xlane.f32.xlu0 %v2540
        %v2542 = vpop.xlane.xlu0 %2541
        %v2543 = vadd.f32 %v2439, %v2441
        %2544 = vadd.xlane.f32.xlu0 %v2543
        %v2545 = vpop.xlane.xlu0 %2544
        %v2546 = vadd.f32 %v2443, %v2445
        %2547 = vadd.xlane.f32.xlu0 %v2546
        %v2548 = vpop.xlane.xlu0 %2547
        %v2549 = vadd.f32 %v2447, %v2449
        %2550 = vadd.xlane.f32.xlu0 %v2549
        %v2551 = vpop.xlane.xlu0 %2550
        %v2552 = vadd.f32 %v2451, %v2453
        %2553 = vadd.xlane.f32.xlu0 %v2552
        %v2554 = vpop.xlane.xlu0 %2553
        %v2555 = vadd.f32 %v2455, %v2457
        %2556 = vadd.xlane.f32.xlu0 %v2555
        %v2557 = vpop.xlane.xlu0 %2556
        %v2558 = vadd.f32 %v2459, %v2461
        %2559 = vadd.xlane.f32.xlu0 %v2558
        %v2560 = vpop.xlane.xlu0 %2559
        %v2561 = vadd.f32 %v2463, %v2465
        %2562 = vadd.xlane.f32.xlu0 %v2561
        %v2563 = vpop.xlane.xlu0 %2562
        %v2564 = vadd.f32 %v2467, %v2469
        %2565 = vadd.xlane.f32.xlu0 %v2564
        %v2566 = vpop.xlane.xlu0 %2565
        %v2567 = vadd.f32 %v2471, %v2473
        %2568 = vadd.xlane.f32.xlu0 %v2567
        %v2569 = vpop.xlane.xlu0 %2568
        %v2570 = vrcp.pop %v2476
        %v2571 = vrcp.pop %v2479
        %v2572 = vrcp.pop %v2482
        %v2573 = vrcp.pop %v2485
        %v2574 = vrcp.pop %v2488
        %v2575 = vrcp.pop %v2491
        %v2576 = vrcp.pop %v2494
        %v2577 = vrcp.pop %v2497
        %v2578 = vrcp.pop %v2500
        %v2579 = vrcp.pop %v2503
        %v2580 = vrcp.pop %v2506
        %v2581 = vrcp.pop %v2509
        %v2582 = vrcp.pop %v2512
        %v2583 = vrcp.pop %v2515
        %v2584 = vrcp.pop %v2518
        %v2585 = vrcp.pop %v2521
        %v2586 = vrcp.pop %v2524
        %v2587 = vrcp.pop %v2527
        %v2588 = vrcp.pop %v2530
        %v2589 = vrcp.pop %v2533
        %v2590 = vrcp.pop %v2536
        %v2591 = vrcp.pop %v2539
        %v2592 = vrcp.pop %v2542
        %v2593 = vrcp.pop %v2545
        %v2594 = vrcp.pop %v2548
        %v2595 = vrcp.pop %v2551
        %v2596 = vrcp.pop %v2554
        %v2597 = vrcp.pop %v2557
        %v2598 = vrcp.pop %v2560
        %v2599 = vrcp.pop %v2563
        %v2600 = vrcp.pop %v2566
        %v2601 = vrcp.pop %v2569
        %v2602 = vmul.f32 %v2347, %v2570
        %v2603 = vmul.f32 %v2349, %v2570
        %v2604 = vmul.f32 %v2351, %v2571
        %v2605 = vmul.f32 %v2353, %v2571
        %v2606 = vmul.f32 %v2355, %v2572
        %v2607 = vmul.f32 %v2357, %v2572
        %v2608 = vmul.f32 %v2359, %v2573
        %v2609 = vmul.f32 %v2361, %v2573
        %v2610 = vmul.f32 %v2363, %v2574
        %v2611 = vmul.f32 %v2365, %v2574
        %v2612 = vmul.f32 %v2367, %v2575
        %v2613 = vmul.f32 %v2369, %v2575
        %v2614 = vmul.f32 %v2371, %v2576
        %v2615 = vmul.f32 %v2373, %v2576
        %v2616 = vmul.f32 %v2375, %v2577
        %v2617 = vmul.f32 %v2377, %v2577
        %v2618 = vmul.f32 %v2379, %v2578
        %v2619 = vmul.f32 %v2381, %v2578
        %v2620 = vmul.f32 %v2383, %v2579
        %v2621 = vmul.f32 %v2385, %v2579
        %v2622 = vmul.f32 %v2387, %v2580
        %v2623 = vmul.f32 %v2389, %v2580
        %v2624 = vmul.f32 %v2391, %v2581
        %v2625 = vmul.f32 %v2393, %v2581
        %v2626 = vmul.f32 %v2395, %v2582
        %v2627 = vmul.f32 %v2397, %v2582
        %v2628 = vmul.f32 %v2399, %v2583
        %v2629 = vmul.f32 %v2401, %v2583
        %v2630 = vmul.f32 %v2403, %v2584
        %v2631 = vmul.f32 %v2405, %v2584
        %v2632 = vmul.f32 %v2407, %v2585
        %v2633 = vmul.f32 %v2409, %v2585
        %v2634 = vmul.f32 %v2411, %v2586
        %v2635 = vmul.f32 %v2413, %v2586
        %v2636 = vmul.f32 %v2415, %v2587
        %v2637 = vmul.f32 %v2417, %v2587
        %v2638 = vmul.f32 %v2419, %v2588
        %v2639 = vmul.f32 %v2421, %v2588
        %v2640 = vmul.f32 %v2423, %v2589
        %v2641 = vmul.f32 %v2425, %v2589
        %v2642 = vmul.f32 %v2427, %v2590
        %v2643 = vmul.f32 %v2429, %v2590
        %v2644 = vmul.f32 %v2431, %v2591
        %v2645 = vmul.f32 %v2433, %v2591
        %v2646 = vmul.f32 %v2435, %v2592
        %v2647 = vmul.f32 %v2437, %v2592
        %v2648 = vmul.f32 %v2439, %v2593
        %v2649 = vmul.f32 %v2441, %v2593
        %v2650 = vmul.f32 %v2443, %v2594
        %v2651 = vmul.f32 %v2445, %v2594
        %v2652 = vmul.f32 %v2447, %v2595
        %v2653 = vmul.f32 %v2449, %v2595
        %v2654 = vmul.f32 %v2451, %v2596
        %v2655 = vmul.f32 %v2453, %v2596
        %v2656 = vmul.f32 %v2455, %v2597
        %v2657 = vmul.f32 %v2457, %v2597
        %v2658 = vmul.f32 %v2459, %v2598
        %v2659 = vmul.f32 %v2461, %v2598
        %v2660 = vmul.f32 %v2463, %v2599
        %v2661 = vmul.f32 %v2465, %v2599
        %v2662 = vmul.f32 %v2467, %v2600
        %v2663 = vmul.f32 %v2469, %v2600
        %v2664 = vmul.f32 %v2471, %v2601
        %v2665 = vmul.f32 %v2473, %v2601
        %v2666 = vpack.c.bf16 %v2604, %v2602
        %v2667 = vpack.c.bf16 %v2605, %v2603
        %v2668 = vpack.c.bf16 %v2608, %v2606
        %v2669 = vpack.c.bf16 %v2609, %v2607
        %v2670 = vpack.c.bf16 %v2612, %v2610
        %v2671 = vpack.c.bf16 %v2613, %v2611
        %v2672 = vpack.c.bf16 %v2616, %v2614
        %v2673 = vpack.c.bf16 %v2617, %v2615
        %v2674 = vpack.c.bf16 %v2620, %v2618
        %v2675 = vpack.c.bf16 %v2621, %v2619
        %v2676 = vpack.c.bf16 %v2624, %v2622
        %v2677 = vpack.c.bf16 %v2625, %v2623
        %v2678 = vpack.c.bf16 %v2628, %v2626
        %v2679 = vpack.c.bf16 %v2629, %v2627
        %v2680 = vpack.c.bf16 %v2632, %v2630
        %v2681 = vpack.c.bf16 %v2633, %v2631
        %v2682 = vpack.c.bf16 %v2636, %v2634
        %v2683 = vpack.c.bf16 %v2637, %v2635
        %v2684 = vpack.c.bf16 %v2640, %v2638
        %v2685 = vpack.c.bf16 %v2641, %v2639
        %v2686 = vpack.c.bf16 %v2644, %v2642
        %v2687 = vpack.c.bf16 %v2645, %v2643
        %v2688 = vpack.c.bf16 %v2648, %v2646
        %v2689 = vpack.c.bf16 %v2649, %v2647
        %v2690 = vpack.c.bf16 %v2652, %v2650
        %v2691 = vpack.c.bf16 %v2653, %v2651
        %v2692 = vpack.c.bf16 %v2656, %v2654
        %v2693 = vpack.c.bf16 %v2657, %v2655
        %v2694 = vpack.c.bf16 %v2660, %v2658
        %v2695 = vpack.c.bf16 %v2661, %v2659
        %v2696 = vpack.c.bf16 %v2664, %v2662
        %v2697 = vpack.c.bf16 %v2665, %v2663
        %2698 = vmatprep.subr.bf16.mxu0 0
        %2699 = vmatpush1.bf16.msra.mxu0 %v1880
        %2700 = vmatprep.subr.bf16.mxu0 0
        %2701 = vmatpush1.bf16.msra.mxu0 %v1881
        %2702 = vmatprep.subr.bf16.mxu0 0
        %2703 = vmatpush1.bf16.msra.mxu0 %v1882
        %2704 = vmatprep.subr.bf16.mxu0 0
        %2705 = vmatpush1.bf16.msra.mxu0 %v1883
        %2706 = vmatprep.subr.bf16.mxu0 0
        %2707 = vmatpush1.bf16.msra.mxu0 %v1884
        %2708 = vmatprep.subr.bf16.mxu0 0
        %2709 = vmatpush1.bf16.msra.mxu0 %v1885
        %2710 = vmatprep.subr.bf16.mxu0 0
        %2711 = vmatpush1.bf16.msra.mxu0 %v1886
        %2712 = vmatprep.subr.bf16.mxu0 0
        %2713 = vmatpush1.bf16.msra.mxu0 %v1887
        %2714 = vmatprep.subr.bf16.mxu0 0
        %2715 = vmatpush1.bf16.msra.mxu0 %v1888
        %2716 = vmatprep.subr.bf16.mxu0 0
        %2717 = vmatpush1.bf16.msra.mxu0 %v1889
        %2718 = vmatprep.subr.bf16.mxu0 0
        %2719 = vmatpush1.bf16.msra.mxu0 %v1890
        %2720 = vmatprep.subr.bf16.mxu0 0
        %2721 = vmatpush1.bf16.msra.mxu0 %v1891
        %2722 = vmatprep.subr.bf16.mxu0 0
        %2723 = vmatpush1.bf16.msra.mxu0 %v1892
        %2724 = vmatprep.subr.bf16.mxu0 0
        %2725 = vmatpush1.bf16.msra.mxu0 %v1893
        %2726 = vmatprep.subr.bf16.mxu0 0
        %2727 = vmatpush1.bf16.msra.mxu0 %v1894
        %2728 = vmatprep.subr.bf16.mxu0 0
        %2729 = vmatpush1.bf16.msra.mxu0 %v1895
        %2730 = vmatprep.mubr.bf16.mxu0 %v2667
        %2731 = vmatmul.mubr.bf16.gmra.mrb[0].mxu0 %v2666
        %v2732 = vpop.f32.mrb[0].mxu0
        %v2733 = vadd.f32 0.0, %v2732
        %v2734 = vpop.f32.mrb[0].mxu0
        %v2735 = vpop.f32.mrb[0].mxu0
        %v2736 = vadd.f32 0.0, %v2735
        %v2737 = vpop.f32.mrb[0].mxu0
        %2738 = vmatprep.mubr.bf16.mxu0 %v2669
        %2739 = vmatmul.mubr.bf16.gmra.mrb[0].mxu0 %v2668
        %v2740 = vpop.f32.mrb[0].mxu0
        %v2741 = vadd.f32 0.0, %v2740
        %v2742 = vpop.f32.mrb[0].mxu0
        %v2743 = vpop.f32.mrb[0].mxu0
        %v2744 = vadd.f32 0.0, %v2743
        %v2745 = vpop.f32.mrb[0].mxu0
        %2746 = vmatprep.mubr.bf16.mxu0 %v2671
        %2747 = vmatmul.mubr.bf16.gmra.mrb[0].mxu0 %v2670
        %v2748 = vpop.f32.mrb[0].mxu0
        %v2749 = vadd.f32 0.0, %v2748
        %v2750 = vpop.f32.mrb[0].mxu0
        %v2751 = vpop.f32.mrb[0].mxu0
        %v2752 = vadd.f32 0.0, %v2751
        %v2753 = vpop.f32.mrb[0].mxu0
        %2754 = vmatprep.mubr.bf16.mxu0 %v2673
        %2755 = vmatmul.mubr.bf16.gmra.mrb[0].mxu0 %v2672
        %v2756 = vpop.f32.mrb[0].mxu0
        %v2757 = vadd.f32 0.0, %v2756
        %v2758 = vpop.f32.mrb[0].mxu0
        %v2759 = vpop.f32.mrb[0].mxu0
        %v2760 = vadd.f32 0.0, %v2759
        %v2761 = vpop.f32.mrb[0].mxu0
        %2762 = vmatprep.mubr.bf16.mxu0 %v2675
        %2763 = vmatmul.mubr.bf16.gmra.mrb[0].mxu0 %v2674
        %v2764 = vpop.f32.mrb[0].mxu0
        %v2765 = vadd.f32 0.0, %v2764
        %v2766 = vpop.f32.mrb[0].mxu0
        %v2767 = vpop.f32.mrb[0].mxu0
        %v2768 = vadd.f32 0.0, %v2767
        %v2769 = vpop.f32.mrb[0].mxu0
        %2770 = vmatprep.mubr.bf16.mxu0 %v2677
        %2771 = vmatmul.mubr.bf16.gmra.mrb[0].mxu0 %v2676
        %v2772 = vpop.f32.mrb[0].mxu0
        %v2773 = vadd.f32 0.0, %v2772
        %v2774 = vpop.f32.mrb[0].mxu0
        %v2775 = vpop.f32.mrb[0].mxu0
        %v2776 = vadd.f32 0.0, %v2775
        %v2777 = vpop.f32.mrb[0].mxu0
        %2778 = vmatprep.mubr.bf16.mxu0 %v2679
        %2779 = vmatmul.mubr.bf16.gmra.mrb[0].mxu0 %v2678
        %v2780 = vpop.f32.mrb[0].mxu0
        %v2781 = vadd.f32 0.0, %v2780
        %v2782 = vpop.f32.mrb[0].mxu0
        %v2783 = vpop.f32.mrb[0].mxu0
        %v2784 = vadd.f32 0.0, %v2783
        %v2785 = vpop.f32.mrb[0].mxu0
        %2786 = vmatprep.mubr.bf16.mxu0 %v2681
        %2787 = vmatmul.mubr.bf16.gmra.mrb[0].mxu0 %v2680
        %v2788 = vpop.f32.mrb[0].mxu0
        %v2789 = vadd.f32 0.0, %v2788
        %v2790 = vpop.f32.mrb[0].mxu0
        %v2791 = vpop.f32.mrb[0].mxu0
        %v2792 = vadd.f32 0.0, %v2791
        %v2793 = vpop.f32.mrb[0].mxu0
        %2794 = vmatprep.mubr.bf16.mxu0 %v2683
        %2795 = vmatmul.mubr.bf16.gmra.mrb[0].mxu0 %v2682
        %v2796 = vpop.f32.mrb[0].mxu0
        %v2797 = vadd.f32 0.0, %v2796
        %v2798 = vpop.f32.mrb[0].mxu0
        %v2799 = vpop.f32.mrb[0].mxu0
        %v2800 = vadd.f32 0.0, %v2799
        %v2801 = vpop.f32.mrb[0].mxu0
        %2802 = vmatprep.mubr.bf16.mxu0 %v2685
        %2803 = vmatmul.mubr.bf16.gmra.mrb[0].mxu0 %v2684
        %v2804 = vpop.f32.mrb[0].mxu0
        %v2805 = vadd.f32 0.0, %v2804
        %v2806 = vpop.f32.mrb[0].mxu0
        %v2807 = vpop.f32.mrb[0].mxu0
        %v2808 = vadd.f32 0.0, %v2807
        %v2809 = vpop.f32.mrb[0].mxu0
        %2810 = vmatprep.mubr.bf16.mxu0 %v2687
        %2811 = vmatmul.mubr.bf16.gmra.mrb[0].mxu0 %v2686
        %v2812 = vpop.f32.mrb[0].mxu0
        %v2813 = vadd.f32 0.0, %v2812
        %v2814 = vpop.f32.mrb[0].mxu0
        %v2815 = vpop.f32.mrb[0].mxu0
        %v2816 = vadd.f32 0.0, %v2815
        %v2817 = vpop.f32.mrb[0].mxu0
        %2818 = vmatprep.mubr.bf16.mxu0 %v2689
        %2819 = vmatmul.mubr.bf16.gmra.mrb[0].mxu0 %v2688
        %v2820 = vpop.f32.mrb[0].mxu0
        %v2821 = vadd.f32 0.0, %v2820
        %v2822 = vpop.f32.mrb[0].mxu0
        %v2823 = vpop.f32.mrb[0].mxu0
        %v2824 = vadd.f32 0.0, %v2823
        %v2825 = vpop.f32.mrb[0].mxu0
        %2826 = vmatprep.mubr.bf16.mxu0 %v2691
        %2827 = vmatmul.mubr.bf16.gmra.mrb[0].mxu0 %v2690
        %v2828 = vpop.f32.mrb[0].mxu0
        %v2829 = vadd.f32 0.0, %v2828
        %v2830 = vpop.f32.mrb[0].mxu0
        %v2831 = vpop.f32.mrb[0].mxu0
        %v2832 = vadd.f32 0.0, %v2831
        %v2833 = vpop.f32.mrb[0].mxu0
        %2834 = vmatprep.mubr.bf16.mxu0 %v2693
        %2835 = vmatmul.mubr.bf16.gmra.mrb[0].mxu0 %v2692
        %v2836 = vpop.f32.mrb[0].mxu0
        %v2837 = vadd.f32 0.0, %v2836
        %v2838 = vpop.f32.mrb[0].mxu0
        %v2839 = vpop.f32.mrb[0].mxu0
        %v2840 = vadd.f32 0.0, %v2839
        %v2841 = vpop.f32.mrb[0].mxu0
        %2842 = vmatprep.mubr.bf16.mxu0 %v2695
        %2843 = vmatmul.mubr.bf16.gmra.mrb[0].mxu0 %v2694
        %v2844 = vpop.f32.mrb[0].mxu0
        %v2845 = vadd.f32 0.0, %v2844
        %v2846 = vpop.f32.mrb[0].mxu0
        %v2847 = vpop.f32.mrb[0].mxu0
        %v2848 = vadd.f32 0.0, %v2847
        %v2849 = vpop.f32.mrb[0].mxu0
        %2850 = vmatprep.mubr.bf16.mxu0 %v2697
        %2851 = vmatmul.mubr.bf16.gmra.mrb[0].mxu0 %v2696
        %v2852 = vpop.f32.mrb[0].mxu0
        %v2853 = vadd.f32 0.0, %v2852
        %v2854 = vpop.f32.mrb[0].mxu0
        %v2855 = vpop.f32.mrb[0].mxu0
        %v2856 = vadd.f32 0.0, %v2855
        %v2857 = vpop.f32.mrb[0].mxu0
        %2858 = vdwg.mxu0
        %v2859 = vld [vmem:[#allocation2] sm:$0xff]
        %v2860 = vld [vmem:[#allocation2 + $0x8] sm:$0xff]
        %v2861 = vld [vmem:[#allocation2 + $0x10] sm:$0xff]
        %v2862 = vld [vmem:[#allocation2 + $0x18] sm:$0xff]
        %v2863 = vld [vmem:[#allocation2 + $0x20] sm:$0xff]
        %v2864 = vld [vmem:[#allocation2 + $0x28] sm:$0xff]
        %v2865 = vld [vmem:[#allocation2 + $0x30] sm:$0xff]
        %v2866 = vld [vmem:[#allocation2 + $0x38] sm:$0xff]
        %v2867 = vld [vmem:[#allocation2 + $0x40] sm:$0xff]
        %v2868 = vld [vmem:[#allocation2 + $0x48] sm:$0xff]
        %v2869 = vld [vmem:[#allocation2 + $0x50] sm:$0xff]
        %v2870 = vld [vmem:[#allocation2 + $0x58] sm:$0xff]
        %v2871 = vld [vmem:[#allocation2 + $0x60] sm:$0xff]
        %v2872 = vld [vmem:[#allocation2 + $0x68] sm:$0xff]
        %v2873 = vld [vmem:[#allocation2 + $0x70] sm:$0xff]
        %v2874 = vld [vmem:[#allocation2 + $0x78] sm:$0xff]
        %v2875 = vld [vmem:[#allocation2 + $0x80] sm:$0xff]
        %v2876 = vld [vmem:[#allocation2 + $0x88] sm:$0xff]
        %v2877 = vld [vmem:[#allocation2 + $0x90] sm:$0xff]
        %v2878 = vld [vmem:[#allocation2 + $0x98] sm:$0xff]
        %v2879 = vld [vmem:[#allocation2 + $0xa0] sm:$0xff]
        %v2880 = vld [vmem:[#allocation2 + $0xa8] sm:$0xff]
        %v2881 = vld [vmem:[#allocation2 + $0xb0] sm:$0xff]
        %v2882 = vld [vmem:[#allocation2 + $0xb8] sm:$0xff]
        %v2883 = vld [vmem:[#allocation2 + $0xc0] sm:$0xff]
        %v2884 = vld [vmem:[#allocation2 + $0xc8] sm:$0xff]
        %v2885 = vld [vmem:[#allocation2 + $0xd0] sm:$0xff]
        %v2886 = vld [vmem:[#allocation2 + $0xd8] sm:$0xff]
        %v2887 = vld [vmem:[#allocation2 + $0xe0] sm:$0xff]
        %v2888 = vld [vmem:[#allocation2 + $0xe8] sm:$0xff]
        %v2889 = vld [vmem:[#allocation2 + $0xf0] sm:$0xff]
        %v2890 = vld [vmem:[#allocation2 + $0xf8] sm:$0xff]
        %v2891 = vld [vmem:[#allocation2 + $0x100] sm:$0xff]
        %v2892 = vld [vmem:[#allocation2 + $0x108] sm:$0xff]
        %v2893 = vld [vmem:[#allocation2 + $0x110] sm:$0xff]
        %v2894 = vld [vmem:[#allocation2 + $0x118] sm:$0xff]
        %v2895 = vld [vmem:[#allocation2 + $0x120] sm:$0xff]
        %v2896 = vld [vmem:[#allocation2 + $0x128] sm:$0xff]
        %v2897 = vld [vmem:[#allocation2 + $0x130] sm:$0xff]
        %v2898 = vld [vmem:[#allocation2 + $0x138] sm:$0xff]
        %v2899 = vld [vmem:[#allocation2 + $0x140] sm:$0xff]
        %v2900 = vld [vmem:[#allocation2 + $0x148] sm:$0xff]
        %v2901 = vld [vmem:[#allocation2 + $0x150] sm:$0xff]
        %v2902 = vld [vmem:[#allocation2 + $0x158] sm:$0xff]
        %v2903 = vld [vmem:[#allocation2 + $0x160] sm:$0xff]
        %v2904 = vld [vmem:[#allocation2 + $0x168] sm:$0xff]
        %v2905 = vld [vmem:[#allocation2 + $0x170] sm:$0xff]
        %v2906 = vld [vmem:[#allocation2 + $0x178] sm:$0xff]
        %v2907 = vld [vmem:[#allocation2 + $0x180] sm:$0xff]
        %v2908 = vld [vmem:[#allocation2 + $0x188] sm:$0xff]
        %v2909 = vld [vmem:[#allocation2 + $0x190] sm:$0xff]
        %v2910 = vld [vmem:[#allocation2 + $0x198] sm:$0xff]
        %v2911 = vld [vmem:[#allocation2 + $0x1a0] sm:$0xff]
        %v2912 = vld [vmem:[#allocation2 + $0x1a8] sm:$0xff]
        %v2913 = vld [vmem:[#allocation2 + $0x1b0] sm:$0xff]
        %v2914 = vld [vmem:[#allocation2 + $0x1b8] sm:$0xff]
        %v2915 = vld [vmem:[#allocation2 + $0x1c0] sm:$0xff]
        %v2916 = vld [vmem:[#allocation2 + $0x1c8] sm:$0xff]
        %v2917 = vld [vmem:[#allocation2 + $0x1d0] sm:$0xff]
        %v2918 = vld [vmem:[#allocation2 + $0x1d8] sm:$0xff]
        %v2919 = vld [vmem:[#allocation2 + $0x1e0] sm:$0xff]
        %v2920 = vld [vmem:[#allocation2 + $0x1e8] sm:$0xff]
        %v2921 = vld [vmem:[#allocation2 + $0x1f0] sm:$0xff]
        %v2922 = vld [vmem:[#allocation2 + $0x1f8] sm:$0xff]
        %v2923 = vpack.c.bf16 %v2736, %v2733
        %v2924 = vpack.c.bf16 %v2744, %v2741
        %v2925 = vpack.c.bf16 %v2752, %v2749
        %v2926 = vpack.c.bf16 %v2760, %v2757
        %v2927 = vpack.c.bf16 %v2768, %v2765
        %v2928 = vpack.c.bf16 %v2776, %v2773
        %v2929 = vpack.c.bf16 %v2784, %v2781
        %v2930 = vpack.c.bf16 %v2792, %v2789
        %v2931 = vpack.c.bf16 %v2800, %v2797
        %v2932 = vpack.c.bf16 %v2808, %v2805
        %v2933 = vpack.c.bf16 %v2816, %v2813
        %v2934 = vpack.c.bf16 %v2824, %v2821
        %v2935 = vpack.c.bf16 %v2832, %v2829
        %v2936 = vpack.c.bf16 %v2840, %v2837
        %v2937 = vpack.c.bf16 %v2848, %v2845
        %v2938 = vpack.c.bf16 %v2856, %v2853
        %v2939 = vld [vmem:[#allocation8] sm:$0xff]
        %v2940 = vld [vmem:[#allocation8 + $0x8] sm:$0xff]
        %v2941 = vld [vmem:[#allocation8 + $0x10] sm:$0xff]
        %v2942 = vld [vmem:[#allocation8 + $0x18] sm:$0xff]
        %v2943 = vld [vmem:[#allocation8 + $0x20] sm:$0xff]
        %v2944 = vld [vmem:[#allocation8 + $0x28] sm:$0xff]
        %v2945 = vld [vmem:[#allocation8 + $0x30] sm:$0xff]
        %v2946 = vld [vmem:[#allocation8 + $0x38] sm:$0xff]
        %v2955 = vunpack.c.l.b16 %v2939
        %v2956 = vunpack.c.h.b16 %v2939
        %v2957 = vunpack.c.l.b16 %v2940
        %v2958 = vunpack.c.h.b16 %v2940
        %v2959 = vunpack.c.l.b16 %v2941
        %v2960 = vunpack.c.h.b16 %v2941
        %v2961 = vunpack.c.l.b16 %v2942
        %v2962 = vunpack.c.h.b16 %v2942
        %v2963 = vunpack.c.l.b16 %v2943
        %v2964 = vunpack.c.h.b16 %v2943
        %v2965 = vunpack.c.l.b16 %v2944
        %v2966 = vunpack.c.h.b16 %v2944
        %v2967 = vunpack.c.l.b16 %v2945
        %v2968 = vunpack.c.h.b16 %v2945
        %v2969 = vunpack.c.l.b16 %v2946
        %v2970 = vunpack.c.h.b16 %v2946
        %v2971 = vpack.c.b16 %v2957, %v2955
        %v2972 = vpack.c.b16 %v2958, %v2956
        %v2973 = vpack.c.b16 %v2961, %v2959
        %v2974 = vpack.c.b16 %v2962, %v2960
        %v2975 = vpack.c.b16 %v2965, %v2963
        %v2976 = vpack.c.b16 %v2966, %v2964
        %v2977 = vpack.c.b16 %v2969, %v2967
        %v2978 = vpack.c.b16 %v2970, %v2968
        %v2988 = vsel %vm1896, %v2923, 0
        %v2991 = vsel %vm1896, %v2924, 0
        %v2994 = vsel %vm1896, %v2925, 0
        %v2997 = vsel %vm1896, %v2926, 0
        %v3000 = vsel %vm1896, %v2927, 0
        %v3003 = vsel %vm1896, %v2928, 0
        %v3006 = vsel %vm1896, %v2929, 0
        %v3009 = vsel %vm1896, %v2930, 0
        %v3012 = vsel %vm1896, %v2931, 0
        %v3015 = vsel %vm1896, %v2932, 0
        %v3018 = vsel %vm1896, %v2933, 0
        %v3021 = vsel %vm1896, %v2934, 0
        %v3024 = vsel %vm1896, %v2935, 0
        %v3027 = vsel %vm1896, %v2936, 0
        %v3030 = vsel %vm1896, %v2937, 0
        %v3033 = vsel %vm1896, %v2938, 0
        %3035 = vmatprep.subr.bf16.mxu0 %v2972
        %3036 = vmatpush1.bf16.msra.mxu0 %v2971
        %3037 = vmatprep.subr.bf16.mxu0 %v2974
        %3038 = vmatpush1.bf16.msra.mxu0 %v2973
        %3039 = vmatprep.subr.bf16.mxu0 %v2976
        %3040 = vmatpush1.bf16.msra.mxu0 %v2975
        %3041 = vmatprep.subr.bf16.mxu0 %v2978
        %3042 = vmatpush1.bf16.msra.mxu0 %v2977
        %3043 = vmatprep.subr.bf16.mxu0 0
        %3044 = vmatpush1.bf16.msra.mxu0 0
        %3045 = vmatprep.subr.bf16.mxu0 0
        %3046 = vmatpush1.bf16.msra.mxu0 0
        %3047 = vmatprep.subr.bf16.mxu0 0
        %3048 = vmatpush1.bf16.msra.mxu0 0
        %3049 = vmatprep.subr.bf16.mxu0 0
        %3050 = vmatpush1.bf16.msra.mxu0 0
        %3051 = vmatprep.subr.bf16.mxu0 0
        %3052 = vmatpush1.bf16.msra.mxu0 0
        %3053 = vmatprep.subr.bf16.mxu0 0
        %3054 = vmatpush1.bf16.msra.mxu0 0
        %3055 = vmatprep.subr.bf16.mxu0 0
        %3056 = vmatpush1.bf16.msra.mxu0 0
        %3057 = vmatprep.subr.bf16.mxu0 0
        %3058 = vmatpush1.bf16.msra.mxu0 0
        %3059 = vmatprep.subr.bf16.mxu0 0
        %3060 = vmatpush1.bf16.msra.mxu0 0
        %3061 = vmatprep.subr.bf16.mxu0 0
        %3062 = vmatpush1.bf16.msra.mxu0 0
        %3063 = vmatprep.subr.bf16.mxu0 0
        %3064 = vmatpush1.bf16.msra.mxu0 0
        %3065 = vmatprep.subr.bf16.mxu0 0
        %3066 = vmatpush1.bf16.msra.mxu0 0
        %3067 = vmatprep.mubr.bf16.mxu0 0
        %3068 = vmatmul.mubr.bf16.gmra.mrb[0].mxu0 %v2988
        %v3069 = vpop.f32.mrb[0].mxu0
        %v3070 = vadd.f32 0.0, %v3069
        %v3071 = vpop.f32.mrb[0].mxu0
        %v3072 = vadd.f32 0.0, %v3071
        %v3073 = vpop.f32.mrb[0].mxu0
        %v3074 = vadd.f32 0.0, %v3073
        %v3075 = vpop.f32.mrb[0].mxu0
        %v3076 = vadd.f32 0.0, %v3075
        %3077 = vmatprep.mubr.bf16.mxu0 0
        %3078 = vmatmul.mubr.bf16.gmra.mrb[0].mxu0 %v2991
        %v3079 = vpop.f32.mrb[0].mxu0
        %v3080 = vadd.f32 0.0, %v3079
        %v3081 = vpop.f32.mrb[0].mxu0
        %v3082 = vadd.f32 0.0, %v3081
        %v3083 = vpop.f32.mrb[0].mxu0
        %v3084 = vadd.f32 0.0, %v3083
        %v3085 = vpop.f32.mrb[0].mxu0
        %v3086 = vadd.f32 0.0, %v3085
        %3087 = vmatprep.mubr.bf16.mxu0 0
        %3088 = vmatmul.mubr.bf16.gmra.mrb[0].mxu0 %v2994
        %v3089 = vpop.f32.mrb[0].mxu0
        %v3090 = vadd.f32 0.0, %v3089
        %v3091 = vpop.f32.mrb[0].mxu0
        %v3092 = vadd.f32 0.0, %v3091
        %v3093 = vpop.f32.mrb[0].mxu0
        %v3094 = vadd.f32 0.0, %v3093
        %v3095 = vpop.f32.mrb[0].mxu0
        %v3096 = vadd.f32 0.0, %v3095
        %3097 = vmatprep.mubr.bf16.mxu0 0
        %3098 = vmatmul.mubr.bf16.gmra.mrb[0].mxu0 %v2997
        %v3099 = vpop.f32.mrb[0].mxu0
        %v3100 = vadd.f32 0.0, %v3099
        %v3101 = vpop.f32.mrb[0].mxu0
        %v3102 = vadd.f32 0.0, %v3101
        %v3103 = vpop.f32.mrb[0].mxu0
        %v3104 = vadd.f32 0.0, %v3103
        %v3105 = vpop.f32.mrb[0].mxu0
        %v3106 = vadd.f32 0.0, %v3105
        %3107 = vmatprep.mubr.bf16.mxu0 0
        %3108 = vmatmul.mubr.bf16.gmra.mrb[0].mxu0 %v3000
        %v3109 = vpop.f32.mrb[0].mxu0
        %v3110 = vadd.f32 0.0, %v3109
        %v3111 = vpop.f32.mrb[0].mxu0
        %v3112 = vadd.f32 0.0, %v3111
        %v3113 = vpop.f32.mrb[0].mxu0
        %v3114 = vadd.f32 0.0, %v3113
        %v3115 = vpop.f32.mrb[0].mxu0
        %v3116 = vadd.f32 0.0, %v3115
        %3117 = vmatprep.mubr.bf16.mxu0 0
        %3118 = vmatmul.mubr.bf16.gmra.mrb[0].mxu0 %v3003
        %v3119 = vpop.f32.mrb[0].mxu0
        %v3120 = vadd.f32 0.0, %v3119
        %v3121 = vpop.f32.mrb[0].mxu0
        %v3122 = vadd.f32 0.0, %v3121
        %v3123 = vpop.f32.mrb[0].mxu0
        %v3124 = vadd.f32 0.0, %v3123
        %v3125 = vpop.f32.mrb[0].mxu0
        %v3126 = vadd.f32 0.0, %v3125
        %3127 = vmatprep.mubr.bf16.mxu0 0
        %3128 = vmatmul.mubr.bf16.gmra.mrb[0].mxu0 %v3006
        %v3129 = vpop.f32.mrb[0].mxu0
        %v3130 = vadd.f32 0.0, %v3129
        %v3131 = vpop.f32.mrb[0].mxu0
        %v3132 = vadd.f32 0.0, %v3131
        %v3133 = vpop.f32.mrb[0].mxu0
        %v3134 = vadd.f32 0.0, %v3133
        %v3135 = vpop.f32.mrb[0].mxu0
        %v3136 = vadd.f32 0.0, %v3135
        %3137 = vmatprep.mubr.bf16.mxu0 0
        %3138 = vmatmul.mubr.bf16.gmra.mrb[0].mxu0 %v3009
        %v3139 = vpop.f32.mrb[0].mxu0
        %v3140 = vadd.f32 0.0, %v3139
        %v3141 = vpop.f32.mrb[0].mxu0
        %v3142 = vadd.f32 0.0, %v3141
        %v3143 = vpop.f32.mrb[0].mxu0
        %v3144 = vadd.f32 0.0, %v3143
        %v3145 = vpop.f32.mrb[0].mxu0
        %v3146 = vadd.f32 0.0, %v3145
        %3147 = vmatprep.mubr.bf16.mxu0 0
        %3148 = vmatmul.mubr.bf16.gmra.mrb[0].mxu0 %v3012
        %v3149 = vpop.f32.mrb[0].mxu0
        %v3150 = vadd.f32 0.0, %v3149
        %v3151 = vpop.f32.mrb[0].mxu0
        %v3152 = vadd.f32 0.0, %v3151
        %v3153 = vpop.f32.mrb[0].mxu0
        %v3154 = vadd.f32 0.0, %v3153
        %v3155 = vpop.f32.mrb[0].mxu0
        %v3156 = vadd.f32 0.0, %v3155
        %3157 = vmatprep.mubr.bf16.mxu0 0
        %3158 = vmatmul.mubr.bf16.gmra.mrb[0].mxu0 %v3015
        %v3159 = vpop.f32.mrb[0].mxu0
        %v3160 = vadd.f32 0.0, %v3159
        %v3161 = vpop.f32.mrb[0].mxu0
        %v3162 = vadd.f32 0.0, %v3161
        %v3163 = vpop.f32.mrb[0].mxu0
        %v3164 = vadd.f32 0.0, %v3163
        %v3165 = vpop.f32.mrb[0].mxu0
        %v3166 = vadd.f32 0.0, %v3165
        %3167 = vmatprep.mubr.bf16.mxu0 0
        %3168 = vmatmul.mubr.bf16.gmra.mrb[0].mxu0 %v3018
        %v3169 = vpop.f32.mrb[0].mxu0
        %v3170 = vadd.f32 0.0, %v3169
        %v3171 = vpop.f32.mrb[0].mxu0
        %v3172 = vadd.f32 0.0, %v3171
        %v3173 = vpop.f32.mrb[0].mxu0
        %v3174 = vadd.f32 0.0, %v3173
        %v3175 = vpop.f32.mrb[0].mxu0
        %v3176 = vadd.f32 0.0, %v3175
        %3177 = vmatprep.mubr.bf16.mxu0 0
        %3178 = vmatmul.mubr.bf16.gmra.mrb[0].mxu0 %v3021
        %v3179 = vpop.f32.mrb[0].mxu0
        %v3180 = vadd.f32 0.0, %v3179
        %v3181 = vpop.f32.mrb[0].mxu0
        %v3182 = vadd.f32 0.0, %v3181
        %v3183 = vpop.f32.mrb[0].mxu0
        %v3184 = vadd.f32 0.0, %v3183
        %v3185 = vpop.f32.mrb[0].mxu0
        %v3186 = vadd.f32 0.0, %v3185
        %3187 = vmatprep.mubr.bf16.mxu0 0
        %3188 = vmatmul.mubr.bf16.gmra.mrb[0].mxu0 %v3024
        %v3189 = vpop.f32.mrb[0].mxu0
        %v3190 = vadd.f32 0.0, %v3189
        %v3191 = vpop.f32.mrb[0].mxu0
        %v3192 = vadd.f32 0.0, %v3191
        %v3193 = vpop.f32.mrb[0].mxu0
        %v3194 = vadd.f32 0.0, %v3193
        %v3195 = vpop.f32.mrb[0].mxu0
        %v3196 = vadd.f32 0.0, %v3195
        %3197 = vmatprep.mubr.bf16.mxu0 0
        %3198 = vmatmul.mubr.bf16.gmra.mrb[0].mxu0 %v3027
        %v3199 = vpop.f32.mrb[0].mxu0
        %v3200 = vadd.f32 0.0, %v3199
        %v3201 = vpop.f32.mrb[0].mxu0
        %v3202 = vadd.f32 0.0, %v3201
        %v3203 = vpop.f32.mrb[0].mxu0
        %v3204 = vadd.f32 0.0, %v3203
        %v3205 = vpop.f32.mrb[0].mxu0
        %v3206 = vadd.f32 0.0, %v3205
        %3207 = vmatprep.mubr.bf16.mxu0 0
        %3208 = vmatmul.mubr.bf16.gmra.mrb[0].mxu0 %v3030
        %v3209 = vpop.f32.mrb[0].mxu0
        %v3210 = vadd.f32 0.0, %v3209
        %v3211 = vpop.f32.mrb[0].mxu0
        %v3212 = vadd.f32 0.0, %v3211
        %v3213 = vpop.f32.mrb[0].mxu0
        %v3214 = vadd.f32 0.0, %v3213
        %v3215 = vpop.f32.mrb[0].mxu0
        %v3216 = vadd.f32 0.0, %v3215
        %3217 = vmatprep.mubr.bf16.mxu0 0
        %3218 = vmatmul.mubr.bf16.gmra.mrb[0].mxu0 %v3033
        %v3219 = vpop.f32.mrb[0].mxu0
        %v3220 = vadd.f32 0.0, %v3219
        %v3221 = vpop.f32.mrb[0].mxu0
        %v3222 = vadd.f32 0.0, %v3221
        %v3223 = vpop.f32.mrb[0].mxu0
        %v3224 = vadd.f32 0.0, %v3223
        %v3225 = vpop.f32.mrb[0].mxu0
        %v3226 = vadd.f32 0.0, %v3225
        %3227 = vdwg.mxu0
        %v3228 = vadd.f32 %v2859, %v3070
        %v3229 = vadd.f32 %v2860, %v3072
        %v3230 = vadd.f32 %v2861, %v3074
        %v3231 = vadd.f32 %v2862, %v3076
        %v3232 = vadd.f32 %v2863, %v3080
        %v3233 = vadd.f32 %v2864, %v3082
        %v3234 = vadd.f32 %v2865, %v3084
        %v3235 = vadd.f32 %v2866, %v3086
        %v3236 = vadd.f32 %v2867, %v3090
        %v3237 = vadd.f32 %v2868, %v3092
        %v3238 = vadd.f32 %v2869, %v3094
        %v3239 = vadd.f32 %v2870, %v3096
        %v3240 = vadd.f32 %v2871, %v3100
        %v3241 = vadd.f32 %v2872, %v3102
        %v3242 = vadd.f32 %v2873, %v3104
        %v3243 = vadd.f32 %v2874, %v3106
        %v3244 = vadd.f32 %v2875, %v3110
        %v3245 = vadd.f32 %v2876, %v3112
        %v3246 = vadd.f32 %v2877, %v3114
        %v3247 = vadd.f32 %v2878, %v3116
        %v3248 = vadd.f32 %v2879, %v3120
        %v3249 = vadd.f32 %v2880, %v3122
        %v3250 = vadd.f32 %v2881, %v3124
        %v3251 = vadd.f32 %v2882, %v3126
        %v3252 = vadd.f32 %v2883, %v3130
        %v3253 = vadd.f32 %v2884, %v3132
        %v3254 = vadd.f32 %v2885, %v3134
        %v3255 = vadd.f32 %v2886, %v3136
        %v3256 = vadd.f32 %v2887, %v3140
        %v3257 = vadd.f32 %v2888, %v3142
        %v3258 = vadd.f32 %v2889, %v3144
        %v3259 = vadd.f32 %v2890, %v3146
        %v3260 = vadd.f32 %v2891, %v3150
        %v3261 = vadd.f32 %v2892, %v3152
        %v3262 = vadd.f32 %v2893, %v3154
        %v3263 = vadd.f32 %v2894, %v3156
        %v3264 = vadd.f32 %v2895, %v3160
        %v3265 = vadd.f32 %v2896, %v3162
        %v3266 = vadd.f32 %v2897, %v3164
        %v3267 = vadd.f32 %v2898, %v3166
        %v3268 = vadd.f32 %v2899, %v3170
        %v3269 = vadd.f32 %v2900, %v3172
        %v3270 = vadd.f32 %v2901, %v3174
        %v3271 = vadd.f32 %v2902, %v3176
        %v3272 = vadd.f32 %v2903, %v3180
        %v3273 = vadd.f32 %v2904, %v3182
        %v3274 = vadd.f32 %v2905, %v3184
        %v3275 = vadd.f32 %v2906, %v3186
        %v3276 = vadd.f32 %v2907, %v3190
        %v3277 = vadd.f32 %v2908, %v3192
        %v3278 = vadd.f32 %v2909, %v3194
        %v3279 = vadd.f32 %v2910, %v3196
        %v3280 = vadd.f32 %v2911, %v3200
        %v3281 = vadd.f32 %v2912, %v3202
        %v3282 = vadd.f32 %v2913, %v3204
        %v3283 = vadd.f32 %v2914, %v3206
        %v3284 = vadd.f32 %v2915, %v3210
        %v3285 = vadd.f32 %v2916, %v3212
        %v3286 = vadd.f32 %v2917, %v3214
        %v3287 = vadd.f32 %v2918, %v3216
        %v3288 = vadd.f32 %v2919, %v3220
        %v3289 = vadd.f32 %v2920, %v3222
        %v3290 = vadd.f32 %v2921, %v3224
        %v3291 = vadd.f32 %v2922, %v3226
        %3292 = vst [vmem:[#allocation2] sm:$0xff] %v3228
        %3293 = vst [vmem:[#allocation2 + $0x8] sm:$0xff] %v3229
        %3294 = vst [vmem:[#allocation2 + $0x10] sm:$0xff] %v3230
        %3295 = vst [vmem:[#allocation2 + $0x18] sm:$0xff] %v3231
        %3296 = vst [vmem:[#allocation2 + $0x20] sm:$0xff] %v3232
        %3297 = vst [vmem:[#allocation2 + $0x28] sm:$0xff] %v3233
        %3298 = vst [vmem:[#allocation2 + $0x30] sm:$0xff] %v3234
        %3299 = vst [vmem:[#allocation2 + $0x38] sm:$0xff] %v3235
        %3300 = vst [vmem:[#allocation2 + $0x40] sm:$0xff] %v3236
        %3301 = vst [vmem:[#allocation2 + $0x48] sm:$0xff] %v3237
        %3302 = vst [vmem:[#allocation2 + $0x50] sm:$0xff] %v3238
        %3303 = vst [vmem:[#allocation2 + $0x58] sm:$0xff] %v3239
        %3304 = vst [vmem:[#allocation2 + $0x60] sm:$0xff] %v3240
        %3305 = vst [vmem:[#allocation2 + $0x68] sm:$0xff] %v3241
        %3306 = vst [vmem:[#allocation2 + $0x70] sm:$0xff] %v3242
        %3307 = vst [vmem:[#allocation2 + $0x78] sm:$0xff] %v3243
        %3308 = vst [vmem:[#allocation2 + $0x80] sm:$0xff] %v3244
        %3309 = vst [vmem:[#allocation2 + $0x88] sm:$0xff] %v3245
        %3310 = vst [vmem:[#allocation2 + $0x90] sm:$0xff] %v3246
        %3311 = vst [vmem:[#allocation2 + $0x98] sm:$0xff] %v3247
        %3312 = vst [vmem:[#allocation2 + $0xa0] sm:$0xff] %v3248
        %3313 = vst [vmem:[#allocation2 + $0xa8] sm:$0xff] %v3249
        %3314 = vst [vmem:[#allocation2 + $0xb0] sm:$0xff] %v3250
        %3315 = vst [vmem:[#allocation2 + $0xb8] sm:$0xff] %v3251
        %3316 = vst [vmem:[#allocation2 + $0xc0] sm:$0xff] %v3252
        %3317 = vst [vmem:[#allocation2 + $0xc8] sm:$0xff] %v3253
        %3318 = vst [vmem:[#allocation2 + $0xd0] sm:$0xff] %v3254
        %3319 = vst [vmem:[#allocation2 + $0xd8] sm:$0xff] %v3255
        %3320 = vst [vmem:[#allocation2 + $0xe0] sm:$0xff] %v3256
        %3321 = vst [vmem:[#allocation2 + $0xe8] sm:$0xff] %v3257
        %3322 = vst [vmem:[#allocation2 + $0xf0] sm:$0xff] %v3258
        %3323 = vst [vmem:[#allocation2 + $0xf8] sm:$0xff] %v3259
        %3324 = vst [vmem:[#allocation2 + $0x100] sm:$0xff] %v3260
        %3325 = vst [vmem:[#allocation2 + $0x108] sm:$0xff] %v3261
        %3326 = vst [vmem:[#allocation2 + $0x110] sm:$0xff] %v3262
        %3327 = vst [vmem:[#allocation2 + $0x118] sm:$0xff] %v3263
        %3328 = vst [vmem:[#allocation2 + $0x120] sm:$0xff] %v3264
        %3329 = vst [vmem:[#allocation2 + $0x128] sm:$0xff] %v3265
        %3330 = vst [vmem:[#allocation2 + $0x130] sm:$0xff] %v3266
        %3331 = vst [vmem:[#allocation2 + $0x138] sm:$0xff] %v3267
        %3332 = vst [vmem:[#allocation2 + $0x140] sm:$0xff] %v3268
        %3333 = vst [vmem:[#allocation2 + $0x148] sm:$0xff] %v3269
        %3334 = vst [vmem:[#allocation2 + $0x150] sm:$0xff] %v3270
        %3335 = vst [vmem:[#allocation2 + $0x158] sm:$0xff] %v3271
        %3336 = vst [vmem:[#allocation2 + $0x160] sm:$0xff] %v3272
        %3337 = vst [vmem:[#allocation2 + $0x168] sm:$0xff] %v3273
        %3338 = vst [vmem:[#allocation2 + $0x170] sm:$0xff] %v3274
        %3339 = vst [vmem:[#allocation2 + $0x178] sm:$0xff] %v3275
        %3340 = vst [vmem:[#allocation2 + $0x180] sm:$0xff] %v3276
        %3341 = vst [vmem:[#allocation2 + $0x188] sm:$0xff] %v3277
        %3342 = vst [vmem:[#allocation2 + $0x190] sm:$0xff] %v3278
        %3343 = vst [vmem:[#allocation2 + $0x198] sm:$0xff] %v3279
        %3344 = vst [vmem:[#allocation2 + $0x1a0] sm:$0xff] %v3280
        %3345 = vst [vmem:[#allocation2 + $0x1a8] sm:$0xff] %v3281
        %3346 = vst [vmem:[#allocation2 + $0x1b0] sm:$0xff] %v3282
        %3347 = vst [vmem:[#allocation2 + $0x1b8] sm:$0xff] %v3283
        %3348 = vst [vmem:[#allocation2 + $0x1c0] sm:$0xff] %v3284
        %3349 = vst [vmem:[#allocation2 + $0x1c8] sm:$0xff] %v3285
        %3350 = vst [vmem:[#allocation2 + $0x1d0] sm:$0xff] %v3286
        %3351 = vst [vmem:[#allocation2 + $0x1d8] sm:$0xff] %v3287
        %3352 = vst [vmem:[#allocation2 + $0x1e0] sm:$0xff] %v3288
        %3353 = vst [vmem:[#allocation2 + $0x1e8] sm:$0xff] %v3289
        %3354 = vst [vmem:[#allocation2 + $0x1f0] sm:$0xff] %v3290
        %3355 = vst [vmem:[#allocation2 + $0x1f8] sm:$0xff] %v3291
        %3372 = vrot.lane.b32.xlu0 %v1848, 64
        %v3373 = vpop.permute.xlu0 %3372
        %3374 = vrot.lane.b32.xlu0 %v1849, 64
        %v3375 = vpop.permute.xlu0 %3374
        %3376 = vrot.lane.b32.xlu0 %v1850, 64
        %v3377 = vpop.permute.xlu0 %3376
        %3378 = vrot.lane.b32.xlu0 %v1851, 64
        %v3379 = vpop.permute.xlu0 %3378
        %3380 = vrot.lane.b32.xlu0 %v1852, 64
        %v3381 = vpop.permute.xlu0 %3380
        %3382 = vrot.lane.b32.xlu0 %v1853, 64
        %v3383 = vpop.permute.xlu0 %3382
        %3384 = vrot.lane.b32.xlu0 %v1854, 64
        %v3385 = vpop.permute.xlu0 %3384
        %3386 = vrot.lane.b32.xlu0 %v1855, 64
        %v3387 = vpop.permute.xlu0 %3386
        %3388 = vrot.lane.b32.xlu0 %v1856, 64
        %v3389 = vpop.permute.xlu0 %3388
        %3390 = vrot.lane.b32.xlu0 %v1857, 64
        %v3391 = vpop.permute.xlu0 %3390
        %3392 = vrot.lane.b32.xlu0 %v1858, 64
        %v3393 = vpop.permute.xlu0 %3392
        %3394 = vrot.lane.b32.xlu0 %v1859, 64
        %v3395 = vpop.permute.xlu0 %3394
        %3396 = vrot.lane.b32.xlu0 %v1860, 64
        %v3397 = vpop.permute.xlu0 %3396
        %3398 = vrot.lane.b32.xlu0 %v1861, 64
        %v3399 = vpop.permute.xlu0 %3398
        %3400 = vrot.lane.b32.xlu0 %v1862, 64
        %v3401 = vpop.permute.xlu0 %3400
        %3402 = vrot.lane.b32.xlu0 %v1863, 64
        %v3403 = vpop.permute.xlu0 %3402
        %3420 = vrot.lane.b32.xlu0 %v1864, 64
        %v3421 = vpop.permute.xlu0 %3420
        %3422 = vrot.lane.b32.xlu0 %v1865, 64
        %v3423 = vpop.permute.xlu0 %3422
        %3424 = vrot.lane.b32.xlu0 %v1866, 64
        %v3425 = vpop.permute.xlu0 %3424
        %3426 = vrot.lane.b32.xlu0 %v1867, 64
        %v3427 = vpop.permute.xlu0 %3426
        %3428 = vrot.lane.b32.xlu0 %v1868, 64
        %v3429 = vpop.permute.xlu0 %3428
        %3430 = vrot.lane.b32.xlu0 %v1869, 64
        %v3431 = vpop.permute.xlu0 %3430
        %3432 = vrot.lane.b32.xlu0 %v1870, 64
        %v3433 = vpop.permute.xlu0 %3432
        %3434 = vrot.lane.b32.xlu0 %v1871, 64
        %v3435 = vpop.permute.xlu0 %3434
        %3436 = vrot.lane.b32.xlu0 %v1872, 64
        %v3437 = vpop.permute.xlu0 %3436
        %3438 = vrot.lane.b32.xlu0 %v1873, 64
        %v3439 = vpop.permute.xlu0 %3438
        %3440 = vrot.lane.b32.xlu0 %v1874, 64
        %v3441 = vpop.permute.xlu0 %3440
        %3442 = vrot.lane.b32.xlu0 %v1875, 64
        %v3443 = vpop.permute.xlu0 %3442
        %3444 = vrot.lane.b32.xlu0 %v1876, 64
        %v3445 = vpop.permute.xlu0 %3444
        %3446 = vrot.lane.b32.xlu0 %v1877, 64
        %v3447 = vpop.permute.xlu0 %3446
        %3448 = vrot.lane.b32.xlu0 %v1878, 64
        %v3449 = vpop.permute.xlu0 %3448
        %3450 = vrot.lane.b32.xlu0 %v1879, 64
        %v3451 = vpop.permute.xlu0 %3450
        %v3453 = vsel %vm1896, %v3373, 0
        %v3456 = vsel %vm1896, %v3375, 0
        %v3459 = vsel %vm1896, %v3377, 0
        %v3462 = vsel %vm1896, %v3379, 0
        %v3465 = vsel %vm1896, %v3381, 0
        %v3468 = vsel %vm1896, %v3383, 0
        %v3471 = vsel %vm1896, %v3385, 0
        %v3474 = vsel %vm1896, %v3387, 0
        %v3477 = vsel %vm1896, %v3389, 0
        %v3480 = vsel %vm1896, %v3391, 0
        %v3483 = vsel %vm1896, %v3393, 0
        %v3486 = vsel %vm1896, %v3395, 0
        %v3489 = vsel %vm1896, %v3397, 0
        %v3492 = vsel %vm1896, %v3399, 0
        %v3495 = vsel %vm1896, %v3401, 0
        %v3498 = vsel %vm1896, %v3403, 0
        %v3501 = vsel %vm1896, %v3421, 0
        %v3504 = vsel %vm1896, %v3423, 0
        %v3507 = vsel %vm1896, %v3425, 0
        %v3510 = vsel %vm1896, %v3427, 0
        %v3513 = vsel %vm1896, %v3429, 0
        %v3516 = vsel %vm1896, %v3431, 0
        %v3519 = vsel %vm1896, %v3433, 0
        %v3522 = vsel %vm1896, %v3435, 0
        %v3525 = vsel %vm1896, %v3437, 0
        %v3528 = vsel %vm1896, %v3439, 0
        %v3531 = vsel %vm1896, %v3441, 0
        %v3534 = vsel %vm1896, %v3443, 0
        %v3537 = vsel %vm1896, %v3445, 0
        %v3540 = vsel %vm1896, %v3447, 0
        %v3543 = vsel %vm1896, %v3449, 0
        %v3546 = vsel %vm1896, %v3451, 0
        %3548 = vmatprep.subr.bf16.mxu0 0
        %3549 = vmatpush1.bf16.xpose.msra.mxu0 %v3501
        %3550 = vmatprep.subr.bf16.mxu0 0
        %3551 = vmatpush1.bf16.xpose.msra.mxu0 %v3504
        %3552 = vmatprep.subr.bf16.mxu0 0
        %3553 = vmatpush1.bf16.xpose.msra.mxu0 %v3507
        %3554 = vmatprep.subr.bf16.mxu0 0
        %3555 = vmatpush1.bf16.xpose.msra.mxu0 %v3510
        %3556 = vmatprep.subr.bf16.mxu0 0
        %3557 = vmatpush1.bf16.xpose.msra.mxu0 %v3513
        %3558 = vmatprep.subr.bf16.mxu0 0
        %3559 = vmatpush1.bf16.xpose.msra.mxu0 %v3516
        %3560 = vmatprep.subr.bf16.mxu0 0
        %3561 = vmatpush1.bf16.xpose.msra.mxu0 %v3519
        %3562 = vmatprep.subr.bf16.mxu0 0
        %3563 = vmatpush1.bf16.xpose.msra.mxu0 %v3522
        %3564 = vmatprep.subr.bf16.mxu0 0
        %3565 = vmatpush1.bf16.xpose.msra.mxu0 %v3525
        %3566 = vmatprep.subr.bf16.mxu0 0
        %3567 = vmatpush1.bf16.xpose.msra.mxu0 %v3528
        %3568 = vmatprep.subr.bf16.mxu0 0
        %3569 = vmatpush1.bf16.xpose.msra.mxu0 %v3531
        %3570 = vmatprep.subr.bf16.mxu0 0
        %3571 = vmatpush1.bf16.xpose.msra.mxu0 %v3534
        %3572 = vmatprep.subr.bf16.mxu0 0
        %3573 = vmatpush1.bf16.xpose.msra.mxu0 %v3537
        %3574 = vmatprep.subr.bf16.mxu0 0
        %3575 = vmatpush1.bf16.xpose.msra.mxu0 %v3540
        %3576 = vmatprep.subr.bf16.mxu0 0
        %3577 = vmatpush1.bf16.xpose.msra.mxu0 %v3543
        %3578 = vmatprep.subr.bf16.mxu0 0
        %3579 = vmatpush1.bf16.xpose.msra.mxu0 %v3546
        %3580 = vmatprep.mubr.bf16.mxu0 0
        %3581 = vmatmul.mubr.bf16.gmra.mrb[0].mxu0 %v3453
        %v3582 = vpop.f32.mrb[0].mxu0
        %v3583 = vadd.f32 %v1720, %v3582
        %v3584 = vpop.f32.mrb[0].mxu0
        %v3585 = vadd.f32 %v1721, %v3584
        %v3586 = vpop.f32.mrb[0].mxu0
        %v3587 = vadd.f32 %v1722, %v3586
        %v3588 = vpop.f32.mrb[0].mxu0
        %v3589 = vadd.f32 %v1723, %v3588
        %3590 = vmatprep.mubr.bf16.mxu0 0
        %3591 = vmatmul.mubr.bf16.gmra.mrb[0].mxu0 %v3456
        %v3592 = vpop.f32.mrb[0].mxu0
        %v3593 = vadd.f32 %v1724, %v3592
        %v3594 = vpop.f32.mrb[0].mxu0
        %v3595 = vadd.f32 %v1725, %v3594
        %v3596 = vpop.f32.mrb[0].mxu0
        %v3597 = vadd.f32 %v1726, %v3596
        %v3598 = vpop.f32.mrb[0].mxu0
        %v3599 = vadd.f32 %v1727, %v3598
        %3600 = vmatprep.mubr.bf16.mxu0 0
        %3601 = vmatmul.mubr.bf16.gmra.mrb[0].mxu0 %v3459
        %v3602 = vpop.f32.mrb[0].mxu0
        %v3603 = vadd.f32 %v1728, %v3602
        %v3604 = vpop.f32.mrb[0].mxu0
        %v3605 = vadd.f32 %v1729, %v3604
        %v3606 = vpop.f32.mrb[0].mxu0
        %v3607 = vadd.f32 %v1730, %v3606
        %v3608 = vpop.f32.mrb[0].mxu0
        %v3609 = vadd.f32 %v1731, %v3608
        %3610 = vmatprep.mubr.bf16.mxu0 0
        %3611 = vmatmul.mubr.bf16.gmra.mrb[0].mxu0 %v3462
        %v3612 = vpop.f32.mrb[0].mxu0
        %v3613 = vadd.f32 %v1732, %v3612
        %v3614 = vpop.f32.mrb[0].mxu0
        %v3615 = vadd.f32 %v1733, %v3614
        %v3616 = vpop.f32.mrb[0].mxu0
        %v3617 = vadd.f32 %v1734, %v3616
        %v3618 = vpop.f32.mrb[0].mxu0
        %v3619 = vadd.f32 %v1735, %v3618
        %3620 = vmatprep.mubr.bf16.mxu0 0
        %3621 = vmatmul.mubr.bf16.gmra.mrb[0].mxu0 %v3465
        %v3622 = vpop.f32.mrb[0].mxu0
        %v3623 = vadd.f32 %v1736, %v3622
        %v3624 = vpop.f32.mrb[0].mxu0
        %v3625 = vadd.f32 %v1737, %v3624
        %v3626 = vpop.f32.mrb[0].mxu0
        %v3627 = vadd.f32 %v1738, %v3626
        %v3628 = vpop.f32.mrb[0].mxu0
        %v3629 = vadd.f32 %v1739, %v3628
        %3630 = vmatprep.mubr.bf16.mxu0 0
        %3631 = vmatmul.mubr.bf16.gmra.mrb[0].mxu0 %v3468
        %v3632 = vpop.f32.mrb[0].mxu0
        %v3633 = vadd.f32 %v1740, %v3632
        %v3634 = vpop.f32.mrb[0].mxu0
        %v3635 = vadd.f32 %v1741, %v3634
        %v3636 = vpop.f32.mrb[0].mxu0
        %v3637 = vadd.f32 %v1742, %v3636
        %v3638 = vpop.f32.mrb[0].mxu0
        %v3639 = vadd.f32 %v1743, %v3638
        %3640 = vmatprep.mubr.bf16.mxu0 0
        %3641 = vmatmul.mubr.bf16.gmra.mrb[0].mxu0 %v3471
        %v3642 = vpop.f32.mrb[0].mxu0
        %v3643 = vadd.f32 %v1744, %v3642
        %v3644 = vpop.f32.mrb[0].mxu0
        %v3645 = vadd.f32 %v1745, %v3644
        %v3646 = vpop.f32.mrb[0].mxu0
        %v3647 = vadd.f32 %v1746, %v3646
        %v3648 = vpop.f32.mrb[0].mxu0
        %v3649 = vadd.f32 %v1747, %v3648
        %3650 = vmatprep.mubr.bf16.mxu0 0
        %3651 = vmatmul.mubr.bf16.gmra.mrb[0].mxu0 %v3474
        %v3652 = vpop.f32.mrb[0].mxu0
        %v3653 = vadd.f32 %v1748, %v3652
        %v3654 = vpop.f32.mrb[0].mxu0
        %v3655 = vadd.f32 %v1749, %v3654
        %v3656 = vpop.f32.mrb[0].mxu0
        %v3657 = vadd.f32 %v1750, %v3656
        %v3658 = vpop.f32.mrb[0].mxu0
        %v3659 = vadd.f32 %v1751, %v3658
        %3660 = vmatprep.mubr.bf16.mxu0 0
        %3661 = vmatmul.mubr.bf16.gmra.mrb[0].mxu0 %v3477
        %v3662 = vpop.f32.mrb[0].mxu0
        %v3663 = vadd.f32 %v1752, %v3662
        %v3664 = vpop.f32.mrb[0].mxu0
        %v3665 = vadd.f32 %v1753, %v3664
        %v3666 = vpop.f32.mrb[0].mxu0
        %v3667 = vadd.f32 %v1754, %v3666
        %v3668 = vpop.f32.mrb[0].mxu0
        %v3669 = vadd.f32 %v1755, %v3668
        %3670 = vmatprep.mubr.bf16.mxu0 0
        %3671 = vmatmul.mubr.bf16.gmra.mrb[0].mxu0 %v3480
        %v3672 = vpop.f32.mrb[0].mxu0
        %v3673 = vadd.f32 %v1756, %v3672
        %v3674 = vpop.f32.mrb[0].mxu0
        %v3675 = vadd.f32 %v1757, %v3674
        %v3676 = vpop.f32.mrb[0].mxu0
        %v3677 = vadd.f32 %v1758, %v3676
        %v3678 = vpop.f32.mrb[0].mxu0
        %v3679 = vadd.f32 %v1759, %v3678
        %3680 = vmatprep.mubr.bf16.mxu0 0
        %3681 = vmatmul.mubr.bf16.gmra.mrb[0].mxu0 %v3483
        %v3682 = vpop.f32.mrb[0].mxu0
        %v3683 = vadd.f32 %v1760, %v3682
        %v3684 = vpop.f32.mrb[0].mxu0
        %v3685 = vadd.f32 %v1761, %v3684
        %v3686 = vpop.f32.mrb[0].mxu0
        %v3687 = vadd.f32 %v1762, %v3686
        %v3688 = vpop.f32.mrb[0].mxu0
        %v3689 = vadd.f32 %v1763, %v3688
        %3690 = vmatprep.mubr.bf16.mxu0 0
        %3691 = vmatmul.mubr.bf16.gmra.mrb[0].mxu0 %v3486
        %v3692 = vpop.f32.mrb[0].mxu0
        %v3693 = vadd.f32 %v1764, %v3692
        %v3694 = vpop.f32.mrb[0].mxu0
        %v3695 = vadd.f32 %v1765, %v3694
        %v3696 = vpop.f32.mrb[0].mxu0
        %v3697 = vadd.f32 %v1766, %v3696
        %v3698 = vpop.f32.mrb[0].mxu0
        %v3699 = vadd.f32 %v1767, %v3698
        %3700 = vmatprep.mubr.bf16.mxu0 0
        %3701 = vmatmul.mubr.bf16.gmra.mrb[0].mxu0 %v3489
        %v3702 = vpop.f32.mrb[0].mxu0
        %v3703 = vadd.f32 %v1768, %v3702
        %v3704 = vpop.f32.mrb[0].mxu0
        %v3705 = vadd.f32 %v1769, %v3704
        %v3706 = vpop.f32.mrb[0].mxu0
        %v3707 = vadd.f32 %v1770, %v3706
        %v3708 = vpop.f32.mrb[0].mxu0
        %v3709 = vadd.f32 %v1771, %v3708
        %3710 = vmatprep.mubr.bf16.mxu0 0
        %3711 = vmatmul.mubr.bf16.gmra.mrb[0].mxu0 %v3492
        %v3712 = vpop.f32.mrb[0].mxu0
        %v3713 = vadd.f32 %v1772, %v3712
        %v3714 = vpop.f32.mrb[0].mxu0
        %v3715 = vadd.f32 %v1773, %v3714
        %v3716 = vpop.f32.mrb[0].mxu0
        %v3717 = vadd.f32 %v1774, %v3716
        %v3718 = vpop.f32.mrb[0].mxu0
        %v3719 = vadd.f32 %v1775, %v3718
        %3720 = vmatprep.mubr.bf16.mxu0 0
        %3721 = vmatmul.mubr.bf16.gmra.mrb[0].mxu0 %v3495
        %v3722 = vpop.f32.mrb[0].mxu0
        %v3723 = vadd.f32 %v1776, %v3722
        %v3724 = vpop.f32.mrb[0].mxu0
        %v3725 = vadd.f32 %v1777, %v3724
        %v3726 = vpop.f32.mrb[0].mxu0
        %v3727 = vadd.f32 %v1778, %v3726
        %v3728 = vpop.f32.mrb[0].mxu0
        %v3729 = vadd.f32 %v1779, %v3728
        %3730 = vmatprep.mubr.bf16.mxu0 0
        %3731 = vmatmul.mubr.bf16.gmra.mrb[0].mxu0 %v3498
        %v3732 = vpop.f32.mrb[0].mxu0
        %v3733 = vadd.f32 %v1780, %v3732
        %v3734 = vpop.f32.mrb[0].mxu0
        %v3735 = vadd.f32 %v1781, %v3734
        %v3736 = vpop.f32.mrb[0].mxu0
        %v3737 = vadd.f32 %v1782, %v3736
        %v3738 = vpop.f32.mrb[0].mxu0
        %v3739 = vadd.f32 %v1783, %v3738
        %3740 = vdwg.mxu0
        %v3741 = vmax.f32 %v3583, %v3585
        %3742 = vmax.xlane.f32.xlu0 %v3741
        %v3743 = vpop.xlane.xlu0 %3742
        %v3744 = vmax.f32 %v3587, %v3589
        %3745 = vmax.xlane.f32.xlu0 %v3744
        %v3746 = vpop.xlane.xlu0 %3745
        %v3747 = vmax.f32 %v3593, %v3595
        %3748 = vmax.xlane.f32.xlu0 %v3747
        %v3749 = vpop.xlane.xlu0 %3748
        %v3750 = vmax.f32 %v3597, %v3599
        %3751 = vmax.xlane.f32.xlu0 %v3750
        %v3752 = vpop.xlane.xlu0 %3751
        %v3753 = vmax.f32 %v3603, %v3605
        %3754 = vmax.xlane.f32.xlu0 %v3753
        %v3755 = vpop.xlane.xlu0 %3754
        %v3756 = vmax.f32 %v3607, %v3609
        %3757 = vmax.xlane.f32.xlu0 %v3756
        %v3758 = vpop.xlane.xlu0 %3757
        %v3759 = vmax.f32 %v3613, %v3615
        %3760 = vmax.xlane.f32.xlu0 %v3759
        %v3761 = vpop.xlane.xlu0 %3760
        %v3762 = vmax.f32 %v3617, %v3619
        %3763 = vmax.xlane.f32.xlu0 %v3762
        %v3764 = vpop.xlane.xlu0 %3763
        %v3765 = vmax.f32 %v3623, %v3625
        %3766 = vmax.xlane.f32.xlu0 %v3765
        %v3767 = vpop.xlane.xlu0 %3766
        %v3768 = vmax.f32 %v3627, %v3629
        %3769 = vmax.xlane.f32.xlu0 %v3768
        %v3770 = vpop.xlane.xlu0 %3769
        %v3771 = vmax.f32 %v3633, %v3635
        %3772 = vmax.xlane.f32.xlu0 %v3771
        %v3773 = vpop.xlane.xlu0 %3772
        %v3774 = vmax.f32 %v3637, %v3639
        %3775 = vmax.xlane.f32.xlu0 %v3774
        %v3776 = vpop.xlane.xlu0 %3775
        %v3777 = vmax.f32 %v3643, %v3645
        %3778 = vmax.xlane.f32.xlu0 %v3777
        %v3779 = vpop.xlane.xlu0 %3778
        %v3780 = vmax.f32 %v3647, %v3649
        %3781 = vmax.xlane.f32.xlu0 %v3780
        %v3782 = vpop.xlane.xlu0 %3781
        %v3783 = vmax.f32 %v3653, %v3655
        %3784 = vmax.xlane.f32.xlu0 %v3783
        %v3785 = vpop.xlane.xlu0 %3784
        %v3786 = vmax.f32 %v3657, %v3659
        %3787 = vmax.xlane.f32.xlu0 %v3786
        %v3788 = vpop.xlane.xlu0 %3787
        %v3789 = vmax.f32 %v3663, %v3665
        %3790 = vmax.xlane.f32.xlu0 %v3789
        %v3791 = vpop.xlane.xlu0 %3790
        %v3792 = vmax.f32 %v3667, %v3669
        %3793 = vmax.xlane.f32.xlu0 %v3792
        %v3794 = vpop.xlane.xlu0 %3793
        %v3795 = vmax.f32 %v3673, %v3675
        %3796 = vmax.xlane.f32.xlu0 %v3795
        %v3797 = vpop.xlane.xlu0 %3796
        %v3798 = vmax.f32 %v3677, %v3679
        %3799 = vmax.xlane.f32.xlu0 %v3798
        %v3800 = vpop.xlane.xlu0 %3799
        %v3801 = vmax.f32 %v3683, %v3685
        %3802 = vmax.xlane.f32.xlu0 %v3801
        %v3803 = vpop.xlane.xlu0 %3802
        %v3804 = vmax.f32 %v3687, %v3689
        %3805 = vmax.xlane.f32.xlu0 %v3804
        %v3806 = vpop.xlane.xlu0 %3805
        %v3807 = vmax.f32 %v3693, %v3695
        %3808 = vmax.xlane.f32.xlu0 %v3807
        %v3809 = vpop.xlane.xlu0 %3808
        %v3810 = vmax.f32 %v3697, %v3699
        %3811 = vmax.xlane.f32.xlu0 %v3810
        %v3812 = vpop.xlane.xlu0 %3811
        %v3813 = vmax.f32 %v3703, %v3705
        %3814 = vmax.xlane.f32.xlu0 %v3813
        %v3815 = vpop.xlane.xlu0 %3814
        %v3816 = vmax.f32 %v3707, %v3709
        %3817 = vmax.xlane.f32.xlu0 %v3816
        %v3818 = vpop.xlane.xlu0 %3817
        %v3819 = vmax.f32 %v3713, %v3715
        %3820 = vmax.xlane.f32.xlu0 %v3819
        %v3821 = vpop.xlane.xlu0 %3820
        %v3822 = vmax.f32 %v3717, %v3719
        %3823 = vmax.xlane.f32.xlu0 %v3822
        %v3824 = vpop.xlane.xlu0 %3823
        %v3825 = vmax.f32 %v3723, %v3725
        %3826 = vmax.xlane.f32.xlu0 %v3825
        %v3827 = vpop.xlane.xlu0 %3826
        %v3828 = vmax.f32 %v3727, %v3729
        %3829 = vmax.xlane.f32.xlu0 %v3828
        %v3830 = vpop.xlane.xlu0 %3829
        %v3831 = vmax.f32 %v3733, %v3735
        %3832 = vmax.xlane.f32.xlu0 %v3831
        %v3833 = vpop.xlane.xlu0 %3832
        %v3834 = vmax.f32 %v3737, %v3739
        %3835 = vmax.xlane.f32.xlu0 %v3834
        %v3836 = vpop.xlane.xlu0 %3835
        %v3837 = vsub.f32 %v3583, %v3743
        %v3838 = vsub.f32 %v3585, %v3743
        %v3839 = vsub.f32 %v3587, %v3746
        %v3840 = vsub.f32 %v3589, %v3746
        %v3841 = vsub.f32 %v3593, %v3749
        %v3842 = vsub.f32 %v3595, %v3749
        %v3843 = vsub.f32 %v3597, %v3752
        %v3844 = vsub.f32 %v3599, %v3752
        %v3845 = vsub.f32 %v3603, %v3755
        %v3846 = vsub.f32 %v3605, %v3755
        %v3847 = vsub.f32 %v3607, %v3758
        %v3848 = vsub.f32 %v3609, %v3758
        %v3849 = vsub.f32 %v3613, %v3761
        %v3850 = vsub.f32 %v3615, %v3761
        %v3851 = vsub.f32 %v3617, %v3764
        %v3852 = vsub.f32 %v3619, %v3764
        %v3853 = vsub.f32 %v3623, %v3767
        %v3854 = vsub.f32 %v3625, %v3767
        %v3855 = vsub.f32 %v3627, %v3770
        %v3856 = vsub.f32 %v3629, %v3770
        %v3857 = vsub.f32 %v3633, %v3773
        %v3858 = vsub.f32 %v3635, %v3773
        %v3859 = vsub.f32 %v3637, %v3776
        %v3860 = vsub.f32 %v3639, %v3776
        %v3861 = vsub.f32 %v3643, %v3779
        %v3862 = vsub.f32 %v3645, %v3779
        %v3863 = vsub.f32 %v3647, %v3782
        %v3864 = vsub.f32 %v3649, %v3782
        %v3865 = vsub.f32 %v3653, %v3785
        %v3866 = vsub.f32 %v3655, %v3785
        %v3867 = vsub.f32 %v3657, %v3788
        %v3868 = vsub.f32 %v3659, %v3788
        %v3869 = vsub.f32 %v3663, %v3791
        %v3870 = vsub.f32 %v3665, %v3791
        %v3871 = vsub.f32 %v3667, %v3794
        %v3872 = vsub.f32 %v3669, %v3794
        %v3873 = vsub.f32 %v3673, %v3797
        %v3874 = vsub.f32 %v3675, %v3797
        %v3875 = vsub.f32 %v3677, %v3800
        %v3876 = vsub.f32 %v3679, %v3800
        %v3877 = vsub.f32 %v3683, %v3803
        %v3878 = vsub.f32 %v3685, %v3803
        %v3879 = vsub.f32 %v3687, %v3806
        %v3880 = vsub.f32 %v3689, %v3806
        %v3881 = vsub.f32 %v3693, %v3809
        %v3882 = vsub.f32 %v3695, %v3809
        %v3883 = vsub.f32 %v3697, %v3812
        %v3884 = vsub.f32 %v3699, %v3812
        %v3885 = vsub.f32 %v3703, %v3815
        %v3886 = vsub.f32 %v3705, %v3815
        %v3887 = vsub.f32 %v3707, %v3818
        %v3888 = vsub.f32 %v3709, %v3818
        %v3889 = vsub.f32 %v3713, %v3821
        %v3890 = vsub.f32 %v3715, %v3821
        %v3891 = vsub.f32 %v3717, %v3824
        %v3892 = vsub.f32 %v3719, %v3824
        %v3893 = vsub.f32 %v3723, %v3827
        %v3894 = vsub.f32 %v3725, %v3827
        %v3895 = vsub.f32 %v3727, %v3830
        %v3896 = vsub.f32 %v3729, %v3830
        %v3897 = vsub.f32 %v3733, %v3833
        %v3898 = vsub.f32 %v3735, %v3833
        %v3899 = vsub.f32 %v3737, %v3836
        %v3900 = vsub.f32 %v3739, %v3836
        %v3901 = vmul.f32 %v3837, 1.442695
        %v3902 = vpow.pop %v3901
        %v3903 = vmul.f32 %v3838, 1.442695
        %v3904 = vpow.pop %v3903
        %v3905 = vmul.f32 %v3839, 1.442695
        %v3906 = vpow.pop %v3905
        %v3907 = vmul.f32 %v3840, 1.442695
        %v3908 = vpow.pop %v3907
        %v3909 = vmul.f32 %v3841, 1.442695
        %v3910 = vpow.pop %v3909
        %v3911 = vmul.f32 %v3842, 1.442695
        %v3912 = vpow.pop %v3911
        %v3913 = vmul.f32 %v3843, 1.442695
        %v3914 = vpow.pop %v3913
        %v3915 = vmul.f32 %v3844, 1.442695
        %v3916 = vpow.pop %v3915
        %v3917 = vmul.f32 %v3845, 1.442695
        %v3918 = vpow.pop %v3917
        %v3919 = vmul.f32 %v3846, 1.442695
        %v3920 = vpow.pop %v3919
        %v3921 = vmul.f32 %v3847, 1.442695
        %v3922 = vpow.pop %v3921
        %v3923 = vmul.f32 %v3848, 1.442695
        %v3924 = vpow.pop %v3923
        %v3925 = vmul.f32 %v3849, 1.442695
        %v3926 = vpow.pop %v3925
        %v3927 = vmul.f32 %v3850, 1.442695
        %v3928 = vpow.pop %v3927
        %v3929 = vmul.f32 %v3851, 1.442695
        %v3930 = vpow.pop %v3929
        %v3931 = vmul.f32 %v3852, 1.442695
        %v3932 = vpow.pop %v3931
        %v3933 = vmul.f32 %v3853, 1.442695
        %v3934 = vpow.pop %v3933
        %v3935 = vmul.f32 %v3854, 1.442695
        %v3936 = vpow.pop %v3935
        %v3937 = vmul.f32 %v3855, 1.442695
        %v3938 = vpow.pop %v3937
        %v3939 = vmul.f32 %v3856, 1.442695
        %v3940 = vpow.pop %v3939
        %v3941 = vmul.f32 %v3857, 1.442695
        %v3942 = vpow.pop %v3941
        %v3943 = vmul.f32 %v3858, 1.442695
        %v3944 = vpow.pop %v3943
        %v3945 = vmul.f32 %v3859, 1.442695
        %v3946 = vpow.pop %v3945
        %v3947 = vmul.f32 %v3860, 1.442695
        %v3948 = vpow.pop %v3947
        %v3949 = vmul.f32 %v3861, 1.442695
        %v3950 = vpow.pop %v3949
        %v3951 = vmul.f32 %v3862, 1.442695
        %v3952 = vpow.pop %v3951
        %v3953 = vmul.f32 %v3863, 1.442695
        %v3954 = vpow.pop %v3953
        %v3955 = vmul.f32 %v3864, 1.442695
        %v3956 = vpow.pop %v3955
        %v3957 = vmul.f32 %v3865, 1.442695
        %v3958 = vpow.pop %v3957
        %v3959 = vmul.f32 %v3866, 1.442695
        %v3960 = vpow.pop %v3959
        %v3961 = vmul.f32 %v3867, 1.442695
        %v3962 = vpow.pop %v3961
        %v3963 = vmul.f32 %v3868, 1.442695
        %v3964 = vpow.pop %v3963
        %v3965 = vmul.f32 %v3869, 1.442695
        %v3966 = vpow.pop %v3965
        %v3967 = vmul.f32 %v3870, 1.442695
        %v3968 = vpow.pop %v3967
        %v3969 = vmul.f32 %v3871, 1.442695
        %v3970 = vpow.pop %v3969
        %v3971 = vmul.f32 %v3872, 1.442695
        %v3972 = vpow.pop %v3971
        %v3973 = vmul.f32 %v3873, 1.442695
        %v3974 = vpow.pop %v3973
        %v3975 = vmul.f32 %v3874, 1.442695
        %v3976 = vpow.pop %v3975
        %v3977 = vmul.f32 %v3875, 1.442695
        %v3978 = vpow.pop %v3977
        %v3979 = vmul.f32 %v3876, 1.442695
        %v3980 = vpow.pop %v3979
        %v3981 = vmul.f32 %v3877, 1.442695
        %v3982 = vpow.pop %v3981
        %v3983 = vmul.f32 %v3878, 1.442695
        %v3984 = vpow.pop %v3983
        %v3985 = vmul.f32 %v3879, 1.442695
        %v3986 = vpow.pop %v3985
        %v3987 = vmul.f32 %v3880, 1.442695
        %v3988 = vpow.pop %v3987
        %v3989 = vmul.f32 %v3881, 1.442695
        %v3990 = vpow.pop %v3989
        %v3991 = vmul.f32 %v3882, 1.442695
        %v3992 = vpow.pop %v3991
        %v3993 = vmul.f32 %v3883, 1.442695
        %v3994 = vpow.pop %v3993
        %v3995 = vmul.f32 %v3884, 1.442695
        %v3996 = vpow.pop %v3995
        %v3997 = vmul.f32 %v3885, 1.442695
        %v3998 = vpow.pop %v3997
        %v3999 = vmul.f32 %v3886, 1.442695
        %v4000 = vpow.pop %v3999
        %v4001 = vmul.f32 %v3887, 1.442695
        %v4002 = vpow.pop %v4001
        %v4003 = vmul.f32 %v3888, 1.442695
        %v4004 = vpow.pop %v4003
        %v4005 = vmul.f32 %v3889, 1.442695
        %v4006 = vpow.pop %v4005
        %v4007 = vmul.f32 %v3890, 1.442695
        %v4008 = vpow.pop %v4007
        %v4009 = vmul.f32 %v3891, 1.442695
        %v4010 = vpow.pop %v4009
        %v4011 = vmul.f32 %v3892, 1.442695
        %v4012 = vpow.pop %v4011
        %v4013 = vmul.f32 %v3893, 1.442695
        %v4014 = vpow.pop %v4013
        %v4015 = vmul.f32 %v3894, 1.442695
        %v4016 = vpow.pop %v4015
        %v4017 = vmul.f32 %v3895, 1.442695
        %v4018 = vpow.pop %v4017
        %v4019 = vmul.f32 %v3896, 1.442695
        %v4020 = vpow.pop %v4019
        %v4021 = vmul.f32 %v3897, 1.442695
        %v4022 = vpow.pop %v4021
        %v4023 = vmul.f32 %v3898, 1.442695
        %v4024 = vpow.pop %v4023
        %v4025 = vmul.f32 %v3899, 1.442695
        %v4026 = vpow.pop %v4025
        %v4027 = vmul.f32 %v3900, 1.442695
        %v4028 = vpow.pop %v4027
        %v4029 = vadd.f32 %v3902, %v3904
        %4030 = vadd.xlane.f32.xlu0 %v4029
        %v4031 = vpop.xlane.xlu0 %4030
        %v4032 = vadd.f32 %v3906, %v3908
        %4033 = vadd.xlane.f32.xlu0 %v4032
        %v4034 = vpop.xlane.xlu0 %4033
        %v4035 = vadd.f32 %v3910, %v3912
        %4036 = vadd.xlane.f32.xlu0 %v4035
        %v4037 = vpop.xlane.xlu0 %4036
        %v4038 = vadd.f32 %v3914, %v3916
        %4039 = vadd.xlane.f32.xlu0 %v4038
        %v4040 = vpop.xlane.xlu0 %4039
        %v4041 = vadd.f32 %v3918, %v3920
        %4042 = vadd.xlane.f32.xlu0 %v4041
        %v4043 = vpop.xlane.xlu0 %4042
        %v4044 = vadd.f32 %v3922, %v3924
        %4045 = vadd.xlane.f32.xlu0 %v4044
        %v4046 = vpop.xlane.xlu0 %4045
        %v4047 = vadd.f32 %v3926, %v3928
        %4048 = vadd.xlane.f32.xlu0 %v4047
        %v4049 = vpop.xlane.xlu0 %4048
        %v4050 = vadd.f32 %v3930, %v3932
        %4051 = vadd.xlane.f32.xlu0 %v4050
        %v4052 = vpop.xlane.xlu0 %4051
        %v4053 = vadd.f32 %v3934, %v3936
        %4054 = vadd.xlane.f32.xlu0 %v4053
        %v4055 = vpop.xlane.xlu0 %4054
        %v4056 = vadd.f32 %v3938, %v3940
        %4057 = vadd.xlane.f32.xlu0 %v4056
        %v4058 = vpop.xlane.xlu0 %4057
        %v4059 = vadd.f32 %v3942, %v3944
        %4060 = vadd.xlane.f32.xlu0 %v4059
        %v4061 = vpop.xlane.xlu0 %4060
        %v4062 = vadd.f32 %v3946, %v3948
        %4063 = vadd.xlane.f32.xlu0 %v4062
        %v4064 = vpop.xlane.xlu0 %4063
        %v4065 = vadd.f32 %v3950, %v3952
        %4066 = vadd.xlane.f32.xlu0 %v4065
        %v4067 = vpop.xlane.xlu0 %4066
        %v4068 = vadd.f32 %v3954, %v3956
        %4069 = vadd.xlane.f32.xlu0 %v4068
        %v4070 = vpop.xlane.xlu0 %4069
        %v4071 = vadd.f32 %v3958, %v3960
        %4072 = vadd.xlane.f32.xlu0 %v4071
        %v4073 = vpop.xlane.xlu0 %4072
        %v4074 = vadd.f32 %v3962, %v3964
        %4075 = vadd.xlane.f32.xlu0 %v4074
        %v4076 = vpop.xlane.xlu0 %4075
        %v4077 = vadd.f32 %v3966, %v3968
        %4078 = vadd.xlane.f32.xlu0 %v4077
        %v4079 = vpop.xlane.xlu0 %4078
        %v4080 = vadd.f32 %v3970, %v3972
        %4081 = vadd.xlane.f32.xlu0 %v4080
        %v4082 = vpop.xlane.xlu0 %4081
        %v4083 = vadd.f32 %v3974, %v3976
        %4084 = vadd.xlane.f32.xlu0 %v4083
        %v4085 = vpop.xlane.xlu0 %4084
        %v4086 = vadd.f32 %v3978, %v3980
        %4087 = vadd.xlane.f32.xlu0 %v4086
        %v4088 = vpop.xlane.xlu0 %4087
        %v4089 = vadd.f32 %v3982, %v3984
        %4090 = vadd.xlane.f32.xlu0 %v4089
        %v4091 = vpop.xlane.xlu0 %4090
        %v4092 = vadd.f32 %v3986, %v3988
        %4093 = vadd.xlane.f32.xlu0 %v4092
        %v4094 = vpop.xlane.xlu0 %4093
        %v4095 = vadd.f32 %v3990, %v3992
        %4096 = vadd.xlane.f32.xlu0 %v4095
        %v4097 = vpop.xlane.xlu0 %4096
        %v4098 = vadd.f32 %v3994, %v3996
        %4099 = vadd.xlane.f32.xlu0 %v4098
        %v4100 = vpop.xlane.xlu0 %4099
        %v4101 = vadd.f32 %v3998, %v4000
        %4102 = vadd.xlane.f32.xlu0 %v4101
        %v4103 = vpop.xlane.xlu0 %4102
        %v4104 = vadd.f32 %v4002, %v4004
        %4105 = vadd.xlane.f32.xlu0 %v4104
        %v4106 = vpop.xlane.xlu0 %4105
        %v4107 = vadd.f32 %v4006, %v4008
        %4108 = vadd.xlane.f32.xlu0 %v4107
        %v4109 = vpop.xlane.xlu0 %4108
        %v4110 = vadd.f32 %v4010, %v4012
        %4111 = vadd.xlane.f32.xlu0 %v4110
        %v4112 = vpop.xlane.xlu0 %4111
        %v4113 = vadd.f32 %v4014, %v4016
        %4114 = vadd.xlane.f32.xlu0 %v4113
        %v4115 = vpop.xlane.xlu0 %4114
        %v4116 = vadd.f32 %v4018, %v4020
        %4117 = vadd.xlane.f32.xlu0 %v4116
        %v4118 = vpop.xlane.xlu0 %4117
        %v4119 = vadd.f32 %v4022, %v4024
        %4120 = vadd.xlane.f32.xlu0 %v4119
        %v4121 = vpop.xlane.xlu0 %4120
        %v4122 = vadd.f32 %v4026, %v4028
        %4123 = vadd.xlane.f32.xlu0 %v4122
        %v4124 = vpop.xlane.xlu0 %4123
        %v4125 = vrcp.pop %v4031
        %v4126 = vrcp.pop %v4034
        %v4127 = vrcp.pop %v4037
        %v4128 = vrcp.pop %v4040
        %v4129 = vrcp.pop %v4043
        %v4130 = vrcp.pop %v4046
        %v4131 = vrcp.pop %v4049
        %v4132 = vrcp.pop %v4052
        %v4133 = vrcp.pop %v4055
        %v4134 = vrcp.pop %v4058
        %v4135 = vrcp.pop %v4061
        %v4136 = vrcp.pop %v4064
        %v4137 = vrcp.pop %v4067
        %v4138 = vrcp.pop %v4070
        %v4139 = vrcp.pop %v4073
        %v4140 = vrcp.pop %v4076
        %v4141 = vrcp.pop %v4079
        %v4142 = vrcp.pop %v4082
        %v4143 = vrcp.pop %v4085
        %v4144 = vrcp.pop %v4088
        %v4145 = vrcp.pop %v4091
        %v4146 = vrcp.pop %v4094
        %v4147 = vrcp.pop %v4097
        %v4148 = vrcp.pop %v4100
        %v4149 = vrcp.pop %v4103
        %v4150 = vrcp.pop %v4106
        %v4151 = vrcp.pop %v4109
        %v4152 = vrcp.pop %v4112
        %v4153 = vrcp.pop %v4115
        %v4154 = vrcp.pop %v4118
        %v4155 = vrcp.pop %v4121
        %v4156 = vrcp.pop %v4124
        %v4157 = vmul.f32 %v3902, %v4125
        %v4158 = vmul.f32 %v3904, %v4125
        %v4159 = vmul.f32 %v3906, %v4126
        %v4160 = vmul.f32 %v3908, %v4126
        %v4161 = vmul.f32 %v3910, %v4127
        %v4162 = vmul.f32 %v3912, %v4127
        %v4163 = vmul.f32 %v3914, %v4128
        %v4164 = vmul.f32 %v3916, %v4128
        %v4165 = vmul.f32 %v3918, %v4129
        %v4166 = vmul.f32 %v3920, %v4129
        %v4167 = vmul.f32 %v3922, %v4130
        %v4168 = vmul.f32 %v3924, %v4130
        %v4169 = vmul.f32 %v3926, %v4131
        %v4170 = vmul.f32 %v3928, %v4131
        %v4171 = vmul.f32 %v3930, %v4132
        %v4172 = vmul.f32 %v3932, %v4132
        %v4173 = vmul.f32 %v3934, %v4133
        %v4174 = vmul.f32 %v3936, %v4133
        %v4175 = vmul.f32 %v3938, %v4134
        %v4176 = vmul.f32 %v3940, %v4134
        %v4177 = vmul.f32 %v3942, %v4135
        %v4178 = vmul.f32 %v3944, %v4135
        %v4179 = vmul.f32 %v3946, %v4136
        %v4180 = vmul.f32 %v3948, %v4136
        %v4181 = vmul.f32 %v3950, %v4137
        %v4182 = vmul.f32 %v3952, %v4137
        %v4183 = vmul.f32 %v3954, %v4138
        %v4184 = vmul.f32 %v3956, %v4138
        %v4185 = vmul.f32 %v3958, %v4139
        %v4186 = vmul.f32 %v3960, %v4139
        %v4187 = vmul.f32 %v3962, %v4140
        %v4188 = vmul.f32 %v3964, %v4140
        %v4189 = vmul.f32 %v3966, %v4141
        %v4190 = vmul.f32 %v3968, %v4141
        %v4191 = vmul.f32 %v3970, %v4142
        %v4192 = vmul.f32 %v3972, %v4142
        %v4193 = vmul.f32 %v3974, %v4143
        %v4194 = vmul.f32 %v3976, %v4143
        %v4195 = vmul.f32 %v3978, %v4144
        %v4196 = vmul.f32 %v3980, %v4144
        %v4197 = vmul.f32 %v3982, %v4145
        %v4198 = vmul.f32 %v3984, %v4145
        %v4199 = vmul.f32 %v3986, %v4146
        %v4200 = vmul.f32 %v3988, %v4146
        %v4201 = vmul.f32 %v3990, %v4147
        %v4202 = vmul.f32 %v3992, %v4147
        %v4203 = vmul.f32 %v3994, %v4148
        %v4204 = vmul.f32 %v3996, %v4148
        %v4205 = vmul.f32 %v3998, %v4149
        %v4206 = vmul.f32 %v4000, %v4149
        %v4207 = vmul.f32 %v4002, %v4150
        %v4208 = vmul.f32 %v4004, %v4150
        %v4209 = vmul.f32 %v4006, %v4151
        %v4210 = vmul.f32 %v4008, %v4151
        %v4211 = vmul.f32 %v4010, %v4152
        %v4212 = vmul.f32 %v4012, %v4152
        %v4213 = vmul.f32 %v4014, %v4153
        %v4214 = vmul.f32 %v4016, %v4153
        %v4215 = vmul.f32 %v4018, %v4154
        %v4216 = vmul.f32 %v4020, %v4154
        %v4217 = vmul.f32 %v4022, %v4155
        %v4218 = vmul.f32 %v4024, %v4155
        %v4219 = vmul.f32 %v4026, %v4156
        %v4220 = vmul.f32 %v4028, %v4156
        %v4221 = vpack.c.bf16 %v4159, %v4157
        %v4222 = vpack.c.bf16 %v4160, %v4158
        %v4223 = vpack.c.bf16 %v4163, %v4161
        %v4224 = vpack.c.bf16 %v4164, %v4162
        %v4225 = vpack.c.bf16 %v4167, %v4165
        %v4226 = vpack.c.bf16 %v4168, %v4166
        %v4227 = vpack.c.bf16 %v4171, %v4169
        %v4228 = vpack.c.bf16 %v4172, %v4170
        %v4229 = vpack.c.bf16 %v4175, %v4173
        %v4230 = vpack.c.bf16 %v4176, %v4174
        %v4231 = vpack.c.bf16 %v4179, %v4177
        %v4232 = vpack.c.bf16 %v4180, %v4178
        %v4233 = vpack.c.bf16 %v4183, %v4181
        %v4234 = vpack.c.bf16 %v4184, %v4182
        %v4235 = vpack.c.bf16 %v4187, %v4185
        %v4236 = vpack.c.bf16 %v4188, %v4186
        %v4237 = vpack.c.bf16 %v4191, %v4189
        %v4238 = vpack.c.bf16 %v4192, %v4190
        %v4239 = vpack.c.bf16 %v4195, %v4193
        %v4240 = vpack.c.bf16 %v4196, %v4194
        %v4241 = vpack.c.bf16 %v4199, %v4197
        %v4242 = vpack.c.bf16 %v4200, %v4198
        %v4243 = vpack.c.bf16 %v4203, %v4201
        %v4244 = vpack.c.bf16 %v4204, %v4202
        %v4245 = vpack.c.bf16 %v4207, %v4205
        %v4246 = vpack.c.bf16 %v4208, %v4206
        %v4247 = vpack.c.bf16 %v4211, %v4209
        %v4248 = vpack.c.bf16 %v4212, %v4210
        %v4249 = vpack.c.bf16 %v4215, %v4213
        %v4250 = vpack.c.bf16 %v4216, %v4214
        %v4251 = vpack.c.bf16 %v4219, %v4217
        %v4252 = vpack.c.bf16 %v4220, %v4218
        %4269 = vrot.lane.b32.xlu0 %v1880, 64
        %v4270 = vpop.permute.xlu0 %4269
        %4271 = vrot.lane.b32.xlu0 %v1881, 64
        %v4272 = vpop.permute.xlu0 %4271
        %4273 = vrot.lane.b32.xlu0 %v1882, 64
        %v4274 = vpop.permute.xlu0 %4273
        %4275 = vrot.lane.b32.xlu0 %v1883, 64
        %v4276 = vpop.permute.xlu0 %4275
        %4277 = vrot.lane.b32.xlu0 %v1884, 64
        %v4278 = vpop.permute.xlu0 %4277
        %4279 = vrot.lane.b32.xlu0 %v1885, 64
        %v4280 = vpop.permute.xlu0 %4279
        %4281 = vrot.lane.b32.xlu0 %v1886, 64
        %v4282 = vpop.permute.xlu0 %4281
        %4283 = vrot.lane.b32.xlu0 %v1887, 64
        %v4284 = vpop.permute.xlu0 %4283
        %4285 = vrot.lane.b32.xlu0 %v1888, 64
        %v4286 = vpop.permute.xlu0 %4285
        %4287 = vrot.lane.b32.xlu0 %v1889, 64
        %v4288 = vpop.permute.xlu0 %4287
        %4289 = vrot.lane.b32.xlu0 %v1890, 64
        %v4290 = vpop.permute.xlu0 %4289
        %4291 = vrot.lane.b32.xlu0 %v1891, 64
        %v4292 = vpop.permute.xlu0 %4291
        %4293 = vrot.lane.b32.xlu0 %v1892, 64
        %v4294 = vpop.permute.xlu0 %4293
        %4295 = vrot.lane.b32.xlu0 %v1893, 64
        %v4296 = vpop.permute.xlu0 %4295
        %4297 = vrot.lane.b32.xlu0 %v1894, 64
        %v4298 = vpop.permute.xlu0 %4297
        %4299 = vrot.lane.b32.xlu0 %v1895, 64
        %v4300 = vpop.permute.xlu0 %4299
        %4317 = vmatprep.subr.bf16.mxu0 0
        %4318 = vmatpush1.bf16.msra.mxu0 %v4270
        %4319 = vmatprep.subr.bf16.mxu0 0
        %4320 = vmatpush1.bf16.msra.mxu0 %v4272
        %4321 = vmatprep.subr.bf16.mxu0 0
        %4322 = vmatpush1.bf16.msra.mxu0 %v4274
        %4323 = vmatprep.subr.bf16.mxu0 0
        %4324 = vmatpush1.bf16.msra.mxu0 %v4276
        %4325 = vmatprep.subr.bf16.mxu0 0
        %4326 = vmatpush1.bf16.msra.mxu0 %v4278
        %4327 = vmatprep.subr.bf16.mxu0 0
        %4328 = vmatpush1.bf16.msra.mxu0 %v4280
        %4329 = vmatprep.subr.bf16.mxu0 0
        %4330 = vmatpush1.bf16.msra.mxu0 %v4282
        %4331 = vmatprep.subr.bf16.mxu0 0
        %4332 = vmatpush1.bf16.msra.mxu0 %v4284
        %4333 = vmatprep.subr.bf16.mxu0 0
        %4334 = vmatpush1.bf16.msra.mxu0 %v4286
        %4335 = vmatprep.subr.bf16.mxu0 0
        %4336 = vmatpush1.bf16.msra.mxu0 %v4288
        %4337 = vmatprep.subr.bf16.mxu0 0
        %4338 = vmatpush1.bf16.msra.mxu0 %v4290
        %4339 = vmatprep.subr.bf16.mxu0 0
        %4340 = vmatpush1.bf16.msra.mxu0 %v4292
        %4341 = vmatprep.subr.bf16.mxu0 0
        %4342 = vmatpush1.bf16.msra.mxu0 %v4294
        %4343 = vmatprep.subr.bf16.mxu0 0
        %4344 = vmatpush1.bf16.msra.mxu0 %v4296
        %4345 = vmatprep.subr.bf16.mxu0 0
        %4346 = vmatpush1.bf16.msra.mxu0 %v4298
        %4347 = vmatprep.subr.bf16.mxu0 0
        %4348 = vmatpush1.bf16.msra.mxu0 %v4300
        %4349 = vmatprep.mubr.bf16.mxu0 %v4222
        %4350 = vmatmul.mubr.bf16.gmra.mrb[0].mxu0 %v4221
        %v4351 = vpop.f32.mrb[0].mxu0
        %v4352 = vadd.f32 0.0, %v4351
        %v4353 = vpop.f32.mrb[0].mxu0
        %v4354 = vpop.f32.mrb[0].mxu0
        %v4355 = vadd.f32 0.0, %v4354
        %v4356 = vpop.f32.mrb[0].mxu0
        %4357 = vmatprep.mubr.bf16.mxu0 %v4224
        %4358 = vmatmul.mubr.bf16.gmra.mrb[0].mxu0 %v4223
        %v4359 = vpop.f32.mrb[0].mxu0
        %v4360 = vadd.f32 0.0, %v4359
        %v4361 = vpop.f32.mrb[0].mxu0
        %v4362 = vpop.f32.mrb[0].mxu0
        %v4363 = vadd.f32 0.0, %v4362
        %v4364 = vpop.f32.mrb[0].mxu0
        %4365 = vmatprep.mubr.bf16.mxu0 %v4226
        %4366 = vmatmul.mubr.bf16.gmra.mrb[0].mxu0 %v4225
        %v4367 = vpop.f32.mrb[0].mxu0
        %v4368 = vadd.f32 0.0, %v4367
        %v4369 = vpop.f32.mrb[0].mxu0
        %v4370 = vpop.f32.mrb[0].mxu0
        %v4371 = vadd.f32 0.0, %v4370
        %v4372 = vpop.f32.mrb[0].mxu0
        %4373 = vmatprep.mubr.bf16.mxu0 %v4228
        %4374 = vmatmul.mubr.bf16.gmra.mrb[0].mxu0 %v4227
        %v4375 = vpop.f32.mrb[0].mxu0
        %v4376 = vadd.f32 0.0, %v4375
        %v4377 = vpop.f32.mrb[0].mxu0
        %v4378 = vpop.f32.mrb[0].mxu0
        %v4379 = vadd.f32 0.0, %v4378
        %v4380 = vpop.f32.mrb[0].mxu0
        %4381 = vmatprep.mubr.bf16.mxu0 %v4230
        %4382 = vmatmul.mubr.bf16.gmra.mrb[0].mxu0 %v4229
        %v4383 = vpop.f32.mrb[0].mxu0
        %v4384 = vadd.f32 0.0, %v4383
        %v4385 = vpop.f32.mrb[0].mxu0
        %v4386 = vpop.f32.mrb[0].mxu0
        %v4387 = vadd.f32 0.0, %v4386
        %v4388 = vpop.f32.mrb[0].mxu0
        %4389 = vmatprep.mubr.bf16.mxu0 %v4232
        %4390 = vmatmul.mubr.bf16.gmra.mrb[0].mxu0 %v4231
        %v4391 = vpop.f32.mrb[0].mxu0
        %v4392 = vadd.f32 0.0, %v4391
        %v4393 = vpop.f32.mrb[0].mxu0
        %v4394 = vpop.f32.mrb[0].mxu0
        %v4395 = vadd.f32 0.0, %v4394
        %v4396 = vpop.f32.mrb[0].mxu0
        %4397 = vmatprep.mubr.bf16.mxu0 %v4234
        %4398 = vmatmul.mubr.bf16.gmra.mrb[0].mxu0 %v4233
        %v4399 = vpop.f32.mrb[0].mxu0
        %v4400 = vadd.f32 0.0, %v4399
        %v4401 = vpop.f32.mrb[0].mxu0
        %v4402 = vpop.f32.mrb[0].mxu0
        %v4403 = vadd.f32 0.0, %v4402
        %v4404 = vpop.f32.mrb[0].mxu0
        %4405 = vmatprep.mubr.bf16.mxu0 %v4236
        %4406 = vmatmul.mubr.bf16.gmra.mrb[0].mxu0 %v4235
        %v4407 = vpop.f32.mrb[0].mxu0
        %v4408 = vadd.f32 0.0, %v4407
        %v4409 = vpop.f32.mrb[0].mxu0
        %v4410 = vpop.f32.mrb[0].mxu0
        %v4411 = vadd.f32 0.0, %v4410
        %v4412 = vpop.f32.mrb[0].mxu0
        %4413 = vmatprep.mubr.bf16.mxu0 %v4238
        %4414 = vmatmul.mubr.bf16.gmra.mrb[0].mxu0 %v4237
        %v4415 = vpop.f32.mrb[0].mxu0
        %v4416 = vadd.f32 0.0, %v4415
        %v4417 = vpop.f32.mrb[0].mxu0
        %v4418 = vpop.f32.mrb[0].mxu0
        %v4419 = vadd.f32 0.0, %v4418
        %v4420 = vpop.f32.mrb[0].mxu0
        %4421 = vmatprep.mubr.bf16.mxu0 %v4240
        %4422 = vmatmul.mubr.bf16.gmra.mrb[0].mxu0 %v4239
        %v4423 = vpop.f32.mrb[0].mxu0
        %v4424 = vadd.f32 0.0, %v4423
        %v4425 = vpop.f32.mrb[0].mxu0
        %v4426 = vpop.f32.mrb[0].mxu0
        %v4427 = vadd.f32 0.0, %v4426
        %v4428 = vpop.f32.mrb[0].mxu0
        %4429 = vmatprep.mubr.bf16.mxu0 %v4242
        %4430 = vmatmul.mubr.bf16.gmra.mrb[0].mxu0 %v4241
        %v4431 = vpop.f32.mrb[0].mxu0
        %v4432 = vadd.f32 0.0, %v4431
        %v4433 = vpop.f32.mrb[0].mxu0
        %v4434 = vpop.f32.mrb[0].mxu0
        %v4435 = vadd.f32 0.0, %v4434
        %v4436 = vpop.f32.mrb[0].mxu0
        %4437 = vmatprep.mubr.bf16.mxu0 %v4244
        %4438 = vmatmul.mubr.bf16.gmra.mrb[0].mxu0 %v4243
        %v4439 = vpop.f32.mrb[0].mxu0
        %v4440 = vadd.f32 0.0, %v4439
        %v4441 = vpop.f32.mrb[0].mxu0
        %v4442 = vpop.f32.mrb[0].mxu0
        %v4443 = vadd.f32 0.0, %v4442
        %v4444 = vpop.f32.mrb[0].mxu0
        %4445 = vmatprep.mubr.bf16.mxu0 %v4246
        %4446 = vmatmul.mubr.bf16.gmra.mrb[0].mxu0 %v4245
        %v4447 = vpop.f32.mrb[0].mxu0
        %v4448 = vadd.f32 0.0, %v4447
        %v4449 = vpop.f32.mrb[0].mxu0
        %v4450 = vpop.f32.mrb[0].mxu0
        %v4451 = vadd.f32 0.0, %v4450
        %v4452 = vpop.f32.mrb[0].mxu0
        %4453 = vmatprep.mubr.bf16.mxu0 %v4248
        %4454 = vmatmul.mubr.bf16.gmra.mrb[0].mxu0 %v4247
        %v4455 = vpop.f32.mrb[0].mxu0
        %v4456 = vadd.f32 0.0, %v4455
        %v4457 = vpop.f32.mrb[0].mxu0
        %v4458 = vpop.f32.mrb[0].mxu0
        %v4459 = vadd.f32 0.0, %v4458
        %v4460 = vpop.f32.mrb[0].mxu0
        %4461 = vmatprep.mubr.bf16.mxu0 %v4250
        %4462 = vmatmul.mubr.bf16.gmra.mrb[0].mxu0 %v4249
        %v4463 = vpop.f32.mrb[0].mxu0
        %v4464 = vadd.f32 0.0, %v4463
        %v4465 = vpop.f32.mrb[0].mxu0
        %v4466 = vpop.f32.mrb[0].mxu0
        %v4467 = vadd.f32 0.0, %v4466
        %v4468 = vpop.f32.mrb[0].mxu0
        %4469 = vmatprep.mubr.bf16.mxu0 %v4252
        %4470 = vmatmul.mubr.bf16.gmra.mrb[0].mxu0 %v4251
        %v4471 = vpop.f32.mrb[0].mxu0
        %v4472 = vadd.f32 0.0, %v4471
        %v4473 = vpop.f32.mrb[0].mxu0
        %v4474 = vpop.f32.mrb[0].mxu0
        %v4475 = vadd.f32 0.0, %v4474
        %v4476 = vpop.f32.mrb[0].mxu0
        %4477 = vdwg.mxu0
        %v4478 = vld [vmem:[#allocation2] sm:$0xff]
        %v4479 = vld [vmem:[#allocation2 + $0x8] sm:$0xff]
        %v4480 = vld [vmem:[#allocation2 + $0x10] sm:$0xff]
        %v4481 = vld [vmem:[#allocation2 + $0x18] sm:$0xff]
        %v4482 = vld [vmem:[#allocation2 + $0x20] sm:$0xff]
        %v4483 = vld [vmem:[#allocation2 + $0x28] sm:$0xff]
        %v4484 = vld [vmem:[#allocation2 + $0x30] sm:$0xff]
        %v4485 = vld [vmem:[#allocation2 + $0x38] sm:$0xff]
        %v4486 = vld [vmem:[#allocation2 + $0x40] sm:$0xff]
        %v4487 = vld [vmem:[#allocation2 + $0x48] sm:$0xff]
        %v4488 = vld [vmem:[#allocation2 + $0x50] sm:$0xff]
        %v4489 = vld [vmem:[#allocation2 + $0x58] sm:$0xff]
        %v4490 = vld [vmem:[#allocation2 + $0x60] sm:$0xff]
        %v4491 = vld [vmem:[#allocation2 + $0x68] sm:$0xff]
        %v4492 = vld [vmem:[#allocation2 + $0x70] sm:$0xff]
        %v4493 = vld [vmem:[#allocation2 + $0x78] sm:$0xff]
        %v4494 = vld [vmem:[#allocation2 + $0x80] sm:$0xff]
        %v4495 = vld [vmem:[#allocation2 + $0x88] sm:$0xff]
        %v4496 = vld [vmem:[#allocation2 + $0x90] sm:$0xff]
        %v4497 = vld [vmem:[#allocation2 + $0x98] sm:$0xff]
        %v4498 = vld [vmem:[#allocation2 + $0xa0] sm:$0xff]
        %v4499 = vld [vmem:[#allocation2 + $0xa8] sm:$0xff]
        %v4500 = vld [vmem:[#allocation2 + $0xb0] sm:$0xff]
        %v4501 = vld [vmem:[#allocation2 + $0xb8] sm:$0xff]
        %v4502 = vld [vmem:[#allocation2 + $0xc0] sm:$0xff]
        %v4503 = vld [vmem:[#allocation2 + $0xc8] sm:$0xff]
        %v4504 = vld [vmem:[#allocation2 + $0xd0] sm:$0xff]
        %v4505 = vld [vmem:[#allocation2 + $0xd8] sm:$0xff]
        %v4506 = vld [vmem:[#allocation2 + $0xe0] sm:$0xff]
        %v4507 = vld [vmem:[#allocation2 + $0xe8] sm:$0xff]
        %v4508 = vld [vmem:[#allocation2 + $0xf0] sm:$0xff]
        %v4509 = vld [vmem:[#allocation2 + $0xf8] sm:$0xff]
        %v4510 = vld [vmem:[#allocation2 + $0x100] sm:$0xff]
        %v4511 = vld [vmem:[#allocation2 + $0x108] sm:$0xff]
        %v4512 = vld [vmem:[#allocation2 + $0x110] sm:$0xff]
        %v4513 = vld [vmem:[#allocation2 + $0x118] sm:$0xff]
        %v4514 = vld [vmem:[#allocation2 + $0x120] sm:$0xff]
        %v4515 = vld [vmem:[#allocation2 + $0x128] sm:$0xff]
        %v4516 = vld [vmem:[#allocation2 + $0x130] sm:$0xff]
        %v4517 = vld [vmem:[#allocation2 + $0x138] sm:$0xff]
        %v4518 = vld [vmem:[#allocation2 + $0x140] sm:$0xff]
        %v4519 = vld [vmem:[#allocation2 + $0x148] sm:$0xff]
        %v4520 = vld [vmem:[#allocation2 + $0x150] sm:$0xff]
        %v4521 = vld [vmem:[#allocation2 + $0x158] sm:$0xff]
        %v4522 = vld [vmem:[#allocation2 + $0x160] sm:$0xff]
        %v4523 = vld [vmem:[#allocation2 + $0x168] sm:$0xff]
        %v4524 = vld [vmem:[#allocation2 + $0x170] sm:$0xff]
        %v4525 = vld [vmem:[#allocation2 + $0x178] sm:$0xff]
        %v4526 = vld [vmem:[#allocation2 + $0x180] sm:$0xff]
        %v4527 = vld [vmem:[#allocation2 + $0x188] sm:$0xff]
        %v4528 = vld [vmem:[#allocation2 + $0x190] sm:$0xff]
        %v4529 = vld [vmem:[#allocation2 + $0x198] sm:$0xff]
        %v4530 = vld [vmem:[#allocation2 + $0x1a0] sm:$0xff]
        %v4531 = vld [vmem:[#allocation2 + $0x1a8] sm:$0xff]
        %v4532 = vld [vmem:[#allocation2 + $0x1b0] sm:$0xff]
        %v4533 = vld [vmem:[#allocation2 + $0x1b8] sm:$0xff]
        %v4534 = vld [vmem:[#allocation2 + $0x1c0] sm:$0xff]
        %v4535 = vld [vmem:[#allocation2 + $0x1c8] sm:$0xff]
        %v4536 = vld [vmem:[#allocation2 + $0x1d0] sm:$0xff]
        %v4537 = vld [vmem:[#allocation2 + $0x1d8] sm:$0xff]
        %v4538 = vld [vmem:[#allocation2 + $0x1e0] sm:$0xff]
        %v4539 = vld [vmem:[#allocation2 + $0x1e8] sm:$0xff]
        %v4540 = vld [vmem:[#allocation2 + $0x1f0] sm:$0xff]
        %v4541 = vld [vmem:[#allocation2 + $0x1f8] sm:$0xff]
        %v4542 = vpack.c.bf16 %v4355, %v4352
        %v4543 = vpack.c.bf16 %v4363, %v4360
        %v4544 = vpack.c.bf16 %v4371, %v4368
        %v4545 = vpack.c.bf16 %v4379, %v4376
        %v4546 = vpack.c.bf16 %v4387, %v4384
        %v4547 = vpack.c.bf16 %v4395, %v4392
        %v4548 = vpack.c.bf16 %v4403, %v4400
        %v4549 = vpack.c.bf16 %v4411, %v4408
        %v4550 = vpack.c.bf16 %v4419, %v4416
        %v4551 = vpack.c.bf16 %v4427, %v4424
        %v4552 = vpack.c.bf16 %v4435, %v4432
        %v4553 = vpack.c.bf16 %v4443, %v4440
        %v4554 = vpack.c.bf16 %v4451, %v4448
        %v4555 = vpack.c.bf16 %v4459, %v4456
        %v4556 = vpack.c.bf16 %v4467, %v4464
        %v4557 = vpack.c.bf16 %v4475, %v4472
        %v4558 = vld [vmem:[#allocation8 + $0x40] sm:$0xff]
        %v4559 = vld [vmem:[#allocation8 + $0x48] sm:$0xff]
        %v4560 = vld [vmem:[#allocation8 + $0x50] sm:$0xff]
        %v4561 = vld [vmem:[#allocation8 + $0x58] sm:$0xff]
        %v4562 = vld [vmem:[#allocation8 + $0x60] sm:$0xff]
        %v4563 = vld [vmem:[#allocation8 + $0x68] sm:$0xff]
        %v4564 = vld [vmem:[#allocation8 + $0x70] sm:$0xff]
        %v4565 = vld [vmem:[#allocation8 + $0x78] sm:$0xff]
        %v4574 = vunpack.c.l.b16 %v4558
        %v4575 = vunpack.c.h.b16 %v4558
        %v4576 = vunpack.c.l.b16 %v4559
        %v4577 = vunpack.c.h.b16 %v4559
        %v4578 = vunpack.c.l.b16 %v4560
        %v4579 = vunpack.c.h.b16 %v4560
        %v4580 = vunpack.c.l.b16 %v4561
        %v4581 = vunpack.c.h.b16 %v4561
        %v4582 = vunpack.c.l.b16 %v4562
        %v4583 = vunpack.c.h.b16 %v4562
        %v4584 = vunpack.c.l.b16 %v4563
        %v4585 = vunpack.c.h.b16 %v4563
        %v4586 = vunpack.c.l.b16 %v4564
        %v4587 = vunpack.c.h.b16 %v4564
        %v4588 = vunpack.c.l.b16 %v4565
        %v4589 = vunpack.c.h.b16 %v4565
        %v4590 = vpack.c.b16 %v4576, %v4574
        %v4591 = vpack.c.b16 %v4577, %v4575
        %v4592 = vpack.c.b16 %v4580, %v4578
        %v4593 = vpack.c.b16 %v4581, %v4579
        %v4594 = vpack.c.b16 %v4584, %v4582
        %v4595 = vpack.c.b16 %v4585, %v4583
        %v4596 = vpack.c.b16 %v4588, %v4586
        %v4597 = vpack.c.b16 %v4589, %v4587
        %v4607 = vsel %vm1896, %v4542, 0
        %v4610 = vsel %vm1896, %v4543, 0
        %v4613 = vsel %vm1896, %v4544, 0
        %v4616 = vsel %vm1896, %v4545, 0
        %v4619 = vsel %vm1896, %v4546, 0
        %v4622 = vsel %vm1896, %v4547, 0
        %v4625 = vsel %vm1896, %v4548, 0
        %v4628 = vsel %vm1896, %v4549, 0
        %v4631 = vsel %vm1896, %v4550, 0
        %v4634 = vsel %vm1896, %v4551, 0
        %v4637 = vsel %vm1896, %v4552, 0
        %v4640 = vsel %vm1896, %v4553, 0
        %v4643 = vsel %vm1896, %v4554, 0
        %v4646 = vsel %vm1896, %v4555, 0
        %v4649 = vsel %vm1896, %v4556, 0
        %v4652 = vsel %vm1896, %v4557, 0
        %4654 = vmatprep.subr.bf16.mxu0 %v4591
        %4655 = vmatpush1.bf16.msra.mxu0 %v4590
        %4656 = vmatprep.subr.bf16.mxu0 %v4593
        %4657 = vmatpush1.bf16.msra.mxu0 %v4592
        %4658 = vmatprep.subr.bf16.mxu0 %v4595
        %4659 = vmatpush1.bf16.msra.mxu0 %v4594
        %4660 = vmatprep.subr.bf16.mxu0 %v4597
        %4661 = vmatpush1.bf16.msra.mxu0 %v4596
        %4662 = vmatprep.subr.bf16.mxu0 0
        %4663 = vmatpush1.bf16.msra.mxu0 0
        %4664 = vmatprep.subr.bf16.mxu0 0
        %4665 = vmatpush1.bf16.msra.mxu0 0
        %4666 = vmatprep.subr.bf16.mxu0 0
        %4667 = vmatpush1.bf16.msra.mxu0 0
        %4668 = vmatprep.subr.bf16.mxu0 0
        %4669 = vmatpush1.bf16.msra.mxu0 0
        %4670 = vmatprep.subr.bf16.mxu0 0
        %4671 = vmatpush1.bf16.msra.mxu0 0
        %4672 = vmatprep.subr.bf16.mxu0 0
        %4673 = vmatpush1.bf16.msra.mxu0 0
        %4674 = vmatprep.subr.bf16.mxu0 0
        %4675 = vmatpush1.bf16.msra.mxu0 0
        %4676 = vmatprep.subr.bf16.mxu0 0
        %4677 = vmatpush1.bf16.msra.mxu0 0
        %4678 = vmatprep.subr.bf16.mxu0 0
        %4679 = vmatpush1.bf16.msra.mxu0 0
        %4680 = vmatprep.subr.bf16.mxu0 0
        %4681 = vmatpush1.bf16.msra.mxu0 0
        %4682 = vmatprep.subr.bf16.mxu0 0
        %4683 = vmatpush1.bf16.msra.mxu0 0
        %4684 = vmatprep.subr.bf16.mxu0 0
        %4685 = vmatpush1.bf16.msra.mxu0 0
        %4686 = vmatprep.mubr.bf16.mxu0 0
        %4687 = vmatmul.mubr.bf16.gmra.mrb[0].mxu0 %v4607
        %v4688 = vpop.f32.mrb[0].mxu0
        %v4689 = vadd.f32 0.0, %v4688
        %v4690 = vpop.f32.mrb[0].mxu0
        %v4691 = vadd.f32 0.0, %v4690
        %v4692 = vpop.f32.mrb[0].mxu0
        %v4693 = vadd.f32 0.0, %v4692
        %v4694 = vpop.f32.mrb[0].mxu0
        %v4695 = vadd.f32 0.0, %v4694
        %4696 = vmatprep.mubr.bf16.mxu0 0
        %4697 = vmatmul.mubr.bf16.gmra.mrb[0].mxu0 %v4610
        %v4698 = vpop.f32.mrb[0].mxu0
        %v4699 = vadd.f32 0.0, %v4698
        %v4700 = vpop.f32.mrb[0].mxu0
        %v4701 = vadd.f32 0.0, %v4700
        %v4702 = vpop.f32.mrb[0].mxu0
        %v4703 = vadd.f32 0.0, %v4702
        %v4704 = vpop.f32.mrb[0].mxu0
        %v4705 = vadd.f32 0.0, %v4704
        %4706 = vmatprep.mubr.bf16.mxu0 0
        %4707 = vmatmul.mubr.bf16.gmra.mrb[0].mxu0 %v4613
        %v4708 = vpop.f32.mrb[0].mxu0
        %v4709 = vadd.f32 0.0, %v4708
        %v4710 = vpop.f32.mrb[0].mxu0
        %v4711 = vadd.f32 0.0, %v4710
        %v4712 = vpop.f32.mrb[0].mxu0
        %v4713 = vadd.f32 0.0, %v4712
        %v4714 = vpop.f32.mrb[0].mxu0
        %v4715 = vadd.f32 0.0, %v4714
        %4716 = vmatprep.mubr.bf16.mxu0 0
        %4717 = vmatmul.mubr.bf16.gmra.mrb[0].mxu0 %v4616
        %v4718 = vpop.f32.mrb[0].mxu0
        %v4719 = vadd.f32 0.0, %v4718
        %v4720 = vpop.f32.mrb[0].mxu0
        %v4721 = vadd.f32 0.0, %v4720
        %v4722 = vpop.f32.mrb[0].mxu0
        %v4723 = vadd.f32 0.0, %v4722
        %v4724 = vpop.f32.mrb[0].mxu0
        %v4725 = vadd.f32 0.0, %v4724
        %4726 = vmatprep.mubr.bf16.mxu0 0
        %4727 = vmatmul.mubr.bf16.gmra.mrb[0].mxu0 %v4619
        %v4728 = vpop.f32.mrb[0].mxu0
        %v4729 = vadd.f32 0.0, %v4728
        %v4730 = vpop.f32.mrb[0].mxu0
        %v4731 = vadd.f32 0.0, %v4730
        %v4732 = vpop.f32.mrb[0].mxu0
        %v4733 = vadd.f32 0.0, %v4732
        %v4734 = vpop.f32.mrb[0].mxu0
        %v4735 = vadd.f32 0.0, %v4734
        %4736 = vmatprep.mubr.bf16.mxu0 0
        %4737 = vmatmul.mubr.bf16.gmra.mrb[0].mxu0 %v4622
        %v4738 = vpop.f32.mrb[0].mxu0
        %v4739 = vadd.f32 0.0, %v4738
        %v4740 = vpop.f32.mrb[0].mxu0
        %v4741 = vadd.f32 0.0, %v4740
        %v4742 = vpop.f32.mrb[0].mxu0
        %v4743 = vadd.f32 0.0, %v4742
        %v4744 = vpop.f32.mrb[0].mxu0
        %v4745 = vadd.f32 0.0, %v4744
        %4746 = vmatprep.mubr.bf16.mxu0 0
        %4747 = vmatmul.mubr.bf16.gmra.mrb[0].mxu0 %v4625
        %v4748 = vpop.f32.mrb[0].mxu0
        %v4749 = vadd.f32 0.0, %v4748
        %v4750 = vpop.f32.mrb[0].mxu0
        %v4751 = vadd.f32 0.0, %v4750
        %v4752 = vpop.f32.mrb[0].mxu0
        %v4753 = vadd.f32 0.0, %v4752
        %v4754 = vpop.f32.mrb[0].mxu0
        %v4755 = vadd.f32 0.0, %v4754
        %4756 = vmatprep.mubr.bf16.mxu0 0
        %4757 = vmatmul.mubr.bf16.gmra.mrb[0].mxu0 %v4628
        %v4758 = vpop.f32.mrb[0].mxu0
        %v4759 = vadd.f32 0.0, %v4758
        %v4760 = vpop.f32.mrb[0].mxu0
        %v4761 = vadd.f32 0.0, %v4760
        %v4762 = vpop.f32.mrb[0].mxu0
        %v4763 = vadd.f32 0.0, %v4762
        %v4764 = vpop.f32.mrb[0].mxu0
        %v4765 = vadd.f32 0.0, %v4764
        %4766 = vmatprep.mubr.bf16.mxu0 0
        %4767 = vmatmul.mubr.bf16.gmra.mrb[0].mxu0 %v4631
        %v4768 = vpop.f32.mrb[0].mxu0
        %v4769 = vadd.f32 0.0, %v4768
        %v4770 = vpop.f32.mrb[0].mxu0
        %v4771 = vadd.f32 0.0, %v4770
        %v4772 = vpop.f32.mrb[0].mxu0
        %v4773 = vadd.f32 0.0, %v4772
        %v4774 = vpop.f32.mrb[0].mxu0
        %v4775 = vadd.f32 0.0, %v4774
        %4776 = vmatprep.mubr.bf16.mxu0 0
        %4777 = vmatmul.mubr.bf16.gmra.mrb[0].mxu0 %v4634
        %v4778 = vpop.f32.mrb[0].mxu0
        %v4779 = vadd.f32 0.0, %v4778
        %v4780 = vpop.f32.mrb[0].mxu0
        %v4781 = vadd.f32 0.0, %v4780
        %v4782 = vpop.f32.mrb[0].mxu0
        %v4783 = vadd.f32 0.0, %v4782
        %v4784 = vpop.f32.mrb[0].mxu0
        %v4785 = vadd.f32 0.0, %v4784
        %4786 = vmatprep.mubr.bf16.mxu0 0
        %4787 = vmatmul.mubr.bf16.gmra.mrb[0].mxu0 %v4637
        %v4788 = vpop.f32.mrb[0].mxu0
        %v4789 = vadd.f32 0.0, %v4788
        %v4790 = vpop.f32.mrb[0].mxu0
        %v4791 = vadd.f32 0.0, %v4790
        %v4792 = vpop.f32.mrb[0].mxu0
        %v4793 = vadd.f32 0.0, %v4792
        %v4794 = vpop.f32.mrb[0].mxu0
        %v4795 = vadd.f32 0.0, %v4794
        %4796 = vmatprep.mubr.bf16.mxu0 0
        %4797 = vmatmul.mubr.bf16.gmra.mrb[0].mxu0 %v4640
        %v4798 = vpop.f32.mrb[0].mxu0
        %v4799 = vadd.f32 0.0, %v4798
        %v4800 = vpop.f32.mrb[0].mxu0
        %v4801 = vadd.f32 0.0, %v4800
        %v4802 = vpop.f32.mrb[0].mxu0
        %v4803 = vadd.f32 0.0, %v4802
        %v4804 = vpop.f32.mrb[0].mxu0
        %v4805 = vadd.f32 0.0, %v4804
        %4806 = vmatprep.mubr.bf16.mxu0 0
        %4807 = vmatmul.mubr.bf16.gmra.mrb[0].mxu0 %v4643
        %v4808 = vpop.f32.mrb[0].mxu0
        %v4809 = vadd.f32 0.0, %v4808
        %v4810 = vpop.f32.mrb[0].mxu0
        %v4811 = vadd.f32 0.0, %v4810
        %v4812 = vpop.f32.mrb[0].mxu0
        %v4813 = vadd.f32 0.0, %v4812
        %v4814 = vpop.f32.mrb[0].mxu0
        %v4815 = vadd.f32 0.0, %v4814
        %4816 = vmatprep.mubr.bf16.mxu0 0
        %4817 = vmatmul.mubr.bf16.gmra.mrb[0].mxu0 %v4646
        %v4818 = vpop.f32.mrb[0].mxu0
        %v4819 = vadd.f32 0.0, %v4818
        %v4820 = vpop.f32.mrb[0].mxu0
        %v4821 = vadd.f32 0.0, %v4820
        %v4822 = vpop.f32.mrb[0].mxu0
        %v4823 = vadd.f32 0.0, %v4822
        %v4824 = vpop.f32.mrb[0].mxu0
        %v4825 = vadd.f32 0.0, %v4824
        %4826 = vmatprep.mubr.bf16.mxu0 0
        %4827 = vmatmul.mubr.bf16.gmra.mrb[0].mxu0 %v4649
        %v4828 = vpop.f32.mrb[0].mxu0
        %v4829 = vadd.f32 0.0, %v4828
        %v4830 = vpop.f32.mrb[0].mxu0
        %v4831 = vadd.f32 0.0, %v4830
        %v4832 = vpop.f32.mrb[0].mxu0
        %v4833 = vadd.f32 0.0, %v4832
        %v4834 = vpop.f32.mrb[0].mxu0
        %v4835 = vadd.f32 0.0, %v4834
        %4836 = vmatprep.mubr.bf16.mxu0 0
        %4837 = vmatmul.mubr.bf16.gmra.mrb[0].mxu0 %v4652
        %v4838 = vpop.f32.mrb[0].mxu0
        %v4839 = vadd.f32 0.0, %v4838
        %v4840 = vpop.f32.mrb[0].mxu0
        %v4841 = vadd.f32 0.0, %v4840
        %v4842 = vpop.f32.mrb[0].mxu0
        %v4843 = vadd.f32 0.0, %v4842
        %v4844 = vpop.f32.mrb[0].mxu0
        %v4845 = vadd.f32 0.0, %v4844
        %4846 = vdwg.mxu0
        %v4847 = vadd.f32 %v4478, %v4689
        %v4848 = vadd.f32 %v4479, %v4691
        %v4849 = vadd.f32 %v4480, %v4693
        %v4850 = vadd.f32 %v4481, %v4695
        %v4851 = vadd.f32 %v4482, %v4699
        %v4852 = vadd.f32 %v4483, %v4701
        %v4853 = vadd.f32 %v4484, %v4703
        %v4854 = vadd.f32 %v4485, %v4705
        %v4855 = vadd.f32 %v4486, %v4709
        %v4856 = vadd.f32 %v4487, %v4711
        %v4857 = vadd.f32 %v4488, %v4713
        %v4858 = vadd.f32 %v4489, %v4715
        %v4859 = vadd.f32 %v4490, %v4719
        %v4860 = vadd.f32 %v4491, %v4721
        %v4861 = vadd.f32 %v4492, %v4723
        %v4862 = vadd.f32 %v4493, %v4725
        %v4863 = vadd.f32 %v4494, %v4729
        %v4864 = vadd.f32 %v4495, %v4731
        %v4865 = vadd.f32 %v4496, %v4733
        %v4866 = vadd.f32 %v4497, %v4735
        %v4867 = vadd.f32 %v4498, %v4739
        %v4868 = vadd.f32 %v4499, %v4741
        %v4869 = vadd.f32 %v4500, %v4743
        %v4870 = vadd.f32 %v4501, %v4745
        %v4871 = vadd.f32 %v4502, %v4749
        %v4872 = vadd.f32 %v4503, %v4751
        %v4873 = vadd.f32 %v4504, %v4753
        %v4874 = vadd.f32 %v4505, %v4755
        %v4875 = vadd.f32 %v4506, %v4759
        %v4876 = vadd.f32 %v4507, %v4761
        %v4877 = vadd.f32 %v4508, %v4763
        %v4878 = vadd.f32 %v4509, %v4765
        %v4879 = vadd.f32 %v4510, %v4769
        %v4880 = vadd.f32 %v4511, %v4771
        %v4881 = vadd.f32 %v4512, %v4773
        %v4882 = vadd.f32 %v4513, %v4775
        %v4883 = vadd.f32 %v4514, %v4779
        %v4884 = vadd.f32 %v4515, %v4781
        %v4885 = vadd.f32 %v4516, %v4783
        %v4886 = vadd.f32 %v4517, %v4785
        %v4887 = vadd.f32 %v4518, %v4789
        %v4888 = vadd.f32 %v4519, %v4791
        %v4889 = vadd.f32 %v4520, %v4793
        %v4890 = vadd.f32 %v4521, %v4795
        %v4891 = vadd.f32 %v4522, %v4799
        %v4892 = vadd.f32 %v4523, %v4801
        %v4893 = vadd.f32 %v4524, %v4803
        %v4894 = vadd.f32 %v4525, %v4805
        %v4895 = vadd.f32 %v4526, %v4809
        %v4896 = vadd.f32 %v4527, %v4811
        %v4897 = vadd.f32 %v4528, %v4813
        %v4898 = vadd.f32 %v4529, %v4815
        %v4899 = vadd.f32 %v4530, %v4819
        %v4900 = vadd.f32 %v4531, %v4821
        %v4901 = vadd.f32 %v4532, %v4823
        %v4902 = vadd.f32 %v4533, %v4825
        %v4903 = vadd.f32 %v4534, %v4829
        %v4904 = vadd.f32 %v4535, %v4831
        %v4905 = vadd.f32 %v4536, %v4833
        %v4906 = vadd.f32 %v4537, %v4835
        %v4907 = vadd.f32 %v4538, %v4839
        %v4908 = vadd.f32 %v4539, %v4841
        %v4909 = vadd.f32 %v4540, %v4843
        %v4910 = vadd.f32 %v4541, %v4845
        %4911 = vst [vmem:[#allocation2] sm:$0xff] %v4847
        %4912 = vst [vmem:[#allocation2 + $0x8] sm:$0xff] %v4848
        %4913 = vst [vmem:[#allocation2 + $0x10] sm:$0xff] %v4849
        %4914 = vst [vmem:[#allocation2 + $0x18] sm:$0xff] %v4850
        %4915 = vst [vmem:[#allocation2 + $0x20] sm:$0xff] %v4851
        %4916 = vst [vmem:[#allocation2 + $0x28] sm:$0xff] %v4852
        %4917 = vst [vmem:[#allocation2 + $0x30] sm:$0xff] %v4853
        %4918 = vst [vmem:[#allocation2 + $0x38] sm:$0xff] %v4854
        %4919 = vst [vmem:[#allocation2 + $0x40] sm:$0xff] %v4855
        %4920 = vst [vmem:[#allocation2 + $0x48] sm:$0xff] %v4856
        %4921 = vst [vmem:[#allocation2 + $0x50] sm:$0xff] %v4857
        %4922 = vst [vmem:[#allocation2 + $0x58] sm:$0xff] %v4858
        %4923 = vst [vmem:[#allocation2 + $0x60] sm:$0xff] %v4859
        %4924 = vst [vmem:[#allocation2 + $0x68] sm:$0xff] %v4860
        %4925 = vst [vmem:[#allocation2 + $0x70] sm:$0xff] %v4861
        %4926 = vst [vmem:[#allocation2 + $0x78] sm:$0xff] %v4862
        %4927 = vst [vmem:[#allocation2 + $0x80] sm:$0xff] %v4863
        %4928 = vst [vmem:[#allocation2 + $0x88] sm:$0xff] %v4864
        %4929 = vst [vmem:[#allocation2 + $0x90] sm:$0xff] %v4865
        %4930 = vst [vmem:[#allocation2 + $0x98] sm:$0xff] %v4866
        %4931 = vst [vmem:[#allocation2 + $0xa0] sm:$0xff] %v4867
        %4932 = vst [vmem:[#allocation2 + $0xa8] sm:$0xff] %v4868
        %4933 = vst [vmem:[#allocation2 + $0xb0] sm:$0xff] %v4869
        %4934 = vst [vmem:[#allocation2 + $0xb8] sm:$0xff] %v4870
        %4935 = vst [vmem:[#allocation2 + $0xc0] sm:$0xff] %v4871
        %4936 = vst [vmem:[#allocation2 + $0xc8] sm:$0xff] %v4872
        %4937 = vst [vmem:[#allocation2 + $0xd0] sm:$0xff] %v4873
        %4938 = vst [vmem:[#allocation2 + $0xd8] sm:$0xff] %v4874
        %4939 = vst [vmem:[#allocation2 + $0xe0] sm:$0xff] %v4875
        %4940 = vst [vmem:[#allocation2 + $0xe8] sm:$0xff] %v4876
        %4941 = vst [vmem:[#allocation2 + $0xf0] sm:$0xff] %v4877
        %4942 = vst [vmem:[#allocation2 + $0xf8] sm:$0xff] %v4878
        %4943 = vst [vmem:[#allocation2 + $0x100] sm:$0xff] %v4879
        %4944 = vst [vmem:[#allocation2 + $0x108] sm:$0xff] %v4880
        %4945 = vst [vmem:[#allocation2 + $0x110] sm:$0xff] %v4881
        %4946 = vst [vmem:[#allocation2 + $0x118] sm:$0xff] %v4882
        %4947 = vst [vmem:[#allocation2 + $0x120] sm:$0xff] %v4883
        %4948 = vst [vmem:[#allocation2 + $0x128] sm:$0xff] %v4884
        %4949 = vst [vmem:[#allocation2 + $0x130] sm:$0xff] %v4885
        %4950 = vst [vmem:[#allocation2 + $0x138] sm:$0xff] %v4886
        %4951 = vst [vmem:[#allocation2 + $0x140] sm:$0xff] %v4887
        %4952 = vst [vmem:[#allocation2 + $0x148] sm:$0xff] %v4888
        %4953 = vst [vmem:[#allocation2 + $0x150] sm:$0xff] %v4889
        %4954 = vst [vmem:[#allocation2 + $0x158] sm:$0xff] %v4890
        %4955 = vst [vmem:[#allocation2 + $0x160] sm:$0xff] %v4891
        %4956 = vst [vmem:[#allocation2 + $0x168] sm:$0xff] %v4892
        %4957 = vst [vmem:[#allocation2 + $0x170] sm:$0xff] %v4893
        %4958 = vst [vmem:[#allocation2 + $0x178] sm:$0xff] %v4894
        %4959 = vst [vmem:[#allocation2 + $0x180] sm:$0xff] %v4895
        %4960 = vst [vmem:[#allocation2 + $0x188] sm:$0xff] %v4896
        %4961 = vst [vmem:[#allocation2 + $0x190] sm:$0xff] %v4897
        %4962 = vst [vmem:[#allocation2 + $0x198] sm:$0xff] %v4898
        %4963 = vst [vmem:[#allocation2 + $0x1a0] sm:$0xff] %v4899
        %4964 = vst [vmem:[#allocation2 + $0x1a8] sm:$0xff] %v4900
        %4965 = vst [vmem:[#allocation2 + $0x1b0] sm:$0xff] %v4901
        %4966 = vst [vmem:[#allocation2 + $0x1b8] sm:$0xff] %v4902
        %4967 = vst [vmem:[#allocation2 + $0x1c0] sm:$0xff] %v4903
        %4968 = vst [vmem:[#allocation2 + $0x1c8] sm:$0xff] %v4904
        %4969 = vst [vmem:[#allocation2 + $0x1d0] sm:$0xff] %v4905
        %4970 = vst [vmem:[#allocation2 + $0x1d8] sm:$0xff] %v4906
        %4971 = vst [vmem:[#allocation2 + $0x1e0] sm:$0xff] %v4907
        %4972 = vst [vmem:[#allocation2 + $0x1e8] sm:$0xff] %v4908
        %4973 = vst [vmem:[#allocation2 + $0x1f0] sm:$0xff] %v4909
        %4974 = vst [vmem:[#allocation2 + $0x1f8] sm:$0xff] %v4910
        %v4975 = vpack.c.bf16 %v1559, %v1557
        %v4976 = vpack.c.bf16 %v1563, %v1561
        %v4977 = vpack.c.bf16 %v1567, %v1565
        %v4978 = vpack.c.bf16 %v1571, %v1569
        %v4979 = vpack.c.bf16 %v1575, %v1573
        %v4980 = vpack.c.bf16 %v1579, %v1577
        %v4981 = vpack.c.bf16 %v1583, %v1581
        %v4982 = vpack.c.bf16 %v1587, %v1585
        %v4983 = vpack.c.bf16 %v1591, %v1589
        %v4984 = vpack.c.bf16 %v1595, %v1593
        %v4985 = vpack.c.bf16 %v1599, %v1597
        %v4986 = vpack.c.bf16 %v1603, %v1601
        %v4987 = vpack.c.bf16 %v1607, %v1605
        %v4988 = vpack.c.bf16 %v1611, %v1609
        %v4989 = vpack.c.bf16 %v1615, %v1613
        %v4990 = vpack.c.bf16 %v1619, %v1617
        %v4991 = vpack.c.bf16 %v1211, %v1207
        %v4992 = vpack.c.bf16 %v1221, %v1217
        %v4993 = vpack.c.bf16 %v1231, %v1227
        %v4994 = vpack.c.bf16 %v1241, %v1237
        %v4995 = vpack.c.bf16 %v1251, %v1247
        %v4996 = vpack.c.bf16 %v1261, %v1257
        %v4997 = vpack.c.bf16 %v1271, %v1267
        %v4998 = vpack.c.bf16 %v1281, %v1277
        %v4999 = vpack.c.bf16 %v1291, %v1287
        %v5000 = vpack.c.bf16 %v1301, %v1297
        %v5001 = vpack.c.bf16 %v1311, %v1307
        %v5002 = vpack.c.bf16 %v1321, %v1317
        %v5003 = vpack.c.bf16 %v1331, %v1327
        %v5004 = vpack.c.bf16 %v1341, %v1337
        %v5005 = vpack.c.bf16 %v1351, %v1347
        %v5006 = vpack.c.bf16 %v1361, %v1357
        %v5007 = vpack.c.bf16 %v1404, %v1400
        %v5008 = vpack.c.bf16 %v1414, %v1410
        %v5009 = vpack.c.bf16 %v1424, %v1420
        %v5010 = vpack.c.bf16 %v1434, %v1430
        %v5011 = vpack.c.bf16 %v1444, %v1440
        %v5012 = vpack.c.bf16 %v1454, %v1450
        %v5013 = vpack.c.bf16 %v1464, %v1460
        %v5014 = vpack.c.bf16 %v1474, %v1470
        %v5015 = vpack.c.bf16 %v1484, %v1480
        %v5016 = vpack.c.bf16 %v1494, %v1490
        %v5017 = vpack.c.bf16 %v1504, %v1500
        %v5018 = vpack.c.bf16 %v1514, %v1510
        %v5019 = vpack.c.bf16 %v1524, %v1520
        %v5020 = vpack.c.bf16 %v1534, %v1530
        %v5021 = vpack.c.bf16 %v1544, %v1540
        %v5022 = vpack.c.bf16 %v1554, %v1550
        %v5024 = vsel %vm1896, %v4975, 0
        %v5027 = vsel %vm1896, %v4976, 0
        %v5030 = vsel %vm1896, %v4977, 0
        %v5033 = vsel %vm1896, %v4978, 0
        %v5036 = vsel %vm1896, %v4979, 0
        %v5039 = vsel %vm1896, %v4980, 0
        %v5042 = vsel %vm1896, %v4981, 0
        %v5045 = vsel %vm1896, %v4982, 0
        %v5048 = vsel %vm1896, %v4983, 0
        %v5051 = vsel %vm1896, %v4984, 0
        %v5054 = vsel %vm1896, %v4985, 0
        %v5057 = vsel %vm1896, %v4986, 0
        %v5060 = vsel %vm1896, %v4987, 0
        %v5063 = vsel %vm1896, %v4988, 0
        %v5066 = vsel %vm1896, %v4989, 0
        %v5069 = vsel %vm1896, %v4990, 0
        %v5072 = vsel %vm1896, %v4991, 0
        %v5075 = vsel %vm1896, %v4992, 0
        %v5078 = vsel %vm1896, %v4993, 0
        %v5081 = vsel %vm1896, %v4994, 0
        %v5084 = vsel %vm1896, %v4995, 0
        %v5087 = vsel %vm1896, %v4996, 0
        %v5090 = vsel %vm1896, %v4997, 0
        %v5093 = vsel %vm1896, %v4998, 0
        %v5096 = vsel %vm1896, %v4999, 0
        %v5099 = vsel %vm1896, %v5000, 0
        %v5102 = vsel %vm1896, %v5001, 0
        %v5105 = vsel %vm1896, %v5002, 0
        %v5108 = vsel %vm1896, %v5003, 0
        %v5111 = vsel %vm1896, %v5004, 0
        %v5114 = vsel %vm1896, %v5005, 0
        %v5117 = vsel %vm1896, %v5006, 0
        %5119 = vmatprep.subr.bf16.mxu0 0
        %5120 = vmatpush1.bf16.xpose.msra.mxu0 %v5072
        %5121 = vmatprep.subr.bf16.mxu0 0
        %5122 = vmatpush1.bf16.xpose.msra.mxu0 %v5075
        %5123 = vmatprep.subr.bf16.mxu0 0
        %5124 = vmatpush1.bf16.xpose.msra.mxu0 %v5078
        %5125 = vmatprep.subr.bf16.mxu0 0
        %5126 = vmatpush1.bf16.xpose.msra.mxu0 %v5081
        %5127 = vmatprep.subr.bf16.mxu0 0
        %5128 = vmatpush1.bf16.xpose.msra.mxu0 %v5084
        %5129 = vmatprep.subr.bf16.mxu0 0
        %5130 = vmatpush1.bf16.xpose.msra.mxu0 %v5087
        %5131 = vmatprep.subr.bf16.mxu0 0
        %5132 = vmatpush1.bf16.xpose.msra.mxu0 %v5090
        %5133 = vmatprep.subr.bf16.mxu0 0
        %5134 = vmatpush1.bf16.xpose.msra.mxu0 %v5093
        %5135 = vmatprep.subr.bf16.mxu0 0
        %5136 = vmatpush1.bf16.xpose.msra.mxu0 %v5096
        %5137 = vmatprep.subr.bf16.mxu0 0
        %5138 = vmatpush1.bf16.xpose.msra.mxu0 %v5099
        %5139 = vmatprep.subr.bf16.mxu0 0
        %5140 = vmatpush1.bf16.xpose.msra.mxu0 %v5102
        %5141 = vmatprep.subr.bf16.mxu0 0
        %5142 = vmatpush1.bf16.xpose.msra.mxu0 %v5105
        %5143 = vmatprep.subr.bf16.mxu0 0
        %5144 = vmatpush1.bf16.xpose.msra.mxu0 %v5108
        %5145 = vmatprep.subr.bf16.mxu0 0
        %5146 = vmatpush1.bf16.xpose.msra.mxu0 %v5111
        %5147 = vmatprep.subr.bf16.mxu0 0
        %5148 = vmatpush1.bf16.xpose.msra.mxu0 %v5114
        %5149 = vmatprep.subr.bf16.mxu0 0
        %5150 = vmatpush1.bf16.xpose.msra.mxu0 %v5117
        %5151 = vmatprep.mubr.bf16.mxu0 0
        %5152 = vmatmul.mubr.bf16.gmra.mrb[0].mxu0 %v5024
        %v5153 = vpop.f32.mrb[0].mxu0
        %v5154 = vadd.f32 %v1720, %v5153
        %v5155 = vpop.f32.mrb[0].mxu0
        %v5156 = vadd.f32 %v1721, %v5155
        %v5157 = vpop.f32.mrb[0].mxu0
        %v5158 = vadd.f32 %v1722, %v5157
        %v5159 = vpop.f32.mrb[0].mxu0
        %v5160 = vadd.f32 %v1723, %v5159
        %5161 = vmatprep.mubr.bf16.mxu0 0
        %5162 = vmatmul.mubr.bf16.gmra.mrb[0].mxu0 %v5027
        %v5163 = vpop.f32.mrb[0].mxu0
        %v5164 = vadd.f32 %v1724, %v5163
        %v5165 = vpop.f32.mrb[0].mxu0
        %v5166 = vadd.f32 %v1725, %v5165
        %v5167 = vpop.f32.mrb[0].mxu0
        %v5168 = vadd.f32 %v1726, %v5167
        %v5169 = vpop.f32.mrb[0].mxu0
        %v5170 = vadd.f32 %v1727, %v5169
        %5171 = vmatprep.mubr.bf16.mxu0 0
        %5172 = vmatmul.mubr.bf16.gmra.mrb[0].mxu0 %v5030
        %v5173 = vpop.f32.mrb[0].mxu0
        %v5174 = vadd.f32 %v1728, %v5173
        %v5175 = vpop.f32.mrb[0].mxu0
        %v5176 = vadd.f32 %v1729, %v5175
        %v5177 = vpop.f32.mrb[0].mxu0
        %v5178 = vadd.f32 %v1730, %v5177
        %v5179 = vpop.f32.mrb[0].mxu0
        %v5180 = vadd.f32 %v1731, %v5179
        %5181 = vmatprep.mubr.bf16.mxu0 0
        %5182 = vmatmul.mubr.bf16.gmra.mrb[0].mxu0 %v5033
        %v5183 = vpop.f32.mrb[0].mxu0
        %v5184 = vadd.f32 %v1732, %v5183
        %v5185 = vpop.f32.mrb[0].mxu0
        %v5186 = vadd.f32 %v1733, %v5185
        %v5187 = vpop.f32.mrb[0].mxu0
        %v5188 = vadd.f32 %v1734, %v5187
        %v5189 = vpop.f32.mrb[0].mxu0
        %v5190 = vadd.f32 %v1735, %v5189
        %5191 = vmatprep.mubr.bf16.mxu0 0
        %5192 = vmatmul.mubr.bf16.gmra.mrb[0].mxu0 %v5036
        %v5193 = vpop.f32.mrb[0].mxu0
        %v5194 = vadd.f32 %v1736, %v5193
        %v5195 = vpop.f32.mrb[0].mxu0
        %v5196 = vadd.f32 %v1737, %v5195
        %v5197 = vpop.f32.mrb[0].mxu0
        %v5198 = vadd.f32 %v1738, %v5197
        %v5199 = vpop.f32.mrb[0].mxu0
        %v5200 = vadd.f32 %v1739, %v5199
        %5201 = vmatprep.mubr.bf16.mxu0 0
        %5202 = vmatmul.mubr.bf16.gmra.mrb[0].mxu0 %v5039
        %v5203 = vpop.f32.mrb[0].mxu0
        %v5204 = vadd.f32 %v1740, %v5203
        %v5205 = vpop.f32.mrb[0].mxu0
        %v5206 = vadd.f32 %v1741, %v5205
        %v5207 = vpop.f32.mrb[0].mxu0
        %v5208 = vadd.f32 %v1742, %v5207
        %v5209 = vpop.f32.mrb[0].mxu0
        %v5210 = vadd.f32 %v1743, %v5209
        %5211 = vmatprep.mubr.bf16.mxu0 0
        %5212 = vmatmul.mubr.bf16.gmra.mrb[0].mxu0 %v5042
        %v5213 = vpop.f32.mrb[0].mxu0
        %v5214 = vadd.f32 %v1744, %v5213
        %v5215 = vpop.f32.mrb[0].mxu0
        %v5216 = vadd.f32 %v1745, %v5215
        %v5217 = vpop.f32.mrb[0].mxu0
        %v5218 = vadd.f32 %v1746, %v5217
        %v5219 = vpop.f32.mrb[0].mxu0
        %v5220 = vadd.f32 %v1747, %v5219
        %5221 = vmatprep.mubr.bf16.mxu0 0
        %5222 = vmatmul.mubr.bf16.gmra.mrb[0].mxu0 %v5045
        %v5223 = vpop.f32.mrb[0].mxu0
        %v5224 = vadd.f32 %v1748, %v5223
        %v5225 = vpop.f32.mrb[0].mxu0
        %v5226 = vadd.f32 %v1749, %v5225
        %v5227 = vpop.f32.mrb[0].mxu0
        %v5228 = vadd.f32 %v1750, %v5227
        %v5229 = vpop.f32.mrb[0].mxu0
        %v5230 = vadd.f32 %v1751, %v5229
        %5231 = vmatprep.mubr.bf16.mxu0 0
        %5232 = vmatmul.mubr.bf16.gmra.mrb[0].mxu0 %v5048
        %v5233 = vpop.f32.mrb[0].mxu0
        %v5234 = vadd.f32 %v1752, %v5233
        %v5235 = vpop.f32.mrb[0].mxu0
        %v5236 = vadd.f32 %v1753, %v5235
        %v5237 = vpop.f32.mrb[0].mxu0
        %v5238 = vadd.f32 %v1754, %v5237
        %v5239 = vpop.f32.mrb[0].mxu0
        %v5240 = vadd.f32 %v1755, %v5239
        %5241 = vmatprep.mubr.bf16.mxu0 0
        %5242 = vmatmul.mubr.bf16.gmra.mrb[0].mxu0 %v5051
        %v5243 = vpop.f32.mrb[0].mxu0
        %v5244 = vadd.f32 %v1756, %v5243
        %v5245 = vpop.f32.mrb[0].mxu0
        %v5246 = vadd.f32 %v1757, %v5245
        %v5247 = vpop.f32.mrb[0].mxu0
        %v5248 = vadd.f32 %v1758, %v5247
        %v5249 = vpop.f32.mrb[0].mxu0
        %v5250 = vadd.f32 %v1759, %v5249
        %5251 = vmatprep.mubr.bf16.mxu0 0
        %5252 = vmatmul.mubr.bf16.gmra.mrb[0].mxu0 %v5054
        %v5253 = vpop.f32.mrb[0].mxu0
        %v5254 = vadd.f32 %v1760, %v5253
        %v5255 = vpop.f32.mrb[0].mxu0
        %v5256 = vadd.f32 %v1761, %v5255
        %v5257 = vpop.f32.mrb[0].mxu0
        %v5258 = vadd.f32 %v1762, %v5257
        %v5259 = vpop.f32.mrb[0].mxu0
        %v5260 = vadd.f32 %v1763, %v5259
        %5261 = vmatprep.mubr.bf16.mxu0 0
        %5262 = vmatmul.mubr.bf16.gmra.mrb[0].mxu0 %v5057
        %v5263 = vpop.f32.mrb[0].mxu0
        %v5264 = vadd.f32 %v1764, %v5263
        %v5265 = vpop.f32.mrb[0].mxu0
        %v5266 = vadd.f32 %v1765, %v5265
        %v5267 = vpop.f32.mrb[0].mxu0
        %v5268 = vadd.f32 %v1766, %v5267
        %v5269 = vpop.f32.mrb[0].mxu0
        %v5270 = vadd.f32 %v1767, %v5269
        %5271 = vmatprep.mubr.bf16.mxu0 0
        %5272 = vmatmul.mubr.bf16.gmra.mrb[0].mxu0 %v5060
        %v5273 = vpop.f32.mrb[0].mxu0
        %v5274 = vadd.f32 %v1768, %v5273
        %v5275 = vpop.f32.mrb[0].mxu0
        %v5276 = vadd.f32 %v1769, %v5275
        %v5277 = vpop.f32.mrb[0].mxu0
        %v5278 = vadd.f32 %v1770, %v5277
        %v5279 = vpop.f32.mrb[0].mxu0
        %v5280 = vadd.f32 %v1771, %v5279
        %5281 = vmatprep.mubr.bf16.mxu0 0
        %5282 = vmatmul.mubr.bf16.gmra.mrb[0].mxu0 %v5063
        %v5283 = vpop.f32.mrb[0].mxu0
        %v5284 = vadd.f32 %v1772, %v5283
        %v5285 = vpop.f32.mrb[0].mxu0
        %v5286 = vadd.f32 %v1773, %v5285
        %v5287 = vpop.f32.mrb[0].mxu0
        %v5288 = vadd.f32 %v1774, %v5287
        %v5289 = vpop.f32.mrb[0].mxu0
        %v5290 = vadd.f32 %v1775, %v5289
        %5291 = vmatprep.mubr.bf16.mxu0 0
        %5292 = vmatmul.mubr.bf16.gmra.mrb[0].mxu0 %v5066
        %v5293 = vpop.f32.mrb[0].mxu0
        %v5294 = vadd.f32 %v1776, %v5293
        %v5295 = vpop.f32.mrb[0].mxu0
        %v5296 = vadd.f32 %v1777, %v5295
        %v5297 = vpop.f32.mrb[0].mxu0
        %v5298 = vadd.f32 %v1778, %v5297
        %v5299 = vpop.f32.mrb[0].mxu0
        %v5300 = vadd.f32 %v1779, %v5299
        %5301 = vmatprep.mubr.bf16.mxu0 0
        %5302 = vmatmul.mubr.bf16.gmra.mrb[0].mxu0 %v5069
        %v5303 = vpop.f32.mrb[0].mxu0
        %v5304 = vadd.f32 %v1780, %v5303
        %v5305 = vpop.f32.mrb[0].mxu0
        %v5306 = vadd.f32 %v1781, %v5305
        %v5307 = vpop.f32.mrb[0].mxu0
        %v5308 = vadd.f32 %v1782, %v5307
        %v5309 = vpop.f32.mrb[0].mxu0
        %v5310 = vadd.f32 %v1783, %v5309
        %5311 = vdwg.mxu0
        %v5312 = vmax.f32 %v5154, %v5156
        %5313 = vmax.xlane.f32.xlu0 %v5312
        %v5314 = vpop.xlane.xlu0 %5313
        %v5315 = vmax.f32 %v5158, %v5160
        %5316 = vmax.xlane.f32.xlu0 %v5315
        %v5317 = vpop.xlane.xlu0 %5316
        %v5318 = vmax.f32 %v5164, %v5166
        %5319 = vmax.xlane.f32.xlu0 %v5318
        %v5320 = vpop.xlane.xlu0 %5319
        %v5321 = vmax.f32 %v5168, %v5170
        %5322 = vmax.xlane.f32.xlu0 %v5321
        %v5323 = vpop.xlane.xlu0 %5322
        %v5324 = vmax.f32 %v5174, %v5176
        %5325 = vmax.xlane.f32.xlu0 %v5324
        %v5326 = vpop.xlane.xlu0 %5325
        %v5327 = vmax.f32 %v5178, %v5180
        %5328 = vmax.xlane.f32.xlu0 %v5327
        %v5329 = vpop.xlane.xlu0 %5328
        %v5330 = vmax.f32 %v5184, %v5186
        %5331 = vmax.xlane.f32.xlu0 %v5330
        %v5332 = vpop.xlane.xlu0 %5331
        %v5333 = vmax.f32 %v5188, %v5190
        %5334 = vmax.xlane.f32.xlu0 %v5333
        %v5335 = vpop.xlane.xlu0 %5334
        %v5336 = vmax.f32 %v5194, %v5196
        %5337 = vmax.xlane.f32.xlu0 %v5336
        %v5338 = vpop.xlane.xlu0 %5337
        %v5339 = vmax.f32 %v5198, %v5200
        %5340 = vmax.xlane.f32.xlu0 %v5339
        %v5341 = vpop.xlane.xlu0 %5340
        %v5342 = vmax.f32 %v5204, %v5206
        %5343 = vmax.xlane.f32.xlu0 %v5342
        %v5344 = vpop.xlane.xlu0 %5343
        %v5345 = vmax.f32 %v5208, %v5210
        %5346 = vmax.xlane.f32.xlu0 %v5345
        %v5347 = vpop.xlane.xlu0 %5346
        %v5348 = vmax.f32 %v5214, %v5216
        %5349 = vmax.xlane.f32.xlu0 %v5348
        %v5350 = vpop.xlane.xlu0 %5349
        %v5351 = vmax.f32 %v5218, %v5220
        %5352 = vmax.xlane.f32.xlu0 %v5351
        %v5353 = vpop.xlane.xlu0 %5352
        %v5354 = vmax.f32 %v5224, %v5226
        %5355 = vmax.xlane.f32.xlu0 %v5354
        %v5356 = vpop.xlane.xlu0 %5355
        %v5357 = vmax.f32 %v5228, %v5230
        %5358 = vmax.xlane.f32.xlu0 %v5357
        %v5359 = vpop.xlane.xlu0 %5358
        %v5360 = vmax.f32 %v5234, %v5236
        %5361 = vmax.xlane.f32.xlu0 %v5360
        %v5362 = vpop.xlane.xlu0 %5361
        %v5363 = vmax.f32 %v5238, %v5240
        %5364 = vmax.xlane.f32.xlu0 %v5363
        %v5365 = vpop.xlane.xlu0 %5364
        %v5366 = vmax.f32 %v5244, %v5246
        %5367 = vmax.xlane.f32.xlu0 %v5366
        %v5368 = vpop.xlane.xlu0 %5367
        %v5369 = vmax.f32 %v5248, %v5250
        %5370 = vmax.xlane.f32.xlu0 %v5369
        %v5371 = vpop.xlane.xlu0 %5370
        %v5372 = vmax.f32 %v5254, %v5256
        %5373 = vmax.xlane.f32.xlu0 %v5372
        %v5374 = vpop.xlane.xlu0 %5373
        %v5375 = vmax.f32 %v5258, %v5260
        %5376 = vmax.xlane.f32.xlu0 %v5375
        %v5377 = vpop.xlane.xlu0 %5376
        %v5378 = vmax.f32 %v5264, %v5266
        %5379 = vmax.xlane.f32.xlu0 %v5378
        %v5380 = vpop.xlane.xlu0 %5379
        %v5381 = vmax.f32 %v5268, %v5270
        %5382 = vmax.xlane.f32.xlu0 %v5381
        %v5383 = vpop.xlane.xlu0 %5382
        %v5384 = vmax.f32 %v5274, %v5276
        %5385 = vmax.xlane.f32.xlu0 %v5384
        %v5386 = vpop.xlane.xlu0 %5385
        %v5387 = vmax.f32 %v5278, %v5280
        %5388 = vmax.xlane.f32.xlu0 %v5387
        %v5389 = vpop.xlane.xlu0 %5388
        %v5390 = vmax.f32 %v5284, %v5286
        %5391 = vmax.xlane.f32.xlu0 %v5390
        %v5392 = vpop.xlane.xlu0 %5391
        %v5393 = vmax.f32 %v5288, %v5290
        %5394 = vmax.xlane.f32.xlu0 %v5393
        %v5395 = vpop.xlane.xlu0 %5394
        %v5396 = vmax.f32 %v5294, %v5296
        %5397 = vmax.xlane.f32.xlu0 %v5396
        %v5398 = vpop.xlane.xlu0 %5397
        %v5399 = vmax.f32 %v5298, %v5300
        %5400 = vmax.xlane.f32.xlu0 %v5399
        %v5401 = vpop.xlane.xlu0 %5400
        %v5402 = vmax.f32 %v5304, %v5306
        %5403 = vmax.xlane.f32.xlu0 %v5402
        %v5404 = vpop.xlane.xlu0 %5403
        %v5405 = vmax.f32 %v5308, %v5310
        %5406 = vmax.xlane.f32.xlu0 %v5405
        %v5407 = vpop.xlane.xlu0 %5406
        %v5408 = vsub.f32 %v5154, %v5314
        %v5409 = vsub.f32 %v5156, %v5314
        %v5410 = vsub.f32 %v5158, %v5317
        %v5411 = vsub.f32 %v5160, %v5317
        %v5412 = vsub.f32 %v5164, %v5320
        %v5413 = vsub.f32 %v5166, %v5320
        %v5414 = vsub.f32 %v5168, %v5323
        %v5415 = vsub.f32 %v5170, %v5323
        %v5416 = vsub.f32 %v5174, %v5326
        %v5417 = vsub.f32 %v5176, %v5326
        %v5418 = vsub.f32 %v5178, %v5329
        %v5419 = vsub.f32 %v5180, %v5329
        %v5420 = vsub.f32 %v5184, %v5332
        %v5421 = vsub.f32 %v5186, %v5332
        %v5422 = vsub.f32 %v5188, %v5335
        %v5423 = vsub.f32 %v5190, %v5335
        %v5424 = vsub.f32 %v5194, %v5338
        %v5425 = vsub.f32 %v5196, %v5338
        %v5426 = vsub.f32 %v5198, %v5341
        %v5427 = vsub.f32 %v5200, %v5341
        %v5428 = vsub.f32 %v5204, %v5344
        %v5429 = vsub.f32 %v5206, %v5344
        %v5430 = vsub.f32 %v5208, %v5347
        %v5431 = vsub.f32 %v5210, %v5347
        %v5432 = vsub.f32 %v5214, %v5350
        %v5433 = vsub.f32 %v5216, %v5350
        %v5434 = vsub.f32 %v5218, %v5353
        %v5435 = vsub.f32 %v5220, %v5353
        %v5436 = vsub.f32 %v5224, %v5356
        %v5437 = vsub.f32 %v5226, %v5356
        %v5438 = vsub.f32 %v5228, %v5359
        %v5439 = vsub.f32 %v5230, %v5359
        %v5440 = vsub.f32 %v5234, %v5362
        %v5441 = vsub.f32 %v5236, %v5362
        %v5442 = vsub.f32 %v5238, %v5365
        %v5443 = vsub.f32 %v5240, %v5365
        %v5444 = vsub.f32 %v5244, %v5368
        %v5445 = vsub.f32 %v5246, %v5368
        %v5446 = vsub.f32 %v5248, %v5371
        %v5447 = vsub.f32 %v5250, %v5371
        %v5448 = vsub.f32 %v5254, %v5374
        %v5449 = vsub.f32 %v5256, %v5374
        %v5450 = vsub.f32 %v5258, %v5377
        %v5451 = vsub.f32 %v5260, %v5377
        %v5452 = vsub.f32 %v5264, %v5380
        %v5453 = vsub.f32 %v5266, %v5380
        %v5454 = vsub.f32 %v5268, %v5383
        %v5455 = vsub.f32 %v5270, %v5383
        %v5456 = vsub.f32 %v5274, %v5386
        %v5457 = vsub.f32 %v5276, %v5386
        %v5458 = vsub.f32 %v5278, %v5389
        %v5459 = vsub.f32 %v5280, %v5389
        %v5460 = vsub.f32 %v5284, %v5392
        %v5461 = vsub.f32 %v5286, %v5392
        %v5462 = vsub.f32 %v5288, %v5395
        %v5463 = vsub.f32 %v5290, %v5395
        %v5464 = vsub.f32 %v5294, %v5398
        %v5465 = vsub.f32 %v5296, %v5398
        %v5466 = vsub.f32 %v5298, %v5401
        %v5467 = vsub.f32 %v5300, %v5401
        %v5468 = vsub.f32 %v5304, %v5404
        %v5469 = vsub.f32 %v5306, %v5404
        %v5470 = vsub.f32 %v5308, %v5407
        %v5471 = vsub.f32 %v5310, %v5407
        %v5472 = vmul.f32 %v5408, 1.442695
        %v5473 = vpow.pop %v5472
        %v5474 = vmul.f32 %v5409, 1.442695
        %v5475 = vpow.pop %v5474
        %v5476 = vmul.f32 %v5410, 1.442695
        %v5477 = vpow.pop %v5476
        %v5478 = vmul.f32 %v5411, 1.442695
        %v5479 = vpow.pop %v5478
        %v5480 = vmul.f32 %v5412, 1.442695
        %v5481 = vpow.pop %v5480
        %v5482 = vmul.f32 %v5413, 1.442695
        %v5483 = vpow.pop %v5482
        %v5484 = vmul.f32 %v5414, 1.442695
        %v5485 = vpow.pop %v5484
        %v5486 = vmul.f32 %v5415, 1.442695
        %v5487 = vpow.pop %v5486
        %v5488 = vmul.f32 %v5416, 1.442695
        %v5489 = vpow.pop %v5488
        %v5490 = vmul.f32 %v5417, 1.442695
        %v5491 = vpow.pop %v5490
        %v5492 = vmul.f32 %v5418, 1.442695
        %v5493 = vpow.pop %v5492
        %v5494 = vmul.f32 %v5419, 1.442695
        %v5495 = vpow.pop %v5494
        %v5496 = vmul.f32 %v5420, 1.442695
        %v5497 = vpow.pop %v5496
        %v5498 = vmul.f32 %v5421, 1.442695
        %v5499 = vpow.pop %v5498
        %v5500 = vmul.f32 %v5422, 1.442695
        %v5501 = vpow.pop %v5500
        %v5502 = vmul.f32 %v5423, 1.442695
        %v5503 = vpow.pop %v5502
        %v5504 = vmul.f32 %v5424, 1.442695
        %v5505 = vpow.pop %v5504
        %v5506 = vmul.f32 %v5425, 1.442695
        %v5507 = vpow.pop %v5506
        %v5508 = vmul.f32 %v5426, 1.442695
        %v5509 = vpow.pop %v5508
        %v5510 = vmul.f32 %v5427, 1.442695
        %v5511 = vpow.pop %v5510
        %v5512 = vmul.f32 %v5428, 1.442695
        %v5513 = vpow.pop %v5512
        %v5514 = vmul.f32 %v5429, 1.442695
        %v5515 = vpow.pop %v5514
        %v5516 = vmul.f32 %v5430, 1.442695
        %v5517 = vpow.pop %v5516
        %v5518 = vmul.f32 %v5431, 1.442695
        %v5519 = vpow.pop %v5518
        %v5520 = vmul.f32 %v5432, 1.442695
        %v5521 = vpow.pop %v5520
        %v5522 = vmul.f32 %v5433, 1.442695
        %v5523 = vpow.pop %v5522
        %v5524 = vmul.f32 %v5434, 1.442695
        %v5525 = vpow.pop %v5524
        %v5526 = vmul.f32 %v5435, 1.442695
        %v5527 = vpow.pop %v5526
        %v5528 = vmul.f32 %v5436, 1.442695
        %v5529 = vpow.pop %v5528
        %v5530 = vmul.f32 %v5437, 1.442695
        %v5531 = vpow.pop %v5530
        %v5532 = vmul.f32 %v5438, 1.442695
        %v5533 = vpow.pop %v5532
        %v5534 = vmul.f32 %v5439, 1.442695
        %v5535 = vpow.pop %v5534
        %v5536 = vmul.f32 %v5440, 1.442695
        %v5537 = vpow.pop %v5536
        %v5538 = vmul.f32 %v5441, 1.442695
        %v5539 = vpow.pop %v5538
        %v5540 = vmul.f32 %v5442, 1.442695
        %v5541 = vpow.pop %v5540
        %v5542 = vmul.f32 %v5443, 1.442695
        %v5543 = vpow.pop %v5542
        %v5544 = vmul.f32 %v5444, 1.442695
        %v5545 = vpow.pop %v5544
        %v5546 = vmul.f32 %v5445, 1.442695
        %v5547 = vpow.pop %v5546
        %v5548 = vmul.f32 %v5446, 1.442695
        %v5549 = vpow.pop %v5548
        %v5550 = vmul.f32 %v5447, 1.442695
        %v5551 = vpow.pop %v5550
        %v5552 = vmul.f32 %v5448, 1.442695
        %v5553 = vpow.pop %v5552
        %v5554 = vmul.f32 %v5449, 1.442695
        %v5555 = vpow.pop %v5554
        %v5556 = vmul.f32 %v5450, 1.442695
        %v5557 = vpow.pop %v5556
        %v5558 = vmul.f32 %v5451, 1.442695
        %v5559 = vpow.pop %v5558
        %v5560 = vmul.f32 %v5452, 1.442695
        %v5561 = vpow.pop %v5560
        %v5562 = vmul.f32 %v5453, 1.442695
        %v5563 = vpow.pop %v5562
        %v5564 = vmul.f32 %v5454, 1.442695
        %v5565 = vpow.pop %v5564
        %v5566 = vmul.f32 %v5455, 1.442695
        %v5567 = vpow.pop %v5566
        %v5568 = vmul.f32 %v5456, 1.442695
        %v5569 = vpow.pop %v5568
        %v5570 = vmul.f32 %v5457, 1.442695
        %v5571 = vpow.pop %v5570
        %v5572 = vmul.f32 %v5458, 1.442695
        %v5573 = vpow.pop %v5572
        %v5574 = vmul.f32 %v5459, 1.442695
        %v5575 = vpow.pop %v5574
        %v5576 = vmul.f32 %v5460, 1.442695
        %v5577 = vpow.pop %v5576
        %v5578 = vmul.f32 %v5461, 1.442695
        %v5579 = vpow.pop %v5578
        %v5580 = vmul.f32 %v5462, 1.442695
        %v5581 = vpow.pop %v5580
        %v5582 = vmul.f32 %v5463, 1.442695
        %v5583 = vpow.pop %v5582
        %v5584 = vmul.f32 %v5464, 1.442695
        %v5585 = vpow.pop %v5584
        %v5586 = vmul.f32 %v5465, 1.442695
        %v5587 = vpow.pop %v5586
        %v5588 = vmul.f32 %v5466, 1.442695
        %v5589 = vpow.pop %v5588
        %v5590 = vmul.f32 %v5467, 1.442695
        %v5591 = vpow.pop %v5590
        %v5592 = vmul.f32 %v5468, 1.442695
        %v5593 = vpow.pop %v5592
        %v5594 = vmul.f32 %v5469, 1.442695
        %v5595 = vpow.pop %v5594
        %v5596 = vmul.f32 %v5470, 1.442695
        %v5597 = vpow.pop %v5596
        %v5598 = vmul.f32 %v5471, 1.442695
        %v5599 = vpow.pop %v5598
        %v5600 = vadd.f32 %v5473, %v5475
        %5601 = vadd.xlane.f32.xlu0 %v5600
        %v5602 = vpop.xlane.xlu0 %5601
        %v5603 = vadd.f32 %v5477, %v5479
        %5604 = vadd.xlane.f32.xlu0 %v5603
        %v5605 = vpop.xlane.xlu0 %5604
        %v5606 = vadd.f32 %v5481, %v5483
        %5607 = vadd.xlane.f32.xlu0 %v5606
        %v5608 = vpop.xlane.xlu0 %5607
        %v5609 = vadd.f32 %v5485, %v5487
        %5610 = vadd.xlane.f32.xlu0 %v5609
        %v5611 = vpop.xlane.xlu0 %5610
        %v5612 = vadd.f32 %v5489, %v5491
        %5613 = vadd.xlane.f32.xlu0 %v5612
        %v5614 = vpop.xlane.xlu0 %5613
        %v5615 = vadd.f32 %v5493, %v5495
        %5616 = vadd.xlane.f32.xlu0 %v5615
        %v5617 = vpop.xlane.xlu0 %5616
        %v5618 = vadd.f32 %v5497, %v5499
        %5619 = vadd.xlane.f32.xlu0 %v5618
        %v5620 = vpop.xlane.xlu0 %5619
        %v5621 = vadd.f32 %v5501, %v5503
        %5622 = vadd.xlane.f32.xlu0 %v5621
        %v5623 = vpop.xlane.xlu0 %5622
        %v5624 = vadd.f32 %v5505, %v5507
        %5625 = vadd.xlane.f32.xlu0 %v5624
        %v5626 = vpop.xlane.xlu0 %5625
        %v5627 = vadd.f32 %v5509, %v5511
        %5628 = vadd.xlane.f32.xlu0 %v5627
        %v5629 = vpop.xlane.xlu0 %5628
        %v5630 = vadd.f32 %v5513, %v5515
        %5631 = vadd.xlane.f32.xlu0 %v5630
        %v5632 = vpop.xlane.xlu0 %5631
        %v5633 = vadd.f32 %v5517, %v5519
        %5634 = vadd.xlane.f32.xlu0 %v5633
        %v5635 = vpop.xlane.xlu0 %5634
        %v5636 = vadd.f32 %v5521, %v5523
        %5637 = vadd.xlane.f32.xlu0 %v5636
        %v5638 = vpop.xlane.xlu0 %5637
        %v5639 = vadd.f32 %v5525, %v5527
        %5640 = vadd.xlane.f32.xlu0 %v5639
        %v5641 = vpop.xlane.xlu0 %5640
        %v5642 = vadd.f32 %v5529, %v5531
        %5643 = vadd.xlane.f32.xlu0 %v5642
        %v5644 = vpop.xlane.xlu0 %5643
        %v5645 = vadd.f32 %v5533, %v5535
        %5646 = vadd.xlane.f32.xlu0 %v5645
        %v5647 = vpop.xlane.xlu0 %5646
        %v5648 = vadd.f32 %v5537, %v5539
        %5649 = vadd.xlane.f32.xlu0 %v5648
        %v5650 = vpop.xlane.xlu0 %5649
        %v5651 = vadd.f32 %v5541, %v5543
        %5652 = vadd.xlane.f32.xlu0 %v5651
        %v5653 = vpop.xlane.xlu0 %5652
        %v5654 = vadd.f32 %v5545, %v5547
        %5655 = vadd.xlane.f32.xlu0 %v5654
        %v5656 = vpop.xlane.xlu0 %5655
        %v5657 = vadd.f32 %v5549, %v5551
        %5658 = vadd.xlane.f32.xlu0 %v5657
        %v5659 = vpop.xlane.xlu0 %5658
        %v5660 = vadd.f32 %v5553, %v5555
        %5661 = vadd.xlane.f32.xlu0 %v5660
        %v5662 = vpop.xlane.xlu0 %5661
        %v5663 = vadd.f32 %v5557, %v5559
        %5664 = vadd.xlane.f32.xlu0 %v5663
        %v5665 = vpop.xlane.xlu0 %5664
        %v5666 = vadd.f32 %v5561, %v5563
        %5667 = vadd.xlane.f32.xlu0 %v5666
        %v5668 = vpop.xlane.xlu0 %5667
        %v5669 = vadd.f32 %v5565, %v5567
        %5670 = vadd.xlane.f32.xlu0 %v5669
        %v5671 = vpop.xlane.xlu0 %5670
        %v5672 = vadd.f32 %v5569, %v5571
        %5673 = vadd.xlane.f32.xlu0 %v5672
        %v5674 = vpop.xlane.xlu0 %5673
        %v5675 = vadd.f32 %v5573, %v5575
        %5676 = vadd.xlane.f32.xlu0 %v5675
        %v5677 = vpop.xlane.xlu0 %5676
        %v5678 = vadd.f32 %v5577, %v5579
        %5679 = vadd.xlane.f32.xlu0 %v5678
        %v5680 = vpop.xlane.xlu0 %5679
        %v5681 = vadd.f32 %v5581, %v5583
        %5682 = vadd.xlane.f32.xlu0 %v5681
        %v5683 = vpop.xlane.xlu0 %5682
        %v5684 = vadd.f32 %v5585, %v5587
        %5685 = vadd.xlane.f32.xlu0 %v5684
        %v5686 = vpop.xlane.xlu0 %5685
        %v5687 = vadd.f32 %v5589, %v5591
        %5688 = vadd.xlane.f32.xlu0 %v5687
        %v5689 = vpop.xlane.xlu0 %5688
        %v5690 = vadd.f32 %v5593, %v5595
        %5691 = vadd.xlane.f32.xlu0 %v5690
        %v5692 = vpop.xlane.xlu0 %5691
        %v5693 = vadd.f32 %v5597, %v5599
        %5694 = vadd.xlane.f32.xlu0 %v5693
        %v5695 = vpop.xlane.xlu0 %5694
        %v5696 = vrcp.pop %v5602
        %v5697 = vrcp.pop %v5605
        %v5698 = vrcp.pop %v5608
        %v5699 = vrcp.pop %v5611
        %v5700 = vrcp.pop %v5614
        %v5701 = vrcp.pop %v5617
        %v5702 = vrcp.pop %v5620
        %v5703 = vrcp.pop %v5623
        %v5704 = vrcp.pop %v5626
        %v5705 = vrcp.pop %v5629
        %v5706 = vrcp.pop %v5632
        %v5707 = vrcp.pop %v5635
        %v5708 = vrcp.pop %v5638
        %v5709 = vrcp.pop %v5641
        %v5710 = vrcp.pop %v5644
        %v5711 = vrcp.pop %v5647
        %v5712 = vrcp.pop %v5650
        %v5713 = vrcp.pop %v5653
        %v5714 = vrcp.pop %v5656
        %v5715 = vrcp.pop %v5659
        %v5716 = vrcp.pop %v5662
        %v5717 = vrcp.pop %v5665
        %v5718 = vrcp.pop %v5668
        %v5719 = vrcp.pop %v5671
        %v5720 = vrcp.pop %v5674
        %v5721 = vrcp.pop %v5677
        %v5722 = vrcp.pop %v5680
        %v5723 = vrcp.pop %v5683
        %v5724 = vrcp.pop %v5686
        %v5725 = vrcp.pop %v5689
        %v5726 = vrcp.pop %v5692
        %v5727 = vrcp.pop %v5695
        %v5728 = vmul.f32 %v5473, %v5696
        %v5729 = vmul.f32 %v5475, %v5696
        %v5730 = vmul.f32 %v5477, %v5697
        %v5731 = vmul.f32 %v5479, %v5697
        %v5732 = vmul.f32 %v5481, %v5698
        %v5733 = vmul.f32 %v5483, %v5698
        %v5734 = vmul.f32 %v5485, %v5699
        %v5735 = vmul.f32 %v5487, %v5699
        %v5736 = vmul.f32 %v5489, %v5700
        %v5737 = vmul.f32 %v5491, %v5700
        %v5738 = vmul.f32 %v5493, %v5701
        %v5739 = vmul.f32 %v5495, %v5701
        %v5740 = vmul.f32 %v5497, %v5702
        %v5741 = vmul.f32 %v5499, %v5702
        %v5742 = vmul.f32 %v5501, %v5703
        %v5743 = vmul.f32 %v5503, %v5703
        %v5744 = vmul.f32 %v5505, %v5704
        %v5745 = vmul.f32 %v5507, %v5704
        %v5746 = vmul.f32 %v5509, %v5705
        %v5747 = vmul.f32 %v5511, %v5705
        %v5748 = vmul.f32 %v5513, %v5706
        %v5749 = vmul.f32 %v5515, %v5706
        %v5750 = vmul.f32 %v5517, %v5707
        %v5751 = vmul.f32 %v5519, %v5707
        %v5752 = vmul.f32 %v5521, %v5708
        %v5753 = vmul.f32 %v5523, %v5708
        %v5754 = vmul.f32 %v5525, %v5709
        %v5755 = vmul.f32 %v5527, %v5709
        %v5756 = vmul.f32 %v5529, %v5710
        %v5757 = vmul.f32 %v5531, %v5710
        %v5758 = vmul.f32 %v5533, %v5711
        %v5759 = vmul.f32 %v5535, %v5711
        %v5760 = vmul.f32 %v5537, %v5712
        %v5761 = vmul.f32 %v5539, %v5712
        %v5762 = vmul.f32 %v5541, %v5713
        %v5763 = vmul.f32 %v5543, %v5713
        %v5764 = vmul.f32 %v5545, %v5714
        %v5765 = vmul.f32 %v5547, %v5714
        %v5766 = vmul.f32 %v5549, %v5715
        %v5767 = vmul.f32 %v5551, %v5715
        %v5768 = vmul.f32 %v5553, %v5716
        %v5769 = vmul.f32 %v5555, %v5716
        %v5770 = vmul.f32 %v5557, %v5717
        %v5771 = vmul.f32 %v5559, %v5717
        %v5772 = vmul.f32 %v5561, %v5718
        %v5773 = vmul.f32 %v5563, %v5718
        %v5774 = vmul.f32 %v5565, %v5719
        %v5775 = vmul.f32 %v5567, %v5719
        %v5776 = vmul.f32 %v5569, %v5720
        %v5777 = vmul.f32 %v5571, %v5720
        %v5778 = vmul.f32 %v5573, %v5721
        %v5779 = vmul.f32 %v5575, %v5721
        %v5780 = vmul.f32 %v5577, %v5722
        %v5781 = vmul.f32 %v5579, %v5722
        %v5782 = vmul.f32 %v5581, %v5723
        %v5783 = vmul.f32 %v5583, %v5723
        %v5784 = vmul.f32 %v5585, %v5724
        %v5785 = vmul.f32 %v5587, %v5724
        %v5786 = vmul.f32 %v5589, %v5725
        %v5787 = vmul.f32 %v5591, %v5725
        %v5788 = vmul.f32 %v5593, %v5726
        %v5789 = vmul.f32 %v5595, %v5726
        %v5790 = vmul.f32 %v5597, %v5727
        %v5791 = vmul.f32 %v5599, %v5727
        %v5792 = vpack.c.bf16 %v5730, %v5728
        %v5793 = vpack.c.bf16 %v5731, %v5729
        %v5794 = vpack.c.bf16 %v5734, %v5732
        %v5795 = vpack.c.bf16 %v5735, %v5733
        %v5796 = vpack.c.bf16 %v5738, %v5736
        %v5797 = vpack.c.bf16 %v5739, %v5737
        %v5798 = vpack.c.bf16 %v5742, %v5740
        %v5799 = vpack.c.bf16 %v5743, %v5741
        %v5800 = vpack.c.bf16 %v5746, %v5744
        %v5801 = vpack.c.bf16 %v5747, %v5745
        %v5802 = vpack.c.bf16 %v5750, %v5748
        %v5803 = vpack.c.bf16 %v5751, %v5749
        %v5804 = vpack.c.bf16 %v5754, %v5752
        %v5805 = vpack.c.bf16 %v5755, %v5753
        %v5806 = vpack.c.bf16 %v5758, %v5756
        %v5807 = vpack.c.bf16 %v5759, %v5757
        %v5808 = vpack.c.bf16 %v5762, %v5760
        %v5809 = vpack.c.bf16 %v5763, %v5761
        %v5810 = vpack.c.bf16 %v5766, %v5764
        %v5811 = vpack.c.bf16 %v5767, %v5765
        %v5812 = vpack.c.bf16 %v5770, %v5768
        %v5813 = vpack.c.bf16 %v5771, %v5769
        %v5814 = vpack.c.bf16 %v5774, %v5772
        %v5815 = vpack.c.bf16 %v5775, %v5773
        %v5816 = vpack.c.bf16 %v5778, %v5776
        %v5817 = vpack.c.bf16 %v5779, %v5777
        %v5818 = vpack.c.bf16 %v5782, %v5780
        %v5819 = vpack.c.bf16 %v5783, %v5781
        %v5820 = vpack.c.bf16 %v5786, %v5784
        %v5821 = vpack.c.bf16 %v5787, %v5785
        %v5822 = vpack.c.bf16 %v5790, %v5788
        %v5823 = vpack.c.bf16 %v5791, %v5789
        %5824 = vmatprep.subr.bf16.mxu0 0
        %5825 = vmatpush1.bf16.msra.mxu0 %v5007
        %5826 = vmatprep.subr.bf16.mxu0 0
        %5827 = vmatpush1.bf16.msra.mxu0 %v5008
        %5828 = vmatprep.subr.bf16.mxu0 0
        %5829 = vmatpush1.bf16.msra.mxu0 %v5009
        %5830 = vmatprep.subr.bf16.mxu0 0
        %5831 = vmatpush1.bf16.msra.mxu0 %v5010
        %5832 = vmatprep.subr.bf16.mxu0 0
        %5833 = vmatpush1.bf16.msra.mxu0 %v5011
        %5834 = vmatprep.subr.bf16.mxu0 0
        %5835 = vmatpush1.bf16.msra.mxu0 %v5012
        %5836 = vmatprep.subr.bf16.mxu0 0
        %5837 = vmatpush1.bf16.msra.mxu0 %v5013
        %5838 = vmatprep.subr.bf16.mxu0 0
        %5839 = vmatpush1.bf16.msra.mxu0 %v5014
        %5840 = vmatprep.subr.bf16.mxu0 0
        %5841 = vmatpush1.bf16.msra.mxu0 %v5015
        %5842 = vmatprep.subr.bf16.mxu0 0
        %5843 = vmatpush1.bf16.msra.mxu0 %v5016
        %5844 = vmatprep.subr.bf16.mxu0 0
        %5845 = vmatpush1.bf16.msra.mxu0 %v5017
        %5846 = vmatprep.subr.bf16.mxu0 0
        %5847 = vmatpush1.bf16.msra.mxu0 %v5018
        %5848 = vmatprep.subr.bf16.mxu0 0
        %5849 = vmatpush1.bf16.msra.mxu0 %v5019
        %5850 = vmatprep.subr.bf16.mxu0 0
        %5851 = vmatpush1.bf16.msra.mxu0 %v5020
        %5852 = vmatprep.subr.bf16.mxu0 0
        %5853 = vmatpush1.bf16.msra.mxu0 %v5021
        %5854 = vmatprep.subr.bf16.mxu0 0
        %5855 = vmatpush1.bf16.msra.mxu0 %v5022
        %5856 = vmatprep.mubr.bf16.mxu0 %v5793
        %5857 = vmatmul.mubr.bf16.gmra.mrb[0].mxu0 %v5792
        %v5858 = vpop.f32.mrb[0].mxu0
        %v5859 = vadd.f32 0.0, %v5858
        %v5860 = vpop.f32.mrb[0].mxu0
        %v5861 = vpop.f32.mrb[0].mxu0
        %v5862 = vadd.f32 0.0, %v5861
        %v5863 = vpop.f32.mrb[0].mxu0
        %5864 = vmatprep.mubr.bf16.mxu0 %v5795
        %5865 = vmatmul.mubr.bf16.gmra.mrb[0].mxu0 %v5794
        %v5866 = vpop.f32.mrb[0].mxu0
        %v5867 = vadd.f32 0.0, %v5866
        %v5868 = vpop.f32.mrb[0].mxu0
        %v5869 = vpop.f32.mrb[0].mxu0
        %v5870 = vadd.f32 0.0, %v5869
        %v5871 = vpop.f32.mrb[0].mxu0
        %5872 = vmatprep.mubr.bf16.mxu0 %v5797
        %5873 = vmatmul.mubr.bf16.gmra.mrb[0].mxu0 %v5796
        %v5874 = vpop.f32.mrb[0].mxu0
        %v5875 = vadd.f32 0.0, %v5874
        %v5876 = vpop.f32.mrb[0].mxu0
        %v5877 = vpop.f32.mrb[0].mxu0
        %v5878 = vadd.f32 0.0, %v5877
        %v5879 = vpop.f32.mrb[0].mxu0
        %5880 = vmatprep.mubr.bf16.mxu0 %v5799
        %5881 = vmatmul.mubr.bf16.gmra.mrb[0].mxu0 %v5798
        %v5882 = vpop.f32.mrb[0].mxu0
        %v5883 = vadd.f32 0.0, %v5882
        %v5884 = vpop.f32.mrb[0].mxu0
        %v5885 = vpop.f32.mrb[0].mxu0
        %v5886 = vadd.f32 0.0, %v5885
        %v5887 = vpop.f32.mrb[0].mxu0
        %5888 = vmatprep.mubr.bf16.mxu0 %v5801
        %5889 = vmatmul.mubr.bf16.gmra.mrb[0].mxu0 %v5800
        %v5890 = vpop.f32.mrb[0].mxu0
        %v5891 = vadd.f32 0.0, %v5890
        %v5892 = vpop.f32.mrb[0].mxu0
        %v5893 = vpop.f32.mrb[0].mxu0
        %v5894 = vadd.f32 0.0, %v5893
        %v5895 = vpop.f32.mrb[0].mxu0
        %5896 = vmatprep.mubr.bf16.mxu0 %v5803
        %5897 = vmatmul.mubr.bf16.gmra.mrb[0].mxu0 %v5802
        %v5898 = vpop.f32.mrb[0].mxu0
        %v5899 = vadd.f32 0.0, %v5898
        %v5900 = vpop.f32.mrb[0].mxu0
        %v5901 = vpop.f32.mrb[0].mxu0
        %v5902 = vadd.f32 0.0, %v5901
        %v5903 = vpop.f32.mrb[0].mxu0
        %5904 = vmatprep.mubr.bf16.mxu0 %v5805
        %5905 = vmatmul.mubr.bf16.gmra.mrb[0].mxu0 %v5804
        %v5906 = vpop.f32.mrb[0].mxu0
        %v5907 = vadd.f32 0.0, %v5906
        %v5908 = vpop.f32.mrb[0].mxu0
        %v5909 = vpop.f32.mrb[0].mxu0
        %v5910 = vadd.f32 0.0, %v5909
        %v5911 = vpop.f32.mrb[0].mxu0
        %5912 = vmatprep.mubr.bf16.mxu0 %v5807
        %5913 = vmatmul.mubr.bf16.gmra.mrb[0].mxu0 %v5806
        %v5914 = vpop.f32.mrb[0].mxu0
        %v5915 = vadd.f32 0.0, %v5914
        %v5916 = vpop.f32.mrb[0].mxu0
        %v5917 = vpop.f32.mrb[0].mxu0
        %v5918 = vadd.f32 0.0, %v5917
        %v5919 = vpop.f32.mrb[0].mxu0
        %5920 = vmatprep.mubr.bf16.mxu0 %v5809
        %5921 = vmatmul.mubr.bf16.gmra.mrb[0].mxu0 %v5808
        %v5922 = vpop.f32.mrb[0].mxu0
        %v5923 = vadd.f32 0.0, %v5922
        %v5924 = vpop.f32.mrb[0].mxu0
        %v5925 = vpop.f32.mrb[0].mxu0
        %v5926 = vadd.f32 0.0, %v5925
        %v5927 = vpop.f32.mrb[0].mxu0
        %5928 = vmatprep.mubr.bf16.mxu0 %v5811
        %5929 = vmatmul.mubr.bf16.gmra.mrb[0].mxu0 %v5810
        %v5930 = vpop.f32.mrb[0].mxu0
        %v5931 = vadd.f32 0.0, %v5930
        %v5932 = vpop.f32.mrb[0].mxu0
        %v5933 = vpop.f32.mrb[0].mxu0
        %v5934 = vadd.f32 0.0, %v5933
        %v5935 = vpop.f32.mrb[0].mxu0
        %5936 = vmatprep.mubr.bf16.mxu0 %v5813
        %5937 = vmatmul.mubr.bf16.gmra.mrb[0].mxu0 %v5812
        %v5938 = vpop.f32.mrb[0].mxu0
        %v5939 = vadd.f32 0.0, %v5938
        %v5940 = vpop.f32.mrb[0].mxu0
        %v5941 = vpop.f32.mrb[0].mxu0
        %v5942 = vadd.f32 0.0, %v5941
        %v5943 = vpop.f32.mrb[0].mxu0
        %5944 = vmatprep.mubr.bf16.mxu0 %v5815
        %5945 = vmatmul.mubr.bf16.gmra.mrb[0].mxu0 %v5814
        %v5946 = vpop.f32.mrb[0].mxu0
        %v5947 = vadd.f32 0.0, %v5946
        %v5948 = vpop.f32.mrb[0].mxu0
        %v5949 = vpop.f32.mrb[0].mxu0
        %v5950 = vadd.f32 0.0, %v5949
        %v5951 = vpop.f32.mrb[0].mxu0
        %5952 = vmatprep.mubr.bf16.mxu0 %v5817
        %5953 = vmatmul.mubr.bf16.gmra.mrb[0].mxu0 %v5816
        %v5954 = vpop.f32.mrb[0].mxu0
        %v5955 = vadd.f32 0.0, %v5954
        %v5956 = vpop.f32.mrb[0].mxu0
        %v5957 = vpop.f32.mrb[0].mxu0
        %v5958 = vadd.f32 0.0, %v5957
        %v5959 = vpop.f32.mrb[0].mxu0
        %5960 = vmatprep.mubr.bf16.mxu0 %v5819
        %5961 = vmatmul.mubr.bf16.gmra.mrb[0].mxu0 %v5818
        %v5962 = vpop.f32.mrb[0].mxu0
        %v5963 = vadd.f32 0.0, %v5962
        %v5964 = vpop.f32.mrb[0].mxu0
        %v5965 = vpop.f32.mrb[0].mxu0
        %v5966 = vadd.f32 0.0, %v5965
        %v5967 = vpop.f32.mrb[0].mxu0
        %5968 = vmatprep.mubr.bf16.mxu0 %v5821
        %5969 = vmatmul.mubr.bf16.gmra.mrb[0].mxu0 %v5820
        %v5970 = vpop.f32.mrb[0].mxu0
        %v5971 = vadd.f32 0.0, %v5970
        %v5972 = vpop.f32.mrb[0].mxu0
        %v5973 = vpop.f32.mrb[0].mxu0
        %v5974 = vadd.f32 0.0, %v5973
        %v5975 = vpop.f32.mrb[0].mxu0
        %5976 = vmatprep.mubr.bf16.mxu0 %v5823
        %5977 = vmatmul.mubr.bf16.gmra.mrb[0].mxu0 %v5822
        %v5978 = vpop.f32.mrb[0].mxu0
        %v5979 = vadd.f32 0.0, %v5978
        %v5980 = vpop.f32.mrb[0].mxu0
        %v5981 = vpop.f32.mrb[0].mxu0
        %v5982 = vadd.f32 0.0, %v5981
        %v5983 = vpop.f32.mrb[0].mxu0
        %5984 = vdwg.mxu0
        %v5985 = vld [vmem:[#allocation2] sm:$0xff]
        %v5986 = vld [vmem:[#allocation2 + $0x8] sm:$0xff]
        %v5987 = vld [vmem:[#allocation2 + $0x10] sm:$0xff]
        %v5988 = vld [vmem:[#allocation2 + $0x18] sm:$0xff]
        %v5989 = vld [vmem:[#allocation2 + $0x20] sm:$0xff]
        %v5990 = vld [vmem:[#allocation2 + $0x28] sm:$0xff]
        %v5991 = vld [vmem:[#allocation2 + $0x30] sm:$0xff]
        %v5992 = vld [vmem:[#allocation2 + $0x38] sm:$0xff]
        %v5993 = vld [vmem:[#allocation2 + $0x40] sm:$0xff]
        %v5994 = vld [vmem:[#allocation2 + $0x48] sm:$0xff]
        %v5995 = vld [vmem:[#allocation2 + $0x50] sm:$0xff]
        %v5996 = vld [vmem:[#allocation2 + $0x58] sm:$0xff]
        %v5997 = vld [vmem:[#allocation2 + $0x60] sm:$0xff]
        %v5998 = vld [vmem:[#allocation2 + $0x68] sm:$0xff]
        %v5999 = vld [vmem:[#allocation2 + $0x70] sm:$0xff]
        %v6000 = vld [vmem:[#allocation2 + $0x78] sm:$0xff]
        %v6001 = vld [vmem:[#allocation2 + $0x80] sm:$0xff]
        %v6002 = vld [vmem:[#allocation2 + $0x88] sm:$0xff]
        %v6003 = vld [vmem:[#allocation2 + $0x90] sm:$0xff]
        %v6004 = vld [vmem:[#allocation2 + $0x98] sm:$0xff]
        %v6005 = vld [vmem:[#allocation2 + $0xa0] sm:$0xff]
        %v6006 = vld [vmem:[#allocation2 + $0xa8] sm:$0xff]
        %v6007 = vld [vmem:[#allocation2 + $0xb0] sm:$0xff]
        %v6008 = vld [vmem:[#allocation2 + $0xb8] sm:$0xff]
        %v6009 = vld [vmem:[#allocation2 + $0xc0] sm:$0xff]
        %v6010 = vld [vmem:[#allocation2 + $0xc8] sm:$0xff]
        %v6011 = vld [vmem:[#allocation2 + $0xd0] sm:$0xff]
        %v6012 = vld [vmem:[#allocation2 + $0xd8] sm:$0xff]
        %v6013 = vld [vmem:[#allocation2 + $0xe0] sm:$0xff]
        %v6014 = vld [vmem:[#allocation2 + $0xe8] sm:$0xff]
        %v6015 = vld [vmem:[#allocation2 + $0xf0] sm:$0xff]
        %v6016 = vld [vmem:[#allocation2 + $0xf8] sm:$0xff]
        %v6017 = vld [vmem:[#allocation2 + $0x100] sm:$0xff]
        %v6018 = vld [vmem:[#allocation2 + $0x108] sm:$0xff]
        %v6019 = vld [vmem:[#allocation2 + $0x110] sm:$0xff]
        %v6020 = vld [vmem:[#allocation2 + $0x118] sm:$0xff]
        %v6021 = vld [vmem:[#allocation2 + $0x120] sm:$0xff]
        %v6022 = vld [vmem:[#allocation2 + $0x128] sm:$0xff]
        %v6023 = vld [vmem:[#allocation2 + $0x130] sm:$0xff]
        %v6024 = vld [vmem:[#allocation2 + $0x138] sm:$0xff]
        %v6025 = vld [vmem:[#allocation2 + $0x140] sm:$0xff]
        %v6026 = vld [vmem:[#allocation2 + $0x148] sm:$0xff]
        %v6027 = vld [vmem:[#allocation2 + $0x150] sm:$0xff]
        %v6028 = vld [vmem:[#allocation2 + $0x158] sm:$0xff]
        %v6029 = vld [vmem:[#allocation2 + $0x160] sm:$0xff]
        %v6030 = vld [vmem:[#allocation2 + $0x168] sm:$0xff]
        %v6031 = vld [vmem:[#allocation2 + $0x170] sm:$0xff]
        %v6032 = vld [vmem:[#allocation2 + $0x178] sm:$0xff]
        %v6033 = vld [vmem:[#allocation2 + $0x180] sm:$0xff]
        %v6034 = vld [vmem:[#allocation2 + $0x188] sm:$0xff]
        %v6035 = vld [vmem:[#allocation2 + $0x190] sm:$0xff]
        %v6036 = vld [vmem:[#allocation2 + $0x198] sm:$0xff]
        %v6037 = vld [vmem:[#allocation2 + $0x1a0] sm:$0xff]
        %v6038 = vld [vmem:[#allocation2 + $0x1a8] sm:$0xff]
        %v6039 = vld [vmem:[#allocation2 + $0x1b0] sm:$0xff]
        %v6040 = vld [vmem:[#allocation2 + $0x1b8] sm:$0xff]
        %v6041 = vld [vmem:[#allocation2 + $0x1c0] sm:$0xff]
        %v6042 = vld [vmem:[#allocation2 + $0x1c8] sm:$0xff]
        %v6043 = vld [vmem:[#allocation2 + $0x1d0] sm:$0xff]
        %v6044 = vld [vmem:[#allocation2 + $0x1d8] sm:$0xff]
        %v6045 = vld [vmem:[#allocation2 + $0x1e0] sm:$0xff]
        %v6046 = vld [vmem:[#allocation2 + $0x1e8] sm:$0xff]
        %v6047 = vld [vmem:[#allocation2 + $0x1f0] sm:$0xff]
        %v6048 = vld [vmem:[#allocation2 + $0x1f8] sm:$0xff]
        %v6049 = vpack.c.bf16 %v5862, %v5859
        %v6050 = vpack.c.bf16 %v5870, %v5867
        %v6051 = vpack.c.bf16 %v5878, %v5875
        %v6052 = vpack.c.bf16 %v5886, %v5883
        %v6053 = vpack.c.bf16 %v5894, %v5891
        %v6054 = vpack.c.bf16 %v5902, %v5899
        %v6055 = vpack.c.bf16 %v5910, %v5907
        %v6056 = vpack.c.bf16 %v5918, %v5915
        %v6057 = vpack.c.bf16 %v5926, %v5923
        %v6058 = vpack.c.bf16 %v5934, %v5931
        %v6059 = vpack.c.bf16 %v5942, %v5939
        %v6060 = vpack.c.bf16 %v5950, %v5947
        %v6061 = vpack.c.bf16 %v5958, %v5955
        %v6062 = vpack.c.bf16 %v5966, %v5963
        %v6063 = vpack.c.bf16 %v5974, %v5971
        %v6064 = vpack.c.bf16 %v5982, %v5979
        %v6065 = vld [vmem:[#allocation8 + $0x80] sm:$0xff]
        %v6066 = vld [vmem:[#allocation8 + $0x88] sm:$0xff]
        %v6067 = vld [vmem:[#allocation8 + $0x90] sm:$0xff]
        %v6068 = vld [vmem:[#allocation8 + $0x98] sm:$0xff]
        %v6069 = vld [vmem:[#allocation8 + $0xa0] sm:$0xff]
        %v6070 = vld [vmem:[#allocation8 + $0xa8] sm:$0xff]
        %v6071 = vld [vmem:[#allocation8 + $0xb0] sm:$0xff]
        %v6072 = vld [vmem:[#allocation8 + $0xb8] sm:$0xff]
        %v6081 = vunpack.c.l.b16 %v6065
        %v6082 = vunpack.c.h.b16 %v6065
        %v6083 = vunpack.c.l.b16 %v6066
        %v6084 = vunpack.c.h.b16 %v6066
        %v6085 = vunpack.c.l.b16 %v6067
        %v6086 = vunpack.c.h.b16 %v6067
        %v6087 = vunpack.c.l.b16 %v6068
        %v6088 = vunpack.c.h.b16 %v6068
        %v6089 = vunpack.c.l.b16 %v6069
        %v6090 = vunpack.c.h.b16 %v6069
        %v6091 = vunpack.c.l.b16 %v6070
        %v6092 = vunpack.c.h.b16 %v6070
        %v6093 = vunpack.c.l.b16 %v6071
        %v6094 = vunpack.c.h.b16 %v6071
        %v6095 = vunpack.c.l.b16 %v6072
        %v6096 = vunpack.c.h.b16 %v6072
        %v6097 = vpack.c.b16 %v6083, %v6081
        %v6098 = vpack.c.b16 %v6084, %v6082
        %v6099 = vpack.c.b16 %v6087, %v6085
        %v6100 = vpack.c.b16 %v6088, %v6086
        %v6101 = vpack.c.b16 %v6091, %v6089
        %v6102 = vpack.c.b16 %v6092, %v6090
        %v6103 = vpack.c.b16 %v6095, %v6093
        %v6104 = vpack.c.b16 %v6096, %v6094
        %v6114 = vsel %vm1896, %v6049, 0
        %v6117 = vsel %vm1896, %v6050, 0
        %v6120 = vsel %vm1896, %v6051, 0
        %v6123 = vsel %vm1896, %v6052, 0
        %v6126 = vsel %vm1896, %v6053, 0
        %v6129 = vsel %vm1896, %v6054, 0
        %v6132 = vsel %vm1896, %v6055, 0
        %v6135 = vsel %vm1896, %v6056, 0
        %v6138 = vsel %vm1896, %v6057, 0
        %v6141 = vsel %vm1896, %v6058, 0
        %v6144 = vsel %vm1896, %v6059, 0
        %v6147 = vsel %vm1896, %v6060, 0
        %v6150 = vsel %vm1896, %v6061, 0
        %v6153 = vsel %vm1896, %v6062, 0
        %v6156 = vsel %vm1896, %v6063, 0
        %v6159 = vsel %vm1896, %v6064, 0
        %6161 = vmatprep.subr.bf16.mxu0 %v6098
        %6162 = vmatpush1.bf16.msra.mxu0 %v6097
        %6163 = vmatprep.subr.bf16.mxu0 %v6100
        %6164 = vmatpush1.bf16.msra.mxu0 %v6099
        %6165 = vmatprep.subr.bf16.mxu0 %v6102
        %6166 = vmatpush1.bf16.msra.mxu0 %v6101
        %6167 = vmatprep.subr.bf16.mxu0 %v6104
        %6168 = vmatpush1.bf16.msra.mxu0 %v6103
        %6169 = vmatprep.subr.bf16.mxu0 0
        %6170 = vmatpush1.bf16.msra.mxu0 0
        %6171 = vmatprep.subr.bf16.mxu0 0
        %6172 = vmatpush1.bf16.msra.mxu0 0
        %6173 = vmatprep.subr.bf16.mxu0 0
        %6174 = vmatpush1.bf16.msra.mxu0 0
        %6175 = vmatprep.subr.bf16.mxu0 0
        %6176 = vmatpush1.bf16.msra.mxu0 0
        %6177 = vmatprep.subr.bf16.mxu0 0
        %6178 = vmatpush1.bf16.msra.mxu0 0
        %6179 = vmatprep.subr.bf16.mxu0 0
        %6180 = vmatpush1.bf16.msra.mxu0 0
        %6181 = vmatprep.subr.bf16.mxu0 0
        %6182 = vmatpush1.bf16.msra.mxu0 0
        %6183 = vmatprep.subr.bf16.mxu0 0
        %6184 = vmatpush1.bf16.msra.mxu0 0
        %6185 = vmatprep.subr.bf16.mxu0 0
        %6186 = vmatpush1.bf16.msra.mxu0 0
        %6187 = vmatprep.subr.bf16.mxu0 0
        %6188 = vmatpush1.bf16.msra.mxu0 0
        %6189 = vmatprep.subr.bf16.mxu0 0
        %6190 = vmatpush1.bf16.msra.mxu0 0
        %6191 = vmatprep.subr.bf16.mxu0 0
        %6192 = vmatpush1.bf16.msra.mxu0 0
        %6193 = vmatprep.mubr.bf16.mxu0 0
        %6194 = vmatmul.mubr.bf16.gmra.mrb[0].mxu0 %v6114
        %v6195 = vpop.f32.mrb[0].mxu0
        %v6196 = vadd.f32 0.0, %v6195
        %v6197 = vpop.f32.mrb[0].mxu0
        %v6198 = vadd.f32 0.0, %v6197
        %v6199 = vpop.f32.mrb[0].mxu0
        %v6200 = vadd.f32 0.0, %v6199
        %v6201 = vpop.f32.mrb[0].mxu0
        %v6202 = vadd.f32 0.0, %v6201
        %6203 = vmatprep.mubr.bf16.mxu0 0
        %6204 = vmatmul.mubr.bf16.gmra.mrb[0].mxu0 %v6117
        %v6205 = vpop.f32.mrb[0].mxu0
        %v6206 = vadd.f32 0.0, %v6205
        %v6207 = vpop.f32.mrb[0].mxu0
        %v6208 = vadd.f32 0.0, %v6207
        %v6209 = vpop.f32.mrb[0].mxu0
        %v6210 = vadd.f32 0.0, %v6209
        %v6211 = vpop.f32.mrb[0].mxu0
        %v6212 = vadd.f32 0.0, %v6211
        %6213 = vmatprep.mubr.bf16.mxu0 0
        %6214 = vmatmul.mubr.bf16.gmra.mrb[0].mxu0 %v6120
        %v6215 = vpop.f32.mrb[0].mxu0
        %v6216 = vadd.f32 0.0, %v6215
        %v6217 = vpop.f32.mrb[0].mxu0
        %v6218 = vadd.f32 0.0, %v6217
        %v6219 = vpop.f32.mrb[0].mxu0
        %v6220 = vadd.f32 0.0, %v6219
        %v6221 = vpop.f32.mrb[0].mxu0
        %v6222 = vadd.f32 0.0, %v6221
        %6223 = vmatprep.mubr.bf16.mxu0 0
        %6224 = vmatmul.mubr.bf16.gmra.mrb[0].mxu0 %v6123
        %v6225 = vpop.f32.mrb[0].mxu0
        %v6226 = vadd.f32 0.0, %v6225
        %v6227 = vpop.f32.mrb[0].mxu0
        %v6228 = vadd.f32 0.0, %v6227
        %v6229 = vpop.f32.mrb[0].mxu0
        %v6230 = vadd.f32 0.0, %v6229
        %v6231 = vpop.f32.mrb[0].mxu0
        %v6232 = vadd.f32 0.0, %v6231
        %6233 = vmatprep.mubr.bf16.mxu0 0
        %6234 = vmatmul.mubr.bf16.gmra.mrb[0].mxu0 %v6126
        %v6235 = vpop.f32.mrb[0].mxu0
        %v6236 = vadd.f32 0.0, %v6235
        %v6237 = vpop.f32.mrb[0].mxu0
        %v6238 = vadd.f32 0.0, %v6237
        %v6239 = vpop.f32.mrb[0].mxu0
        %v6240 = vadd.f32 0.0, %v6239
        %v6241 = vpop.f32.mrb[0].mxu0
        %v6242 = vadd.f32 0.0, %v6241
        %6243 = vmatprep.mubr.bf16.mxu0 0
        %6244 = vmatmul.mubr.bf16.gmra.mrb[0].mxu0 %v6129
        %v6245 = vpop.f32.mrb[0].mxu0
        %v6246 = vadd.f32 0.0, %v6245
        %v6247 = vpop.f32.mrb[0].mxu0
        %v6248 = vadd.f32 0.0, %v6247
        %v6249 = vpop.f32.mrb[0].mxu0
        %v6250 = vadd.f32 0.0, %v6249
        %v6251 = vpop.f32.mrb[0].mxu0
        %v6252 = vadd.f32 0.0, %v6251
        %6253 = vmatprep.mubr.bf16.mxu0 0
        %6254 = vmatmul.mubr.bf16.gmra.mrb[0].mxu0 %v6132
        %v6255 = vpop.f32.mrb[0].mxu0
        %v6256 = vadd.f32 0.0, %v6255
        %v6257 = vpop.f32.mrb[0].mxu0
        %v6258 = vadd.f32 0.0, %v6257
        %v6259 = vpop.f32.mrb[0].mxu0
        %v6260 = vadd.f32 0.0, %v6259
        %v6261 = vpop.f32.mrb[0].mxu0
        %v6262 = vadd.f32 0.0, %v6261
        %6263 = vmatprep.mubr.bf16.mxu0 0
        %6264 = vmatmul.mubr.bf16.gmra.mrb[0].mxu0 %v6135
        %v6265 = vpop.f32.mrb[0].mxu0
        %v6266 = vadd.f32 0.0, %v6265
        %v6267 = vpop.f32.mrb[0].mxu0
        %v6268 = vadd.f32 0.0, %v6267
        %v6269 = vpop.f32.mrb[0].mxu0
        %v6270 = vadd.f32 0.0, %v6269
        %v6271 = vpop.f32.mrb[0].mxu0
        %v6272 = vadd.f32 0.0, %v6271
        %6273 = vmatprep.mubr.bf16.mxu0 0
        %6274 = vmatmul.mubr.bf16.gmra.mrb[0].mxu0 %v6138
        %v6275 = vpop.f32.mrb[0].mxu0
        %v6276 = vadd.f32 0.0, %v6275
        %v6277 = vpop.f32.mrb[0].mxu0
        %v6278 = vadd.f32 0.0, %v6277
        %v6279 = vpop.f32.mrb[0].mxu0
        %v6280 = vadd.f32 0.0, %v6279
        %v6281 = vpop.f32.mrb[0].mxu0
        %v6282 = vadd.f32 0.0, %v6281
        %6283 = vmatprep.mubr.bf16.mxu0 0
        %6284 = vmatmul.mubr.bf16.gmra.mrb[0].mxu0 %v6141
        %v6285 = vpop.f32.mrb[0].mxu0
        %v6286 = vadd.f32 0.0, %v6285
        %v6287 = vpop.f32.mrb[0].mxu0
        %v6288 = vadd.f32 0.0, %v6287
        %v6289 = vpop.f32.mrb[0].mxu0
        %v6290 = vadd.f32 0.0, %v6289
        %v6291 = vpop.f32.mrb[0].mxu0
        %v6292 = vadd.f32 0.0, %v6291
        %6293 = vmatprep.mubr.bf16.mxu0 0
        %6294 = vmatmul.mubr.bf16.gmra.mrb[0].mxu0 %v6144
        %v6295 = vpop.f32.mrb[0].mxu0
        %v6296 = vadd.f32 0.0, %v6295
        %v6297 = vpop.f32.mrb[0].mxu0
        %v6298 = vadd.f32 0.0, %v6297
        %v6299 = vpop.f32.mrb[0].mxu0
        %v6300 = vadd.f32 0.0, %v6299
        %v6301 = vpop.f32.mrb[0].mxu0
        %v6302 = vadd.f32 0.0, %v6301
        %6303 = vmatprep.mubr.bf16.mxu0 0
        %6304 = vmatmul.mubr.bf16.gmra.mrb[0].mxu0 %v6147
        %v6305 = vpop.f32.mrb[0].mxu0
        %v6306 = vadd.f32 0.0, %v6305
        %v6307 = vpop.f32.mrb[0].mxu0
        %v6308 = vadd.f32 0.0, %v6307
        %v6309 = vpop.f32.mrb[0].mxu0
        %v6310 = vadd.f32 0.0, %v6309
        %v6311 = vpop.f32.mrb[0].mxu0
        %v6312 = vadd.f32 0.0, %v6311
        %6313 = vmatprep.mubr.bf16.mxu0 0
        %6314 = vmatmul.mubr.bf16.gmra.mrb[0].mxu0 %v6150
        %v6315 = vpop.f32.mrb[0].mxu0
        %v6316 = vadd.f32 0.0, %v6315
        %v6317 = vpop.f32.mrb[0].mxu0
        %v6318 = vadd.f32 0.0, %v6317
        %v6319 = vpop.f32.mrb[0].mxu0
        %v6320 = vadd.f32 0.0, %v6319
        %v6321 = vpop.f32.mrb[0].mxu0
        %v6322 = vadd.f32 0.0, %v6321
        %6323 = vmatprep.mubr.bf16.mxu0 0
        %6324 = vmatmul.mubr.bf16.gmra.mrb[0].mxu0 %v6153
        %v6325 = vpop.f32.mrb[0].mxu0
        %v6326 = vadd.f32 0.0, %v6325
        %v6327 = vpop.f32.mrb[0].mxu0
        %v6328 = vadd.f32 0.0, %v6327
        %v6329 = vpop.f32.mrb[0].mxu0
        %v6330 = vadd.f32 0.0, %v6329
        %v6331 = vpop.f32.mrb[0].mxu0
        %v6332 = vadd.f32 0.0, %v6331
        %6333 = vmatprep.mubr.bf16.mxu0 0
        %6334 = vmatmul.mubr.bf16.gmra.mrb[0].mxu0 %v6156
        %v6335 = vpop.f32.mrb[0].mxu0
        %v6336 = vadd.f32 0.0, %v6335
        %v6337 = vpop.f32.mrb[0].mxu0
        %v6338 = vadd.f32 0.0, %v6337
        %v6339 = vpop.f32.mrb[0].mxu0
        %v6340 = vadd.f32 0.0, %v6339
        %v6341 = vpop.f32.mrb[0].mxu0
        %v6342 = vadd.f32 0.0, %v6341
        %6343 = vmatprep.mubr.bf16.mxu0 0
        %6344 = vmatmul.mubr.bf16.gmra.mrb[0].mxu0 %v6159
        %v6345 = vpop.f32.mrb[0].mxu0
        %v6346 = vadd.f32 0.0, %v6345
        %v6347 = vpop.f32.mrb[0].mxu0
        %v6348 = vadd.f32 0.0, %v6347
        %v6349 = vpop.f32.mrb[0].mxu0
        %v6350 = vadd.f32 0.0, %v6349
        %v6351 = vpop.f32.mrb[0].mxu0
        %v6352 = vadd.f32 0.0, %v6351
        %6353 = vdwg.mxu0
        %v6354 = vadd.f32 %v5985, %v6196
        %v6355 = vadd.f32 %v5986, %v6198
        %v6356 = vadd.f32 %v5987, %v6200
        %v6357 = vadd.f32 %v5988, %v6202
        %v6358 = vadd.f32 %v5989, %v6206
        %v6359 = vadd.f32 %v5990, %v6208
        %v6360 = vadd.f32 %v5991, %v6210
        %v6361 = vadd.f32 %v5992, %v6212
        %v6362 = vadd.f32 %v5993, %v6216
        %v6363 = vadd.f32 %v5994, %v6218
        %v6364 = vadd.f32 %v5995, %v6220
        %v6365 = vadd.f32 %v5996, %v6222
        %v6366 = vadd.f32 %v5997, %v6226
        %v6367 = vadd.f32 %v5998, %v6228
        %v6368 = vadd.f32 %v5999, %v6230
        %v6369 = vadd.f32 %v6000, %v6232
        %v6370 = vadd.f32 %v6001, %v6236
        %v6371 = vadd.f32 %v6002, %v6238
        %v6372 = vadd.f32 %v6003, %v6240
        %v6373 = vadd.f32 %v6004, %v6242
        %v6374 = vadd.f32 %v6005, %v6246
        %v6375 = vadd.f32 %v6006, %v6248
        %v6376 = vadd.f32 %v6007, %v6250
        %v6377 = vadd.f32 %v6008, %v6252
        %v6378 = vadd.f32 %v6009, %v6256
        %v6379 = vadd.f32 %v6010, %v6258
        %v6380 = vadd.f32 %v6011, %v6260
        %v6381 = vadd.f32 %v6012, %v6262
        %v6382 = vadd.f32 %v6013, %v6266
        %v6383 = vadd.f32 %v6014, %v6268
        %v6384 = vadd.f32 %v6015, %v6270
        %v6385 = vadd.f32 %v6016, %v6272
        %v6386 = vadd.f32 %v6017, %v6276
        %v6387 = vadd.f32 %v6018, %v6278
        %v6388 = vadd.f32 %v6019, %v6280
        %v6389 = vadd.f32 %v6020, %v6282
        %v6390 = vadd.f32 %v6021, %v6286
        %v6391 = vadd.f32 %v6022, %v6288
        %v6392 = vadd.f32 %v6023, %v6290
        %v6393 = vadd.f32 %v6024, %v6292
        %v6394 = vadd.f32 %v6025, %v6296
        %v6395 = vadd.f32 %v6026, %v6298
        %v6396 = vadd.f32 %v6027, %v6300
        %v6397 = vadd.f32 %v6028, %v6302
        %v6398 = vadd.f32 %v6029, %v6306
        %v6399 = vadd.f32 %v6030, %v6308
        %v6400 = vadd.f32 %v6031, %v6310
        %v6401 = vadd.f32 %v6032, %v6312
        %v6402 = vadd.f32 %v6033, %v6316
        %v6403 = vadd.f32 %v6034, %v6318
        %v6404 = vadd.f32 %v6035, %v6320
        %v6405 = vadd.f32 %v6036, %v6322
        %v6406 = vadd.f32 %v6037, %v6326
        %v6407 = vadd.f32 %v6038, %v6328
        %v6408 = vadd.f32 %v6039, %v6330
        %v6409 = vadd.f32 %v6040, %v6332
        %v6410 = vadd.f32 %v6041, %v6336
        %v6411 = vadd.f32 %v6042, %v6338
        %v6412 = vadd.f32 %v6043, %v6340
        %v6413 = vadd.f32 %v6044, %v6342
        %v6414 = vadd.f32 %v6045, %v6346
        %v6415 = vadd.f32 %v6046, %v6348
        %v6416 = vadd.f32 %v6047, %v6350
        %v6417 = vadd.f32 %v6048, %v6352
        %6418 = vst [vmem:[#allocation2] sm:$0xff] %v6354
        %6419 = vst [vmem:[#allocation2 + $0x8] sm:$0xff] %v6355
        %6420 = vst [vmem:[#allocation2 + $0x10] sm:$0xff] %v6356
        %6421 = vst [vmem:[#allocation2 + $0x18] sm:$0xff] %v6357
        %6422 = vst [vmem:[#allocation2 + $0x20] sm:$0xff] %v6358
        %6423 = vst [vmem:[#allocation2 + $0x28] sm:$0xff] %v6359
        %6424 = vst [vmem:[#allocation2 + $0x30] sm:$0xff] %v6360
        %6425 = vst [vmem:[#allocation2 + $0x38] sm:$0xff] %v6361
        %6426 = vst [vmem:[#allocation2 + $0x40] sm:$0xff] %v6362
        %6427 = vst [vmem:[#allocation2 + $0x48] sm:$0xff] %v6363
        %6428 = vst [vmem:[#allocation2 + $0x50] sm:$0xff] %v6364
        %6429 = vst [vmem:[#allocation2 + $0x58] sm:$0xff] %v6365
        %6430 = vst [vmem:[#allocation2 + $0x60] sm:$0xff] %v6366
        %6431 = vst [vmem:[#allocation2 + $0x68] sm:$0xff] %v6367
        %6432 = vst [vmem:[#allocation2 + $0x70] sm:$0xff] %v6368
        %6433 = vst [vmem:[#allocation2 + $0x78] sm:$0xff] %v6369
        %6434 = vst [vmem:[#allocation2 + $0x80] sm:$0xff] %v6370
        %6435 = vst [vmem:[#allocation2 + $0x88] sm:$0xff] %v6371
        %6436 = vst [vmem:[#allocation2 + $0x90] sm:$0xff] %v6372
        %6437 = vst [vmem:[#allocation2 + $0x98] sm:$0xff] %v6373
        %6438 = vst [vmem:[#allocation2 + $0xa0] sm:$0xff] %v6374
        %6439 = vst [vmem:[#allocation2 + $0xa8] sm:$0xff] %v6375
        %6440 = vst [vmem:[#allocation2 + $0xb0] sm:$0xff] %v6376
        %6441 = vst [vmem:[#allocation2 + $0xb8] sm:$0xff] %v6377
        %6442 = vst [vmem:[#allocation2 + $0xc0] sm:$0xff] %v6378
        %6443 = vst [vmem:[#allocation2 + $0xc8] sm:$0xff] %v6379
        %6444 = vst [vmem:[#allocation2 + $0xd0] sm:$0xff] %v6380
        %6445 = vst [vmem:[#allocation2 + $0xd8] sm:$0xff] %v6381
        %6446 = vst [vmem:[#allocation2 + $0xe0] sm:$0xff] %v6382
        %6447 = vst [vmem:[#allocation2 + $0xe8] sm:$0xff] %v6383
        %6448 = vst [vmem:[#allocation2 + $0xf0] sm:$0xff] %v6384
        %6449 = vst [vmem:[#allocation2 + $0xf8] sm:$0xff] %v6385
        %6450 = vst [vmem:[#allocation2 + $0x100] sm:$0xff] %v6386
        %6451 = vst [vmem:[#allocation2 + $0x108] sm:$0xff] %v6387
        %6452 = vst [vmem:[#allocation2 + $0x110] sm:$0xff] %v6388
        %6453 = vst [vmem:[#allocation2 + $0x118] sm:$0xff] %v6389
        %6454 = vst [vmem:[#allocation2 + $0x120] sm:$0xff] %v6390
        %6455 = vst [vmem:[#allocation2 + $0x128] sm:$0xff] %v6391
        %6456 = vst [vmem:[#allocation2 + $0x130] sm:$0xff] %v6392
        %6457 = vst [vmem:[#allocation2 + $0x138] sm:$0xff] %v6393
        %6458 = vst [vmem:[#allocation2 + $0x140] sm:$0xff] %v6394
        %6459 = vst [vmem:[#allocation2 + $0x148] sm:$0xff] %v6395
        %6460 = vst [vmem:[#allocation2 + $0x150] sm:$0xff] %v6396
        %6461 = vst [vmem:[#allocation2 + $0x158] sm:$0xff] %v6397
        %6462 = vst [vmem:[#allocation2 + $0x160] sm:$0xff] %v6398
        %6463 = vst [vmem:[#allocation2 + $0x168] sm:$0xff] %v6399
        %6464 = vst [vmem:[#allocation2 + $0x170] sm:$0xff] %v6400
        %6465 = vst [vmem:[#allocation2 + $0x178] sm:$0xff] %v6401
        %6466 = vst [vmem:[#allocation2 + $0x180] sm:$0xff] %v6402
        %6467 = vst [vmem:[#allocation2 + $0x188] sm:$0xff] %v6403
        %6468 = vst [vmem:[#allocation2 + $0x190] sm:$0xff] %v6404
        %6469 = vst [vmem:[#allocation2 + $0x198] sm:$0xff] %v6405
        %6470 = vst [vmem:[#allocation2 + $0x1a0] sm:$0xff] %v6406
        %6471 = vst [vmem:[#allocation2 + $0x1a8] sm:$0xff] %v6407
        %6472 = vst [vmem:[#allocation2 + $0x1b0] sm:$0xff] %v6408
        %6473 = vst [vmem:[#allocation2 + $0x1b8] sm:$0xff] %v6409
        %6474 = vst [vmem:[#allocation2 + $0x1c0] sm:$0xff] %v6410
        %6475 = vst [vmem:[#allocation2 + $0x1c8] sm:$0xff] %v6411
        %6476 = vst [vmem:[#allocation2 + $0x1d0] sm:$0xff] %v6412
        %6477 = vst [vmem:[#allocation2 + $0x1d8] sm:$0xff] %v6413
        %6478 = vst [vmem:[#allocation2 + $0x1e0] sm:$0xff] %v6414
        %6479 = vst [vmem:[#allocation2 + $0x1e8] sm:$0xff] %v6415
        %6480 = vst [vmem:[#allocation2 + $0x1f0] sm:$0xff] %v6416
        %6481 = vst [vmem:[#allocation2 + $0x1f8] sm:$0xff] %v6417
        %6498 = vrot.lane.b32.xlu0 %v4975, 64
        %v6499 = vpop.permute.xlu0 %6498
        %6500 = vrot.lane.b32.xlu0 %v4976, 64
        %v6501 = vpop.permute.xlu0 %6500
        %6502 = vrot.lane.b32.xlu0 %v4977, 64
        %v6503 = vpop.permute.xlu0 %6502
        %6504 = vrot.lane.b32.xlu0 %v4978, 64
        %v6505 = vpop.permute.xlu0 %6504
        %6506 = vrot.lane.b32.xlu0 %v4979, 64
        %v6507 = vpop.permute.xlu0 %6506
        %6508 = vrot.lane.b32.xlu0 %v4980, 64
        %v6509 = vpop.permute.xlu0 %6508
        %6510 = vrot.lane.b32.xlu0 %v4981, 64
        %v6511 = vpop.permute.xlu0 %6510
        %6512 = vrot.lane.b32.xlu0 %v4982, 64
        %v6513 = vpop.permute.xlu0 %6512
        %6514 = vrot.lane.b32.xlu0 %v4983, 64
        %v6515 = vpop.permute.xlu0 %6514
        %6516 = vrot.lane.b32.xlu0 %v4984, 64
        %v6517 = vpop.permute.xlu0 %6516
        %6518 = vrot.lane.b32.xlu0 %v4985, 64
        %v6519 = vpop.permute.xlu0 %6518
        %6520 = vrot.lane.b32.xlu0 %v4986, 64
        %v6521 = vpop.permute.xlu0 %6520
        %6522 = vrot.lane.b32.xlu0 %v4987, 64
        %v6523 = vpop.permute.xlu0 %6522
        %6524 = vrot.lane.b32.xlu0 %v4988, 64
        %v6525 = vpop.permute.xlu0 %6524
        %6526 = vrot.lane.b32.xlu0 %v4989, 64
        %v6527 = vpop.permute.xlu0 %6526
        %6528 = vrot.lane.b32.xlu0 %v4990, 64
        %v6529 = vpop.permute.xlu0 %6528
        %6546 = vrot.lane.b32.xlu0 %v4991, 64
        %v6547 = vpop.permute.xlu0 %6546
        %6548 = vrot.lane.b32.xlu0 %v4992, 64
        %v6549 = vpop.permute.xlu0 %6548
        %6550 = vrot.lane.b32.xlu0 %v4993, 64
        %v6551 = vpop.permute.xlu0 %6550
        %6552 = vrot.lane.b32.xlu0 %v4994, 64
        %v6553 = vpop.permute.xlu0 %6552
        %6554 = vrot.lane.b32.xlu0 %v4995, 64
        %v6555 = vpop.permute.xlu0 %6554
        %6556 = vrot.lane.b32.xlu0 %v4996, 64
        %v6557 = vpop.permute.xlu0 %6556
        %6558 = vrot.lane.b32.xlu0 %v4997, 64
        %v6559 = vpop.permute.xlu0 %6558
        %6560 = vrot.lane.b32.xlu0 %v4998, 64
        %v6561 = vpop.permute.xlu0 %6560
        %6562 = vrot.lane.b32.xlu0 %v4999, 64
        %v6563 = vpop.permute.xlu0 %6562
        %6564 = vrot.lane.b32.xlu0 %v5000, 64
        %v6565 = vpop.permute.xlu0 %6564
        %6566 = vrot.lane.b32.xlu0 %v5001, 64
        %v6567 = vpop.permute.xlu0 %6566
        %6568 = vrot.lane.b32.xlu0 %v5002, 64
        %v6569 = vpop.permute.xlu0 %6568
        %6570 = vrot.lane.b32.xlu0 %v5003, 64
        %v6571 = vpop.permute.xlu0 %6570
        %6572 = vrot.lane.b32.xlu0 %v5004, 64
        %v6573 = vpop.permute.xlu0 %6572
        %6574 = vrot.lane.b32.xlu0 %v5005, 64
        %v6575 = vpop.permute.xlu0 %6574
        %6576 = vrot.lane.b32.xlu0 %v5006, 64
        %v6577 = vpop.permute.xlu0 %6576
        %v6579 = vsel %vm1896, %v6499, 0
        %v6582 = vsel %vm1896, %v6501, 0
        %v6585 = vsel %vm1896, %v6503, 0
        %v6588 = vsel %vm1896, %v6505, 0
        %v6591 = vsel %vm1896, %v6507, 0
        %v6594 = vsel %vm1896, %v6509, 0
        %v6597 = vsel %vm1896, %v6511, 0
        %v6600 = vsel %vm1896, %v6513, 0
        %v6603 = vsel %vm1896, %v6515, 0
        %v6606 = vsel %vm1896, %v6517, 0
        %v6609 = vsel %vm1896, %v6519, 0
        %v6612 = vsel %vm1896, %v6521, 0
        %v6615 = vsel %vm1896, %v6523, 0
        %v6618 = vsel %vm1896, %v6525, 0
        %v6621 = vsel %vm1896, %v6527, 0
        %v6624 = vsel %vm1896, %v6529, 0
        %v6627 = vsel %vm1896, %v6547, 0
        %v6630 = vsel %vm1896, %v6549, 0
        %v6633 = vsel %vm1896, %v6551, 0
        %v6636 = vsel %vm1896, %v6553, 0
        %v6639 = vsel %vm1896, %v6555, 0
        %v6642 = vsel %vm1896, %v6557, 0
        %v6645 = vsel %vm1896, %v6559, 0
        %v6648 = vsel %vm1896, %v6561, 0
        %v6651 = vsel %vm1896, %v6563, 0
        %v6654 = vsel %vm1896, %v6565, 0
        %v6657 = vsel %vm1896, %v6567, 0
        %v6660 = vsel %vm1896, %v6569, 0
        %v6663 = vsel %vm1896, %v6571, 0
        %v6666 = vsel %vm1896, %v6573, 0
        %v6669 = vsel %vm1896, %v6575, 0
        %v6672 = vsel %vm1896, %v6577, 0
        %6674 = vmatprep.subr.bf16.mxu0 0
        %6675 = vmatpush1.bf16.xpose.msra.mxu0 %v6627
        %6676 = vmatprep.subr.bf16.mxu0 0
        %6677 = vmatpush1.bf16.xpose.msra.mxu0 %v6630
        %6678 = vmatprep.subr.bf16.mxu0 0
        %6679 = vmatpush1.bf16.xpose.msra.mxu0 %v6633
        %6680 = vmatprep.subr.bf16.mxu0 0
        %6681 = vmatpush1.bf16.xpose.msra.mxu0 %v6636
        %6682 = vmatprep.subr.bf16.mxu0 0
        %6683 = vmatpush1.bf16.xpose.msra.mxu0 %v6639
        %6684 = vmatprep.subr.bf16.mxu0 0
        %6685 = vmatpush1.bf16.xpose.msra.mxu0 %v6642
        %6686 = vmatprep.subr.bf16.mxu0 0
        %6687 = vmatpush1.bf16.xpose.msra.mxu0 %v6645
        %6688 = vmatprep.subr.bf16.mxu0 0
        %6689 = vmatpush1.bf16.xpose.msra.mxu0 %v6648
        %6690 = vmatprep.subr.bf16.mxu0 0
        %6691 = vmatpush1.bf16.xpose.msra.mxu0 %v6651
        %6692 = vmatprep.subr.bf16.mxu0 0
        %6693 = vmatpush1.bf16.xpose.msra.mxu0 %v6654
        %6694 = vmatprep.subr.bf16.mxu0 0
        %6695 = vmatpush1.bf16.xpose.msra.mxu0 %v6657
        %6696 = vmatprep.subr.bf16.mxu0 0
        %6697 = vmatpush1.bf16.xpose.msra.mxu0 %v6660
        %6698 = vmatprep.subr.bf16.mxu0 0
        %6699 = vmatpush1.bf16.xpose.msra.mxu0 %v6663
        %6700 = vmatprep.subr.bf16.mxu0 0
        %6701 = vmatpush1.bf16.xpose.msra.mxu0 %v6666
        %6702 = vmatprep.subr.bf16.mxu0 0
        %6703 = vmatpush1.bf16.xpose.msra.mxu0 %v6669
        %6704 = vmatprep.subr.bf16.mxu0 0
        %6705 = vmatpush1.bf16.xpose.msra.mxu0 %v6672
        %6706 = vmatprep.mubr.bf16.mxu0 0
        %6707 = vmatmul.mubr.bf16.gmra.mrb[0].mxu0 %v6579
        %v6708 = vpop.f32.mrb[0].mxu0
        %v6709 = vadd.f32 %v1720, %v6708
        %v6710 = vpop.f32.mrb[0].mxu0
        %v6711 = vadd.f32 %v1721, %v6710
        %v6712 = vpop.f32.mrb[0].mxu0
        %v6713 = vadd.f32 %v1722, %v6712
        %v6714 = vpop.f32.mrb[0].mxu0
        %v6715 = vadd.f32 %v1723, %v6714
        %6716 = vmatprep.mubr.bf16.mxu0 0
        %6717 = vmatmul.mubr.bf16.gmra.mrb[0].mxu0 %v6582
        %v6718 = vpop.f32.mrb[0].mxu0
        %v6719 = vadd.f32 %v1724, %v6718
        %v6720 = vpop.f32.mrb[0].mxu0
        %v6721 = vadd.f32 %v1725, %v6720
        %v6722 = vpop.f32.mrb[0].mxu0
        %v6723 = vadd.f32 %v1726, %v6722
        %v6724 = vpop.f32.mrb[0].mxu0
        %v6725 = vadd.f32 %v1727, %v6724
        %6726 = vmatprep.mubr.bf16.mxu0 0
        %6727 = vmatmul.mubr.bf16.gmra.mrb[0].mxu0 %v6585
        %v6728 = vpop.f32.mrb[0].mxu0
        %v6729 = vadd.f32 %v1728, %v6728
        %v6730 = vpop.f32.mrb[0].mxu0
        %v6731 = vadd.f32 %v1729, %v6730
        %v6732 = vpop.f32.mrb[0].mxu0
        %v6733 = vadd.f32 %v1730, %v6732
        %v6734 = vpop.f32.mrb[0].mxu0
        %v6735 = vadd.f32 %v1731, %v6734
        %6736 = vmatprep.mubr.bf16.mxu0 0
        %6737 = vmatmul.mubr.bf16.gmra.mrb[0].mxu0 %v6588
        %v6738 = vpop.f32.mrb[0].mxu0
        %v6739 = vadd.f32 %v1732, %v6738
        %v6740 = vpop.f32.mrb[0].mxu0
        %v6741 = vadd.f32 %v1733, %v6740
        %v6742 = vpop.f32.mrb[0].mxu0
        %v6743 = vadd.f32 %v1734, %v6742
        %v6744 = vpop.f32.mrb[0].mxu0
        %v6745 = vadd.f32 %v1735, %v6744
        %6746 = vmatprep.mubr.bf16.mxu0 0
        %6747 = vmatmul.mubr.bf16.gmra.mrb[0].mxu0 %v6591
        %v6748 = vpop.f32.mrb[0].mxu0
        %v6749 = vadd.f32 %v1736, %v6748
        %v6750 = vpop.f32.mrb[0].mxu0
        %v6751 = vadd.f32 %v1737, %v6750
        %v6752 = vpop.f32.mrb[0].mxu0
        %v6753 = vadd.f32 %v1738, %v6752
        %v6754 = vpop.f32.mrb[0].mxu0
        %v6755 = vadd.f32 %v1739, %v6754
        %6756 = vmatprep.mubr.bf16.mxu0 0
        %6757 = vmatmul.mubr.bf16.gmra.mrb[0].mxu0 %v6594
        %v6758 = vpop.f32.mrb[0].mxu0
        %v6759 = vadd.f32 %v1740, %v6758
        %v6760 = vpop.f32.mrb[0].mxu0
        %v6761 = vadd.f32 %v1741, %v6760
        %v6762 = vpop.f32.mrb[0].mxu0
        %v6763 = vadd.f32 %v1742, %v6762
        %v6764 = vpop.f32.mrb[0].mxu0
        %v6765 = vadd.f32 %v1743, %v6764
        %6766 = vmatprep.mubr.bf16.mxu0 0
        %6767 = vmatmul.mubr.bf16.gmra.mrb[0].mxu0 %v6597
        %v6768 = vpop.f32.mrb[0].mxu0
        %v6769 = vadd.f32 %v1744, %v6768
        %v6770 = vpop.f32.mrb[0].mxu0
        %v6771 = vadd.f32 %v1745, %v6770
        %v6772 = vpop.f32.mrb[0].mxu0
        %v6773 = vadd.f32 %v1746, %v6772
        %v6774 = vpop.f32.mrb[0].mxu0
        %v6775 = vadd.f32 %v1747, %v6774
        %6776 = vmatprep.mubr.bf16.mxu0 0
        %6777 = vmatmul.mubr.bf16.gmra.mrb[0].mxu0 %v6600
        %v6778 = vpop.f32.mrb[0].mxu0
        %v6779 = vadd.f32 %v1748, %v6778
        %v6780 = vpop.f32.mrb[0].mxu0
        %v6781 = vadd.f32 %v1749, %v6780
        %v6782 = vpop.f32.mrb[0].mxu0
        %v6783 = vadd.f32 %v1750, %v6782
        %v6784 = vpop.f32.mrb[0].mxu0
        %v6785 = vadd.f32 %v1751, %v6784
        %6786 = vmatprep.mubr.bf16.mxu0 0
        %6787 = vmatmul.mubr.bf16.gmra.mrb[0].mxu0 %v6603
        %v6788 = vpop.f32.mrb[0].mxu0
        %v6789 = vadd.f32 %v1752, %v6788
        %v6790 = vpop.f32.mrb[0].mxu0
        %v6791 = vadd.f32 %v1753, %v6790
        %v6792 = vpop.f32.mrb[0].mxu0
        %v6793 = vadd.f32 %v1754, %v6792
        %v6794 = vpop.f32.mrb[0].mxu0
        %v6795 = vadd.f32 %v1755, %v6794
        %6796 = vmatprep.mubr.bf16.mxu0 0
        %6797 = vmatmul.mubr.bf16.gmra.mrb[0].mxu0 %v6606
        %v6798 = vpop.f32.mrb[0].mxu0
        %v6799 = vadd.f32 %v1756, %v6798
        %v6800 = vpop.f32.mrb[0].mxu0
        %v6801 = vadd.f32 %v1757, %v6800
        %v6802 = vpop.f32.mrb[0].mxu0
        %v6803 = vadd.f32 %v1758, %v6802
        %v6804 = vpop.f32.mrb[0].mxu0
        %v6805 = vadd.f32 %v1759, %v6804
        %6806 = vmatprep.mubr.bf16.mxu0 0
        %6807 = vmatmul.mubr.bf16.gmra.mrb[0].mxu0 %v6609
        %v6808 = vpop.f32.mrb[0].mxu0
        %v6809 = vadd.f32 %v1760, %v6808
        %v6810 = vpop.f32.mrb[0].mxu0
        %v6811 = vadd.f32 %v1761, %v6810
        %v6812 = vpop.f32.mrb[0].mxu0
        %v6813 = vadd.f32 %v1762, %v6812
        %v6814 = vpop.f32.mrb[0].mxu0
        %v6815 = vadd.f32 %v1763, %v6814
        %6816 = vmatprep.mubr.bf16.mxu0 0
        %6817 = vmatmul.mubr.bf16.gmra.mrb[0].mxu0 %v6612
        %v6818 = vpop.f32.mrb[0].mxu0
        %v6819 = vadd.f32 %v1764, %v6818
        %v6820 = vpop.f32.mrb[0].mxu0
        %v6821 = vadd.f32 %v1765, %v6820
        %v6822 = vpop.f32.mrb[0].mxu0
        %v6823 = vadd.f32 %v1766, %v6822
        %v6824 = vpop.f32.mrb[0].mxu0
        %v6825 = vadd.f32 %v1767, %v6824
        %6826 = vmatprep.mubr.bf16.mxu0 0
        %6827 = vmatmul.mubr.bf16.gmra.mrb[0].mxu0 %v6615
        %v6828 = vpop.f32.mrb[0].mxu0
        %v6829 = vadd.f32 %v1768, %v6828
        %v6830 = vpop.f32.mrb[0].mxu0
        %v6831 = vadd.f32 %v1769, %v6830
        %v6832 = vpop.f32.mrb[0].mxu0
        %v6833 = vadd.f32 %v1770, %v6832
        %v6834 = vpop.f32.mrb[0].mxu0
        %v6835 = vadd.f32 %v1771, %v6834
        %6836 = vmatprep.mubr.bf16.mxu0 0
        %6837 = vmatmul.mubr.bf16.gmra.mrb[0].mxu0 %v6618
        %v6838 = vpop.f32.mrb[0].mxu0
        %v6839 = vadd.f32 %v1772, %v6838
        %v6840 = vpop.f32.mrb[0].mxu0
        %v6841 = vadd.f32 %v1773, %v6840
        %v6842 = vpop.f32.mrb[0].mxu0
        %v6843 = vadd.f32 %v1774, %v6842
        %v6844 = vpop.f32.mrb[0].mxu0
        %v6845 = vadd.f32 %v1775, %v6844
        %6846 = vmatprep.mubr.bf16.mxu0 0
        %6847 = vmatmul.mubr.bf16.gmra.mrb[0].mxu0 %v6621
        %v6848 = vpop.f32.mrb[0].mxu0
        %v6849 = vadd.f32 %v1776, %v6848
        %v6850 = vpop.f32.mrb[0].mxu0
        %v6851 = vadd.f32 %v1777, %v6850
        %v6852 = vpop.f32.mrb[0].mxu0
        %v6853 = vadd.f32 %v1778, %v6852
        %v6854 = vpop.f32.mrb[0].mxu0
        %v6855 = vadd.f32 %v1779, %v6854
        %6856 = vmatprep.mubr.bf16.mxu0 0
        %6857 = vmatmul.mubr.bf16.gmra.mrb[0].mxu0 %v6624
        %v6858 = vpop.f32.mrb[0].mxu0
        %v6859 = vadd.f32 %v1780, %v6858
        %v6860 = vpop.f32.mrb[0].mxu0
        %v6861 = vadd.f32 %v1781, %v6860
        %v6862 = vpop.f32.mrb[0].mxu0
        %v6863 = vadd.f32 %v1782, %v6862
        %v6864 = vpop.f32.mrb[0].mxu0
        %v6865 = vadd.f32 %v1783, %v6864
        %6866 = vdwg.mxu0
        %v6867 = vmax.f32 %v6709, %v6711
        %6868 = vmax.xlane.f32.xlu0 %v6867
        %v6869 = vpop.xlane.xlu0 %6868
        %v6870 = vmax.f32 %v6713, %v6715
        %6871 = vmax.xlane.f32.xlu0 %v6870
        %v6872 = vpop.xlane.xlu0 %6871
        %v6873 = vmax.f32 %v6719, %v6721
        %6874 = vmax.xlane.f32.xlu0 %v6873
        %v6875 = vpop.xlane.xlu0 %6874
        %v6876 = vmax.f32 %v6723, %v6725
        %6877 = vmax.xlane.f32.xlu0 %v6876
        %v6878 = vpop.xlane.xlu0 %6877
        %v6879 = vmax.f32 %v6729, %v6731
        %6880 = vmax.xlane.f32.xlu0 %v6879
        %v6881 = vpop.xlane.xlu0 %6880
        %v6882 = vmax.f32 %v6733, %v6735
        %6883 = vmax.xlane.f32.xlu0 %v6882
        %v6884 = vpop.xlane.xlu0 %6883
        %v6885 = vmax.f32 %v6739, %v6741
        %6886 = vmax.xlane.f32.xlu0 %v6885
        %v6887 = vpop.xlane.xlu0 %6886
        %v6888 = vmax.f32 %v6743, %v6745
        %6889 = vmax.xlane.f32.xlu0 %v6888
        %v6890 = vpop.xlane.xlu0 %6889
        %v6891 = vmax.f32 %v6749, %v6751
        %6892 = vmax.xlane.f32.xlu0 %v6891
        %v6893 = vpop.xlane.xlu0 %6892
        %v6894 = vmax.f32 %v6753, %v6755
        %6895 = vmax.xlane.f32.xlu0 %v6894
        %v6896 = vpop.xlane.xlu0 %6895
        %v6897 = vmax.f32 %v6759, %v6761
        %6898 = vmax.xlane.f32.xlu0 %v6897
        %v6899 = vpop.xlane.xlu0 %6898
        %v6900 = vmax.f32 %v6763, %v6765
        %6901 = vmax.xlane.f32.xlu0 %v6900
        %v6902 = vpop.xlane.xlu0 %6901
        %v6903 = vmax.f32 %v6769, %v6771
        %6904 = vmax.xlane.f32.xlu0 %v6903
        %v6905 = vpop.xlane.xlu0 %6904
        %v6906 = vmax.f32 %v6773, %v6775
        %6907 = vmax.xlane.f32.xlu0 %v6906
        %v6908 = vpop.xlane.xlu0 %6907
        %v6909 = vmax.f32 %v6779, %v6781
        %6910 = vmax.xlane.f32.xlu0 %v6909
        %v6911 = vpop.xlane.xlu0 %6910
        %v6912 = vmax.f32 %v6783, %v6785
        %6913 = vmax.xlane.f32.xlu0 %v6912
        %v6914 = vpop.xlane.xlu0 %6913
        %v6915 = vmax.f32 %v6789, %v6791
        %6916 = vmax.xlane.f32.xlu0 %v6915
        %v6917 = vpop.xlane.xlu0 %6916
        %v6918 = vmax.f32 %v6793, %v6795
        %6919 = vmax.xlane.f32.xlu0 %v6918
        %v6920 = vpop.xlane.xlu0 %6919
        %v6921 = vmax.f32 %v6799, %v6801
        %6922 = vmax.xlane.f32.xlu0 %v6921
        %v6923 = vpop.xlane.xlu0 %6922
        %v6924 = vmax.f32 %v6803, %v6805
        %6925 = vmax.xlane.f32.xlu0 %v6924
        %v6926 = vpop.xlane.xlu0 %6925
        %v6927 = vmax.f32 %v6809, %v6811
        %6928 = vmax.xlane.f32.xlu0 %v6927
        %v6929 = vpop.xlane.xlu0 %6928
        %v6930 = vmax.f32 %v6813, %v6815
        %6931 = vmax.xlane.f32.xlu0 %v6930
        %v6932 = vpop.xlane.xlu0 %6931
        %v6933 = vmax.f32 %v6819, %v6821
        %6934 = vmax.xlane.f32.xlu0 %v6933
        %v6935 = vpop.xlane.xlu0 %6934
        %v6936 = vmax.f32 %v6823, %v6825
        %6937 = vmax.xlane.f32.xlu0 %v6936
        %v6938 = vpop.xlane.xlu0 %6937
        %v6939 = vmax.f32 %v6829, %v6831
        %6940 = vmax.xlane.f32.xlu0 %v6939
        %v6941 = vpop.xlane.xlu0 %6940
        %v6942 = vmax.f32 %v6833, %v6835
        %6943 = vmax.xlane.f32.xlu0 %v6942
        %v6944 = vpop.xlane.xlu0 %6943
        %v6945 = vmax.f32 %v6839, %v6841
        %6946 = vmax.xlane.f32.xlu0 %v6945
        %v6947 = vpop.xlane.xlu0 %6946
        %v6948 = vmax.f32 %v6843, %v6845
        %6949 = vmax.xlane.f32.xlu0 %v6948
        %v6950 = vpop.xlane.xlu0 %6949
        %v6951 = vmax.f32 %v6849, %v6851
        %6952 = vmax.xlane.f32.xlu0 %v6951
        %v6953 = vpop.xlane.xlu0 %6952
        %v6954 = vmax.f32 %v6853, %v6855
        %6955 = vmax.xlane.f32.xlu0 %v6954
        %v6956 = vpop.xlane.xlu0 %6955
        %v6957 = vmax.f32 %v6859, %v6861
        %6958 = vmax.xlane.f32.xlu0 %v6957
        %v6959 = vpop.xlane.xlu0 %6958
        %v6960 = vmax.f32 %v6863, %v6865
        %6961 = vmax.xlane.f32.xlu0 %v6960
        %v6962 = vpop.xlane.xlu0 %6961
        %v6963 = vsub.f32 %v6709, %v6869
        %v6964 = vsub.f32 %v6711, %v6869
        %v6965 = vsub.f32 %v6713, %v6872
        %v6966 = vsub.f32 %v6715, %v6872
        %v6967 = vsub.f32 %v6719, %v6875
        %v6968 = vsub.f32 %v6721, %v6875
        %v6969 = vsub.f32 %v6723, %v6878
        %v6970 = vsub.f32 %v6725, %v6878
        %v6971 = vsub.f32 %v6729, %v6881
        %v6972 = vsub.f32 %v6731, %v6881
        %v6973 = vsub.f32 %v6733, %v6884
        %v6974 = vsub.f32 %v6735, %v6884
        %v6975 = vsub.f32 %v6739, %v6887
        %v6976 = vsub.f32 %v6741, %v6887
        %v6977 = vsub.f32 %v6743, %v6890
        %v6978 = vsub.f32 %v6745, %v6890
        %v6979 = vsub.f32 %v6749, %v6893
        %v6980 = vsub.f32 %v6751, %v6893
        %v6981 = vsub.f32 %v6753, %v6896
        %v6982 = vsub.f32 %v6755, %v6896
        %v6983 = vsub.f32 %v6759, %v6899
        %v6984 = vsub.f32 %v6761, %v6899
        %v6985 = vsub.f32 %v6763, %v6902
        %v6986 = vsub.f32 %v6765, %v6902
        %v6987 = vsub.f32 %v6769, %v6905
        %v6988 = vsub.f32 %v6771, %v6905
        %v6989 = vsub.f32 %v6773, %v6908
        %v6990 = vsub.f32 %v6775, %v6908
        %v6991 = vsub.f32 %v6779, %v6911
        %v6992 = vsub.f32 %v6781, %v6911
        %v6993 = vsub.f32 %v6783, %v6914
        %v6994 = vsub.f32 %v6785, %v6914
        %v6995 = vsub.f32 %v6789, %v6917
        %v6996 = vsub.f32 %v6791, %v6917
        %v6997 = vsub.f32 %v6793, %v6920
        %v6998 = vsub.f32 %v6795, %v6920
        %v6999 = vsub.f32 %v6799, %v6923
        %v7000 = vsub.f32 %v6801, %v6923
        %v7001 = vsub.f32 %v6803, %v6926
        %v7002 = vsub.f32 %v6805, %v6926
        %v7003 = vsub.f32 %v6809, %v6929
        %v7004 = vsub.f32 %v6811, %v6929
        %v7005 = vsub.f32 %v6813, %v6932
        %v7006 = vsub.f32 %v6815, %v6932
        %v7007 = vsub.f32 %v6819, %v6935
        %v7008 = vsub.f32 %v6821, %v6935
        %v7009 = vsub.f32 %v6823, %v6938
        %v7010 = vsub.f32 %v6825, %v6938
        %v7011 = vsub.f32 %v6829, %v6941
        %v7012 = vsub.f32 %v6831, %v6941
        %v7013 = vsub.f32 %v6833, %v6944
        %v7014 = vsub.f32 %v6835, %v6944
        %v7015 = vsub.f32 %v6839, %v6947
        %v7016 = vsub.f32 %v6841, %v6947
        %v7017 = vsub.f32 %v6843, %v6950
        %v7018 = vsub.f32 %v6845, %v6950
        %v7019 = vsub.f32 %v6849, %v6953
        %v7020 = vsub.f32 %v6851, %v6953
        %v7021 = vsub.f32 %v6853, %v6956
        %v7022 = vsub.f32 %v6855, %v6956
        %v7023 = vsub.f32 %v6859, %v6959
        %v7024 = vsub.f32 %v6861, %v6959
        %v7025 = vsub.f32 %v6863, %v6962
        %v7026 = vsub.f32 %v6865, %v6962
        %v7027 = vmul.f32 %v6963, 1.442695
        %v7028 = vpow.pop %v7027
        %v7029 = vmul.f32 %v6964, 1.442695
        %v7030 = vpow.pop %v7029
        %v7031 = vmul.f32 %v6965, 1.442695
        %v7032 = vpow.pop %v7031
        %v7033 = vmul.f32 %v6966, 1.442695
        %v7034 = vpow.pop %v7033
        %v7035 = vmul.f32 %v6967, 1.442695
        %v7036 = vpow.pop %v7035
        %v7037 = vmul.f32 %v6968, 1.442695
        %v7038 = vpow.pop %v7037
        %v7039 = vmul.f32 %v6969, 1.442695
        %v7040 = vpow.pop %v7039
        %v7041 = vmul.f32 %v6970, 1.442695
        %v7042 = vpow.pop %v7041
        %v7043 = vmul.f32 %v6971, 1.442695
        %v7044 = vpow.pop %v7043
        %v7045 = vmul.f32 %v6972, 1.442695
        %v7046 = vpow.pop %v7045
        %v7047 = vmul.f32 %v6973, 1.442695
        %v7048 = vpow.pop %v7047
        %v7049 = vmul.f32 %v6974, 1.442695
        %v7050 = vpow.pop %v7049
        %v7051 = vmul.f32 %v6975, 1.442695
        %v7052 = vpow.pop %v7051
        %v7053 = vmul.f32 %v6976, 1.442695
        %v7054 = vpow.pop %v7053
        %v7055 = vmul.f32 %v6977, 1.442695
        %v7056 = vpow.pop %v7055
        %v7057 = vmul.f32 %v6978, 1.442695
        %v7058 = vpow.pop %v7057
        %v7059 = vmul.f32 %v6979, 1.442695
        %v7060 = vpow.pop %v7059
        %v7061 = vmul.f32 %v6980, 1.442695
        %v7062 = vpow.pop %v7061
        %v7063 = vmul.f32 %v6981, 1.442695
        %v7064 = vpow.pop %v7063
        %v7065 = vmul.f32 %v6982, 1.442695
        %v7066 = vpow.pop %v7065
        %v7067 = vmul.f32 %v6983, 1.442695
        %v7068 = vpow.pop %v7067
        %v7069 = vmul.f32 %v6984, 1.442695
        %v7070 = vpow.pop %v7069
        %v7071 = vmul.f32 %v6985, 1.442695
        %v7072 = vpow.pop %v7071
        %v7073 = vmul.f32 %v6986, 1.442695
        %v7074 = vpow.pop %v7073
        %v7075 = vmul.f32 %v6987, 1.442695
        %v7076 = vpow.pop %v7075
        %v7077 = vmul.f32 %v6988, 1.442695
        %v7078 = vpow.pop %v7077
        %v7079 = vmul.f32 %v6989, 1.442695
        %v7080 = vpow.pop %v7079
        %v7081 = vmul.f32 %v6990, 1.442695
        %v7082 = vpow.pop %v7081
        %v7083 = vmul.f32 %v6991, 1.442695
        %v7084 = vpow.pop %v7083
        %v7085 = vmul.f32 %v6992, 1.442695
        %v7086 = vpow.pop %v7085
        %v7087 = vmul.f32 %v6993, 1.442695
        %v7088 = vpow.pop %v7087
        %v7089 = vmul.f32 %v6994, 1.442695
        %v7090 = vpow.pop %v7089
        %v7091 = vmul.f32 %v6995, 1.442695
        %v7092 = vpow.pop %v7091
        %v7093 = vmul.f32 %v6996, 1.442695
        %v7094 = vpow.pop %v7093
        %v7095 = vmul.f32 %v6997, 1.442695
        %v7096 = vpow.pop %v7095
        %v7097 = vmul.f32 %v6998, 1.442695
        %v7098 = vpow.pop %v7097
        %v7099 = vmul.f32 %v6999, 1.442695
        %v7100 = vpow.pop %v7099
        %v7101 = vmul.f32 %v7000, 1.442695
        %v7102 = vpow.pop %v7101
        %v7103 = vmul.f32 %v7001, 1.442695
        %v7104 = vpow.pop %v7103
        %v7105 = vmul.f32 %v7002, 1.442695
        %v7106 = vpow.pop %v7105
        %v7107 = vmul.f32 %v7003, 1.442695
        %v7108 = vpow.pop %v7107
        %v7109 = vmul.f32 %v7004, 1.442695
        %v7110 = vpow.pop %v7109
        %v7111 = vmul.f32 %v7005, 1.442695
        %v7112 = vpow.pop %v7111
        %v7113 = vmul.f32 %v7006, 1.442695
        %v7114 = vpow.pop %v7113
        %v7115 = vmul.f32 %v7007, 1.442695
        %v7116 = vpow.pop %v7115
        %v7117 = vmul.f32 %v7008, 1.442695
        %v7118 = vpow.pop %v7117
        %v7119 = vmul.f32 %v7009, 1.442695
        %v7120 = vpow.pop %v7119
        %v7121 = vmul.f32 %v7010, 1.442695
        %v7122 = vpow.pop %v7121
        %v7123 = vmul.f32 %v7011, 1.442695
        %v7124 = vpow.pop %v7123
        %v7125 = vmul.f32 %v7012, 1.442695
        %v7126 = vpow.pop %v7125
        %v7127 = vmul.f32 %v7013, 1.442695
        %v7128 = vpow.pop %v7127
        %v7129 = vmul.f32 %v7014, 1.442695
        %v7130 = vpow.pop %v7129
        %v7131 = vmul.f32 %v7015, 1.442695
        %v7132 = vpow.pop %v7131
        %v7133 = vmul.f32 %v7016, 1.442695
        %v7134 = vpow.pop %v7133
        %v7135 = vmul.f32 %v7017, 1.442695
        %v7136 = vpow.pop %v7135
        %v7137 = vmul.f32 %v7018, 1.442695
        %v7138 = vpow.pop %v7137
        %v7139 = vmul.f32 %v7019, 1.442695
        %v7140 = vpow.pop %v7139
        %v7141 = vmul.f32 %v7020, 1.442695
        %v7142 = vpow.pop %v7141
        %v7143 = vmul.f32 %v7021, 1.442695
        %v7144 = vpow.pop %v7143
        %v7145 = vmul.f32 %v7022, 1.442695
        %v7146 = vpow.pop %v7145
        %v7147 = vmul.f32 %v7023, 1.442695
        %v7148 = vpow.pop %v7147
        %v7149 = vmul.f32 %v7024, 1.442695
        %v7150 = vpow.pop %v7149
        %v7151 = vmul.f32 %v7025, 1.442695
        %v7152 = vpow.pop %v7151
        %v7153 = vmul.f32 %v7026, 1.442695
        %v7154 = vpow.pop %v7153
        %v7155 = vadd.f32 %v7028, %v7030
        %7156 = vadd.xlane.f32.xlu0 %v7155
        %v7157 = vpop.xlane.xlu0 %7156
        %v7158 = vadd.f32 %v7032, %v7034
        %7159 = vadd.xlane.f32.xlu0 %v7158
        %v7160 = vpop.xlane.xlu0 %7159
        %v7161 = vadd.f32 %v7036, %v7038
        %7162 = vadd.xlane.f32.xlu0 %v7161
        %v7163 = vpop.xlane.xlu0 %7162
        %v7164 = vadd.f32 %v7040, %v7042
        %7165 = vadd.xlane.f32.xlu0 %v7164
        %v7166 = vpop.xlane.xlu0 %7165
        %v7167 = vadd.f32 %v7044, %v7046
        %7168 = vadd.xlane.f32.xlu0 %v7167
        %v7169 = vpop.xlane.xlu0 %7168
        %v7170 = vadd.f32 %v7048, %v7050
        %7171 = vadd.xlane.f32.xlu0 %v7170
        %v7172 = vpop.xlane.xlu0 %7171
        %v7173 = vadd.f32 %v7052, %v7054
        %7174 = vadd.xlane.f32.xlu0 %v7173
        %v7175 = vpop.xlane.xlu0 %7174
        %v7176 = vadd.f32 %v7056, %v7058
        %7177 = vadd.xlane.f32.xlu0 %v7176
        %v7178 = vpop.xlane.xlu0 %7177
        %v7179 = vadd.f32 %v7060, %v7062
        %7180 = vadd.xlane.f32.xlu0 %v7179
        %v7181 = vpop.xlane.xlu0 %7180
        %v7182 = vadd.f32 %v7064, %v7066
        %7183 = vadd.xlane.f32.xlu0 %v7182
        %v7184 = vpop.xlane.xlu0 %7183
        %v7185 = vadd.f32 %v7068, %v7070
        %7186 = vadd.xlane.f32.xlu0 %v7185
        %v7187 = vpop.xlane.xlu0 %7186
        %v7188 = vadd.f32 %v7072, %v7074
        %7189 = vadd.xlane.f32.xlu0 %v7188
        %v7190 = vpop.xlane.xlu0 %7189
        %v7191 = vadd.f32 %v7076, %v7078
        %7192 = vadd.xlane.f32.xlu0 %v7191
        %v7193 = vpop.xlane.xlu0 %7192
        %v7194 = vadd.f32 %v7080, %v7082
        %7195 = vadd.xlane.f32.xlu0 %v7194
        %v7196 = vpop.xlane.xlu0 %7195
        %v7197 = vadd.f32 %v7084, %v7086
        %7198 = vadd.xlane.f32.xlu0 %v7197
        %v7199 = vpop.xlane.xlu0 %7198
        %v7200 = vadd.f32 %v7088, %v7090
        %7201 = vadd.xlane.f32.xlu0 %v7200
        %v7202 = vpop.xlane.xlu0 %7201
        %v7203 = vadd.f32 %v7092, %v7094
        %7204 = vadd.xlane.f32.xlu0 %v7203
        %v7205 = vpop.xlane.xlu0 %7204
        %v7206 = vadd.f32 %v7096, %v7098
        %7207 = vadd.xlane.f32.xlu0 %v7206
        %v7208 = vpop.xlane.xlu0 %7207
        %v7209 = vadd.f32 %v7100, %v7102
        %7210 = vadd.xlane.f32.xlu0 %v7209
        %v7211 = vpop.xlane.xlu0 %7210
        %v7212 = vadd.f32 %v7104, %v7106
        %7213 = vadd.xlane.f32.xlu0 %v7212
        %v7214 = vpop.xlane.xlu0 %7213
        %v7215 = vadd.f32 %v7108, %v7110
        %7216 = vadd.xlane.f32.xlu0 %v7215
        %v7217 = vpop.xlane.xlu0 %7216
        %v7218 = vadd.f32 %v7112, %v7114
        %7219 = vadd.xlane.f32.xlu0 %v7218
        %v7220 = vpop.xlane.xlu0 %7219
        %v7221 = vadd.f32 %v7116, %v7118
        %7222 = vadd.xlane.f32.xlu0 %v7221
        %v7223 = vpop.xlane.xlu0 %7222
        %v7224 = vadd.f32 %v7120, %v7122
        %7225 = vadd.xlane.f32.xlu0 %v7224
        %v7226 = vpop.xlane.xlu0 %7225
        %v7227 = vadd.f32 %v7124, %v7126
        %7228 = vadd.xlane.f32.xlu0 %v7227
        %v7229 = vpop.xlane.xlu0 %7228
        %v7230 = vadd.f32 %v7128, %v7130
        %7231 = vadd.xlane.f32.xlu0 %v7230
        %v7232 = vpop.xlane.xlu0 %7231
        %v7233 = vadd.f32 %v7132, %v7134
        %7234 = vadd.xlane.f32.xlu0 %v7233
        %v7235 = vpop.xlane.xlu0 %7234
        %v7236 = vadd.f32 %v7136, %v7138
        %7237 = vadd.xlane.f32.xlu0 %v7236
        %v7238 = vpop.xlane.xlu0 %7237
        %v7239 = vadd.f32 %v7140, %v7142
        %7240 = vadd.xlane.f32.xlu0 %v7239
        %v7241 = vpop.xlane.xlu0 %7240
        %v7242 = vadd.f32 %v7144, %v7146
        %7243 = vadd.xlane.f32.xlu0 %v7242
        %v7244 = vpop.xlane.xlu0 %7243
        %v7245 = vadd.f32 %v7148, %v7150
        %7246 = vadd.xlane.f32.xlu0 %v7245
        %v7247 = vpop.xlane.xlu0 %7246
        %v7248 = vadd.f32 %v7152, %v7154
        %7249 = vadd.xlane.f32.xlu0 %v7248
        %v7250 = vpop.xlane.xlu0 %7249
        %v7251 = vrcp.pop %v7157
        %v7252 = vrcp.pop %v7160
        %v7253 = vrcp.pop %v7163
        %v7254 = vrcp.pop %v7166
        %v7255 = vrcp.pop %v7169
        %v7256 = vrcp.pop %v7172
        %v7257 = vrcp.pop %v7175
        %v7258 = vrcp.pop %v7178
        %v7259 = vrcp.pop %v7181
        %v7260 = vrcp.pop %v7184
        %v7261 = vrcp.pop %v7187
        %v7262 = vrcp.pop %v7190
        %v7263 = vrcp.pop %v7193
        %v7264 = vrcp.pop %v7196
        %v7265 = vrcp.pop %v7199
        %v7266 = vrcp.pop %v7202
        %v7267 = vrcp.pop %v7205
        %v7268 = vrcp.pop %v7208
        %v7269 = vrcp.pop %v7211
        %v7270 = vrcp.pop %v7214
        %v7271 = vrcp.pop %v7217
        %v7272 = vrcp.pop %v7220
        %v7273 = vrcp.pop %v7223
        %v7274 = vrcp.pop %v7226
        %v7275 = vrcp.pop %v7229
        %v7276 = vrcp.pop %v7232
        %v7277 = vrcp.pop %v7235
        %v7278 = vrcp.pop %v7238
        %v7279 = vrcp.pop %v7241
        %v7280 = vrcp.pop %v7244
        %v7281 = vrcp.pop %v7247
        %v7282 = vrcp.pop %v7250
        %v7283 = vmul.f32 %v7028, %v7251
        %v7284 = vmul.f32 %v7030, %v7251
        %v7285 = vmul.f32 %v7032, %v7252
        %v7286 = vmul.f32 %v7034, %v7252
        %v7287 = vmul.f32 %v7036, %v7253
        %v7288 = vmul.f32 %v7038, %v7253
        %v7289 = vmul.f32 %v7040, %v7254
        %v7290 = vmul.f32 %v7042, %v7254
        %v7291 = vmul.f32 %v7044, %v7255
        %v7292 = vmul.f32 %v7046, %v7255
        %v7293 = vmul.f32 %v7048, %v7256
        %v7294 = vmul.f32 %v7050, %v7256
        %v7295 = vmul.f32 %v7052, %v7257
        %v7296 = vmul.f32 %v7054, %v7257
        %v7297 = vmul.f32 %v7056, %v7258
        %v7298 = vmul.f32 %v7058, %v7258
        %v7299 = vmul.f32 %v7060, %v7259
        %v7300 = vmul.f32 %v7062, %v7259
        %v7301 = vmul.f32 %v7064, %v7260
        %v7302 = vmul.f32 %v7066, %v7260
        %v7303 = vmul.f32 %v7068, %v7261
        %v7304 = vmul.f32 %v7070, %v7261
        %v7305 = vmul.f32 %v7072, %v7262
        %v7306 = vmul.f32 %v7074, %v7262
        %v7307 = vmul.f32 %v7076, %v7263
        %v7308 = vmul.f32 %v7078, %v7263
        %v7309 = vmul.f32 %v7080, %v7264
        %v7310 = vmul.f32 %v7082, %v7264
        %v7311 = vmul.f32 %v7084, %v7265
        %v7312 = vmul.f32 %v7086, %v7265
        %v7313 = vmul.f32 %v7088, %v7266
        %v7314 = vmul.f32 %v7090, %v7266
        %v7315 = vmul.f32 %v7092, %v7267
        %v7316 = vmul.f32 %v7094, %v7267
        %v7317 = vmul.f32 %v7096, %v7268
        %v7318 = vmul.f32 %v7098, %v7268
        %v7319 = vmul.f32 %v7100, %v7269
        %v7320 = vmul.f32 %v7102, %v7269
        %v7321 = vmul.f32 %v7104, %v7270
        %v7322 = vmul.f32 %v7106, %v7270
        %v7323 = vmul.f32 %v7108, %v7271
        %v7324 = vmul.f32 %v7110, %v7271
        %v7325 = vmul.f32 %v7112, %v7272
        %v7326 = vmul.f32 %v7114, %v7272
        %v7327 = vmul.f32 %v7116, %v7273
        %v7328 = vmul.f32 %v7118, %v7273
        %v7329 = vmul.f32 %v7120, %v7274
        %v7330 = vmul.f32 %v7122, %v7274
        %v7331 = vmul.f32 %v7124, %v7275
        %v7332 = vmul.f32 %v7126, %v7275
        %v7333 = vmul.f32 %v7128, %v7276
        %v7334 = vmul.f32 %v7130, %v7276
        %v7335 = vmul.f32 %v7132, %v7277
        %v7336 = vmul.f32 %v7134, %v7277
        %v7337 = vmul.f32 %v7136, %v7278
        %v7338 = vmul.f32 %v7138, %v7278
        %v7339 = vmul.f32 %v7140, %v7279
        %v7340 = vmul.f32 %v7142, %v7279
        %v7341 = vmul.f32 %v7144, %v7280
        %v7342 = vmul.f32 %v7146, %v7280
        %v7343 = vmul.f32 %v7148, %v7281
        %v7344 = vmul.f32 %v7150, %v7281
        %v7345 = vmul.f32 %v7152, %v7282
        %v7346 = vmul.f32 %v7154, %v7282
        %v7347 = vpack.c.bf16 %v7285, %v7283
        %v7348 = vpack.c.bf16 %v7286, %v7284
        %v7349 = vpack.c.bf16 %v7289, %v7287
        %v7350 = vpack.c.bf16 %v7290, %v7288
        %v7351 = vpack.c.bf16 %v7293, %v7291
        %v7352 = vpack.c.bf16 %v7294, %v7292
        %v7353 = vpack.c.bf16 %v7297, %v7295
        %v7354 = vpack.c.bf16 %v7298, %v7296
        %v7355 = vpack.c.bf16 %v7301, %v7299
        %v7356 = vpack.c.bf16 %v7302, %v7300
        %v7357 = vpack.c.bf16 %v7305, %v7303
        %v7358 = vpack.c.bf16 %v7306, %v7304
        %v7359 = vpack.c.bf16 %v7309, %v7307
        %v7360 = vpack.c.bf16 %v7310, %v7308
        %v7361 = vpack.c.bf16 %v7313, %v7311
        %v7362 = vpack.c.bf16 %v7314, %v7312
        %v7363 = vpack.c.bf16 %v7317, %v7315
        %v7364 = vpack.c.bf16 %v7318, %v7316
        %v7365 = vpack.c.bf16 %v7321, %v7319
        %v7366 = vpack.c.bf16 %v7322, %v7320
        %v7367 = vpack.c.bf16 %v7325, %v7323
        %v7368 = vpack.c.bf16 %v7326, %v7324
        %v7369 = vpack.c.bf16 %v7329, %v7327
        %v7370 = vpack.c.bf16 %v7330, %v7328
        %v7371 = vpack.c.bf16 %v7333, %v7331
        %v7372 = vpack.c.bf16 %v7334, %v7332
        %v7373 = vpack.c.bf16 %v7337, %v7335
        %v7374 = vpack.c.bf16 %v7338, %v7336
        %v7375 = vpack.c.bf16 %v7341, %v7339
        %v7376 = vpack.c.bf16 %v7342, %v7340
        %v7377 = vpack.c.bf16 %v7345, %v7343
        %v7378 = vpack.c.bf16 %v7346, %v7344
        %7395 = vrot.lane.b32.xlu0 %v5007, 64
        %v7396 = vpop.permute.xlu0 %7395
        %7397 = vrot.lane.b32.xlu0 %v5008, 64
        %v7398 = vpop.permute.xlu0 %7397
        %7399 = vrot.lane.b32.xlu0 %v5009, 64
        %v7400 = vpop.permute.xlu0 %7399
        %7401 = vrot.lane.b32.xlu0 %v5010, 64
        %v7402 = vpop.permute.xlu0 %7401
        %7403 = vrot.lane.b32.xlu0 %v5011, 64
        %v7404 = vpop.permute.xlu0 %7403
        %7405 = vrot.lane.b32.xlu0 %v5012, 64
        %v7406 = vpop.permute.xlu0 %7405
        %7407 = vrot.lane.b32.xlu0 %v5013, 64
        %v7408 = vpop.permute.xlu0 %7407
        %7409 = vrot.lane.b32.xlu0 %v5014, 64
        %v7410 = vpop.permute.xlu0 %7409
        %7411 = vrot.lane.b32.xlu0 %v5015, 64
        %v7412 = vpop.permute.xlu0 %7411
        %7413 = vrot.lane.b32.xlu0 %v5016, 64
        %v7414 = vpop.permute.xlu0 %7413
        %7415 = vrot.lane.b32.xlu0 %v5017, 64
        %v7416 = vpop.permute.xlu0 %7415
        %7417 = vrot.lane.b32.xlu0 %v5018, 64
        %v7418 = vpop.permute.xlu0 %7417
        %7419 = vrot.lane.b32.xlu0 %v5019, 64
        %v7420 = vpop.permute.xlu0 %7419
        %7421 = vrot.lane.b32.xlu0 %v5020, 64
        %v7422 = vpop.permute.xlu0 %7421
        %7423 = vrot.lane.b32.xlu0 %v5021, 64
        %v7424 = vpop.permute.xlu0 %7423
        %7425 = vrot.lane.b32.xlu0 %v5022, 64
        %v7426 = vpop.permute.xlu0 %7425
        %7443 = vmatprep.subr.bf16.mxu0 0
        %7444 = vmatpush1.bf16.msra.mxu0 %v7396
        %7445 = vmatprep.subr.bf16.mxu0 0
        %7446 = vmatpush1.bf16.msra.mxu0 %v7398
        %7447 = vmatprep.subr.bf16.mxu0 0
        %7448 = vmatpush1.bf16.msra.mxu0 %v7400
        %7449 = vmatprep.subr.bf16.mxu0 0
        %7450 = vmatpush1.bf16.msra.mxu0 %v7402
        %7451 = vmatprep.subr.bf16.mxu0 0
        %7452 = vmatpush1.bf16.msra.mxu0 %v7404
        %7453 = vmatprep.subr.bf16.mxu0 0
        %7454 = vmatpush1.bf16.msra.mxu0 %v7406
        %7455 = vmatprep.subr.bf16.mxu0 0
        %7456 = vmatpush1.bf16.msra.mxu0 %v7408
        %7457 = vmatprep.subr.bf16.mxu0 0
        %7458 = vmatpush1.bf16.msra.mxu0 %v7410
        %7459 = vmatprep.subr.bf16.mxu0 0
        %7460 = vmatpush1.bf16.msra.mxu0 %v7412
        %7461 = vmatprep.subr.bf16.mxu0 0
        %7462 = vmatpush1.bf16.msra.mxu0 %v7414
        %7463 = vmatprep.subr.bf16.mxu0 0
        %7464 = vmatpush1.bf16.msra.mxu0 %v7416
        %7465 = vmatprep.subr.bf16.mxu0 0
        %7466 = vmatpush1.bf16.msra.mxu0 %v7418
        %7467 = vmatprep.subr.bf16.mxu0 0
        %7468 = vmatpush1.bf16.msra.mxu0 %v7420
        %7469 = vmatprep.subr.bf16.mxu0 0
        %7470 = vmatpush1.bf16.msra.mxu0 %v7422
        %7471 = vmatprep.subr.bf16.mxu0 0
        %7472 = vmatpush1.bf16.msra.mxu0 %v7424
        %7473 = vmatprep.subr.bf16.mxu0 0
        %7474 = vmatpush1.bf16.msra.mxu0 %v7426
        %7475 = vmatprep.mubr.bf16.mxu0 %v7348
        %7476 = vmatmul.mubr.bf16.gmra.mrb[0].mxu0 %v7347
        %v7477 = vpop.f32.mrb[0].mxu0
        %v7478 = vadd.f32 0.0, %v7477
        %v7479 = vpop.f32.mrb[0].mxu0
        %v7480 = vpop.f32.mrb[0].mxu0
        %v7481 = vadd.f32 0.0, %v7480
        %v7482 = vpop.f32.mrb[0].mxu0
        %7483 = vmatprep.mubr.bf16.mxu0 %v7350
        %7484 = vmatmul.mubr.bf16.gmra.mrb[0].mxu0 %v7349
        %v7485 = vpop.f32.mrb[0].mxu0
        %v7486 = vadd.f32 0.0, %v7485
        %v7487 = vpop.f32.mrb[0].mxu0
        %v7488 = vpop.f32.mrb[0].mxu0
        %v7489 = vadd.f32 0.0, %v7488
        %v7490 = vpop.f32.mrb[0].mxu0
        %7491 = vmatprep.mubr.bf16.mxu0 %v7352
        %7492 = vmatmul.mubr.bf16.gmra.mrb[0].mxu0 %v7351
        %v7493 = vpop.f32.mrb[0].mxu0
        %v7494 = vadd.f32 0.0, %v7493
        %v7495 = vpop.f32.mrb[0].mxu0
        %v7496 = vpop.f32.mrb[0].mxu0
        %v7497 = vadd.f32 0.0, %v7496
        %v7498 = vpop.f32.mrb[0].mxu0
        %7499 = vmatprep.mubr.bf16.mxu0 %v7354
        %7500 = vmatmul.mubr.bf16.gmra.mrb[0].mxu0 %v7353
        %v7501 = vpop.f32.mrb[0].mxu0
        %v7502 = vadd.f32 0.0, %v7501
        %v7503 = vpop.f32.mrb[0].mxu0
        %v7504 = vpop.f32.mrb[0].mxu0
        %v7505 = vadd.f32 0.0, %v7504
        %v7506 = vpop.f32.mrb[0].mxu0
        %7507 = vmatprep.mubr.bf16.mxu0 %v7356
        %7508 = vmatmul.mubr.bf16.gmra.mrb[0].mxu0 %v7355
        %v7509 = vpop.f32.mrb[0].mxu0
        %v7510 = vadd.f32 0.0, %v7509
        %v7511 = vpop.f32.mrb[0].mxu0
        %v7512 = vpop.f32.mrb[0].mxu0
        %v7513 = vadd.f32 0.0, %v7512
        %v7514 = vpop.f32.mrb[0].mxu0
        %7515 = vmatprep.mubr.bf16.mxu0 %v7358
        %7516 = vmatmul.mubr.bf16.gmra.mrb[0].mxu0 %v7357
        %v7517 = vpop.f32.mrb[0].mxu0
        %v7518 = vadd.f32 0.0, %v7517
        %v7519 = vpop.f32.mrb[0].mxu0
        %v7520 = vpop.f32.mrb[0].mxu0
        %v7521 = vadd.f32 0.0, %v7520
        %v7522 = vpop.f32.mrb[0].mxu0
        %7523 = vmatprep.mubr.bf16.mxu0 %v7360
        %7524 = vmatmul.mubr.bf16.gmra.mrb[0].mxu0 %v7359
        %v7525 = vpop.f32.mrb[0].mxu0
        %v7526 = vadd.f32 0.0, %v7525
        %v7527 = vpop.f32.mrb[0].mxu0
        %v7528 = vpop.f32.mrb[0].mxu0
        %v7529 = vadd.f32 0.0, %v7528
        %v7530 = vpop.f32.mrb[0].mxu0
        %7531 = vmatprep.mubr.bf16.mxu0 %v7362
        %7532 = vmatmul.mubr.bf16.gmra.mrb[0].mxu0 %v7361
        %v7533 = vpop.f32.mrb[0].mxu0
        %v7534 = vadd.f32 0.0, %v7533
        %v7535 = vpop.f32.mrb[0].mxu0
        %v7536 = vpop.f32.mrb[0].mxu0
        %v7537 = vadd.f32 0.0, %v7536
        %v7538 = vpop.f32.mrb[0].mxu0
        %7539 = vmatprep.mubr.bf16.mxu0 %v7364
        %7540 = vmatmul.mubr.bf16.gmra.mrb[0].mxu0 %v7363
        %v7541 = vpop.f32.mrb[0].mxu0
        %v7542 = vadd.f32 0.0, %v7541
        %v7543 = vpop.f32.mrb[0].mxu0
        %v7544 = vpop.f32.mrb[0].mxu0
        %v7545 = vadd.f32 0.0, %v7544
        %v7546 = vpop.f32.mrb[0].mxu0
        %7547 = vmatprep.mubr.bf16.mxu0 %v7366
        %7548 = vmatmul.mubr.bf16.gmra.mrb[0].mxu0 %v7365
        %v7549 = vpop.f32.mrb[0].mxu0
        %v7550 = vadd.f32 0.0, %v7549
        %v7551 = vpop.f32.mrb[0].mxu0
        %v7552 = vpop.f32.mrb[0].mxu0
        %v7553 = vadd.f32 0.0, %v7552
        %v7554 = vpop.f32.mrb[0].mxu0
        %7555 = vmatprep.mubr.bf16.mxu0 %v7368
        %7556 = vmatmul.mubr.bf16.gmra.mrb[0].mxu0 %v7367
        %v7557 = vpop.f32.mrb[0].mxu0
        %v7558 = vadd.f32 0.0, %v7557
        %v7559 = vpop.f32.mrb[0].mxu0
        %v7560 = vpop.f32.mrb[0].mxu0
        %v7561 = vadd.f32 0.0, %v7560
        %v7562 = vpop.f32.mrb[0].mxu0
        %7563 = vmatprep.mubr.bf16.mxu0 %v7370
        %7564 = vmatmul.mubr.bf16.gmra.mrb[0].mxu0 %v7369
        %v7565 = vpop.f32.mrb[0].mxu0
        %v7566 = vadd.f32 0.0, %v7565
        %v7567 = vpop.f32.mrb[0].mxu0
        %v7568 = vpop.f32.mrb[0].mxu0
        %v7569 = vadd.f32 0.0, %v7568
        %v7570 = vpop.f32.mrb[0].mxu0
        %7571 = vmatprep.mubr.bf16.mxu0 %v7372
        %7572 = vmatmul.mubr.bf16.gmra.mrb[0].mxu0 %v7371
        %v7573 = vpop.f32.mrb[0].mxu0
        %v7574 = vadd.f32 0.0, %v7573
        %v7575 = vpop.f32.mrb[0].mxu0
        %v7576 = vpop.f32.mrb[0].mxu0
        %v7577 = vadd.f32 0.0, %v7576
        %v7578 = vpop.f32.mrb[0].mxu0
        %7579 = vmatprep.mubr.bf16.mxu0 %v7374
        %7580 = vmatmul.mubr.bf16.gmra.mrb[0].mxu0 %v7373
        %v7581 = vpop.f32.mrb[0].mxu0
        %v7582 = vadd.f32 0.0, %v7581
        %v7583 = vpop.f32.mrb[0].mxu0
        %v7584 = vpop.f32.mrb[0].mxu0
        %v7585 = vadd.f32 0.0, %v7584
        %v7586 = vpop.f32.mrb[0].mxu0
        %7587 = vmatprep.mubr.bf16.mxu0 %v7376
        %7588 = vmatmul.mubr.bf16.gmra.mrb[0].mxu0 %v7375
        %v7589 = vpop.f32.mrb[0].mxu0
        %v7590 = vadd.f32 0.0, %v7589
        %v7591 = vpop.f32.mrb[0].mxu0
        %v7592 = vpop.f32.mrb[0].mxu0
        %v7593 = vadd.f32 0.0, %v7592
        %v7594 = vpop.f32.mrb[0].mxu0
        %7595 = vmatprep.mubr.bf16.mxu0 %v7378
        %7596 = vmatmul.mubr.bf16.gmra.mrb[0].mxu0 %v7377
        %v7597 = vpop.f32.mrb[0].mxu0
        %v7598 = vadd.f32 0.0, %v7597
        %v7599 = vpop.f32.mrb[0].mxu0
        %v7600 = vpop.f32.mrb[0].mxu0
        %v7601 = vadd.f32 0.0, %v7600
        %v7602 = vpop.f32.mrb[0].mxu0
        %7603 = vdwg.mxu0
        %v7604 = vld [vmem:[#allocation2] sm:$0xff]
        %v7605 = vld [vmem:[#allocation2 + $0x8] sm:$0xff]
        %v7606 = vld [vmem:[#allocation2 + $0x10] sm:$0xff]
        %v7607 = vld [vmem:[#allocation2 + $0x18] sm:$0xff]
        %v7608 = vld [vmem:[#allocation2 + $0x20] sm:$0xff]
        %v7609 = vld [vmem:[#allocation2 + $0x28] sm:$0xff]
        %v7610 = vld [vmem:[#allocation2 + $0x30] sm:$0xff]
        %v7611 = vld [vmem:[#allocation2 + $0x38] sm:$0xff]
        %v7612 = vld [vmem:[#allocation2 + $0x40] sm:$0xff]
        %v7613 = vld [vmem:[#allocation2 + $0x48] sm:$0xff]
        %v7614 = vld [vmem:[#allocation2 + $0x50] sm:$0xff]
        %v7615 = vld [vmem:[#allocation2 + $0x58] sm:$0xff]
        %v7616 = vld [vmem:[#allocation2 + $0x60] sm:$0xff]
        %v7617 = vld [vmem:[#allocation2 + $0x68] sm:$0xff]
        %v7618 = vld [vmem:[#allocation2 + $0x70] sm:$0xff]
        %v7619 = vld [vmem:[#allocation2 + $0x78] sm:$0xff]
        %v7620 = vld [vmem:[#allocation2 + $0x80] sm:$0xff]
        %v7621 = vld [vmem:[#allocation2 + $0x88] sm:$0xff]
        %v7622 = vld [vmem:[#allocation2 + $0x90] sm:$0xff]
        %v7623 = vld [vmem:[#allocation2 + $0x98] sm:$0xff]
        %v7624 = vld [vmem:[#allocation2 + $0xa0] sm:$0xff]
        %v7625 = vld [vmem:[#allocation2 + $0xa8] sm:$0xff]
        %v7626 = vld [vmem:[#allocation2 + $0xb0] sm:$0xff]
        %v7627 = vld [vmem:[#allocation2 + $0xb8] sm:$0xff]
        %v7628 = vld [vmem:[#allocation2 + $0xc0] sm:$0xff]
        %v7629 = vld [vmem:[#allocation2 + $0xc8] sm:$0xff]
        %v7630 = vld [vmem:[#allocation2 + $0xd0] sm:$0xff]
        %v7631 = vld [vmem:[#allocation2 + $0xd8] sm:$0xff]
        %v7632 = vld [vmem:[#allocation2 + $0xe0] sm:$0xff]
        %v7633 = vld [vmem:[#allocation2 + $0xe8] sm:$0xff]
        %v7634 = vld [vmem:[#allocation2 + $0xf0] sm:$0xff]
        %v7635 = vld [vmem:[#allocation2 + $0xf8] sm:$0xff]
        %v7636 = vld [vmem:[#allocation2 + $0x100] sm:$0xff]
        %v7637 = vld [vmem:[#allocation2 + $0x108] sm:$0xff]
        %v7638 = vld [vmem:[#allocation2 + $0x110] sm:$0xff]
        %v7639 = vld [vmem:[#allocation2 + $0x118] sm:$0xff]
        %v7640 = vld [vmem:[#allocation2 + $0x120] sm:$0xff]
        %v7641 = vld [vmem:[#allocation2 + $0x128] sm:$0xff]
        %v7642 = vld [vmem:[#allocation2 + $0x130] sm:$0xff]
        %v7643 = vld [vmem:[#allocation2 + $0x138] sm:$0xff]
        %v7644 = vld [vmem:[#allocation2 + $0x140] sm:$0xff]
        %v7645 = vld [vmem:[#allocation2 + $0x148] sm:$0xff]
        %v7646 = vld [vmem:[#allocation2 + $0x150] sm:$0xff]
        %v7647 = vld [vmem:[#allocation2 + $0x158] sm:$0xff]
        %v7648 = vld [vmem:[#allocation2 + $0x160] sm:$0xff]
        %v7649 = vld [vmem:[#allocation2 + $0x168] sm:$0xff]
        %v7650 = vld [vmem:[#allocation2 + $0x170] sm:$0xff]
        %v7651 = vld [vmem:[#allocation2 + $0x178] sm:$0xff]
        %v7652 = vld [vmem:[#allocation2 + $0x180] sm:$0xff]
        %v7653 = vld [vmem:[#allocation2 + $0x188] sm:$0xff]
        %v7654 = vld [vmem:[#allocation2 + $0x190] sm:$0xff]
        %v7655 = vld [vmem:[#allocation2 + $0x198] sm:$0xff]
        %v7656 = vld [vmem:[#allocation2 + $0x1a0] sm:$0xff]
        %v7657 = vld [vmem:[#allocation2 + $0x1a8] sm:$0xff]
        %v7658 = vld [vmem:[#allocation2 + $0x1b0] sm:$0xff]
        %v7659 = vld [vmem:[#allocation2 + $0x1b8] sm:$0xff]
        %v7660 = vld [vmem:[#allocation2 + $0x1c0] sm:$0xff]
        %v7661 = vld [vmem:[#allocation2 + $0x1c8] sm:$0xff]
        %v7662 = vld [vmem:[#allocation2 + $0x1d0] sm:$0xff]
        %v7663 = vld [vmem:[#allocation2 + $0x1d8] sm:$0xff]
        %v7664 = vld [vmem:[#allocation2 + $0x1e0] sm:$0xff]
        %v7665 = vld [vmem:[#allocation2 + $0x1e8] sm:$0xff]
        %v7666 = vld [vmem:[#allocation2 + $0x1f0] sm:$0xff]
        %v7667 = vld [vmem:[#allocation2 + $0x1f8] sm:$0xff]
        %v7668 = vpack.c.bf16 %v7481, %v7478
        %v7669 = vpack.c.bf16 %v7489, %v7486
        %v7670 = vpack.c.bf16 %v7497, %v7494
        %v7671 = vpack.c.bf16 %v7505, %v7502
        %v7672 = vpack.c.bf16 %v7513, %v7510
        %v7673 = vpack.c.bf16 %v7521, %v7518
        %v7674 = vpack.c.bf16 %v7529, %v7526
        %v7675 = vpack.c.bf16 %v7537, %v7534
        %v7676 = vpack.c.bf16 %v7545, %v7542
        %v7677 = vpack.c.bf16 %v7553, %v7550
        %v7678 = vpack.c.bf16 %v7561, %v7558
        %v7679 = vpack.c.bf16 %v7569, %v7566
        %v7680 = vpack.c.bf16 %v7577, %v7574
        %v7681 = vpack.c.bf16 %v7585, %v7582
        %v7682 = vpack.c.bf16 %v7593, %v7590
        %v7683 = vpack.c.bf16 %v7601, %v7598
        %v7684 = vld [vmem:[#allocation8 + $0xc0] sm:$0xff]
        %v7685 = vld [vmem:[#allocation8 + $0xc8] sm:$0xff]
        %v7686 = vld [vmem:[#allocation8 + $0xd0] sm:$0xff]
        %v7687 = vld [vmem:[#allocation8 + $0xd8] sm:$0xff]
        %v7688 = vld [vmem:[#allocation8 + $0xe0] sm:$0xff]
        %v7689 = vld [vmem:[#allocation8 + $0xe8] sm:$0xff]
        %v7690 = vld [vmem:[#allocation8 + $0xf0] sm:$0xff]
        %v7691 = vld [vmem:[#allocation8 + $0xf8] sm:$0xff]
        %v7700 = vunpack.c.l.b16 %v7684
        %v7701 = vunpack.c.h.b16 %v7684
        %v7702 = vunpack.c.l.b16 %v7685
        %v7703 = vunpack.c.h.b16 %v7685
        %v7704 = vunpack.c.l.b16 %v7686
        %v7705 = vunpack.c.h.b16 %v7686
        %v7706 = vunpack.c.l.b16 %v7687
        %v7707 = vunpack.c.h.b16 %v7687
        %v7708 = vunpack.c.l.b16 %v7688
        %v7709 = vunpack.c.h.b16 %v7688
        %v7710 = vunpack.c.l.b16 %v7689
        %v7711 = vunpack.c.h.b16 %v7689
        %v7712 = vunpack.c.l.b16 %v7690
        %v7713 = vunpack.c.h.b16 %v7690
        %v7714 = vunpack.c.l.b16 %v7691
        %v7715 = vunpack.c.h.b16 %v7691
        %v7716 = vpack.c.b16 %v7702, %v7700
        %v7717 = vpack.c.b16 %v7703, %v7701
        %v7718 = vpack.c.b16 %v7706, %v7704
        %v7719 = vpack.c.b16 %v7707, %v7705
        %v7720 = vpack.c.b16 %v7710, %v7708
        %v7721 = vpack.c.b16 %v7711, %v7709
        %v7722 = vpack.c.b16 %v7714, %v7712
        %v7723 = vpack.c.b16 %v7715, %v7713
        %v7733 = vsel %vm1896, %v7668, 0
        %v7736 = vsel %vm1896, %v7669, 0
        %v7739 = vsel %vm1896, %v7670, 0
        %v7742 = vsel %vm1896, %v7671, 0
        %v7745 = vsel %vm1896, %v7672, 0
        %v7748 = vsel %vm1896, %v7673, 0
        %v7751 = vsel %vm1896, %v7674, 0
        %v7754 = vsel %vm1896, %v7675, 0
        %v7757 = vsel %vm1896, %v7676, 0
        %v7760 = vsel %vm1896, %v7677, 0
        %v7763 = vsel %vm1896, %v7678, 0
        %v7766 = vsel %vm1896, %v7679, 0
        %v7769 = vsel %vm1896, %v7680, 0
        %v7772 = vsel %vm1896, %v7681, 0
        %v7775 = vsel %vm1896, %v7682, 0
        %v7778 = vsel %vm1896, %v7683, 0
        %7780 = vmatprep.subr.bf16.mxu0 %v7717
        %7781 = vmatpush1.bf16.msra.mxu0 %v7716
        %7782 = vmatprep.subr.bf16.mxu0 %v7719
        %7783 = vmatpush1.bf16.msra.mxu0 %v7718
        %7784 = vmatprep.subr.bf16.mxu0 %v7721
        %7785 = vmatpush1.bf16.msra.mxu0 %v7720
        %7786 = vmatprep.subr.bf16.mxu0 %v7723
        %7787 = vmatpush1.bf16.msra.mxu0 %v7722
        %7788 = vmatprep.subr.bf16.mxu0 0
        %7789 = vmatpush1.bf16.msra.mxu0 0
        %7790 = vmatprep.subr.bf16.mxu0 0
        %7791 = vmatpush1.bf16.msra.mxu0 0
        %7792 = vmatprep.subr.bf16.mxu0 0
        %7793 = vmatpush1.bf16.msra.mxu0 0
        %7794 = vmatprep.subr.bf16.mxu0 0
        %7795 = vmatpush1.bf16.msra.mxu0 0
        %7796 = vmatprep.subr.bf16.mxu0 0
        %7797 = vmatpush1.bf16.msra.mxu0 0
        %7798 = vmatprep.subr.bf16.mxu0 0
        %7799 = vmatpush1.bf16.msra.mxu0 0
        %7800 = vmatprep.subr.bf16.mxu0 0
        %7801 = vmatpush1.bf16.msra.mxu0 0
        %7802 = vmatprep.subr.bf16.mxu0 0
        %7803 = vmatpush1.bf16.msra.mxu0 0
        %7804 = vmatprep.subr.bf16.mxu0 0
        %7805 = vmatpush1.bf16.msra.mxu0 0
        %7806 = vmatprep.subr.bf16.mxu0 0
        %7807 = vmatpush1.bf16.msra.mxu0 0
        %7808 = vmatprep.subr.bf16.mxu0 0
        %7809 = vmatpush1.bf16.msra.mxu0 0
        %7810 = vmatprep.subr.bf16.mxu0 0
        %7811 = vmatpush1.bf16.msra.mxu0 0
        %7812 = vmatprep.mubr.bf16.mxu0 0
        %7813 = vmatmul.mubr.bf16.gmra.mrb[0].mxu0 %v7733
        %v7814 = vpop.f32.mrb[0].mxu0
        %v7815 = vadd.f32 0.0, %v7814
        %v7816 = vpop.f32.mrb[0].mxu0
        %v7817 = vadd.f32 0.0, %v7816
        %v7818 = vpop.f32.mrb[0].mxu0
        %v7819 = vadd.f32 0.0, %v7818
        %v7820 = vpop.f32.mrb[0].mxu0
        %v7821 = vadd.f32 0.0, %v7820
        %7822 = vmatprep.mubr.bf16.mxu0 0
        %7823 = vmatmul.mubr.bf16.gmra.mrb[0].mxu0 %v7736
        %v7824 = vpop.f32.mrb[0].mxu0
        %v7825 = vadd.f32 0.0, %v7824
        %v7826 = vpop.f32.mrb[0].mxu0
        %v7827 = vadd.f32 0.0, %v7826
        %v7828 = vpop.f32.mrb[0].mxu0
        %v7829 = vadd.f32 0.0, %v7828
        %v7830 = vpop.f32.mrb[0].mxu0
        %v7831 = vadd.f32 0.0, %v7830
        %7832 = vmatprep.mubr.bf16.mxu0 0
        %7833 = vmatmul.mubr.bf16.gmra.mrb[0].mxu0 %v7739
        %v7834 = vpop.f32.mrb[0].mxu0
        %v7835 = vadd.f32 0.0, %v7834
        %v7836 = vpop.f32.mrb[0].mxu0
        %v7837 = vadd.f32 0.0, %v7836
        %v7838 = vpop.f32.mrb[0].mxu0
        %v7839 = vadd.f32 0.0, %v7838
        %v7840 = vpop.f32.mrb[0].mxu0
        %v7841 = vadd.f32 0.0, %v7840
        %7842 = vmatprep.mubr.bf16.mxu0 0
        %7843 = vmatmul.mubr.bf16.gmra.mrb[0].mxu0 %v7742
        %v7844 = vpop.f32.mrb[0].mxu0
        %v7845 = vadd.f32 0.0, %v7844
        %v7846 = vpop.f32.mrb[0].mxu0
        %v7847 = vadd.f32 0.0, %v7846
        %v7848 = vpop.f32.mrb[0].mxu0
        %v7849 = vadd.f32 0.0, %v7848
        %v7850 = vpop.f32.mrb[0].mxu0
        %v7851 = vadd.f32 0.0, %v7850
        %7852 = vmatprep.mubr.bf16.mxu0 0
        %7853 = vmatmul.mubr.bf16.gmra.mrb[0].mxu0 %v7745
        %v7854 = vpop.f32.mrb[0].mxu0
        %v7855 = vadd.f32 0.0, %v7854
        %v7856 = vpop.f32.mrb[0].mxu0
        %v7857 = vadd.f32 0.0, %v7856
        %v7858 = vpop.f32.mrb[0].mxu0
        %v7859 = vadd.f32 0.0, %v7858
        %v7860 = vpop.f32.mrb[0].mxu0
        %v7861 = vadd.f32 0.0, %v7860
        %7862 = vmatprep.mubr.bf16.mxu0 0
        %7863 = vmatmul.mubr.bf16.gmra.mrb[0].mxu0 %v7748
        %v7864 = vpop.f32.mrb[0].mxu0
        %v7865 = vadd.f32 0.0, %v7864
        %v7866 = vpop.f32.mrb[0].mxu0
        %v7867 = vadd.f32 0.0, %v7866
        %v7868 = vpop.f32.mrb[0].mxu0
        %v7869 = vadd.f32 0.0, %v7868
        %v7870 = vpop.f32.mrb[0].mxu0
        %v7871 = vadd.f32 0.0, %v7870
        %7872 = vmatprep.mubr.bf16.mxu0 0
        %7873 = vmatmul.mubr.bf16.gmra.mrb[0].mxu0 %v7751
        %v7874 = vpop.f32.mrb[0].mxu0
        %v7875 = vadd.f32 0.0, %v7874
        %v7876 = vpop.f32.mrb[0].mxu0
        %v7877 = vadd.f32 0.0, %v7876
        %v7878 = vpop.f32.mrb[0].mxu0
        %v7879 = vadd.f32 0.0, %v7878
        %v7880 = vpop.f32.mrb[0].mxu0
        %v7881 = vadd.f32 0.0, %v7880
        %7882 = vmatprep.mubr.bf16.mxu0 0
        %7883 = vmatmul.mubr.bf16.gmra.mrb[0].mxu0 %v7754
        %v7884 = vpop.f32.mrb[0].mxu0
        %v7885 = vadd.f32 0.0, %v7884
        %v7886 = vpop.f32.mrb[0].mxu0
        %v7887 = vadd.f32 0.0, %v7886
        %v7888 = vpop.f32.mrb[0].mxu0
        %v7889 = vadd.f32 0.0, %v7888
        %v7890 = vpop.f32.mrb[0].mxu0
        %v7891 = vadd.f32 0.0, %v7890
        %7892 = vmatprep.mubr.bf16.mxu0 0
        %7893 = vmatmul.mubr.bf16.gmra.mrb[0].mxu0 %v7757
        %v7894 = vpop.f32.mrb[0].mxu0
        %v7895 = vadd.f32 0.0, %v7894
        %v7896 = vpop.f32.mrb[0].mxu0
        %v7897 = vadd.f32 0.0, %v7896
        %v7898 = vpop.f32.mrb[0].mxu0
        %v7899 = vadd.f32 0.0, %v7898
        %v7900 = vpop.f32.mrb[0].mxu0
        %v7901 = vadd.f32 0.0, %v7900
        %7902 = vmatprep.mubr.bf16.mxu0 0
        %7903 = vmatmul.mubr.bf16.gmra.mrb[0].mxu0 %v7760
        %v7904 = vpop.f32.mrb[0].mxu0
        %v7905 = vadd.f32 0.0, %v7904
        %v7906 = vpop.f32.mrb[0].mxu0
        %v7907 = vadd.f32 0.0, %v7906
        %v7908 = vpop.f32.mrb[0].mxu0
        %v7909 = vadd.f32 0.0, %v7908
        %v7910 = vpop.f32.mrb[0].mxu0
        %v7911 = vadd.f32 0.0, %v7910
        %7912 = vmatprep.mubr.bf16.mxu0 0
        %7913 = vmatmul.mubr.bf16.gmra.mrb[0].mxu0 %v7763
        %v7914 = vpop.f32.mrb[0].mxu0
        %v7915 = vadd.f32 0.0, %v7914
        %v7916 = vpop.f32.mrb[0].mxu0
        %v7917 = vadd.f32 0.0, %v7916
        %v7918 = vpop.f32.mrb[0].mxu0
        %v7919 = vadd.f32 0.0, %v7918
        %v7920 = vpop.f32.mrb[0].mxu0
        %v7921 = vadd.f32 0.0, %v7920
        %7922 = vmatprep.mubr.bf16.mxu0 0
        %7923 = vmatmul.mubr.bf16.gmra.mrb[0].mxu0 %v7766
        %v7924 = vpop.f32.mrb[0].mxu0
        %v7925 = vadd.f32 0.0, %v7924
        %v7926 = vpop.f32.mrb[0].mxu0
        %v7927 = vadd.f32 0.0, %v7926
        %v7928 = vpop.f32.mrb[0].mxu0
        %v7929 = vadd.f32 0.0, %v7928
        %v7930 = vpop.f32.mrb[0].mxu0
        %v7931 = vadd.f32 0.0, %v7930
        %7932 = vmatprep.mubr.bf16.mxu0 0
        %7933 = vmatmul.mubr.bf16.gmra.mrb[0].mxu0 %v7769
        %v7934 = vpop.f32.mrb[0].mxu0
        %v7935 = vadd.f32 0.0, %v7934
        %v7936 = vpop.f32.mrb[0].mxu0
        %v7937 = vadd.f32 0.0, %v7936
        %v7938 = vpop.f32.mrb[0].mxu0
        %v7939 = vadd.f32 0.0, %v7938
        %v7940 = vpop.f32.mrb[0].mxu0
        %v7941 = vadd.f32 0.0, %v7940
        %7942 = vmatprep.mubr.bf16.mxu0 0
        %7943 = vmatmul.mubr.bf16.gmra.mrb[0].mxu0 %v7772
        %v7944 = vpop.f32.mrb[0].mxu0
        %v7945 = vadd.f32 0.0, %v7944
        %v7946 = vpop.f32.mrb[0].mxu0
        %v7947 = vadd.f32 0.0, %v7946
        %v7948 = vpop.f32.mrb[0].mxu0
        %v7949 = vadd.f32 0.0, %v7948
        %v7950 = vpop.f32.mrb[0].mxu0
        %v7951 = vadd.f32 0.0, %v7950
        %7952 = vmatprep.mubr.bf16.mxu0 0
        %7953 = vmatmul.mubr.bf16.gmra.mrb[0].mxu0 %v7775
        %v7954 = vpop.f32.mrb[0].mxu0
        %v7955 = vadd.f32 0.0, %v7954
        %v7956 = vpop.f32.mrb[0].mxu0
        %v7957 = vadd.f32 0.0, %v7956
        %v7958 = vpop.f32.mrb[0].mxu0
        %v7959 = vadd.f32 0.0, %v7958
        %v7960 = vpop.f32.mrb[0].mxu0
        %v7961 = vadd.f32 0.0, %v7960
        %7962 = vmatprep.mubr.bf16.mxu0 0
        %7963 = vmatmul.mubr.bf16.gmra.mrb[0].mxu0 %v7778
        %v7964 = vpop.f32.mrb[0].mxu0
        %v7965 = vadd.f32 0.0, %v7964
        %v7966 = vpop.f32.mrb[0].mxu0
        %v7967 = vadd.f32 0.0, %v7966
        %v7968 = vpop.f32.mrb[0].mxu0
        %v7969 = vadd.f32 0.0, %v7968
        %v7970 = vpop.f32.mrb[0].mxu0
        %v7971 = vadd.f32 0.0, %v7970
        %7972 = vdwg.mxu0
        %v7973 = vadd.f32 %v7604, %v7815
        %v7974 = vadd.f32 %v7605, %v7817
        %v7975 = vadd.f32 %v7606, %v7819
        %v7976 = vadd.f32 %v7607, %v7821
        %v7977 = vadd.f32 %v7608, %v7825
        %v7978 = vadd.f32 %v7609, %v7827
        %v7979 = vadd.f32 %v7610, %v7829
        %v7980 = vadd.f32 %v7611, %v7831
        %v7981 = vadd.f32 %v7612, %v7835
        %v7982 = vadd.f32 %v7613, %v7837
        %v7983 = vadd.f32 %v7614, %v7839
        %v7984 = vadd.f32 %v7615, %v7841
        %v7985 = vadd.f32 %v7616, %v7845
        %v7986 = vadd.f32 %v7617, %v7847
        %v7987 = vadd.f32 %v7618, %v7849
        %v7988 = vadd.f32 %v7619, %v7851
        %v7989 = vadd.f32 %v7620, %v7855
        %v7990 = vadd.f32 %v7621, %v7857
        %v7991 = vadd.f32 %v7622, %v7859
        %v7992 = vadd.f32 %v7623, %v7861
        %v7993 = vadd.f32 %v7624, %v7865
        %v7994 = vadd.f32 %v7625, %v7867
        %v7995 = vadd.f32 %v7626, %v7869
        %v7996 = vadd.f32 %v7627, %v7871
        %v7997 = vadd.f32 %v7628, %v7875
        %v7998 = vadd.f32 %v7629, %v7877
        %v7999 = vadd.f32 %v7630, %v7879
        %v8000 = vadd.f32 %v7631, %v7881
        %v8001 = vadd.f32 %v7632, %v7885
        %v8002 = vadd.f32 %v7633, %v7887
        %v8003 = vadd.f32 %v7634, %v7889
        %v8004 = vadd.f32 %v7635, %v7891
        %v8005 = vadd.f32 %v7636, %v7895
        %v8006 = vadd.f32 %v7637, %v7897
        %v8007 = vadd.f32 %v7638, %v7899
        %v8008 = vadd.f32 %v7639, %v7901
        %v8009 = vadd.f32 %v7640, %v7905
        %v8010 = vadd.f32 %v7641, %v7907
        %v8011 = vadd.f32 %v7642, %v7909
        %v8012 = vadd.f32 %v7643, %v7911
        %v8013 = vadd.f32 %v7644, %v7915
        %v8014 = vadd.f32 %v7645, %v7917
        %v8015 = vadd.f32 %v7646, %v7919
        %v8016 = vadd.f32 %v7647, %v7921
        %v8017 = vadd.f32 %v7648, %v7925
        %v8018 = vadd.f32 %v7649, %v7927
        %v8019 = vadd.f32 %v7650, %v7929
        %v8020 = vadd.f32 %v7651, %v7931
        %v8021 = vadd.f32 %v7652, %v7935
        %v8022 = vadd.f32 %v7653, %v7937
        %v8023 = vadd.f32 %v7654, %v7939
        %v8024 = vadd.f32 %v7655, %v7941
        %v8025 = vadd.f32 %v7656, %v7945
        %v8026 = vadd.f32 %v7657, %v7947
        %v8027 = vadd.f32 %v7658, %v7949
        %v8028 = vadd.f32 %v7659, %v7951
        %v8029 = vadd.f32 %v7660, %v7955
        %v8030 = vadd.f32 %v7661, %v7957
        %v8031 = vadd.f32 %v7662, %v7959
        %v8032 = vadd.f32 %v7663, %v7961
        %v8033 = vadd.f32 %v7664, %v7965
        %v8034 = vadd.f32 %v7665, %v7967
        %v8035 = vadd.f32 %v7666, %v7969
        %v8036 = vadd.f32 %v7667, %v7971
        %8037 = vst [vmem:[#allocation2] sm:$0xff] %v7973
        %8038 = vst [vmem:[#allocation2 + $0x8] sm:$0xff] %v7974
        %8039 = vst [vmem:[#allocation2 + $0x10] sm:$0xff] %v7975
        %8040 = vst [vmem:[#allocation2 + $0x18] sm:$0xff] %v7976
        %8041 = vst [vmem:[#allocation2 + $0x20] sm:$0xff] %v7977
        %8042 = vst [vmem:[#allocation2 + $0x28] sm:$0xff] %v7978
        %8043 = vst [vmem:[#allocation2 + $0x30] sm:$0xff] %v7979
        %8044 = vst [vmem:[#allocation2 + $0x38] sm:$0xff] %v7980
        %8045 = vst [vmem:[#allocation2 + $0x40] sm:$0xff] %v7981
        %8046 = vst [vmem:[#allocation2 + $0x48] sm:$0xff] %v7982
        %8047 = vst [vmem:[#allocation2 + $0x50] sm:$0xff] %v7983
        %8048 = vst [vmem:[#allocation2 + $0x58] sm:$0xff] %v7984
        %8049 = vst [vmem:[#allocation2 + $0x60] sm:$0xff] %v7985
        %8050 = vst [vmem:[#allocation2 + $0x68] sm:$0xff] %v7986
        %8051 = vst [vmem:[#allocation2 + $0x70] sm:$0xff] %v7987
        %8052 = vst [vmem:[#allocation2 + $0x78] sm:$0xff] %v7988
        %8053 = vst [vmem:[#allocation2 + $0x80] sm:$0xff] %v7989
        %8054 = vst [vmem:[#allocation2 + $0x88] sm:$0xff] %v7990
        %8055 = vst [vmem:[#allocation2 + $0x90] sm:$0xff] %v7991
        %8056 = vst [vmem:[#allocation2 + $0x98] sm:$0xff] %v7992
        %8057 = vst [vmem:[#allocation2 + $0xa0] sm:$0xff] %v7993
        %8058 = vst [vmem:[#allocation2 + $0xa8] sm:$0xff] %v7994
        %8059 = vst [vmem:[#allocation2 + $0xb0] sm:$0xff] %v7995
        %8060 = vst [vmem:[#allocation2 + $0xb8] sm:$0xff] %v7996
        %8061 = vst [vmem:[#allocation2 + $0xc0] sm:$0xff] %v7997
        %8062 = vst [vmem:[#allocation2 + $0xc8] sm:$0xff] %v7998
        %8063 = vst [vmem:[#allocation2 + $0xd0] sm:$0xff] %v7999
        %8064 = vst [vmem:[#allocation2 + $0xd8] sm:$0xff] %v8000
        %8065 = vst [vmem:[#allocation2 + $0xe0] sm:$0xff] %v8001
        %8066 = vst [vmem:[#allocation2 + $0xe8] sm:$0xff] %v8002
        %8067 = vst [vmem:[#allocation2 + $0xf0] sm:$0xff] %v8003
        %8068 = vst [vmem:[#allocation2 + $0xf8] sm:$0xff] %v8004
        %8069 = vst [vmem:[#allocation2 + $0x100] sm:$0xff] %v8005
        %8070 = vst [vmem:[#allocation2 + $0x108] sm:$0xff] %v8006
        %8071 = vst [vmem:[#allocation2 + $0x110] sm:$0xff] %v8007
        %8072 = vst [vmem:[#allocation2 + $0x118] sm:$0xff] %v8008
        %8073 = vst [vmem:[#allocation2 + $0x120] sm:$0xff] %v8009
        %8074 = vst [vmem:[#allocation2 + $0x128] sm:$0xff] %v8010
        %8075 = vst [vmem:[#allocation2 + $0x130] sm:$0xff] %v8011
        %8076 = vst [vmem:[#allocation2 + $0x138] sm:$0xff] %v8012
        %8077 = vst [vmem:[#allocation2 + $0x140] sm:$0xff] %v8013
        %8078 = vst [vmem:[#allocation2 + $0x148] sm:$0xff] %v8014
        %8079 = vst [vmem:[#allocation2 + $0x150] sm:$0xff] %v8015
        %8080 = vst [vmem:[#allocation2 + $0x158] sm:$0xff] %v8016
        %8081 = vst [vmem:[#allocation2 + $0x160] sm:$0xff] %v8017
        %8082 = vst [vmem:[#allocation2 + $0x168] sm:$0xff] %v8018
        %8083 = vst [vmem:[#allocation2 + $0x170] sm:$0xff] %v8019
        %8084 = vst [vmem:[#allocation2 + $0x178] sm:$0xff] %v8020
        %8085 = vst [vmem:[#allocation2 + $0x180] sm:$0xff] %v8021
        %8086 = vst [vmem:[#allocation2 + $0x188] sm:$0xff] %v8022
        %8087 = vst [vmem:[#allocation2 + $0x190] sm:$0xff] %v8023
        %8088 = vst [vmem:[#allocation2 + $0x198] sm:$0xff] %v8024
        %8089 = vst [vmem:[#allocation2 + $0x1a0] sm:$0xff] %v8025
        %8090 = vst [vmem:[#allocation2 + $0x1a8] sm:$0xff] %v8026
        %8091 = vst [vmem:[#allocation2 + $0x1b0] sm:$0xff] %v8027
        %8092 = vst [vmem:[#allocation2 + $0x1b8] sm:$0xff] %v8028
        %8093 = vst [vmem:[#allocation2 + $0x1c0] sm:$0xff] %v8029
        %8094 = vst [vmem:[#allocation2 + $0x1c8] sm:$0xff] %v8030
        %8095 = vst [vmem:[#allocation2 + $0x1d0] sm:$0xff] %v8031
        %8096 = vst [vmem:[#allocation2 + $0x1d8] sm:$0xff] %v8032
        %8097 = vst [vmem:[#allocation2 + $0x1e0] sm:$0xff] %v8033
        %8098 = vst [vmem:[#allocation2 + $0x1e8] sm:$0xff] %v8034
        %8099 = vst [vmem:[#allocation2 + $0x1f0] sm:$0xff] %v8035
        %8100 = vst [vmem:[#allocation2 + $0x1f8] sm:$0xff] %v8036
        %v8101 = vld [vmem:[#allocation2] sm:$0xff]
        %v8102 = vld [vmem:[#allocation2 + $0x8] sm:$0xff]
        %v8103 = vld [vmem:[#allocation2 + $0x10] sm:$0xff]
        %v8104 = vld [vmem:[#allocation2 + $0x18] sm:$0xff]
        %v8105 = vld [vmem:[#allocation2 + $0x20] sm:$0xff]
        %v8106 = vld [vmem:[#allocation2 + $0x28] sm:$0xff]
        %v8107 = vld [vmem:[#allocation2 + $0x30] sm:$0xff]
        %v8108 = vld [vmem:[#allocation2 + $0x38] sm:$0xff]
        %v8109 = vld [vmem:[#allocation2 + $0x40] sm:$0xff]
        %v8110 = vld [vmem:[#allocation2 + $0x48] sm:$0xff]
        %v8111 = vld [vmem:[#allocation2 + $0x50] sm:$0xff]
        %v8112 = vld [vmem:[#allocation2 + $0x58] sm:$0xff]
        %v8113 = vld [vmem:[#allocation2 + $0x60] sm:$0xff]
        %v8114 = vld [vmem:[#allocation2 + $0x68] sm:$0xff]
        %v8115 = vld [vmem:[#allocation2 + $0x70] sm:$0xff]
        %v8116 = vld [vmem:[#allocation2 + $0x78] sm:$0xff]
        %v8117 = vld [vmem:[#allocation2 + $0x80] sm:$0xff]
        %v8118 = vld [vmem:[#allocation2 + $0x88] sm:$0xff]
        %v8119 = vld [vmem:[#allocation2 + $0x90] sm:$0xff]
        %v8120 = vld [vmem:[#allocation2 + $0x98] sm:$0xff]
        %v8121 = vld [vmem:[#allocation2 + $0xa0] sm:$0xff]
        %v8122 = vld [vmem:[#allocation2 + $0xa8] sm:$0xff]
        %v8123 = vld [vmem:[#allocation2 + $0xb0] sm:$0xff]
        %v8124 = vld [vmem:[#allocation2 + $0xb8] sm:$0xff]
        %v8125 = vld [vmem:[#allocation2 + $0xc0] sm:$0xff]
        %v8126 = vld [vmem:[#allocation2 + $0xc8] sm:$0xff]
        %v8127 = vld [vmem:[#allocation2 + $0xd0] sm:$0xff]
        %v8128 = vld [vmem:[#allocation2 + $0xd8] sm:$0xff]
        %v8129 = vld [vmem:[#allocation2 + $0xe0] sm:$0xff]
        %v8130 = vld [vmem:[#allocation2 + $0xe8] sm:$0xff]
        %v8131 = vld [vmem:[#allocation2 + $0xf0] sm:$0xff]
        %v8132 = vld [vmem:[#allocation2 + $0xf8] sm:$0xff]
        %v8133 = vld [vmem:[#allocation2 + $0x100] sm:$0xff]
        %v8134 = vld [vmem:[#allocation2 + $0x108] sm:$0xff]
        %v8135 = vld [vmem:[#allocation2 + $0x110] sm:$0xff]
        %v8136 = vld [vmem:[#allocation2 + $0x118] sm:$0xff]
        %v8137 = vld [vmem:[#allocation2 + $0x120] sm:$0xff]
        %v8138 = vld [vmem:[#allocation2 + $0x128] sm:$0xff]
        %v8139 = vld [vmem:[#allocation2 + $0x130] sm:$0xff]
        %v8140 = vld [vmem:[#allocation2 + $0x138] sm:$0xff]
        %v8141 = vld [vmem:[#allocation2 + $0x140] sm:$0xff]
        %v8142 = vld [vmem:[#allocation2 + $0x148] sm:$0xff]
        %v8143 = vld [vmem:[#allocation2 + $0x150] sm:$0xff]
        %v8144 = vld [vmem:[#allocation2 + $0x158] sm:$0xff]
        %v8145 = vld [vmem:[#allocation2 + $0x160] sm:$0xff]
        %v8146 = vld [vmem:[#allocation2 + $0x168] sm:$0xff]
        %v8147 = vld [vmem:[#allocation2 + $0x170] sm:$0xff]
        %v8148 = vld [vmem:[#allocation2 + $0x178] sm:$0xff]
        %v8149 = vld [vmem:[#allocation2 + $0x180] sm:$0xff]
        %v8150 = vld [vmem:[#allocation2 + $0x188] sm:$0xff]
        %v8151 = vld [vmem:[#allocation2 + $0x190] sm:$0xff]
        %v8152 = vld [vmem:[#allocation2 + $0x198] sm:$0xff]
        %v8153 = vld [vmem:[#allocation2 + $0x1a0] sm:$0xff]
        %v8154 = vld [vmem:[#allocation2 + $0x1a8] sm:$0xff]
        %v8155 = vld [vmem:[#allocation2 + $0x1b0] sm:$0xff]
        %v8156 = vld [vmem:[#allocation2 + $0x1b8] sm:$0xff]
        %v8157 = vld [vmem:[#allocation2 + $0x1c0] sm:$0xff]
        %v8158 = vld [vmem:[#allocation2 + $0x1c8] sm:$0xff]
        %v8159 = vld [vmem:[#allocation2 + $0x1d0] sm:$0xff]
        %v8160 = vld [vmem:[#allocation2 + $0x1d8] sm:$0xff]
        %v8161 = vld [vmem:[#allocation2 + $0x1e0] sm:$0xff]
        %v8162 = vld [vmem:[#allocation2 + $0x1e8] sm:$0xff]
        %v8163 = vld [vmem:[#allocation2 + $0x1f0] sm:$0xff]
        %v8164 = vld [vmem:[#allocation2 + $0x1f8] sm:$0xff]
        %v8165 = vld [vmem:[%s4] sm:$0x3]
        %v8167 = vlaneseq
        %v8168 = vshrl.u32 %v8167, 7
        %v8169 = vsub.s32 0, %v8168
        %v8170 = vrot.slane %v8165, %v8169
        %v8171 = vlaneseq
        %v8172 = vshrl.u32 %v8171, 7
        %v8173 = vsub.s32 1, %v8172
        %v8174 = vrot.slane %v8165, %v8173
        %v8177 = vadd.f32 %v8101, %v8170
        %v8178 = vadd.f32 %v8102, %v8174
        %v8179 = vadd.f32 %v8103, %v8170
        %v8180 = vadd.f32 %v8104, %v8174
        %v8181 = vadd.f32 %v8105, %v8170
        %v8182 = vadd.f32 %v8106, %v8174
        %v8183 = vadd.f32 %v8107, %v8170
        %v8184 = vadd.f32 %v8108, %v8174
        %v8185 = vadd.f32 %v8109, %v8170
        %v8186 = vadd.f32 %v8110, %v8174
        %v8187 = vadd.f32 %v8111, %v8170
        %v8188 = vadd.f32 %v8112, %v8174
        %v8189 = vadd.f32 %v8113, %v8170
        %v8190 = vadd.f32 %v8114, %v8174
        %v8191 = vadd.f32 %v8115, %v8170
        %v8192 = vadd.f32 %v8116, %v8174
        %v8193 = vadd.f32 %v8117, %v8170
        %v8194 = vadd.f32 %v8118, %v8174
        %v8195 = vadd.f32 %v8119, %v8170
        %v8196 = vadd.f32 %v8120, %v8174
        %v8197 = vadd.f32 %v8121, %v8170
        %v8198 = vadd.f32 %v8122, %v8174
        %v8199 = vadd.f32 %v8123, %v8170
        %v8200 = vadd.f32 %v8124, %v8174
        %v8201 = vadd.f32 %v8125, %v8170
        %v8202 = vadd.f32 %v8126, %v8174
        %v8203 = vadd.f32 %v8127, %v8170
        %v8204 = vadd.f32 %v8128, %v8174
        %v8205 = vadd.f32 %v8129, %v8170
        %v8206 = vadd.f32 %v8130, %v8174
        %v8207 = vadd.f32 %v8131, %v8170
        %v8208 = vadd.f32 %v8132, %v8174
        %v8209 = vadd.f32 %v8133, %v8170
        %v8210 = vadd.f32 %v8134, %v8174
        %v8211 = vadd.f32 %v8135, %v8170
        %v8212 = vadd.f32 %v8136, %v8174
        %v8213 = vadd.f32 %v8137, %v8170
        %v8214 = vadd.f32 %v8138, %v8174
        %v8215 = vadd.f32 %v8139, %v8170
        %v8216 = vadd.f32 %v8140, %v8174
        %v8217 = vadd.f32 %v8141, %v8170
        %v8218 = vadd.f32 %v8142, %v8174
        %v8219 = vadd.f32 %v8143, %v8170
        %v8220 = vadd.f32 %v8144, %v8174
        %v8221 = vadd.f32 %v8145, %v8170
        %v8222 = vadd.f32 %v8146, %v8174
        %v8223 = vadd.f32 %v8147, %v8170
        %v8224 = vadd.f32 %v8148, %v8174
        %v8225 = vadd.f32 %v8149, %v8170
        %v8226 = vadd.f32 %v8150, %v8174
        %v8227 = vadd.f32 %v8151, %v8170
        %v8228 = vadd.f32 %v8152, %v8174
        %v8229 = vadd.f32 %v8153, %v8170
        %v8230 = vadd.f32 %v8154, %v8174
        %v8231 = vadd.f32 %v8155, %v8170
        %v8232 = vadd.f32 %v8156, %v8174
        %v8233 = vadd.f32 %v8157, %v8170
        %v8234 = vadd.f32 %v8158, %v8174
        %v8235 = vadd.f32 %v8159, %v8170
        %v8236 = vadd.f32 %v8160, %v8174
        %v8237 = vadd.f32 %v8161, %v8170
        %v8238 = vadd.f32 %v8162, %v8174
        %v8239 = vadd.f32 %v8163, %v8170
        %v8240 = vadd.f32 %v8164, %v8174
        %8241 = vst [vmem:[%s271] sm:$0xff] %v8177
        %8242 = vst [vmem:[%s271 + $0x8] sm:$0xff] %v8178
        %8243 = vst [vmem:[%s271 + $0x10] sm:$0xff] %v8179
        %8244 = vst [vmem:[%s271 + $0x18] sm:$0xff] %v8180
        %8245 = vst [vmem:[%s271 + $0x20] sm:$0xff] %v8181
        %8246 = vst [vmem:[%s271 + $0x28] sm:$0xff] %v8182
        %8247 = vst [vmem:[%s271 + $0x30] sm:$0xff] %v8183
        %8248 = vst [vmem:[%s271 + $0x38] sm:$0xff] %v8184
        %8249 = vst [vmem:[%s271 + $0x40] sm:$0xff] %v8185
        %8250 = vst [vmem:[%s271 + $0x48] sm:$0xff] %v8186
        %8251 = vst [vmem:[%s271 + $0x50] sm:$0xff] %v8187
        %8252 = vst [vmem:[%s271 + $0x58] sm:$0xff] %v8188
        %8253 = vst [vmem:[%s271 + $0x60] sm:$0xff] %v8189
        %8254 = vst [vmem:[%s271 + $0x68] sm:$0xff] %v8190
        %8255 = vst [vmem:[%s271 + $0x70] sm:$0xff] %v8191
        %8256 = vst [vmem:[%s271 + $0x78] sm:$0xff] %v8192
        %8257 = vst [vmem:[%s271 + $0x80] sm:$0xff] %v8193
        %8258 = vst [vmem:[%s271 + $0x88] sm:$0xff] %v8194
        %8259 = vst [vmem:[%s271 + $0x90] sm:$0xff] %v8195
        %8260 = vst [vmem:[%s271 + $0x98] sm:$0xff] %v8196
        %8261 = vst [vmem:[%s271 + $0xa0] sm:$0xff] %v8197
        %8262 = vst [vmem:[%s271 + $0xa8] sm:$0xff] %v8198
        %8263 = vst [vmem:[%s271 + $0xb0] sm:$0xff] %v8199
        %8264 = vst [vmem:[%s271 + $0xb8] sm:$0xff] %v8200
        %8265 = vst [vmem:[%s271 + $0xc0] sm:$0xff] %v8201
        %8266 = vst [vmem:[%s271 + $0xc8] sm:$0xff] %v8202
        %8267 = vst [vmem:[%s271 + $0xd0] sm:$0xff] %v8203
        %8268 = vst [vmem:[%s271 + $0xd8] sm:$0xff] %v8204
        %8269 = vst [vmem:[%s271 + $0xe0] sm:$0xff] %v8205
        %8270 = vst [vmem:[%s271 + $0xe8] sm:$0xff] %v8206
        %8271 = vst [vmem:[%s271 + $0xf0] sm:$0xff] %v8207
        %8272 = vst [vmem:[%s271 + $0xf8] sm:$0xff] %v8208
        %8273 = vst [vmem:[%s271 + $0x100] sm:$0xff] %v8209
        %8274 = vst [vmem:[%s271 + $0x108] sm:$0xff] %v8210
        %8275 = vst [vmem:[%s271 + $0x110] sm:$0xff] %v8211
        %8276 = vst [vmem:[%s271 + $0x118] sm:$0xff] %v8212
        %8277 = vst [vmem:[%s271 + $0x120] sm:$0xff] %v8213
        %8278 = vst [vmem:[%s271 + $0x128] sm:$0xff] %v8214
        %8279 = vst [vmem:[%s271 + $0x130] sm:$0xff] %v8215
        %8280 = vst [vmem:[%s271 + $0x138] sm:$0xff] %v8216
        %8281 = vst [vmem:[%s271 + $0x140] sm:$0xff] %v8217
        %8282 = vst [vmem:[%s271 + $0x148] sm:$0xff] %v8218
        %8283 = vst [vmem:[%s271 + $0x150] sm:$0xff] %v8219
        %8284 = vst [vmem:[%s271 + $0x158] sm:$0xff] %v8220
        %8285 = vst [vmem:[%s271 + $0x160] sm:$0xff] %v8221
        %8286 = vst [vmem:[%s271 + $0x168] sm:$0xff] %v8222
        %8287 = vst [vmem:[%s271 + $0x170] sm:$0xff] %v8223
        %8288 = vst [vmem:[%s271 + $0x178] sm:$0xff] %v8224
        %8289 = vst [vmem:[%s271 + $0x180] sm:$0xff] %v8225
        %8290 = vst [vmem:[%s271 + $0x188] sm:$0xff] %v8226
        %8291 = vst [vmem:[%s271 + $0x190] sm:$0xff] %v8227
        %8292 = vst [vmem:[%s271 + $0x198] sm:$0xff] %v8228
        %8293 = vst [vmem:[%s271 + $0x1a0] sm:$0xff] %v8229
        %8294 = vst [vmem:[%s271 + $0x1a8] sm:$0xff] %v8230
        %8295 = vst [vmem:[%s271 + $0x1b0] sm:$0xff] %v8231
        %8296 = vst [vmem:[%s271 + $0x1b8] sm:$0xff] %v8232
        %8297 = vst [vmem:[%s271 + $0x1c0] sm:$0xff] %v8233
        %8298 = vst [vmem:[%s271 + $0x1c8] sm:$0xff] %v8234
        %8299 = vst [vmem:[%s271 + $0x1d0] sm:$0xff] %v8235
        %8300 = vst [vmem:[%s271 + $0x1d8] sm:$0xff] %v8236
        %8301 = vst [vmem:[%s271 + $0x1e0] sm:$0xff] %v8237
        %8302 = vst [vmem:[%s271 + $0x1e8] sm:$0xff] %v8238
        %8303 = vst [vmem:[%s271 + $0x1f0] sm:$0xff] %v8239
        %8304 = vst [vmem:[%s271 + $0x1f8] sm:$0xff] %v8240
        %s8305 = sand.u32 %s141, 1
        %s8306 = scalar_lea.sflag [#allocation5], %s8305
        %s8307 = sand.u32 %s141, 1
        %s8308 = smul.addr %s8307, 512
        %s8309 = scalar_lea.vmem [#allocation9], %s8308
        // Predicated region
        $region53: #{tpu_custom_call.1} parent=39 // pred_check
          %p8310 = pneg %p151
        $region54: #{tpu_custom_call.1} parent=39 // pred_check_branch
          %8312 = sbr.rel (%p8310) target = $region56
        $region55: #{tpu_custom_call.1} parent=39 // pred_region
          %s8314 = ssub.s32 8192, 8192
          %8315 = vsyncadd %s8306, %s8314
          %s8316 = smul.addr %s23, 64
          %s8317 = smul.addr %s8316, 128
          %s8318 = scalar_lea.hbm %s5, %s8317
          %s8319 = sshll.u32 %s8309, 4
          %s8320 = int_to_ptr.vmem [resolvable:$true] %s8319
          %8325 = dma.vmem_to_hbm [thread:$0]  %s8320, 8192, %s8318, %s8306, 256, 256, 16
        $region56: #{tpu_custom_call.1} parent=39 // pred_fallthru
          _
      $region40: #{tpu_custom_call.1} parent=5 // pred_fallthru
        _
      %p8326 = scmp.le.s32.totalorder 2, %s18
      // Predicated region
      $region57: #{tpu_custom_call.1} parent=5 // pred_check
        %p8327 = pneg %p8326
      $region58: #{tpu_custom_call.1} parent=5 // pred_check_branch
        %8329 = sbr.rel (%p8327) target = $region60
      $region59: #{tpu_custom_call.1} parent=5 // pred_region
        %s8330 = ssub.s32 %s18, 2
        // Predicated region
        $region61: #{tpu_custom_call.1} parent=59 // pred_check
          %p8331 = pneg %p157
        $region62: #{tpu_custom_call.1} parent=59 // pred_check_branch
          %8333 = sbr.rel (%p8331) target = $region64
        $region63: #{tpu_custom_call.1} parent=59 // pred_region
          %s8334 = sand.u32 %s142, 1
          %s8335 = scalar_lea.sflag [#allocation5], %s8334
          %s8336 = sand.u32 %s142, 1
          %s8337 = smul.addr %s8336, 512
          %s8338 = scalar_lea.vmem [#allocation9], %s8337
          %8339 = dma.done %s8335, 8192
        $region64: #{tpu_custom_call.1} parent=59 // pred_fallthru
          _
      $region60: #{tpu_custom_call.1} parent=5 // pred_fallthru
        _
    $region6: #{tpu_custom_call.1} parent=1 // loop_footer
      %s22 = sadd.s32 1, %s18
    $region7: #{tpu_custom_call.1} parent=1 // loop_footer_branch
      %17 = sbr.rel target = $region3
    $region8: #{tpu_custom_call.1} parent=1 // loop_exit
      _
    %8340 = vsyncpa [#allocation4], 1
    %s8341 = scalar_lea.sflag [#allocation4], 1
    %8342 = vsyncpa %s8341, 1
    %8343 = vsyncpa [#allocation7], 1
    %8344 = vsyncpa [#allocation5], 1
    %s8345 = scalar_lea.sflag [#allocation5], 1
    %8346 = vsyncpa %s8345, 1

</llo_original>
